<compile_context>
chip_gen: v6e
topology: v6e:2x2x1
jax: 0.10.0
libtpu: 0.0.40
codegen_flags: <defaults>
</compile_context>

<pallas_src>
import math

import jax
import jax.numpy as jnp
import numpy as np
from jax.experimental import pallas as pl
from jax.experimental.pallas import tpu as pltpu

DELTA = 2.5
BN_EPS = 1e-5
LEAKY_SLOPE = 0.01  # nn.LeakyReLU default
NEG_INF = -1e30


# ----------------------------- fused Pallas kernel -------------------------- #

def _fused_static_pna_kernel(x_ref, a_ref, emb_w_ref, emb_b_ref,
                             w_ref, rows_ref, o_ref):
    # x_ref      : (GB*N, F)        stacked node features of GB graphs
    # a_ref      : (GB, N, N)       A[g, dst, src]
    # emb_w_ref  : (F, nh), emb_b_ref : (1, nh)
    # w_ref      : (L, 10*nh, nh)   per layer: [w_src ; w_dst ; w_u(7nh) ; w_mix]
    # rows_ref   : (L, 8, nh)       per layer rows: [b_m, b_u, gamma, beta, b_mix, pad..]
    # o_ref      : (GB*N, nh)
    A = a_ref[...]                                    # (GB, N, N)
    GB, N, _ = A.shape
    nh = emb_w_ref.shape[1]
    GBN = GB * N
    n_layers = w_ref.shape[0]

    # --- embedding_h: Linear(F -> nh), all GB graphs stacked -> M = GB*N rows --
    H = (jnp.dot(x_ref[...], emb_w_ref[...], preferred_element_type=jnp.float32)
         + emb_b_ref[...])                            # (GBN, nh)

    # --- graph quantities shared by both PNA layers (A identical), hoisted ----
    deg = jnp.sum(A, axis=2, keepdims=True)           # in-degree (GB, N, 1)
    has_nb = deg > 0.0
    safe_deg = jnp.where(has_nb, deg, 1.0)
    inv_deg = 1.0 / safe_deg                           # single exact divide
    amp = jnp.log(deg + 1.0) / DELTA                   # amplification scaler
    # pre-broadcast once to (GB, N, nh): JAX does not CSE broadcast_in_dim.
    deg_f = jnp.broadcast_to(deg, (GB, N, nh))
    has_f = jnp.broadcast_to(has_nb, (GB, N, nh))
    inv_f = jnp.broadcast_to(inv_deg, (GB, N, nh))
    amp_f = jnp.broadcast_to(amp, (GB, N, nh))
    neg_inf_f = jnp.full((GB, N, nh), NEG_INF, jnp.float32)
    # neighbour masks for the max aggregator, hoisted & pre-broadcast (reused by
    # both layers).  NOTE: this unrolled masked-max is O(N) code / O(N^2) VPU work;
    # switch to a tiled masked max if per-graph N grows past ~64.
    nb_mask = [jnp.broadcast_to(A[:, :, u:u + 1] > 0.0, (GB, N, nh))
               for u in range(N)]
    inv_sqrt_n = jnp.float32(1.0 / math.sqrt(N))

    for l in range(n_layers):
        # Slice weights straight off the ref (no full-slab materialisation).
        w_src = w_ref[l, 0 * nh:1 * nh, :]
        w_dst = w_ref[l, 1 * nh:2 * nh, :]
        w_u = w_ref[l, 2 * nh:9 * nh, :]
        w_mix = w_ref[l, 9 * nh:10 * nh, :]
        b_m = rows_ref[l, 0:1, :]
        b_u = rows_ref[l, 1:2, :]
        gamma = rows_ref[l, 2:3, :]
        beta = rows_ref[l, 3:4, :]
        b_mix = rows_ref[l, 4:5, :]

        # Message MLP M([h_src ; h_dst]) split into src / dst halves so that
        # aggregation becomes dense (per-graph) matmuls against the adjacency.
        S = jnp.dot(H, w_src, preferred_element_type=jnp.float32)            # (GBN, nh)
        Dv = jnp.dot(H, w_dst, preferred_element_type=jnp.float32) + b_m     # (GBN, nh)
        S3 = S.reshape(GB, N, nh)
        Dv3 = Dv.reshape(GB, N, nh)

        # sum / mean aggregators (binary adjacency assumed, matching the contract)
        sum_S = jnp.einsum('bij,bjd->bid', A, S3,
                           preferred_element_type=jnp.float32)
        agg_sum = jnp.where(has_f, sum_S + deg_f * Dv3, 0.0)
        agg_mean = agg_sum * inv_f                     # hoisted exact reciprocal

        # max aggregator: masked elementwise max over the N in-graph sources.
        max_S = neg_inf_f
        for u in range(N):
            s_u = S3[:, u:u + 1, :]                    # (GB, 1, nh)
            max_S = jnp.where(nb_mask[u], jnp.maximum(max_S, s_u), max_S)
        agg_max = jnp.where(has_f, max_S + Dv3, 0.0)

        # U([h ; mean ; max ; sum ; mean*a ; max*a ; sum*a]) as ONE K=7*nh matmul
        H3 = H.reshape(GB, N, nh)
        cat = jnp.concatenate(
            [H3, agg_mean, agg_max, agg_sum,
             agg_mean * amp_f, agg_max * amp_f, agg_sum * amp_f], axis=-1)    # (GB,N,7nh)
        hu = (jnp.dot(cat.reshape(GBN, 7 * nh), w_u,
                      preferred_element_type=jnp.float32) + b_u)              # (GBN, nh)

        # graph-size normalization: h * sqrt(1/N)   (all graphs have N nodes)
        h3 = (hu * inv_sqrt_n).reshape(GB, N, nh)

        # BatchNorm1d, training-mode *per-graph* batch statistics, eps=1e-5
        mu = jnp.mean(h3, axis=1, keepdims=True)
        var = jnp.mean((h3 - mu) ** 2, axis=1, keepdims=True)
        hb = ((h3 - mu) * jax.lax.rsqrt(var + BN_EPS) * gamma + beta).reshape(GBN, nh)

        # mixing layer: Linear + LeakyReLU, then residual with the layer input
        hm = jnp.dot(hb, w_mix, preferred_element_type=jnp.float32) + b_mix
        hm = jnp.maximum(hm, LEAKY_SLOPE * hm)
        H = hm + H

    o_ref[...] = H


def static_pna_pallas(x_flat, a3, emb_w, emb_b, w_layers, row_layers,
                      *, graphs_per_block):
    G, N, _ = a3.shape
    F = x_flat.shape[1]
    nh = emb_w.shape[1]
    GB = graphs_per_block
    assert G % GB == 0, "number of graphs must be divisible by graphs_per_block"
    grid = (G // GB,)
    return pl.pallas_call(
        _fused_static_pna_kernel,
        out_shape=jax.ShapeDtypeStruct((G * N, nh), jnp.float32),
        grid=grid,
        in_specs=[
            pl.BlockSpec((GB * N, F), lambda g: (g, 0)),          # node feats per block
            pl.BlockSpec((GB, N, N), lambda g: (g, 0, 0)),        # adjacencies per block
            pl.BlockSpec(emb_w.shape, lambda g: (0, 0)),          # resident
            pl.BlockSpec(emb_b.shape, lambda g: (0, 0)),          # resident
            pl.BlockSpec(w_layers.shape, lambda g: (0, 0, 0)),    # resident
            pl.BlockSpec(row_layers.shape, lambda g: (0, 0, 0)),  # resident
        ],
        out_specs=pl.BlockSpec((GB * N, nh), lambda g: (g, 0)),
        compiler_params=pltpu.CompilerParams(
            dimension_semantics=("parallel",)),                   # v7x: shard over 2 TCs
    )(x_flat, a3, emb_w, emb_b, w_layers, row_layers)


# --------------------------- parameter construction ------------------------- #

def _uniform(key, shape, fan_in):
    bound = 1.0 / math.sqrt(fan_in)
    return jax.random.uniform(key, shape, jnp.float32, -bound, bound)


def init_pna_layer_params(key, nh):
    ks = jax.random.split(key, 7)
    return {
        # M : Linear(2*nh, nh), split into src / dst halves, stored (in, out)
        "w_src": _uniform(ks[0], (nh, nh), 2 * nh),
        "w_dst": _uniform(ks[1], (nh, nh), 2 * nh),
        "b_m":   _uniform(ks[2], (1, nh), 2 * nh),
        # U : Linear(7*nh, nh), rows ordered [h, mean, max, sum, mean*a, max*a, sum*a]
        "w_u":   _uniform(ks[3], (7 * nh, nh), 7 * nh),
        "b_u":   _uniform(ks[4], (1, nh), 7 * nh),
        # BatchNorm1d affine params
        "gamma": jnp.ones((1, nh), jnp.float32),
        "beta":  jnp.zeros((1, nh), jnp.float32),
        # mixing layer Linear(nh, nh)
        "w_mix": _uniform(ks[5], (nh, nh), nh),
        "b_mix": _uniform(ks[6], (1, nh), nh),
    }


def init_params(key, feats_per_node, nh):
    k_emb_w, k_emb_b, k1, k2 = jax.random.split(key, 4)
    return {
        "emb_w": _uniform(k_emb_w, (feats_per_node, nh), feats_per_node),
        "emb_b": _uniform(k_emb_b, (1, nh), feats_per_node),
        "layer1": init_pna_layer_params(k1, nh),
        "layer2": init_pna_layer_params(k2, nh),
    }


def _pack_layer(p, nh):
    # weights: [w_src ; w_dst ; w_u ; w_mix] -> (10*nh, nh)
    w = jnp.concatenate([p["w_src"], p["w_dst"], p["w_u"], p["w_mix"]], axis=0)
    # bias/affine rows packed to one (8, nh) slab (padded to a full sublane group)
    rows = jnp.concatenate(
        [p["b_m"], p["b_u"], p["gamma"], p["beta"], p["b_mix"],
         jnp.zeros((3, nh), jnp.float32)], axis=0)
    return w, rows


# ------------------------------- full forward -------------------------------- #

def static_pna_forward(x_flat, a3, params, graphs_per_block):
    # embedding_h (Linear branch; the 1/2-hot nn.Embedding branch is just a row
    # lookup and is not exercised here).
    nh = params["emb_w"].shape[1]
    w1, r1 = _pack_layer(params["layer1"], nh)
    w2, r2 = _pack_layer(params["layer2"], nh)
    w_layers = jnp.stack([w1, w2], axis=0)       # (2, 10*nh, nh)
    row_layers = jnp.stack([r1, r2], axis=0)     # (2, 8, nh)
    return static_pna_pallas(x_flat, a3, params["emb_w"], params["emb_b"],
                             w_layers, row_layers,
                             graphs_per_block=graphs_per_block)


static_pna_forward = jax.jit(static_pna_forward,
                             static_argnames=("graphs_per_block",))


# ------------------------------ pure-JAX reference --------------------------- #

def _pna_layer_ref(h, a, p):
    hi = jax.lax.Precision.HIGHEST
    n, nh = h.shape
    S = jnp.dot(h, p["w_src"], precision=hi)
    Dv = jnp.dot(h, p["w_dst"], precision=hi) + p["b_m"]
    deg = jnp.sum(a, axis=1, keepdims=True)
    has = deg > 0
    safe = jnp.where(has, deg, 1.0)
    agg_sum = jnp.where(has, jnp.dot(a, S, precision=hi) + deg * Dv, 0.0)
    agg_mean = jnp.where(has, agg_sum / safe, 0.0)
    masked = jnp.where(a[:, :, None] > 0, S[None, :, :], NEG_INF)
    agg_max = jnp.where(has, jnp.max(masked, axis=1) + Dv, 0.0)
    amp = jnp.log(deg + 1.0) / DELTA
    cat = jnp.concatenate(
        [h, agg_mean, agg_max, agg_sum, agg_mean * amp, agg_max * amp, agg_sum * amp],
        axis=1)
    hu = jnp.dot(cat, p["w_u"], precision=hi) + p["b_u"]
    hu = hu / jnp.sqrt(jnp.float32(n))
    mu = jnp.mean(hu, axis=0, keepdims=True)
    var = jnp.mean((hu - mu) ** 2, axis=0, keepdims=True)
    hb = (hu - mu) / jnp.sqrt(var + BN_EPS) * p["gamma"] + p["beta"]
    hm = jnp.dot(hb, p["w_mix"], precision=hi) + p["b_mix"]
    hm = jnp.where(hm >= 0, hm, LEAKY_SLOPE * hm)
    return hm + h


def static_pna_ref(x, a, params):
    h = jnp.dot(x, params["emb_w"], precision=jax.lax.Precision.HIGHEST) + params["emb_b"]
    h = _pna_layer_ref(h, a, params["layer1"])
    h = _pna_layer_ref(h, a, params["layer2"])
    return h


# ----------------------------------- main ------------------------------------ #

if __name__ == "__main__":
    G = 32                # batched graphs / timesteps (each = one module forward)
    GRAPHS_PER_BLOCK = 16  # graphs per grid step -> M = 16*8 = 128 matmul rows
    N = 8                 # nodes per graph
    FEATS_PER_NODE = 16   # gcn_args.feats_per_node
    N_HID = 128           # gcn_args.hidden_dim (lane-dense: fills full 128-lane vregs)

    key = jax.random.PRNGKey(0)
    k_x, k_a, k_p = jax.random.split(key, 3)

    # Nodes_list[-1]: dense node features (Linear embedding branch), one per graph
    x = jax.random.normal(k_x, (G, N, FEATS_PER_NODE), jnp.float32)

    # graph_list[-1]: dense adjacency A[g, dst, src], no self loops
    a = (jax.random.uniform(k_a, (G, N, N)) < 0.4).astype(jnp.float32)
    a = a * (1.0 - jnp.eye(N, dtype=jnp.float32))[None, :, :]

    params = init_params(k_p, FEATS_PER_NODE, N_HID)

    x_flat = x.reshape(G * N, FEATS_PER_NODE)
    out = static_pna_forward(x_flat, a, params, GRAPHS_PER_BLOCK)
    out = jax.block_until_ready(out)

    ref = jax.vmap(lambda xg, ag: static_pna_ref(xg, ag, params))(x, a)
    ref = ref.reshape(G * N, N_HID)
    np.testing.assert_allclose(np.asarray(out), np.asarray(ref), rtol=2e-3, atol=2e-3)

    # TODO(synk): the use_1/2_hot_node_feats nn.Embedding lookup path (sparse indices)
    # is not exercised; only the dense nn.Linear embedding branch is implemented.
    print("KERNEL_OK")
</pallas_src>

<mosaic_0001>
module attributes {stable_mosaic.version = 11 : i64} {
  func.func @_fused_static_pna_kernel(%arg0: i32, %arg1: memref<128x16xf32, #tpu.memory_space<vmem>>, %arg2: memref<16x8x8xf32, #tpu.memory_space<vmem>>, %arg3: memref<16x128xf32, #tpu.memory_space<vmem>>, %arg4: memref<1x128xf32, #tpu.memory_space<vmem>>, %arg5: memref<2x1280x128xf32, #tpu.memory_space<vmem>>, %arg6: memref<2x8x128xf32, #tpu.memory_space<vmem>>, %arg7: memref<128x128xf32, #tpu.memory_space<vmem>>) attributes {dimension_semantics = [#tpu.dimension_semantics<parallel>], iteration_bounds = array<i64: 2>, scalar_prefetch = 0 : i64, scratch_operands = 0 : i64, tpu.core_type = #tpu.core_type<tc>, window_params = [{transform_indices = @transform_0, window_bounds = array<i64: 128, 16>}, {transform_indices = @transform_1, window_bounds = array<i64: 16, 8, 8>}, {pipeline_mode = #tpu.pipeline_mode<synchronous>, transform_indices = @transform_2, window_bounds = array<i64: 16, 128>}, {pipeline_mode = #tpu.pipeline_mode<synchronous>, transform_indices = @transform_3, window_bounds = array<i64: 1, 128>}, {pipeline_mode = #tpu.pipeline_mode<synchronous>, transform_indices = @transform_4, window_bounds = array<i64: 2, 1280, 128>}, {pipeline_mode = #tpu.pipeline_mode<synchronous>, transform_indices = @transform_5, window_bounds = array<i64: 2, 8, 128>}, {transform_indices = @transform_6, window_bounds = array<i64: 128, 128>}]} {
    %c0 = arith.constant 0 : index
    %c0_0 = arith.constant 0 : index
    %c0_1 = arith.constant 0 : index
    %0 = vector.load %arg2[%c0, %c0_0, %c0_1] : memref<16x8x8xf32, #tpu.memory_space<vmem>>, vector<16x8x8xf32>
    %c0_2 = arith.constant 0 : index
    %c0_3 = arith.constant 0 : index
    %1 = vector.load %arg1[%c0_2, %c0_3] : memref<128x16xf32, #tpu.memory_space<vmem>>, vector<128x16xf32>
    %c0_4 = arith.constant 0 : index
    %c0_5 = arith.constant 0 : index
    %2 = vector.load %arg3[%c0_4, %c0_5] : memref<16x128xf32, #tpu.memory_space<vmem>>, vector<16x128xf32>
    %cst = arith.constant dense<0.000000e+00> : vector<128x128xf32>
    %3 = tpu.matmul %1, %2, %cst {dimension_numbers = #tpu.dot_dimension_numbers<[1], [0], [0], [1], [0, 0, 1, 1], [], []>} : vector<128x16xf32>, vector<16x128xf32>, vector<128x128xf32> -> vector<128x128xf32>
    %c0_6 = arith.constant 0 : index
    %c0_7 = arith.constant 0 : index
    %4 = vector.load %arg4[%c0_6, %c0_7] : memref<1x128xf32, #tpu.memory_space<vmem>>, vector<1x128xf32>
    %5 = vector.broadcast %4 : vector<1x128xf32> to vector<128x128xf32>
    %6 = arith.addf %3, %5 : vector<128x128xf32>
    %cst_8 = arith.constant dense<0.000000e+00> : vector<16x8xf32>
    %7 = vector.multi_reduction <add>, %0, %cst_8 [2] : vector<16x8x8xf32> to vector<16x8xf32>
    %8 = vector.shape_cast %7 : vector<16x8xf32> to vector<16x8x1xf32>
    %cst_9 = arith.constant 0.000000e+00 : f32
    %9 = vector.broadcast %cst_9 : f32 to vector<16x8x1xf32>
    %10 = arith.cmpf ogt, %8, %9 : vector<16x8x1xf32>
    %cst_10 = arith.constant 1.000000e+00 : f32
    %11 = vector.broadcast %cst_10 : f32 to vector<16x8x1xf32>
    %12 = arith.select %10, %8, %11 : vector<16x8x1xi1>, vector<16x8x1xf32>
    %cst_11 = arith.constant 1.000000e+00 : f32
    %13 = vector.broadcast %cst_11 : f32 to vector<16x8x1xf32>
    %14 = arith.divf %13, %12 : vector<16x8x1xf32>
    %cst_12 = arith.constant 1.000000e+00 : f32
    %15 = vector.broadcast %cst_12 : f32 to vector<16x8x1xf32>
    %16 = arith.addf %8, %15 : vector<16x8x1xf32>
    %17 = math.log %16 : vector<16x8x1xf32>
    %cst_13 = arith.constant 2.500000e+00 : f32
    %18 = vector.broadcast %cst_13 : f32 to vector<16x8x1xf32>
    %19 = arith.divf %17, %18 : vector<16x8x1xf32>
    %20 = vector.shape_cast %8 : vector<16x8x1xf32> to vector<16x8x1xf32>
    %21 = vector.broadcast %20 : vector<16x8x1xf32> to vector<16x8x128xf32>
    %22 = vector.shape_cast %10 : vector<16x8x1xi1> to vector<16x8x1xi1>
    %23 = vector.broadcast %22 : vector<16x8x1xi1> to vector<16x8x128xi1>
    %24 = vector.shape_cast %14 : vector<16x8x1xf32> to vector<16x8x1xf32>
    %25 = vector.broadcast %24 : vector<16x8x1xf32> to vector<16x8x128xf32>
    %26 = vector.shape_cast %19 : vector<16x8x1xf32> to vector<16x8x1xf32>
    %27 = vector.broadcast %26 : vector<16x8x1xf32> to vector<16x8x128xf32>
    %cst_14 = arith.constant -1.000000e+30 : f32
    %28 = vector.broadcast %cst_14 : f32 to vector<16x8x128xf32>
    %29 = vector.extract_strided_slice %0 {offsets = [0, 0, 0], sizes = [16, 8, 1], strides = [1, 1, 1]} : vector<16x8x8xf32> to vector<16x8x1xf32>
    %cst_15 = arith.constant 0.000000e+00 : f32
    %30 = vector.broadcast %cst_15 : f32 to vector<16x8x1xf32>
    %31 = arith.cmpf ogt, %29, %30 : vector<16x8x1xf32>
    %32 = vector.shape_cast %31 : vector<16x8x1xi1> to vector<16x8x1xi1>
    %33 = vector.broadcast %32 : vector<16x8x1xi1> to vector<16x8x128xi1>
    %34 = vector.extract_strided_slice %0 {offsets = [0, 0, 1], sizes = [16, 8, 1], strides = [1, 1, 1]} : vector<16x8x8xf32> to vector<16x8x1xf32>
    %cst_16 = arith.constant 0.000000e+00 : f32
    %35 = vector.broadcast %cst_16 : f32 to vector<16x8x1xf32>
    %36 = arith.cmpf ogt, %34, %35 : vector<16x8x1xf32>
    %37 = vector.shape_cast %36 : vector<16x8x1xi1> to vector<16x8x1xi1>
    %38 = vector.broadcast %37 : vector<16x8x1xi1> to vector<16x8x128xi1>
    %39 = vector.extract_strided_slice %0 {offsets = [0, 0, 2], sizes = [16, 8, 1], strides = [1, 1, 1]} : vector<16x8x8xf32> to vector<16x8x1xf32>
    %cst_17 = arith.constant 0.000000e+00 : f32
    %40 = vector.broadcast %cst_17 : f32 to vector<16x8x1xf32>
    %41 = arith.cmpf ogt, %39, %40 : vector<16x8x1xf32>
    %42 = vector.shape_cast %41 : vector<16x8x1xi1> to vector<16x8x1xi1>
    %43 = vector.broadcast %42 : vector<16x8x1xi1> to vector<16x8x128xi1>
    %44 = vector.extract_strided_slice %0 {offsets = [0, 0, 3], sizes = [16, 8, 1], strides = [1, 1, 1]} : vector<16x8x8xf32> to vector<16x8x1xf32>
    %cst_18 = arith.constant 0.000000e+00 : f32
    %45 = vector.broadcast %cst_18 : f32 to vector<16x8x1xf32>
    %46 = arith.cmpf ogt, %44, %45 : vector<16x8x1xf32>
    %47 = vector.shape_cast %46 : vector<16x8x1xi1> to vector<16x8x1xi1>
    %48 = vector.broadcast %47 : vector<16x8x1xi1> to vector<16x8x128xi1>
    %49 = vector.extract_strided_slice %0 {offsets = [0, 0, 4], sizes = [16, 8, 1], strides = [1, 1, 1]} : vector<16x8x8xf32> to vector<16x8x1xf32>
    %cst_19 = arith.constant 0.000000e+00 : f32
    %50 = vector.broadcast %cst_19 : f32 to vector<16x8x1xf32>
    %51 = arith.cmpf ogt, %49, %50 : vector<16x8x1xf32>
    %52 = vector.shape_cast %51 : vector<16x8x1xi1> to vector<16x8x1xi1>
    %53 = vector.broadcast %52 : vector<16x8x1xi1> to vector<16x8x128xi1>
    %54 = vector.extract_strided_slice %0 {offsets = [0, 0, 5], sizes = [16, 8, 1], strides = [1, 1, 1]} : vector<16x8x8xf32> to vector<16x8x1xf32>
    %cst_20 = arith.constant 0.000000e+00 : f32
    %55 = vector.broadcast %cst_20 : f32 to vector<16x8x1xf32>
    %56 = arith.cmpf ogt, %54, %55 : vector<16x8x1xf32>
    %57 = vector.shape_cast %56 : vector<16x8x1xi1> to vector<16x8x1xi1>
    %58 = vector.broadcast %57 : vector<16x8x1xi1> to vector<16x8x128xi1>
    %59 = vector.extract_strided_slice %0 {offsets = [0, 0, 6], sizes = [16, 8, 1], strides = [1, 1, 1]} : vector<16x8x8xf32> to vector<16x8x1xf32>
    %cst_21 = arith.constant 0.000000e+00 : f32
    %60 = vector.broadcast %cst_21 : f32 to vector<16x8x1xf32>
    %61 = arith.cmpf ogt, %59, %60 : vector<16x8x1xf32>
    %62 = vector.shape_cast %61 : vector<16x8x1xi1> to vector<16x8x1xi1>
    %63 = vector.broadcast %62 : vector<16x8x1xi1> to vector<16x8x128xi1>
    %64 = vector.extract_strided_slice %0 {offsets = [0, 0, 7], sizes = [16, 8, 1], strides = [1, 1, 1]} : vector<16x8x8xf32> to vector<16x8x1xf32>
    %cst_22 = arith.constant 0.000000e+00 : f32
    %65 = vector.broadcast %cst_22 : f32 to vector<16x8x1xf32>
    %66 = arith.cmpf ogt, %64, %65 : vector<16x8x1xf32>
    %67 = vector.shape_cast %66 : vector<16x8x1xi1> to vector<16x8x1xi1>
    %68 = vector.broadcast %67 : vector<16x8x1xi1> to vector<16x8x128xi1>
    %c0_23 = arith.constant 0 : index
    %c0_24 = arith.constant 0 : index
    %c0_25 = arith.constant 0 : index
    %69 = vector.load %arg5[%c0_23, %c0_24, %c0_25] : memref<2x1280x128xf32, #tpu.memory_space<vmem>>, vector<1x128x128xf32>
    %70 = vector.shape_cast %69 : vector<1x128x128xf32> to vector<128x128xf32>
    %c0_26 = arith.constant 0 : index
    %c128 = arith.constant 128 : index
    %c0_27 = arith.constant 0 : index
    %71 = vector.load %arg5[%c0_26, %c128, %c0_27] : memref<2x1280x128xf32, #tpu.memory_space<vmem>>, vector<1x128x128xf32>
    %72 = vector.shape_cast %71 : vector<1x128x128xf32> to vector<128x128xf32>
    %c0_28 = arith.constant 0 : index
    %c256 = arith.constant 256 : index
    %c0_29 = arith.constant 0 : index
    %73 = vector.load %arg5[%c0_28, %c256, %c0_29] : memref<2x1280x128xf32, #tpu.memory_space<vmem>>, vector<1x896x128xf32>
    %74 = vector.shape_cast %73 : vector<1x896x128xf32> to vector<896x128xf32>
    %c0_30 = arith.constant 0 : index
    %c1152 = arith.constant 1152 : index
    %c0_31 = arith.constant 0 : index
    %75 = vector.load %arg5[%c0_30, %c1152, %c0_31] : memref<2x1280x128xf32, #tpu.memory_space<vmem>>, vector<1x128x128xf32>
    %76 = vector.shape_cast %75 : vector<1x128x128xf32> to vector<128x128xf32>
    %c0_32 = arith.constant 0 : index
    %c0_33 = arith.constant 0 : index
    %c0_34 = arith.constant 0 : index
    %77 = vector.load %arg6[%c0_32, %c0_33, %c0_34] : memref<2x8x128xf32, #tpu.memory_space<vmem>>, vector<1x1x128xf32>
    %78 = vector.shape_cast %77 : vector<1x1x128xf32> to vector<1x128xf32>
    %c0_35 = arith.constant 0 : index
    %c1 = arith.constant 1 : index
    %c0_36 = arith.constant 0 : index
    %79 = vector.load %arg6[%c0_35, %c1, %c0_36] : memref<2x8x128xf32, #tpu.memory_space<vmem>>, vector<1x1x128xf32>
    %80 = vector.shape_cast %79 : vector<1x1x128xf32> to vector<1x128xf32>
    %c0_37 = arith.constant 0 : index
    %c2 = arith.constant 2 : index
    %c0_38 = arith.constant 0 : index
    %81 = vector.load %arg6[%c0_37, %c2, %c0_38] : memref<2x8x128xf32, #tpu.memory_space<vmem>>, vector<1x1x128xf32>
    %82 = vector.shape_cast %81 : vector<1x1x128xf32> to vector<1x128xf32>
    %c0_39 = arith.constant 0 : index
    %c3 = arith.constant 3 : index
    %c0_40 = arith.constant 0 : index
    %83 = vector.load %arg6[%c0_39, %c3, %c0_40] : memref<2x8x128xf32, #tpu.memory_space<vmem>>, vector<1x1x128xf32>
    %84 = vector.shape_cast %83 : vector<1x1x128xf32> to vector<1x128xf32>
    %c0_41 = arith.constant 0 : index
    %c4 = arith.constant 4 : index
    %c0_42 = arith.constant 0 : index
    %85 = vector.load %arg6[%c0_41, %c4, %c0_42] : memref<2x8x128xf32, #tpu.memory_space<vmem>>, vector<1x1x128xf32>
    %86 = vector.shape_cast %85 : vector<1x1x128xf32> to vector<1x128xf32>
    %cst_43 = arith.constant dense<0.000000e+00> : vector<128x128xf32>
    %87 = tpu.matmul %6, %70, %cst_43 {dimension_numbers = #tpu.dot_dimension_numbers<[1], [0], [0], [1], [0, 0, 1, 1], [], []>} : vector<128x128xf32>, vector<128x128xf32>, vector<128x128xf32> -> vector<128x128xf32>
    %cst_44 = arith.constant dense<0.000000e+00> : vector<128x128xf32>
    %88 = tpu.matmul %6, %72, %cst_44 {dimension_numbers = #tpu.dot_dimension_numbers<[1], [0], [0], [1], [0, 0, 1, 1], [], []>} : vector<128x128xf32>, vector<128x128xf32>, vector<128x128xf32> -> vector<128x128xf32>
    %89 = vector.broadcast %78 : vector<1x128xf32> to vector<128x128xf32>
    %90 = arith.addf %88, %89 : vector<128x128xf32>
    %91 = vector.shape_cast %87 : vector<128x128xf32> to vector<16x8x128xf32>
    %92 = vector.shape_cast %90 : vector<128x128xf32> to vector<16x8x128xf32>
    "tpu.trace_start"() <{level = 10 : i32, message = "bij,bjd->bid"}> : () -> ()
    %cst_45 = arith.constant dense<0.000000e+00> : vector<16x8x128xf32>
    %93 = tpu.matmul %0, %91, %cst_45 {dimension_numbers = #tpu.dot_dimension_numbers<[2], [1], [1], [2], [0, 0, 0, 1, 1, 2], [0], [0]>} : vector<16x8x8xf32>, vector<16x8x128xf32>, vector<16x8x128xf32> -> vector<16x8x128xf32>
    "tpu.trace_stop"() : () -> ()
    %94 = arith.mulf %21, %92 : vector<16x8x128xf32>
    %95 = arith.addf %93, %94 : vector<16x8x128xf32>
    %cst_46 = arith.constant 0.000000e+00 : f32
    %96 = vector.broadcast %cst_46 : f32 to vector<16x8x128xf32>
    %97 = arith.select %23, %95, %96 : vector<16x8x128xi1>, vector<16x8x128xf32>
    %98 = arith.mulf %97, %25 : vector<16x8x128xf32>
    %99 = vector.extract_strided_slice %91 {offsets = [0, 0, 0], sizes = [16, 1, 128], strides = [1, 1, 1]} : vector<16x8x128xf32> to vector<16x1x128xf32>
    %100 = vector.broadcast %99 : vector<16x1x128xf32> to vector<16x8x128xf32>
    %101 = arith.maximumf %28, %100 : vector<16x8x128xf32>
    %102 = arith.select %33, %101, %28 : vector<16x8x128xi1>, vector<16x8x128xf32>
    %103 = vector.extract_strided_slice %91 {offsets = [0, 1, 0], sizes = [16, 1, 128], strides = [1, 1, 1]} : vector<16x8x128xf32> to vector<16x1x128xf32>
    %104 = vector.broadcast %103 : vector<16x1x128xf32> to vector<16x8x128xf32>
    %105 = arith.maximumf %102, %104 : vector<16x8x128xf32>
    %106 = arith.select %38, %105, %102 : vector<16x8x128xi1>, vector<16x8x128xf32>
    %107 = vector.extract_strided_slice %91 {offsets = [0, 2, 0], sizes = [16, 1, 128], strides = [1, 1, 1]} : vector<16x8x128xf32> to vector<16x1x128xf32>
    %108 = vector.broadcast %107 : vector<16x1x128xf32> to vector<16x8x128xf32>
    %109 = arith.maximumf %106, %108 : vector<16x8x128xf32>
    %110 = arith.select %43, %109, %106 : vector<16x8x128xi1>, vector<16x8x128xf32>
    %111 = vector.extract_strided_slice %91 {offsets = [0, 3, 0], sizes = [16, 1, 128], strides = [1, 1, 1]} : vector<16x8x128xf32> to vector<16x1x128xf32>
    %112 = vector.broadcast %111 : vector<16x1x128xf32> to vector<16x8x128xf32>
    %113 = arith.maximumf %110, %112 : vector<16x8x128xf32>
    %114 = arith.select %48, %113, %110 : vector<16x8x128xi1>, vector<16x8x128xf32>
    %115 = vector.extract_strided_slice %91 {offsets = [0, 4, 0], sizes = [16, 1, 128], strides = [1, 1, 1]} : vector<16x8x128xf32> to vector<16x1x128xf32>
    %116 = vector.broadcast %115 : vector<16x1x128xf32> to vector<16x8x128xf32>
    %117 = arith.maximumf %114, %116 : vector<16x8x128xf32>
    %118 = arith.select %53, %117, %114 : vector<16x8x128xi1>, vector<16x8x128xf32>
    %119 = vector.extract_strided_slice %91 {offsets = [0, 5, 0], sizes = [16, 1, 128], strides = [1, 1, 1]} : vector<16x8x128xf32> to vector<16x1x128xf32>
    %120 = vector.broadcast %119 : vector<16x1x128xf32> to vector<16x8x128xf32>
    %121 = arith.maximumf %118, %120 : vector<16x8x128xf32>
    %122 = arith.select %58, %121, %118 : vector<16x8x128xi1>, vector<16x8x128xf32>
    %123 = vector.extract_strided_slice %91 {offsets = [0, 6, 0], sizes = [16, 1, 128], strides = [1, 1, 1]} : vector<16x8x128xf32> to vector<16x1x128xf32>
    %124 = vector.broadcast %123 : vector<16x1x128xf32> to vector<16x8x128xf32>
    %125 = arith.maximumf %122, %124 : vector<16x8x128xf32>
    %126 = arith.select %63, %125, %122 : vector<16x8x128xi1>, vector<16x8x128xf32>
    %127 = vector.extract_strided_slice %91 {offsets = [0, 7, 0], sizes = [16, 1, 128], strides = [1, 1, 1]} : vector<16x8x128xf32> to vector<16x1x128xf32>
    %128 = vector.broadcast %127 : vector<16x1x128xf32> to vector<16x8x128xf32>
    %129 = arith.maximumf %126, %128 : vector<16x8x128xf32>
    %130 = arith.select %68, %129, %126 : vector<16x8x128xi1>, vector<16x8x128xf32>
    %131 = arith.addf %130, %92 : vector<16x8x128xf32>
    %cst_47 = arith.constant 0.000000e+00 : f32
    %132 = vector.broadcast %cst_47 : f32 to vector<16x8x128xf32>
    %133 = arith.select %23, %131, %132 : vector<16x8x128xi1>, vector<16x8x128xf32>
    %134 = vector.shape_cast %6 : vector<128x128xf32> to vector<16x8x128xf32>
    %135 = arith.mulf %98, %27 : vector<16x8x128xf32>
    %136 = arith.mulf %133, %27 : vector<16x8x128xf32>
    %137 = arith.mulf %97, %27 : vector<16x8x128xf32>
    %138 = tpu.concatenate %134, %98, %133, %97, %135, %136, %137 in 2 : vector<16x8x128xf32>, vector<16x8x128xf32>, vector<16x8x128xf32>, vector<16x8x128xf32>, vector<16x8x128xf32>, vector<16x8x128xf32>, vector<16x8x128xf32> -> vector<16x8x896xf32>
    %139 = vector.shape_cast %138 : vector<16x8x896xf32> to vector<128x896xf32>
    %cst_48 = arith.constant dense<0.000000e+00> : vector<128x128xf32>
    %140 = tpu.matmul %139, %74, %cst_48 {dimension_numbers = #tpu.dot_dimension_numbers<[1], [0], [0], [1], [0, 0, 1, 1], [], []>} : vector<128x896xf32>, vector<896x128xf32>, vector<128x128xf32> -> vector<128x128xf32>
    %141 = vector.broadcast %80 : vector<1x128xf32> to vector<128x128xf32>
    %142 = arith.addf %140, %141 : vector<128x128xf32>
    %cst_49 = arith.constant 0.353553385 : f32
    %143 = vector.broadcast %cst_49 : f32 to vector<128x128xf32>
    %144 = arith.mulf %142, %143 : vector<128x128xf32>
    %145 = vector.shape_cast %144 : vector<128x128xf32> to vector<16x8x128xf32>
    %cst_50 = arith.constant dense<0.000000e+00> : vector<16x128xf32>
    %146 = vector.multi_reduction <add>, %145, %cst_50 [1] : vector<16x8x128xf32> to vector<16x128xf32>
    %147 = vector.shape_cast %146 : vector<16x128xf32> to vector<16x1x128xf32>
    %cst_51 = arith.constant 8.000000e+00 : f32
    %148 = vector.broadcast %cst_51 : f32 to vector<16x1x128xf32>
    %149 = arith.divf %147, %148 : vector<16x1x128xf32>
    %150 = vector.broadcast %149 : vector<16x1x128xf32> to vector<16x8x128xf32>
    %151 = arith.subf %145, %150 : vector<16x8x128xf32>
    %152 = arith.mulf %151, %151 : vector<16x8x128xf32>
    %cst_52 = arith.constant dense<0.000000e+00> : vector<16x128xf32>
    %153 = vector.multi_reduction <add>, %152, %cst_52 [1] : vector<16x8x128xf32> to vector<16x128xf32>
    %154 = vector.shape_cast %153 : vector<16x128xf32> to vector<16x1x128xf32>
    %cst_53 = arith.constant 8.000000e+00 : f32
    %155 = vector.broadcast %cst_53 : f32 to vector<16x1x128xf32>
    %156 = arith.divf %154, %155 : vector<16x1x128xf32>
    %157 = vector.broadcast %149 : vector<16x1x128xf32> to vector<16x8x128xf32>
    %158 = arith.subf %145, %157 : vector<16x8x128xf32>
    %cst_54 = arith.constant 9.99999974E-6 : f32
    %159 = vector.broadcast %cst_54 : f32 to vector<16x1x128xf32>
    %160 = arith.addf %156, %159 : vector<16x1x128xf32>
    %161 = math.rsqrt %160 : vector<16x1x128xf32>
    %162 = vector.broadcast %161 : vector<16x1x128xf32> to vector<16x8x128xf32>
    %163 = arith.mulf %158, %162 : vector<16x8x128xf32>
    %164 = vector.shape_cast %82 : vector<1x128xf32> to vector<1x1x128xf32>
    %165 = vector.broadcast %164 : vector<1x1x128xf32> to vector<16x8x128xf32>
    %166 = arith.mulf %163, %165 : vector<16x8x128xf32>
    %167 = vector.shape_cast %84 : vector<1x128xf32> to vector<1x1x128xf32>
    %168 = vector.broadcast %167 : vector<1x1x128xf32> to vector<16x8x128xf32>
    %169 = arith.addf %166, %168 : vector<16x8x128xf32>
    %170 = vector.shape_cast %169 : vector<16x8x128xf32> to vector<128x128xf32>
    %cst_55 = arith.constant dense<0.000000e+00> : vector<128x128xf32>
    %171 = tpu.matmul %170, %76, %cst_55 {dimension_numbers = #tpu.dot_dimension_numbers<[1], [0], [0], [1], [0, 0, 1, 1], [], []>} : vector<128x128xf32>, vector<128x128xf32>, vector<128x128xf32> -> vector<128x128xf32>
    %172 = vector.broadcast %86 : vector<1x128xf32> to vector<128x128xf32>
    %173 = arith.addf %171, %172 : vector<128x128xf32>
    %cst_56 = arith.constant 0.00999999977 : f32
    %174 = vector.broadcast %cst_56 : f32 to vector<128x128xf32>
    %175 = arith.mulf %174, %173 : vector<128x128xf32>
    %176 = arith.maximumf %173, %175 : vector<128x128xf32>
    %177 = arith.addf %176, %6 : vector<128x128xf32>
    %c1_57 = arith.constant 1 : index
    %c0_58 = arith.constant 0 : index
    %c0_59 = arith.constant 0 : index
    %178 = vector.load %arg5[%c1_57, %c0_58, %c0_59] : memref<2x1280x128xf32, #tpu.memory_space<vmem>>, vector<1x128x128xf32>
    %179 = vector.shape_cast %178 : vector<1x128x128xf32> to vector<128x128xf32>
    %c1_60 = arith.constant 1 : index
    %c128_61 = arith.constant 128 : index
    %c0_62 = arith.constant 0 : index
    %180 = vector.load %arg5[%c1_60, %c128_61, %c0_62] : memref<2x1280x128xf32, #tpu.memory_space<vmem>>, vector<1x128x128xf32>
    %181 = vector.shape_cast %180 : vector<1x128x128xf32> to vector<128x128xf32>
    %c1_63 = arith.constant 1 : index
    %c256_64 = arith.constant 256 : index
    %c0_65 = arith.constant 0 : index
    %182 = vector.load %arg5[%c1_63, %c256_64, %c0_65] : memref<2x1280x128xf32, #tpu.memory_space<vmem>>, vector<1x896x128xf32>
    %183 = vector.shape_cast %182 : vector<1x896x128xf32> to vector<896x128xf32>
    %c1_66 = arith.constant 1 : index
    %c1152_67 = arith.constant 1152 : index
    %c0_68 = arith.constant 0 : index
    %184 = vector.load %arg5[%c1_66, %c1152_67, %c0_68] : memref<2x1280x128xf32, #tpu.memory_space<vmem>>, vector<1x128x128xf32>
    %185 = vector.shape_cast %184 : vector<1x128x128xf32> to vector<128x128xf32>
    %c1_69 = arith.constant 1 : index
    %c0_70 = arith.constant 0 : index
    %c0_71 = arith.constant 0 : index
    %186 = vector.load %arg6[%c1_69, %c0_70, %c0_71] : memref<2x8x128xf32, #tpu.memory_space<vmem>>, vector<1x1x128xf32>
    %187 = vector.shape_cast %186 : vector<1x1x128xf32> to vector<1x128xf32>
    %c1_72 = arith.constant 1 : index
    %c1_73 = arith.constant 1 : index
    %c0_74 = arith.constant 0 : index
    %188 = vector.load %arg6[%c1_72, %c1_73, %c0_74] : memref<2x8x128xf32, #tpu.memory_space<vmem>>, vector<1x1x128xf32>
    %189 = vector.shape_cast %188 : vector<1x1x128xf32> to vector<1x128xf32>
    %c1_75 = arith.constant 1 : index
    %c2_76 = arith.constant 2 : index
    %c0_77 = arith.constant 0 : index
    %190 = vector.load %arg6[%c1_75, %c2_76, %c0_77] : memref<2x8x128xf32, #tpu.memory_space<vmem>>, vector<1x1x128xf32>
    %191 = vector.shape_cast %190 : vector<1x1x128xf32> to vector<1x128xf32>
    %c1_78 = arith.constant 1 : index
    %c3_79 = arith.constant 3 : index
    %c0_80 = arith.constant 0 : index
    %192 = vector.load %arg6[%c1_78, %c3_79, %c0_80] : memref<2x8x128xf32, #tpu.memory_space<vmem>>, vector<1x1x128xf32>
    %193 = vector.shape_cast %192 : vector<1x1x128xf32> to vector<1x128xf32>
    %c1_81 = arith.constant 1 : index
    %c4_82 = arith.constant 4 : index
    %c0_83 = arith.constant 0 : index
    %194 = vector.load %arg6[%c1_81, %c4_82, %c0_83] : memref<2x8x128xf32, #tpu.memory_space<vmem>>, vector<1x1x128xf32>
    %195 = vector.shape_cast %194 : vector<1x1x128xf32> to vector<1x128xf32>
    %cst_84 = arith.constant dense<0.000000e+00> : vector<128x128xf32>
    %196 = tpu.matmul %177, %179, %cst_84 {dimension_numbers = #tpu.dot_dimension_numbers<[1], [0], [0], [1], [0, 0, 1, 1], [], []>} : vector<128x128xf32>, vector<128x128xf32>, vector<128x128xf32> -> vector<128x128xf32>
    %cst_85 = arith.constant dense<0.000000e+00> : vector<128x128xf32>
    %197 = tpu.matmul %177, %181, %cst_85 {dimension_numbers = #tpu.dot_dimension_numbers<[1], [0], [0], [1], [0, 0, 1, 1], [], []>} : vector<128x128xf32>, vector<128x128xf32>, vector<128x128xf32> -> vector<128x128xf32>
    %198 = vector.broadcast %187 : vector<1x128xf32> to vector<128x128xf32>
    %199 = arith.addf %197, %198 : vector<128x128xf32>
    %200 = vector.shape_cast %196 : vector<128x128xf32> to vector<16x8x128xf32>
    %201 = vector.shape_cast %199 : vector<128x128xf32> to vector<16x8x128xf32>
    "tpu.trace_start"() <{level = 10 : i32, message = "bij,bjd->bid"}> : () -> ()
    %cst_86 = arith.constant dense<0.000000e+00> : vector<16x8x128xf32>
    %202 = tpu.matmul %0, %200, %cst_86 {dimension_numbers = #tpu.dot_dimension_numbers<[2], [1], [1], [2], [0, 0, 0, 1, 1, 2], [0], [0]>} : vector<16x8x8xf32>, vector<16x8x128xf32>, vector<16x8x128xf32> -> vector<16x8x128xf32>
    "tpu.trace_stop"() : () -> ()
    %203 = arith.mulf %21, %201 : vector<16x8x128xf32>
    %204 = arith.addf %202, %203 : vector<16x8x128xf32>
    %cst_87 = arith.constant 0.000000e+00 : f32
    %205 = vector.broadcast %cst_87 : f32 to vector<16x8x128xf32>
    %206 = arith.select %23, %204, %205 : vector<16x8x128xi1>, vector<16x8x128xf32>
    %207 = arith.mulf %206, %25 : vector<16x8x128xf32>
    %208 = vector.extract_strided_slice %200 {offsets = [0, 0, 0], sizes = [16, 1, 128], strides = [1, 1, 1]} : vector<16x8x128xf32> to vector<16x1x128xf32>
    %209 = vector.broadcast %208 : vector<16x1x128xf32> to vector<16x8x128xf32>
    %210 = arith.maximumf %28, %209 : vector<16x8x128xf32>
    %211 = arith.select %33, %210, %28 : vector<16x8x128xi1>, vector<16x8x128xf32>
    %212 = vector.extract_strided_slice %200 {offsets = [0, 1, 0], sizes = [16, 1, 128], strides = [1, 1, 1]} : vector<16x8x128xf32> to vector<16x1x128xf32>
    %213 = vector.broadcast %212 : vector<16x1x128xf32> to vector<16x8x128xf32>
    %214 = arith.maximumf %211, %213 : vector<16x8x128xf32>
    %215 = arith.select %38, %214, %211 : vector<16x8x128xi1>, vector<16x8x128xf32>
    %216 = vector.extract_strided_slice %200 {offsets = [0, 2, 0], sizes = [16, 1, 128], strides = [1, 1, 1]} : vector<16x8x128xf32> to vector<16x1x128xf32>
    %217 = vector.broadcast %216 : vector<16x1x128xf32> to vector<16x8x128xf32>
    %218 = arith.maximumf %215, %217 : vector<16x8x128xf32>
    %219 = arith.select %43, %218, %215 : vector<16x8x128xi1>, vector<16x8x128xf32>
    %220 = vector.extract_strided_slice %200 {offsets = [0, 3, 0], sizes = [16, 1, 128], strides = [1, 1, 1]} : vector<16x8x128xf32> to vector<16x1x128xf32>
    %221 = vector.broadcast %220 : vector<16x1x128xf32> to vector<16x8x128xf32>
    %222 = arith.maximumf %219, %221 : vector<16x8x128xf32>
    %223 = arith.select %48, %222, %219 : vector<16x8x128xi1>, vector<16x8x128xf32>
    %224 = vector.extract_strided_slice %200 {offsets = [0, 4, 0], sizes = [16, 1, 128], strides = [1, 1, 1]} : vector<16x8x128xf32> to vector<16x1x128xf32>
    %225 = vector.broadcast %224 : vector<16x1x128xf32> to vector<16x8x128xf32>
    %226 = arith.maximumf %223, %225 : vector<16x8x128xf32>
    %227 = arith.select %53, %226, %223 : vector<16x8x128xi1>, vector<16x8x128xf32>
    %228 = vector.extract_strided_slice %200 {offsets = [0, 5, 0], sizes = [16, 1, 128], strides = [1, 1, 1]} : vector<16x8x128xf32> to vector<16x1x128xf32>
    %229 = vector.broadcast %228 : vector<16x1x128xf32> to vector<16x8x128xf32>
    %230 = arith.maximumf %227, %229 : vector<16x8x128xf32>
    %231 = arith.select %58, %230, %227 : vector<16x8x128xi1>, vector<16x8x128xf32>
    %232 = vector.extract_strided_slice %200 {offsets = [0, 6, 0], sizes = [16, 1, 128], strides = [1, 1, 1]} : vector<16x8x128xf32> to vector<16x1x128xf32>
    %233 = vector.broadcast %232 : vector<16x1x128xf32> to vector<16x8x128xf32>
    %234 = arith.maximumf %231, %233 : vector<16x8x128xf32>
    %235 = arith.select %63, %234, %231 : vector<16x8x128xi1>, vector<16x8x128xf32>
    %236 = vector.extract_strided_slice %200 {offsets = [0, 7, 0], sizes = [16, 1, 128], strides = [1, 1, 1]} : vector<16x8x128xf32> to vector<16x1x128xf32>
    %237 = vector.broadcast %236 : vector<16x1x128xf32> to vector<16x8x128xf32>
    %238 = arith.maximumf %235, %237 : vector<16x8x128xf32>
    %239 = arith.select %68, %238, %235 : vector<16x8x128xi1>, vector<16x8x128xf32>
    %240 = arith.addf %239, %201 : vector<16x8x128xf32>
    %cst_88 = arith.constant 0.000000e+00 : f32
    %241 = vector.broadcast %cst_88 : f32 to vector<16x8x128xf32>
    %242 = arith.select %23, %240, %241 : vector<16x8x128xi1>, vector<16x8x128xf32>
    %243 = vector.shape_cast %177 : vector<128x128xf32> to vector<16x8x128xf32>
    %244 = arith.mulf %207, %27 : vector<16x8x128xf32>
    %245 = arith.mulf %242, %27 : vector<16x8x128xf32>
    %246 = arith.mulf %206, %27 : vector<16x8x128xf32>
    %247 = tpu.concatenate %243, %207, %242, %206, %244, %245, %246 in 2 : vector<16x8x128xf32>, vector<16x8x128xf32>, vector<16x8x128xf32>, vector<16x8x128xf32>, vector<16x8x128xf32>, vector<16x8x128xf32>, vector<16x8x128xf32> -> vector<16x8x896xf32>
    %248 = vector.shape_cast %247 : vector<16x8x896xf32> to vector<128x896xf32>
    %cst_89 = arith.constant dense<0.000000e+00> : vector<128x128xf32>
    %249 = tpu.matmul %248, %183, %cst_89 {dimension_numbers = #tpu.dot_dimension_numbers<[1], [0], [0], [1], [0, 0, 1, 1], [], []>} : vector<128x896xf32>, vector<896x128xf32>, vector<128x128xf32> -> vector<128x128xf32>
    %250 = vector.broadcast %189 : vector<1x128xf32> to vector<128x128xf32>
    %251 = arith.addf %249, %250 : vector<128x128xf32>
    %cst_90 = arith.constant 0.353553385 : f32
    %252 = vector.broadcast %cst_90 : f32 to vector<128x128xf32>
    %253 = arith.mulf %251, %252 : vector<128x128xf32>
    %254 = vector.shape_cast %253 : vector<128x128xf32> to vector<16x8x128xf32>
    %cst_91 = arith.constant dense<0.000000e+00> : vector<16x128xf32>
    %255 = vector.multi_reduction <add>, %254, %cst_91 [1] : vector<16x8x128xf32> to vector<16x128xf32>
    %256 = vector.shape_cast %255 : vector<16x128xf32> to vector<16x1x128xf32>
    %cst_92 = arith.constant 8.000000e+00 : f32
    %257 = vector.broadcast %cst_92 : f32 to vector<16x1x128xf32>
    %258 = arith.divf %256, %257 : vector<16x1x128xf32>
    %259 = vector.broadcast %258 : vector<16x1x128xf32> to vector<16x8x128xf32>
    %260 = arith.subf %254, %259 : vector<16x8x128xf32>
    %261 = arith.mulf %260, %260 : vector<16x8x128xf32>
    %cst_93 = arith.constant dense<0.000000e+00> : vector<16x128xf32>
    %262 = vector.multi_reduction <add>, %261, %cst_93 [1] : vector<16x8x128xf32> to vector<16x128xf32>
    %263 = vector.shape_cast %262 : vector<16x128xf32> to vector<16x1x128xf32>
    %cst_94 = arith.constant 8.000000e+00 : f32
    %264 = vector.broadcast %cst_94 : f32 to vector<16x1x128xf32>
    %265 = arith.divf %263, %264 : vector<16x1x128xf32>
    %266 = vector.broadcast %258 : vector<16x1x128xf32> to vector<16x8x128xf32>
    %267 = arith.subf %254, %266 : vector<16x8x128xf32>
    %cst_95 = arith.constant 9.99999974E-6 : f32
    %268 = vector.broadcast %cst_95 : f32 to vector<16x1x128xf32>
    %269 = arith.addf %265, %268 : vector<16x1x128xf32>
    %270 = math.rsqrt %269 : vector<16x1x128xf32>
    %271 = vector.broadcast %270 : vector<16x1x128xf32> to vector<16x8x128xf32>
    %272 = arith.mulf %267, %271 : vector<16x8x128xf32>
    %273 = vector.shape_cast %191 : vector<1x128xf32> to vector<1x1x128xf32>
    %274 = vector.broadcast %273 : vector<1x1x128xf32> to vector<16x8x128xf32>
    %275 = arith.mulf %272, %274 : vector<16x8x128xf32>
    %276 = vector.shape_cast %193 : vector<1x128xf32> to vector<1x1x128xf32>
    %277 = vector.broadcast %276 : vector<1x1x128xf32> to vector<16x8x128xf32>
    %278 = arith.addf %275, %277 : vector<16x8x128xf32>
    %279 = vector.shape_cast %278 : vector<16x8x128xf32> to vector<128x128xf32>
    %cst_96 = arith.constant dense<0.000000e+00> : vector<128x128xf32>
    %280 = tpu.matmul %279, %185, %cst_96 {dimension_numbers = #tpu.dot_dimension_numbers<[1], [0], [0], [1], [0, 0, 1, 1], [], []>} : vector<128x128xf32>, vector<128x128xf32>, vector<128x128xf32> -> vector<128x128xf32>
    %281 = vector.broadcast %195 : vector<1x128xf32> to vector<128x128xf32>
    %282 = arith.addf %280, %281 : vector<128x128xf32>
    %cst_97 = arith.constant 0.00999999977 : f32
    %283 = vector.broadcast %cst_97 : f32 to vector<128x128xf32>
    %284 = arith.mulf %283, %282 : vector<128x128xf32>
    %285 = arith.maximumf %282, %284 : vector<128x128xf32>
    %286 = arith.addf %285, %177 : vector<128x128xf32>
    %c0_98 = arith.constant 0 : index
    %c0_99 = arith.constant 0 : index
    %287 = vector.load %arg7[%c0_98, %c0_99] : memref<128x128xf32, #tpu.memory_space<vmem>>, vector<128x128xf32>
    tpu.vector_store %arg7[%c0_98, %c0_99], %286 {strides = array<i32>} : memref<128x128xf32, #tpu.memory_space<vmem>>, vector<128x128xf32>,
    return
  }
  func.func @transform_0(%arg0: i32) -> (i32, i32) {
    %c0_i32 = arith.constant 0 : i32
    %c0_i32_0 = arith.constant 0 : i32
    return %arg0, %c0_i32 : i32, i32
  }
  func.func @transform_1(%arg0: i32) -> (i32, i32, i32) {
    %c0_i32 = arith.constant 0 : i32
    %c0_i32_0 = arith.constant 0 : i32
    %c0_i32_1 = arith.constant 0 : i32
    return %arg0, %c0_i32, %c0_i32_0 : i32, i32, i32
  }
  func.func @transform_2(%arg0: i32) -> (i32, i32) {
    %c0_i32 = arith.constant 0 : i32
    %c0_i32_0 = arith.constant 0 : i32
    %c0_i32_1 = arith.constant 0 : i32
    return %c0_i32, %c0_i32_0 : i32, i32
  }
  func.func @transform_3(%arg0: i32) -> (i32, i32) {
    %c0_i32 = arith.constant 0 : i32
    %c0_i32_0 = arith.constant 0 : i32
    %c0_i32_1 = arith.constant 0 : i32
    return %c0_i32, %c0_i32_0 : i32, i32
  }
  func.func @transform_4(%arg0: i32) -> (i32, i32, i32) {
    %c0_i32 = arith.constant 0 : i32
    %c0_i32_0 = arith.constant 0 : i32
    %c0_i32_1 = arith.constant 0 : i32
    %c0_i32_2 = arith.constant 0 : i32
    return %c0_i32, %c0_i32_0, %c0_i32_1 : i32, i32, i32
  }
  func.func @transform_5(%arg0: i32) -> (i32, i32, i32) {
    %c0_i32 = arith.constant 0 : i32
    %c0_i32_0 = arith.constant 0 : i32
    %c0_i32_1 = arith.constant 0 : i32
    %c0_i32_2 = arith.constant 0 : i32
    return %c0_i32, %c0_i32_0, %c0_i32_1 : i32, i32, i32
  }
  func.func @transform_6(%arg0: i32) -> (i32, i32) {
    %c0_i32 = arith.constant 0 : i32
    %c0_i32_0 = arith.constant 0 : i32
    return %arg0, %c0_i32 : i32, i32
  }
}

</mosaic_0001>

<llo_original>
// kernel: static_pna_forward.1
$region0: #{static_pna_forward.1}
  #allocation0 [shape = 'u32[]', space=smem, size = 0x4, offset = 0x4, fixed_abs, tag = 'smem constant byte address 0x4 - core index']
  #allocation1 [shape = 'u32[144,128]{1,0:T(1,128)}', space=vmem, size = 0x12000, scoped, tag = 'internal scratch']
  %s0 = inlined_call_operand.vmem [shape: f32[256,16], index: 0, kind: input, shape index: {}]
  %s1 = inlined_call_operand.vmem [shape: f32[32,8,8], index: 1, kind: input, shape index: {}]
  %s2 = inlined_call_operand.vmem [shape: f32[16,128], index: 2, kind: input, shape index: {}]
  %s3 = inlined_call_operand.vmem [shape: f32[1,128], index: 3, kind: input, shape index: {}]
  %s4 = inlined_call_operand.vmem [shape: f32[2,1280,128], index: 4, kind: input, shape index: {}]
  %s5 = inlined_call_operand.vmem [shape: f32[2,8,128], index: 5, kind: input, shape index: {}]
  %s6 = inlined_call_operand.hbm [shape: f32[256,128], index: 6, kind: output, shape index: {}]
  %s7 = sld [smem:[#allocation0]]
  $region57: #{static_pna_forward.1} parent=0
    _
  %s9 = ssub.s32 1, %s7
  %s10 = scalar_select 0, %s9, %s7
  $region1: #{static_pna_forward.1} parent=0
    #allocation2 [shape = 'u8[131072]{0}', space=vmem, size = 0x20000, scoped, tag = 'output window, operand 0']
    #allocation3 [shape = 's32[2]{0}', space=sflag, size = 0x8, scoped, tag = 'scoped memory for static_pna_forward.1']
    %11 = vsyncpa [#allocation3], 0
    %s12 = scalar_lea.sflag [#allocation3], 1
    %13 = vsyncpa %s12, 0
    loop: start=0, step=1, limit=4
    $region2: #{static_pna_forward.1} parent=1 // loop_pre_header
      _
    $region3: #{static_pna_forward.1} parent=1 // loop_header
      %s15 = sphi 0, %s19
      %p16 = scmp.ge.s32.totalorder %s15, 4
      %s25 = sphi 0, %s27
      %s28 = sphi 0, %s25
      %s29 = sphi 0, %s28
      %s45 = sphi 0, %s29
      %s51 = sphi 0, %s53
      %s54 = sphi 0, %s51
      %s55 = sphi 0, %s54
      %s71 = sphi 0, %s55
      %s75 = sphi 0, %s75
      %s77 = sphi 0, %s75
      %s78 = sphi 0, %s77
      %s92 = sphi 0, %s78
      %s96 = sphi 0, %s96
      %s98 = sphi 0, %s96
      %s99 = sphi 0, %s98
      %s113 = sphi 0, %s99
      %s117 = sphi 0, %s117
      %s119 = sphi 0, %s117
      %s120 = sphi 0, %s119
      %s134 = sphi 0, %s120
      %s138 = sphi 0, %s138
      %s140 = sphi 0, %s138
      %s141 = sphi 0, %s140
      %s155 = sphi 0, %s141
      %s161 = sphi 0, %s163
      %s164 = sphi 0, %s161
      %s165 = sphi 0, %s164
      %s181 = sphi 0, %s165
    $region4: #{static_pna_forward.1} parent=1 // loop_header_branch
      %18 = sbr.rel (%p16) target = $region8
    $region5: #{static_pna_forward.1} parent=1 // loop_body
      %s20 = ssub.s32 %s15, 1
      %s21 = ssub.s32 %s15, 2
      %s22 = sadd.s32 %s15, 1
      %s23 = ssub.s32 %s15, %s22
      %p24 = scmp.eq.s32.totalorder %s23, 0
      %s26 = sadd.s32 %s25, 1
      %s27 = scalar_select %p24, %s25, %s26
      %p30 = pneg %p24
      %p31 = scmp.eq.s32.totalorder %s15, 1
      %p32 = por %p30, %p31
      %p33 = scmp.ne.s32.totalorder %s25, %s28
      %p34 = scmp.eq.s32.totalorder %s15, 0
      %p35 = por %p33, %p34
      %p36 = scmp.ne.s32.totalorder %s25, %s28
      %p37 = scmp.eq.s32.totalorder %s20, 1
      %p38 = por %p36, %p37
      %p39 = scmp.ne.s32.totalorder %s28, %s29
      %p40 = scmp.eq.s32.totalorder %s20, 0
      %p41 = por %p39, %p40
      %p42 = scmp.ne.s32.totalorder %s28, %s29
      %p43 = scmp.eq.s32.totalorder %s21, 1
      %p44 = por %p42, %p43
      %p46 = scmp.ne.s32.totalorder %s29, %s45
      %p47 = scmp.eq.s32.totalorder %s21, 0
      %p48 = por %p46, %p47
      %s49 = ssub.s32 %s15, %s22
      %p50 = scmp.eq.s32.totalorder %s49, 0
      %s52 = sadd.s32 %s51, 1
      %s53 = scalar_select %p50, %s51, %s52
      %p56 = pneg %p50
      %p57 = scmp.eq.s32.totalorder %s15, 1
      %p58 = por %p56, %p57
      %p59 = scmp.ne.s32.totalorder %s51, %s54
      %p60 = scmp.eq.s32.totalorder %s15, 0
      %p61 = por %p59, %p60
      %p62 = scmp.ne.s32.totalorder %s51, %s54
      %p63 = scmp.eq.s32.totalorder %s20, 1
      %p64 = por %p62, %p63
      %p65 = scmp.ne.s32.totalorder %s54, %s55
      %p66 = scmp.eq.s32.totalorder %s20, 0
      %p67 = por %p65, %p66
      %p68 = scmp.ne.s32.totalorder %s54, %s55
      %p69 = scmp.eq.s32.totalorder %s21, 1
      %p70 = por %p68, %p69
      %p72 = scmp.ne.s32.totalorder %s55, %s71
      %p73 = scmp.eq.s32.totalorder %s21, 0
      %p74 = por %p72, %p73
      %s76 = sadd.s32 %s75, 1
      %p79 = scmp.eq.s32.totalorder %s15, 1
      %p80 = scmp.ne.s32.totalorder %s75, %s77
      %p81 = scmp.eq.s32.totalorder %s15, 0
      %p82 = por %p80, %p81
      %p83 = scmp.ne.s32.totalorder %s75, %s77
      %p84 = scmp.eq.s32.totalorder %s20, 1
      %p85 = por %p83, %p84
      %p86 = scmp.ne.s32.totalorder %s77, %s78
      %p87 = scmp.eq.s32.totalorder %s20, 0
      %p88 = por %p86, %p87
      %p89 = scmp.ne.s32.totalorder %s77, %s78
      %p90 = scmp.eq.s32.totalorder %s21, 1
      %p91 = por %p89, %p90
      %p93 = scmp.ne.s32.totalorder %s78, %s92
      %p94 = scmp.eq.s32.totalorder %s21, 0
      %p95 = por %p93, %p94
      %s97 = sadd.s32 %s96, 1
      %p100 = scmp.eq.s32.totalorder %s15, 1
      %p101 = scmp.ne.s32.totalorder %s96, %s98
      %p102 = scmp.eq.s32.totalorder %s15, 0
      %p103 = por %p101, %p102
      %p104 = scmp.ne.s32.totalorder %s96, %s98
      %p105 = scmp.eq.s32.totalorder %s20, 1
      %p106 = por %p104, %p105
      %p107 = scmp.ne.s32.totalorder %s98, %s99
      %p108 = scmp.eq.s32.totalorder %s20, 0
      %p109 = por %p107, %p108
      %p110 = scmp.ne.s32.totalorder %s98, %s99
      %p111 = scmp.eq.s32.totalorder %s21, 1
      %p112 = por %p110, %p111
      %p114 = scmp.ne.s32.totalorder %s99, %s113
      %p115 = scmp.eq.s32.totalorder %s21, 0
      %p116 = por %p114, %p115
      %s118 = sadd.s32 %s117, 1
      %p121 = scmp.eq.s32.totalorder %s15, 1
      %p122 = scmp.ne.s32.totalorder %s117, %s119
      %p123 = scmp.eq.s32.totalorder %s15, 0
      %p124 = por %p122, %p123
      %p125 = scmp.ne.s32.totalorder %s117, %s119
      %p126 = scmp.eq.s32.totalorder %s20, 1
      %p127 = por %p125, %p126
      %p128 = scmp.ne.s32.totalorder %s119, %s120
      %p129 = scmp.eq.s32.totalorder %s20, 0
      %p130 = por %p128, %p129
      %p131 = scmp.ne.s32.totalorder %s119, %s120
      %p132 = scmp.eq.s32.totalorder %s21, 1
      %p133 = por %p131, %p132
      %p135 = scmp.ne.s32.totalorder %s120, %s134
      %p136 = scmp.eq.s32.totalorder %s21, 0
      %p137 = por %p135, %p136
      %s139 = sadd.s32 %s138, 1
      %p142 = scmp.eq.s32.totalorder %s15, 1
      %p143 = scmp.ne.s32.totalorder %s138, %s140
      %p144 = scmp.eq.s32.totalorder %s15, 0
      %p145 = por %p143, %p144
      %p146 = scmp.ne.s32.totalorder %s138, %s140
      %p147 = scmp.eq.s32.totalorder %s20, 1
      %p148 = por %p146, %p147
      %p149 = scmp.ne.s32.totalorder %s140, %s141
      %p150 = scmp.eq.s32.totalorder %s20, 0
      %p151 = por %p149, %p150
      %p152 = scmp.ne.s32.totalorder %s140, %s141
      %p153 = scmp.eq.s32.totalorder %s21, 1
      %p154 = por %p152, %p153
      %p156 = scmp.ne.s32.totalorder %s141, %s155
      %p157 = scmp.eq.s32.totalorder %s21, 0
      %p158 = por %p156, %p157
      %s159 = ssub.s32 %s15, %s22
      %p160 = scmp.eq.s32.totalorder %s159, 0
      %s162 = sadd.s32 %s161, 1
      %s163 = scalar_select %p160, %s161, %s162
      %p166 = pneg %p160
      %p167 = scmp.eq.s32.totalorder %s15, 1
      %p168 = por %p166, %p167
      %p169 = scmp.ne.s32.totalorder %s161, %s164
      %p170 = scmp.eq.s32.totalorder %s15, 0
      %p171 = por %p169, %p170
      %p172 = scmp.ne.s32.totalorder %s161, %s164
      %p173 = scmp.eq.s32.totalorder %s20, 1
      %p174 = por %p172, %p173
      %p175 = scmp.ne.s32.totalorder %s164, %s165
      %p176 = scmp.eq.s32.totalorder %s20, 0
      %p177 = por %p175, %p176
      %p178 = scmp.ne.s32.totalorder %s164, %s165
      %p179 = scmp.eq.s32.totalorder %s21, 1
      %p180 = por %p178, %p179
      %p182 = scmp.ne.s32.totalorder %s165, %s181
      %p183 = scmp.eq.s32.totalorder %s21, 0
      %p184 = por %p182, %p183
      %p185 = scmp.le.s32.totalorder 1, %s15
      %p186 = scmp.lt.s32.totalorder %s15, 3
      %p187 = pnand %p185, %p186
      %p188 = pneg %p187
      // Predicated region
      $region9: #{static_pna_forward.1} parent=5 // pred_check
        _
      $region10: #{static_pna_forward.1} parent=5 // pred_check_branch
        %190 = sbr.rel (%p187) target = $region12
      $region11: #{static_pna_forward.1} parent=5 // pred_region
        %s191 = ssub.s32 %s15, 1
        // Predicated region
        $region13: #{static_pna_forward.1} parent=11 // pred_check
          %p192 = pneg %p88
        $region14: #{static_pna_forward.1} parent=11 // pred_check_branch
          %194 = sbr.rel (%p192) target = $region16
        $region15: #{static_pna_forward.1} parent=11 // pred_region
          _
        $region16: #{static_pna_forward.1} parent=11 // pred_fallthru
          _
        // Predicated region
        $region17: #{static_pna_forward.1} parent=11 // pred_check
          %p195 = pneg %p109
        $region18: #{static_pna_forward.1} parent=11 // pred_check_branch
          %197 = sbr.rel (%p195) target = $region20
        $region19: #{static_pna_forward.1} parent=11 // pred_region
          _
        $region20: #{static_pna_forward.1} parent=11 // pred_fallthru
          _
        // Predicated region
        $region21: #{static_pna_forward.1} parent=11 // pred_check
          %p198 = pneg %p130
        $region22: #{static_pna_forward.1} parent=11 // pred_check_branch
          %200 = sbr.rel (%p198) target = $region24
        $region23: #{static_pna_forward.1} parent=11 // pred_region
          _
        $region24: #{static_pna_forward.1} parent=11 // pred_fallthru
          _
        // Predicated region
        $region25: #{static_pna_forward.1} parent=11 // pred_check
          %p201 = pneg %p151
        $region26: #{static_pna_forward.1} parent=11 // pred_check_branch
          %203 = sbr.rel (%p201) target = $region28
        $region27: #{static_pna_forward.1} parent=11 // pred_region
          _
        $region28: #{static_pna_forward.1} parent=11 // pred_fallthru
          _
      $region12: #{static_pna_forward.1} parent=5 // pred_fallthru
        _
      %p204 = scmp.lt.s32.totalorder %s15, 2
      // Predicated region
      $region29: #{static_pna_forward.1} parent=5 // pred_check
        %p205 = pneg %p204
      $region30: #{static_pna_forward.1} parent=5 // pred_check_branch
        %207 = sbr.rel (%p205) target = $region32
      $region31: #{static_pna_forward.1} parent=5 // pred_region
        // Predicated region
        $region33: #{static_pna_forward.1} parent=31 // pred_check
          %p208 = pneg %p35
        $region34: #{static_pna_forward.1} parent=31 // pred_check_branch
          %210 = sbr.rel (%p208) target = $region36
        $region35: #{static_pna_forward.1} parent=31 // pred_region
          %s211 = smul.u32 16, %s15
          %p212 = scmp.lt.s32.totalorder %s211, 31
          %s213 = scalar_select %p212, %s211, 31
          %s214 = smul.addr %s213, 8
          %s215 = scalar_lea.vmem %s0, %s214
          %s216 = smul.u32 16, %s15
        $region36: #{static_pna_forward.1} parent=31 // pred_fallthru
          _
        // Predicated region
        $region37: #{static_pna_forward.1} parent=31 // pred_check
          %p217 = pneg %p61
        $region38: #{static_pna_forward.1} parent=31 // pred_check_branch
          %219 = sbr.rel (%p217) target = $region40
        $region39: #{static_pna_forward.1} parent=31 // pred_region
          %s220 = smul.u32 16, %s15
          %p221 = scmp.lt.s32.totalorder %s220, 31
          %s222 = scalar_select %p221, %s220, 31
          %s223 = smul.addr %s222, 8
          %s224 = scalar_lea.vmem %s1, %s223
          %s225 = smul.u32 16, %s15
        $region40: #{static_pna_forward.1} parent=31 // pred_fallthru
          _
      $region32: #{static_pna_forward.1} parent=5 // pred_fallthru
        _
      %p226 = scmp.le.s32.totalorder 1, %s15
      %p227 = scmp.lt.s32.totalorder %s15, 3
      %p228 = pnand %p226, %p227
      %p229 = pneg %p228
      // Predicated region
      $region41: #{static_pna_forward.1} parent=5 // pred_check
        _
      $region42: #{static_pna_forward.1} parent=5 // pred_check_branch
        %231 = sbr.rel (%p228) target = $region44
      $region43: #{static_pna_forward.1} parent=5 // pred_region
        %s232 = ssub.s32 %s15, 1
        %s233 = smul.u32 16, %s20
        %p234 = scmp.lt.s32.totalorder %s233, 31
        %s235 = scalar_select %p234, %s233, 31
        %s236 = smul.addr %s235, 8
        %s237 = scalar_lea.vmem %s0, %s236
        %p238 = pneg %p41
        %p239 = pneg %p38
        %s240 = smul.u32 16, %s20
        %p241 = scmp.lt.s32.totalorder %s240, 31
        %s242 = scalar_select %p241, %s240, 31
        %s243 = smul.addr %s242, 8
        %s244 = scalar_lea.vmem %s1, %s243
        %p245 = pneg %p67
        %p246 = pneg %p64
        %p247 = pneg %p88
        %p248 = pneg %p85
        %p249 = pneg %p109
        %p250 = pneg %p106
        %p251 = pneg %p130
        %p252 = pneg %p127
        %p253 = pneg %p151
        %p254 = pneg %p148
        %p255 = pneg %p177
        %p256 = pneg %p174
        %s257 = sand.u32 %s164, 1
        %s258 = scalar_lea.sflag [#allocation3], %s257
        %s259 = sand.u32 %s164, 1
        %s260 = smul.addr %s259, 128
        %s261 = scalar_lea.vmem [#allocation2], %s260
        %s262 = smul.u32 16, %s20
        %p263 = scmp.lt.s32.totalorder %s262, 31
        %s264 = scalar_select %p263, %s262, 31
        %s265 = smul.addr %s264, 8
        %s266 = scalar_lea.vmem %s0, %s265
        %s267 = smul.u32 16, %s20
        %s268 = smul.u32 16, %s20
        %p269 = scmp.lt.s32.totalorder %s268, 31
        %s270 = scalar_select %p269, %s268, 31
        %s271 = smul.addr %s270, 8
        %s272 = scalar_lea.vmem %s1, %s271
        %s273 = smul.u32 16, %s20
        %s274 = smul.u32 16, %s20
        %v275 = vld [vmem:[%s272] sm:$0xff]
        %v276 = vld [vmem:[%s272 + $0x8] sm:$0xff]
        %v277 = vld [vmem:[%s272 + $0x10] sm:$0xff]
        %v278 = vld [vmem:[%s272 + $0x18] sm:$0xff]
        %v279 = vld [vmem:[%s272 + $0x20] sm:$0xff]
        %v280 = vld [vmem:[%s272 + $0x28] sm:$0xff]
        %v281 = vld [vmem:[%s272 + $0x30] sm:$0xff]
        %v282 = vld [vmem:[%s272 + $0x38] sm:$0xff]
        %v283 = vld [vmem:[%s272 + $0x40] sm:$0xff]
        %v284 = vld [vmem:[%s272 + $0x48] sm:$0xff]
        %v285 = vld [vmem:[%s272 + $0x50] sm:$0xff]
        %v286 = vld [vmem:[%s272 + $0x58] sm:$0xff]
        %v287 = vld [vmem:[%s272 + $0x60] sm:$0xff]
        %v288 = vld [vmem:[%s272 + $0x68] sm:$0xff]
        %v289 = vld [vmem:[%s272 + $0x70] sm:$0xff]
        %v290 = vld [vmem:[%s272 + $0x78] sm:$0xff]
        %v291 = vld [vmem:[%s266] sm:$0xff]
        %v292 = vld [vmem:[%s266 + $0x8] sm:$0xff]
        %v293 = vld [vmem:[%s266 + $0x10] sm:$0xff]
        %v294 = vld [vmem:[%s266 + $0x18] sm:$0xff]
        %v295 = vld [vmem:[%s266 + $0x20] sm:$0xff]
        %v296 = vld [vmem:[%s266 + $0x28] sm:$0xff]
        %v297 = vld [vmem:[%s266 + $0x30] sm:$0xff]
        %v298 = vld [vmem:[%s266 + $0x38] sm:$0xff]
        %v299 = vld [vmem:[%s266 + $0x40] sm:$0xff]
        %v300 = vld [vmem:[%s266 + $0x48] sm:$0xff]
        %v301 = vld [vmem:[%s266 + $0x50] sm:$0xff]
        %v302 = vld [vmem:[%s266 + $0x58] sm:$0xff]
        %v303 = vld [vmem:[%s266 + $0x60] sm:$0xff]
        %v304 = vld [vmem:[%s266 + $0x68] sm:$0xff]
        %v305 = vld [vmem:[%s266 + $0x70] sm:$0xff]
        %v306 = vld [vmem:[%s266 + $0x78] sm:$0xff]
        %v307 = vld [vmem:[%s2] sm:$0xff]
        %v308 = vld [vmem:[%s2 + $0x8] sm:$0xff]
        %v309 = vld [vmem:[%s3] sm:$0x1]
        %v311 = vlaneseq
        %v312 = vshrl.u32 %v311, 7
        %v313 = vsub.s32 0, %v312
        %v314 = vrot.slane %v309, %v313
        %vm316 = vcmask 130048
        %v318 = vsel %vm316, %v291, 0
        %v321 = vsel %vm316, %v292, 0
        %v324 = vsel %vm316, %v293, 0
        %v327 = vsel %vm316, %v294, 0
        %v330 = vsel %vm316, %v295, 0
        %v333 = vsel %vm316, %v296, 0
        %v336 = vsel %vm316, %v297, 0
        %v339 = vsel %vm316, %v298, 0
        %v342 = vsel %vm316, %v299, 0
        %v345 = vsel %vm316, %v300, 0
        %v348 = vsel %vm316, %v301, 0
        %v351 = vsel %vm316, %v302, 0
        %v354 = vsel %vm316, %v303, 0
        %v357 = vsel %vm316, %v304, 0
        %v360 = vsel %vm316, %v305, 0
        %v363 = vsel %vm316, %v306, 0
        %365 = vmatprep.subr.mxu0 0.0
        %366 = vmatpush1.msra.mxu0 0.0
        %367 = vmatprep.subr.mxu0 0.0
        %368 = vmatpush1.msra.mxu0 0.0
        %369 = vmatprep.subr.mxu0 0.0
        %370 = vmatpush1.msra.mxu0 0.0
        %371 = vmatprep.subr.mxu0 0.0
        %372 = vmatpush1.msra.mxu0 0.0
        %373 = vmatprep.subr.mxu0 0.0
        %374 = vmatpush1.msra.mxu0 0.0
        %375 = vmatprep.subr.mxu0 0.0
        %376 = vmatpush1.msra.mxu0 0.0
        %377 = vmatprep.subr.mxu0 0.0
        %378 = vmatpush1.msra.mxu0 0.0
        %379 = vmatprep.subr.mxu0 0.0
        %380 = vmatpush1.msra.mxu0 0.0
        %381 = vmatprep.subr.mxu0 0.0
        %382 = vmatpush1.msra.mxu0 0.0
        %383 = vmatprep.subr.mxu0 0.0
        %384 = vmatpush1.msra.mxu0 0.0
        %385 = vmatprep.subr.mxu0 0.0
        %386 = vmatpush1.msra.mxu0 0.0
        %387 = vmatprep.subr.mxu0 0.0
        %388 = vmatpush1.msra.mxu0 0.0
        %389 = vmatprep.subr.mxu0 0.0
        %390 = vmatpush1.msra.mxu0 0.0
        %391 = vmatprep.subr.mxu0 0.0
        %392 = vmatpush1.msra.mxu0 0.0
        %393 = vmatprep.subr.mxu0 0.0
        %394 = vmatpush1.msra.mxu0 %v308
        %395 = vmatprep.subr.mxu0 0.0
        %396 = vmatpush1.msra.mxu0 %v307
        %397 = vmatprep.subr.mxu0 0.0
        %398 = vmatpush2.msra.mxu0 0.0
        %399 = vmatprep.subr.mxu0 0.0
        %400 = vmatpush2.msra.mxu0 0.0
        %401 = vmatprep.subr.mxu0 0.0
        %402 = vmatpush2.msra.mxu0 0.0
        %403 = vmatprep.subr.mxu0 0.0
        %404 = vmatpush2.msra.mxu0 0.0
        %405 = vmatprep.subr.mxu0 0.0
        %406 = vmatpush2.msra.mxu0 0.0
        %407 = vmatprep.subr.mxu0 0.0
        %408 = vmatpush2.msra.mxu0 0.0
        %409 = vmatprep.subr.mxu0 0.0
        %410 = vmatpush2.msra.mxu0 0.0
        %411 = vmatprep.subr.mxu0 0.0
        %412 = vmatpush2.msra.mxu0 0.0
        %413 = vmatprep.subr.mxu0 0.0
        %414 = vmatpush2.msra.mxu0 0.0
        %415 = vmatprep.subr.mxu0 0.0
        %416 = vmatpush2.msra.mxu0 0.0
        %417 = vmatprep.subr.mxu0 0.0
        %418 = vmatpush2.msra.mxu0 0.0
        %419 = vmatprep.subr.mxu0 0.0
        %420 = vmatpush2.msra.mxu0 0.0
        %421 = vmatprep.subr.mxu0 0.0
        %422 = vmatpush2.msra.mxu0 0.0
        %423 = vmatprep.subr.mxu0 0.0
        %424 = vmatpush2.msra.mxu0 0.0
        %425 = vmatprep.subr.mxu0 0.0
        %426 = vmatpush2.msra.mxu0 0.0
        %427 = vmatprep.subr.mxu0 0.0
        %428 = vmatpush2.msra.mxu0 0.0
        %429 = vmatprep.mubr.f32.mxu0 0.0
        %430 = vmatmul.mubr.f32.gmra.mxu0 %v318
        %v431 = vpop.f32.mrf.mxu0
        %v432 = vadd.f32 %v314, %v431
        %v433 = vpop.f32.mrf.mxu0
        %434 = vmatprep.mubr.f32.mxu0 0.0
        %435 = vmatmul.mubr.f32.gmra.mxu0 %v321
        %v436 = vpop.f32.mrf.mxu0
        %v437 = vadd.f32 %v314, %v436
        %v438 = vpop.f32.mrf.mxu0
        %439 = vmatprep.mubr.f32.mxu0 0.0
        %440 = vmatmul.mubr.f32.gmra.mxu0 %v324
        %v441 = vpop.f32.mrf.mxu0
        %v442 = vadd.f32 %v314, %v441
        %v443 = vpop.f32.mrf.mxu0
        %444 = vmatprep.mubr.f32.mxu0 0.0
        %445 = vmatmul.mubr.f32.gmra.mxu0 %v327
        %v446 = vpop.f32.mrf.mxu0
        %v447 = vadd.f32 %v314, %v446
        %v448 = vpop.f32.mrf.mxu0
        %449 = vmatprep.mubr.f32.mxu0 0.0
        %450 = vmatmul.mubr.f32.gmra.mxu0 %v330
        %v451 = vpop.f32.mrf.mxu0
        %v452 = vadd.f32 %v314, %v451
        %v453 = vpop.f32.mrf.mxu0
        %454 = vmatprep.mubr.f32.mxu0 0.0
        %455 = vmatmul.mubr.f32.gmra.mxu0 %v333
        %v456 = vpop.f32.mrf.mxu0
        %v457 = vadd.f32 %v314, %v456
        %v458 = vpop.f32.mrf.mxu0
        %459 = vmatprep.mubr.f32.mxu0 0.0
        %460 = vmatmul.mubr.f32.gmra.mxu0 %v336
        %v461 = vpop.f32.mrf.mxu0
        %v462 = vadd.f32 %v314, %v461
        %v463 = vpop.f32.mrf.mxu0
        %464 = vmatprep.mubr.f32.mxu0 0.0
        %465 = vmatmul.mubr.f32.gmra.mxu0 %v339
        %v466 = vpop.f32.mrf.mxu0
        %v467 = vadd.f32 %v314, %v466
        %v468 = vpop.f32.mrf.mxu0
        %469 = vmatprep.mubr.f32.mxu0 0.0
        %470 = vmatmul.mubr.f32.gmra.mxu0 %v342
        %v471 = vpop.f32.mrf.mxu0
        %v472 = vadd.f32 %v314, %v471
        %v473 = vpop.f32.mrf.mxu0
        %474 = vmatprep.mubr.f32.mxu0 0.0
        %475 = vmatmul.mubr.f32.gmra.mxu0 %v345
        %v476 = vpop.f32.mrf.mxu0
        %v477 = vadd.f32 %v314, %v476
        %v478 = vpop.f32.mrf.mxu0
        %479 = vmatprep.mubr.f32.mxu0 0.0
        %480 = vmatmul.mubr.f32.gmra.mxu0 %v348
        %v481 = vpop.f32.mrf.mxu0
        %v482 = vadd.f32 %v314, %v481
        %v483 = vpop.f32.mrf.mxu0
        %484 = vmatprep.mubr.f32.mxu0 0.0
        %485 = vmatmul.mubr.f32.gmra.mxu0 %v351
        %v486 = vpop.f32.mrf.mxu0
        %v487 = vadd.f32 %v314, %v486
        %v488 = vpop.f32.mrf.mxu0
        %489 = vmatprep.mubr.f32.mxu0 0.0
        %490 = vmatmul.mubr.f32.gmra.mxu0 %v354
        %v491 = vpop.f32.mrf.mxu0
        %v492 = vadd.f32 %v314, %v491
        %v493 = vpop.f32.mrf.mxu0
        %494 = vmatprep.mubr.f32.mxu0 0.0
        %495 = vmatmul.mubr.f32.gmra.mxu0 %v357
        %v496 = vpop.f32.mrf.mxu0
        %v497 = vadd.f32 %v314, %v496
        %v498 = vpop.f32.mrf.mxu0
        %499 = vmatprep.mubr.f32.mxu0 0.0
        %500 = vmatmul.mubr.f32.gmra.mxu0 %v360
        %v501 = vpop.f32.mrf.mxu0
        %v502 = vadd.f32 %v314, %v501
        %v503 = vpop.f32.mrf.mxu0
        %504 = vmatprep.mubr.f32.mxu0 0.0
        %505 = vmatmul.mubr.f32.gmra.mxu0 %v363
        %v506 = vpop.f32.mrf.mxu0
        %v507 = vadd.f32 %v314, %v506
        %v508 = vpop.f32.mrf.mxu0
        %509 = vdwg.mxu0
        %vm510 = vcmask 64512
        %v511 = vsel %vm510, %v275, 0.0
        %512 = vadd.xlane.f32.xlu0 %v511
        %v513 = vpop.xlane.xlu0 %512
        %v514 = vsel %vm510, %v276, 0.0
        %515 = vadd.xlane.f32.xlu0 %v514
        %v516 = vpop.xlane.xlu0 %515
        %v517 = vsel %vm510, %v277, 0.0
        %518 = vadd.xlane.f32.xlu0 %v517
        %v519 = vpop.xlane.xlu0 %518
        %v520 = vsel %vm510, %v278, 0.0
        %521 = vadd.xlane.f32.xlu0 %v520
        %v522 = vpop.xlane.xlu0 %521
        %v523 = vsel %vm510, %v279, 0.0
        %524 = vadd.xlane.f32.xlu0 %v523
        %v525 = vpop.xlane.xlu0 %524
        %v526 = vsel %vm510, %v280, 0.0
        %527 = vadd.xlane.f32.xlu0 %v526
        %v528 = vpop.xlane.xlu0 %527
        %v529 = vsel %vm510, %v281, 0.0
        %530 = vadd.xlane.f32.xlu0 %v529
        %v531 = vpop.xlane.xlu0 %530
        %v532 = vsel %vm510, %v282, 0.0
        %533 = vadd.xlane.f32.xlu0 %v532
        %v534 = vpop.xlane.xlu0 %533
        %v535 = vsel %vm510, %v283, 0.0
        %536 = vadd.xlane.f32.xlu0 %v535
        %v537 = vpop.xlane.xlu0 %536
        %v538 = vsel %vm510, %v284, 0.0
        %539 = vadd.xlane.f32.xlu0 %v538
        %v540 = vpop.xlane.xlu0 %539
        %v541 = vsel %vm510, %v285, 0.0
        %542 = vadd.xlane.f32.xlu0 %v541
        %v543 = vpop.xlane.xlu0 %542
        %v544 = vsel %vm510, %v286, 0.0
        %545 = vadd.xlane.f32.xlu0 %v544
        %v546 = vpop.xlane.xlu0 %545
        %v547 = vsel %vm510, %v287, 0.0
        %548 = vadd.xlane.f32.xlu0 %v547
        %v549 = vpop.xlane.xlu0 %548
        %v550 = vsel %vm510, %v288, 0.0
        %551 = vadd.xlane.f32.xlu0 %v550
        %v552 = vpop.xlane.xlu0 %551
        %v553 = vsel %vm510, %v289, 0.0
        %554 = vadd.xlane.f32.xlu0 %v553
        %v555 = vpop.xlane.xlu0 %554
        %v556 = vsel %vm510, %v290, 0.0
        %557 = vadd.xlane.f32.xlu0 %v556
        %v558 = vpop.xlane.xlu0 %557
        %vm559 = vcmp.gt.f32.partialorder %v513, 0.0
        %vm560 = vcmp.gt.f32.partialorder %v516, 0.0
        %vm561 = vcmp.gt.f32.partialorder %v519, 0.0
        %vm562 = vcmp.gt.f32.partialorder %v522, 0.0
        %vm563 = vcmp.gt.f32.partialorder %v525, 0.0
        %vm564 = vcmp.gt.f32.partialorder %v528, 0.0
        %vm565 = vcmp.gt.f32.partialorder %v531, 0.0
        %vm566 = vcmp.gt.f32.partialorder %v534, 0.0
        %vm567 = vcmp.gt.f32.partialorder %v537, 0.0
        %vm568 = vcmp.gt.f32.partialorder %v540, 0.0
        %vm569 = vcmp.gt.f32.partialorder %v543, 0.0
        %vm570 = vcmp.gt.f32.partialorder %v546, 0.0
        %vm571 = vcmp.gt.f32.partialorder %v549, 0.0
        %vm572 = vcmp.gt.f32.partialorder %v552, 0.0
        %vm573 = vcmp.gt.f32.partialorder %v555, 0.0
        %vm574 = vcmp.gt.f32.partialorder %v558, 0.0
        %v575 = vsel %vm559, %v513, 1.0
        %v576 = vsel %vm560, %v516, 1.0
        %v577 = vsel %vm561, %v519, 1.0
        %v578 = vsel %vm562, %v522, 1.0
        %v579 = vsel %vm563, %v525, 1.0
        %v580 = vsel %vm564, %v528, 1.0
        %v581 = vsel %vm565, %v531, 1.0
        %v582 = vsel %vm566, %v534, 1.0
        %v583 = vsel %vm567, %v537, 1.0
        %v584 = vsel %vm568, %v540, 1.0
        %v585 = vsel %vm569, %v543, 1.0
        %v586 = vsel %vm570, %v546, 1.0
        %v587 = vsel %vm571, %v549, 1.0
        %v588 = vsel %vm572, %v552, 1.0
        %v589 = vsel %vm573, %v555, 1.0
        %v590 = vsel %vm574, %v558, 1.0
        %v591 = vrcp.pop %v575
        %v592 = vmul.f32 1.0, %v591
        %v593 = vrcp.pop %v576
        %v594 = vmul.f32 1.0, %v593
        %v595 = vrcp.pop %v577
        %v596 = vmul.f32 1.0, %v595
        %v597 = vrcp.pop %v578
        %v598 = vmul.f32 1.0, %v597
        %v599 = vrcp.pop %v579
        %v600 = vmul.f32 1.0, %v599
        %v601 = vrcp.pop %v580
        %v602 = vmul.f32 1.0, %v601
        %v603 = vrcp.pop %v581
        %v604 = vmul.f32 1.0, %v603
        %v605 = vrcp.pop %v582
        %v606 = vmul.f32 1.0, %v605
        %v607 = vrcp.pop %v583
        %v608 = vmul.f32 1.0, %v607
        %v609 = vrcp.pop %v584
        %v610 = vmul.f32 1.0, %v609
        %v611 = vrcp.pop %v585
        %v612 = vmul.f32 1.0, %v611
        %v613 = vrcp.pop %v586
        %v614 = vmul.f32 1.0, %v613
        %v615 = vrcp.pop %v587
        %v616 = vmul.f32 1.0, %v615
        %v617 = vrcp.pop %v588
        %v618 = vmul.f32 1.0, %v617
        %v619 = vrcp.pop %v589
        %v620 = vmul.f32 1.0, %v619
        %v621 = vrcp.pop %v590
        %v622 = vmul.f32 1.0, %v621
        %v623 = vadd.f32 %v513, 1.0
        %v624 = vadd.f32 %v516, 1.0
        %v625 = vadd.f32 %v519, 1.0
        %v626 = vadd.f32 %v522, 1.0
        %v627 = vadd.f32 %v525, 1.0
        %v628 = vadd.f32 %v528, 1.0
        %v629 = vadd.f32 %v531, 1.0
        %v630 = vadd.f32 %v534, 1.0
        %v631 = vadd.f32 %v537, 1.0
        %v632 = vadd.f32 %v540, 1.0
        %v633 = vadd.f32 %v543, 1.0
        %v634 = vadd.f32 %v546, 1.0
        %v635 = vadd.f32 %v549, 1.0
        %v636 = vadd.f32 %v552, 1.0
        %v637 = vadd.f32 %v555, 1.0
        %v638 = vadd.f32 %v558, 1.0
        %v639 = vlog2.pop %v623
        %v640 = vmul.f32 %v639, 0.6931472
        %v641 = vlog2.pop %v624
        %v642 = vmul.f32 %v641, 0.6931472
        %v643 = vlog2.pop %v625
        %v644 = vmul.f32 %v643, 0.6931472
        %v645 = vlog2.pop %v626
        %v646 = vmul.f32 %v645, 0.6931472
        %v647 = vlog2.pop %v627
        %v648 = vmul.f32 %v647, 0.6931472
        %v649 = vlog2.pop %v628
        %v650 = vmul.f32 %v649, 0.6931472
        %v651 = vlog2.pop %v629
        %v652 = vmul.f32 %v651, 0.6931472
        %v653 = vlog2.pop %v630
        %v654 = vmul.f32 %v653, 0.6931472
        %v655 = vlog2.pop %v631
        %v656 = vmul.f32 %v655, 0.6931472
        %v657 = vlog2.pop %v632
        %v658 = vmul.f32 %v657, 0.6931472
        %v659 = vlog2.pop %v633
        %v660 = vmul.f32 %v659, 0.6931472
        %v661 = vlog2.pop %v634
        %v662 = vmul.f32 %v661, 0.6931472
        %v663 = vlog2.pop %v635
        %v664 = vmul.f32 %v663, 0.6931472
        %v665 = vlog2.pop %v636
        %v666 = vmul.f32 %v665, 0.6931472
        %v667 = vlog2.pop %v637
        %v668 = vmul.f32 %v667, 0.6931472
        %v669 = vlog2.pop %v638
        %v670 = vmul.f32 %v669, 0.6931472
        %v671 = vrcp.pop 2.5
        %v672 = vmul.f32 %v640, %v671
        %v673 = vmul.f32 %v642, %v671
        %v674 = vmul.f32 %v644, %v671
        %v675 = vmul.f32 %v646, %v671
        %v676 = vmul.f32 %v648, %v671
        %v677 = vmul.f32 %v650, %v671
        %v678 = vmul.f32 %v652, %v671
        %v679 = vmul.f32 %v654, %v671
        %v680 = vmul.f32 %v656, %v671
        %v681 = vmul.f32 %v658, %v671
        %v682 = vmul.f32 %v660, %v671
        %v683 = vmul.f32 %v662, %v671
        %v684 = vmul.f32 %v664, %v671
        %v685 = vmul.f32 %v666, %v671
        %v686 = vmul.f32 %v668, %v671
        %v687 = vmul.f32 %v670, %v671
        %v688 = vsel %vm559, 1, 0
        %v689 = vsel %vm560, 1, 0
        %v690 = vsel %vm561, 1, 0
        %v691 = vsel %vm562, 1, 0
        %v692 = vsel %vm563, 1, 0
        %v693 = vsel %vm564, 1, 0
        %v694 = vsel %vm565, 1, 0
        %v695 = vsel %vm566, 1, 0
        %v696 = vsel %vm567, 1, 0
        %v697 = vsel %vm568, 1, 0
        %v698 = vsel %vm569, 1, 0
        %v699 = vsel %vm570, 1, 0
        %v700 = vsel %vm571, 1, 0
        %v701 = vsel %vm572, 1, 0
        %v702 = vsel %vm573, 1, 0
        %v703 = vsel %vm574, 1, 0
        %vm704 = vcmp.eq.s32.totalorder %v688, 1
        %vm705 = vcmp.eq.s32.totalorder %v689, 1
        %vm706 = vcmp.eq.s32.totalorder %v690, 1
        %vm707 = vcmp.eq.s32.totalorder %v691, 1
        %vm708 = vcmp.eq.s32.totalorder %v692, 1
        %vm709 = vcmp.eq.s32.totalorder %v693, 1
        %vm710 = vcmp.eq.s32.totalorder %v694, 1
        %vm711 = vcmp.eq.s32.totalorder %v695, 1
        %vm712 = vcmp.eq.s32.totalorder %v696, 1
        %vm713 = vcmp.eq.s32.totalorder %v697, 1
        %vm714 = vcmp.eq.s32.totalorder %v698, 1
        %vm715 = vcmp.eq.s32.totalorder %v699, 1
        %vm716 = vcmp.eq.s32.totalorder %v700, 1
        %vm717 = vcmp.eq.s32.totalorder %v701, 1
        %vm718 = vcmp.eq.s32.totalorder %v702, 1
        %vm719 = vcmp.eq.s32.totalorder %v703, 1
        %vm720 = vcmp.gt.f32.partialorder %v275, 0.0
        %vm721 = vcmp.gt.f32.partialorder %v276, 0.0
        %vm722 = vcmp.gt.f32.partialorder %v277, 0.0
        %vm723 = vcmp.gt.f32.partialorder %v278, 0.0
        %vm724 = vcmp.gt.f32.partialorder %v279, 0.0
        %vm725 = vcmp.gt.f32.partialorder %v280, 0.0
        %vm726 = vcmp.gt.f32.partialorder %v281, 0.0
        %vm727 = vcmp.gt.f32.partialorder %v282, 0.0
        %vm728 = vcmp.gt.f32.partialorder %v283, 0.0
        %vm729 = vcmp.gt.f32.partialorder %v284, 0.0
        %vm730 = vcmp.gt.f32.partialorder %v285, 0.0
        %vm731 = vcmp.gt.f32.partialorder %v286, 0.0
        %vm732 = vcmp.gt.f32.partialorder %v287, 0.0
        %vm733 = vcmp.gt.f32.partialorder %v288, 0.0
        %vm734 = vcmp.gt.f32.partialorder %v289, 0.0
        %vm735 = vcmp.gt.f32.partialorder %v290, 0.0
        %v736 = vsel %vm720, 1, 0
        %v737 = vsel %vm721, 1, 0
        %v738 = vsel %vm722, 1, 0
        %v739 = vsel %vm723, 1, 0
        %v740 = vsel %vm724, 1, 0
        %v741 = vsel %vm725, 1, 0
        %v742 = vsel %vm726, 1, 0
        %v743 = vsel %vm727, 1, 0
        %v744 = vsel %vm728, 1, 0
        %v745 = vsel %vm729, 1, 0
        %v746 = vsel %vm730, 1, 0
        %v747 = vsel %vm731, 1, 0
        %v748 = vsel %vm732, 1, 0
        %v749 = vsel %vm733, 1, 0
        %v750 = vsel %vm734, 1, 0
        %v751 = vsel %vm735, 1, 0
        %752 = vset.pattern.permute.xlu0 0
        %753 = vperm.xlu0 %752, %v736
        %v754 = vpop.permute.xlu0 %753
        %755 = vset.pattern.permute.xlu0 0
        %756 = vperm.xlu0 %755, %v737
        %v757 = vpop.permute.xlu0 %756
        %758 = vset.pattern.permute.xlu0 0
        %759 = vperm.xlu0 %758, %v738
        %v760 = vpop.permute.xlu0 %759
        %761 = vset.pattern.permute.xlu0 0
        %762 = vperm.xlu0 %761, %v739
        %v763 = vpop.permute.xlu0 %762
        %764 = vset.pattern.permute.xlu0 0
        %765 = vperm.xlu0 %764, %v740
        %v766 = vpop.permute.xlu0 %765
        %767 = vset.pattern.permute.xlu0 0
        %768 = vperm.xlu0 %767, %v741
        %v769 = vpop.permute.xlu0 %768
        %770 = vset.pattern.permute.xlu0 0
        %771 = vperm.xlu0 %770, %v742
        %v772 = vpop.permute.xlu0 %771
        %773 = vset.pattern.permute.xlu0 0
        %774 = vperm.xlu0 %773, %v743
        %v775 = vpop.permute.xlu0 %774
        %776 = vset.pattern.permute.xlu0 0
        %777 = vperm.xlu0 %776, %v744
        %v778 = vpop.permute.xlu0 %777
        %779 = vset.pattern.permute.xlu0 0
        %780 = vperm.xlu0 %779, %v745
        %v781 = vpop.permute.xlu0 %780
        %782 = vset.pattern.permute.xlu0 0
        %783 = vperm.xlu0 %782, %v746
        %v784 = vpop.permute.xlu0 %783
        %785 = vset.pattern.permute.xlu0 0
        %786 = vperm.xlu0 %785, %v747
        %v787 = vpop.permute.xlu0 %786
        %788 = vset.pattern.permute.xlu0 0
        %789 = vperm.xlu0 %788, %v748
        %v790 = vpop.permute.xlu0 %789
        %791 = vset.pattern.permute.xlu0 0
        %792 = vperm.xlu0 %791, %v749
        %v793 = vpop.permute.xlu0 %792
        %794 = vset.pattern.permute.xlu0 0
        %795 = vperm.xlu0 %794, %v750
        %v796 = vpop.permute.xlu0 %795
        %797 = vset.pattern.permute.xlu0 0
        %798 = vperm.xlu0 %797, %v751
        %v799 = vpop.permute.xlu0 %798
        %vm800 = vcmp.eq.s32.totalorder %v754, 1
        %vm801 = vcmp.eq.s32.totalorder %v757, 1
        %vm802 = vcmp.eq.s32.totalorder %v760, 1
        %vm803 = vcmp.eq.s32.totalorder %v763, 1
        %vm804 = vcmp.eq.s32.totalorder %v766, 1
        %vm805 = vcmp.eq.s32.totalorder %v769, 1
        %vm806 = vcmp.eq.s32.totalorder %v772, 1
        %vm807 = vcmp.eq.s32.totalorder %v775, 1
        %vm808 = vcmp.eq.s32.totalorder %v778, 1
        %vm809 = vcmp.eq.s32.totalorder %v781, 1
        %vm810 = vcmp.eq.s32.totalorder %v784, 1
        %vm811 = vcmp.eq.s32.totalorder %v787, 1
        %vm812 = vcmp.eq.s32.totalorder %v790, 1
        %vm813 = vcmp.eq.s32.totalorder %v793, 1
        %vm814 = vcmp.eq.s32.totalorder %v796, 1
        %vm815 = vcmp.eq.s32.totalorder %v799, 1
        %816 = vset.pattern.permute.xlu0 1
        %817 = vperm.xlu0 %816, %v736
        %v818 = vpop.permute.xlu0 %817
        %819 = vset.pattern.permute.xlu0 1
        %820 = vperm.xlu0 %819, %v737
        %v821 = vpop.permute.xlu0 %820
        %822 = vset.pattern.permute.xlu0 1
        %823 = vperm.xlu0 %822, %v738
        %v824 = vpop.permute.xlu0 %823
        %825 = vset.pattern.permute.xlu0 1
        %826 = vperm.xlu0 %825, %v739
        %v827 = vpop.permute.xlu0 %826
        %828 = vset.pattern.permute.xlu0 1
        %829 = vperm.xlu0 %828, %v740
        %v830 = vpop.permute.xlu0 %829
        %831 = vset.pattern.permute.xlu0 1
        %832 = vperm.xlu0 %831, %v741
        %v833 = vpop.permute.xlu0 %832
        %834 = vset.pattern.permute.xlu0 1
        %835 = vperm.xlu0 %834, %v742
        %v836 = vpop.permute.xlu0 %835
        %837 = vset.pattern.permute.xlu0 1
        %838 = vperm.xlu0 %837, %v743
        %v839 = vpop.permute.xlu0 %838
        %840 = vset.pattern.permute.xlu0 1
        %841 = vperm.xlu0 %840, %v744
        %v842 = vpop.permute.xlu0 %841
        %843 = vset.pattern.permute.xlu0 1
        %844 = vperm.xlu0 %843, %v745
        %v845 = vpop.permute.xlu0 %844
        %846 = vset.pattern.permute.xlu0 1
        %847 = vperm.xlu0 %846, %v746
        %v848 = vpop.permute.xlu0 %847
        %849 = vset.pattern.permute.xlu0 1
        %850 = vperm.xlu0 %849, %v747
        %v851 = vpop.permute.xlu0 %850
        %852 = vset.pattern.permute.xlu0 1
        %853 = vperm.xlu0 %852, %v748
        %v854 = vpop.permute.xlu0 %853
        %855 = vset.pattern.permute.xlu0 1
        %856 = vperm.xlu0 %855, %v749
        %v857 = vpop.permute.xlu0 %856
        %858 = vset.pattern.permute.xlu0 1
        %859 = vperm.xlu0 %858, %v750
        %v860 = vpop.permute.xlu0 %859
        %861 = vset.pattern.permute.xlu0 1
        %862 = vperm.xlu0 %861, %v751
        %v863 = vpop.permute.xlu0 %862
        %vm864 = vcmp.eq.s32.totalorder %v818, 1
        %vm865 = vcmp.eq.s32.totalorder %v821, 1
        %vm866 = vcmp.eq.s32.totalorder %v824, 1
        %vm867 = vcmp.eq.s32.totalorder %v827, 1
        %vm868 = vcmp.eq.s32.totalorder %v830, 1
        %vm869 = vcmp.eq.s32.totalorder %v833, 1
        %vm870 = vcmp.eq.s32.totalorder %v836, 1
        %vm871 = vcmp.eq.s32.totalorder %v839, 1
        %vm872 = vcmp.eq.s32.totalorder %v842, 1
        %vm873 = vcmp.eq.s32.totalorder %v845, 1
        %vm874 = vcmp.eq.s32.totalorder %v848, 1
        %vm875 = vcmp.eq.s32.totalorder %v851, 1
        %vm876 = vcmp.eq.s32.totalorder %v854, 1
        %vm877 = vcmp.eq.s32.totalorder %v857, 1
        %vm878 = vcmp.eq.s32.totalorder %v860, 1
        %vm879 = vcmp.eq.s32.totalorder %v863, 1
        %880 = vset.pattern.permute.xlu0 2
        %881 = vperm.xlu0 %880, %v736
        %v882 = vpop.permute.xlu0 %881
        %883 = vset.pattern.permute.xlu0 2
        %884 = vperm.xlu0 %883, %v737
        %v885 = vpop.permute.xlu0 %884
        %886 = vset.pattern.permute.xlu0 2
        %887 = vperm.xlu0 %886, %v738
        %v888 = vpop.permute.xlu0 %887
        %889 = vset.pattern.permute.xlu0 2
        %890 = vperm.xlu0 %889, %v739
        %v891 = vpop.permute.xlu0 %890
        %892 = vset.pattern.permute.xlu0 2
        %893 = vperm.xlu0 %892, %v740
        %v894 = vpop.permute.xlu0 %893
        %895 = vset.pattern.permute.xlu0 2
        %896 = vperm.xlu0 %895, %v741
        %v897 = vpop.permute.xlu0 %896
        %898 = vset.pattern.permute.xlu0 2
        %899 = vperm.xlu0 %898, %v742
        %v900 = vpop.permute.xlu0 %899
        %901 = vset.pattern.permute.xlu0 2
        %902 = vperm.xlu0 %901, %v743
        %v903 = vpop.permute.xlu0 %902
        %904 = vset.pattern.permute.xlu0 2
        %905 = vperm.xlu0 %904, %v744
        %v906 = vpop.permute.xlu0 %905
        %907 = vset.pattern.permute.xlu0 2
        %908 = vperm.xlu0 %907, %v745
        %v909 = vpop.permute.xlu0 %908
        %910 = vset.pattern.permute.xlu0 2
        %911 = vperm.xlu0 %910, %v746
        %v912 = vpop.permute.xlu0 %911
        %913 = vset.pattern.permute.xlu0 2
        %914 = vperm.xlu0 %913, %v747
        %v915 = vpop.permute.xlu0 %914
        %916 = vset.pattern.permute.xlu0 2
        %917 = vperm.xlu0 %916, %v748
        %v918 = vpop.permute.xlu0 %917
        %919 = vset.pattern.permute.xlu0 2
        %920 = vperm.xlu0 %919, %v749
        %v921 = vpop.permute.xlu0 %920
        %922 = vset.pattern.permute.xlu0 2
        %923 = vperm.xlu0 %922, %v750
        %v924 = vpop.permute.xlu0 %923
        %925 = vset.pattern.permute.xlu0 2
        %926 = vperm.xlu0 %925, %v751
        %v927 = vpop.permute.xlu0 %926
        %vm928 = vcmp.eq.s32.totalorder %v882, 1
        %vm929 = vcmp.eq.s32.totalorder %v885, 1
        %vm930 = vcmp.eq.s32.totalorder %v888, 1
        %vm931 = vcmp.eq.s32.totalorder %v891, 1
        %vm932 = vcmp.eq.s32.totalorder %v894, 1
        %vm933 = vcmp.eq.s32.totalorder %v897, 1
        %vm934 = vcmp.eq.s32.totalorder %v900, 1
        %vm935 = vcmp.eq.s32.totalorder %v903, 1
        %vm936 = vcmp.eq.s32.totalorder %v906, 1
        %vm937 = vcmp.eq.s32.totalorder %v909, 1
        %vm938 = vcmp.eq.s32.totalorder %v912, 1
        %vm939 = vcmp.eq.s32.totalorder %v915, 1
        %vm940 = vcmp.eq.s32.totalorder %v918, 1
        %vm941 = vcmp.eq.s32.totalorder %v921, 1
        %vm942 = vcmp.eq.s32.totalorder %v924, 1
        %vm943 = vcmp.eq.s32.totalorder %v927, 1
        %944 = vset.pattern.permute.xlu0 3
        %945 = vperm.xlu0 %944, %v736
        %v946 = vpop.permute.xlu0 %945
        %947 = vset.pattern.permute.xlu0 3
        %948 = vperm.xlu0 %947, %v737
        %v949 = vpop.permute.xlu0 %948
        %950 = vset.pattern.permute.xlu0 3
        %951 = vperm.xlu0 %950, %v738
        %v952 = vpop.permute.xlu0 %951
        %953 = vset.pattern.permute.xlu0 3
        %954 = vperm.xlu0 %953, %v739
        %v955 = vpop.permute.xlu0 %954
        %956 = vset.pattern.permute.xlu0 3
        %957 = vperm.xlu0 %956, %v740
        %v958 = vpop.permute.xlu0 %957
        %959 = vset.pattern.permute.xlu0 3
        %960 = vperm.xlu0 %959, %v741
        %v961 = vpop.permute.xlu0 %960
        %962 = vset.pattern.permute.xlu0 3
        %963 = vperm.xlu0 %962, %v742
        %v964 = vpop.permute.xlu0 %963
        %965 = vset.pattern.permute.xlu0 3
        %966 = vperm.xlu0 %965, %v743
        %v967 = vpop.permute.xlu0 %966
        %968 = vset.pattern.permute.xlu0 3
        %969 = vperm.xlu0 %968, %v744
        %v970 = vpop.permute.xlu0 %969
        %971 = vset.pattern.permute.xlu0 3
        %972 = vperm.xlu0 %971, %v745
        %v973 = vpop.permute.xlu0 %972
        %974 = vset.pattern.permute.xlu0 3
        %975 = vperm.xlu0 %974, %v746
        %v976 = vpop.permute.xlu0 %975
        %977 = vset.pattern.permute.xlu0 3
        %978 = vperm.xlu0 %977, %v747
        %v979 = vpop.permute.xlu0 %978
        %980 = vset.pattern.permute.xlu0 3
        %981 = vperm.xlu0 %980, %v748
        %v982 = vpop.permute.xlu0 %981
        %983 = vset.pattern.permute.xlu0 3
        %984 = vperm.xlu0 %983, %v749
        %v985 = vpop.permute.xlu0 %984
        %986 = vset.pattern.permute.xlu0 3
        %987 = vperm.xlu0 %986, %v750
        %v988 = vpop.permute.xlu0 %987
        %989 = vset.pattern.permute.xlu0 3
        %990 = vperm.xlu0 %989, %v751
        %v991 = vpop.permute.xlu0 %990
        %vm992 = vcmp.eq.s32.totalorder %v946, 1
        %vm993 = vcmp.eq.s32.totalorder %v949, 1
        %vm994 = vcmp.eq.s32.totalorder %v952, 1
        %vm995 = vcmp.eq.s32.totalorder %v955, 1
        %vm996 = vcmp.eq.s32.totalorder %v958, 1
        %vm997 = vcmp.eq.s32.totalorder %v961, 1
        %vm998 = vcmp.eq.s32.totalorder %v964, 1
        %vm999 = vcmp.eq.s32.totalorder %v967, 1
        %vm1000 = vcmp.eq.s32.totalorder %v970, 1
        %vm1001 = vcmp.eq.s32.totalorder %v973, 1
        %vm1002 = vcmp.eq.s32.totalorder %v976, 1
        %vm1003 = vcmp.eq.s32.totalorder %v979, 1
        %vm1004 = vcmp.eq.s32.totalorder %v982, 1
        %vm1005 = vcmp.eq.s32.totalorder %v985, 1
        %vm1006 = vcmp.eq.s32.totalorder %v988, 1
        %vm1007 = vcmp.eq.s32.totalorder %v991, 1
        %1008 = vset.pattern.permute.xlu0 4
        %1009 = vperm.xlu0 %1008, %v736
        %v1010 = vpop.permute.xlu0 %1009
        %1011 = vset.pattern.permute.xlu0 4
        %1012 = vperm.xlu0 %1011, %v737
        %v1013 = vpop.permute.xlu0 %1012
        %1014 = vset.pattern.permute.xlu0 4
        %1015 = vperm.xlu0 %1014, %v738
        %v1016 = vpop.permute.xlu0 %1015
        %1017 = vset.pattern.permute.xlu0 4
        %1018 = vperm.xlu0 %1017, %v739
        %v1019 = vpop.permute.xlu0 %1018
        %1020 = vset.pattern.permute.xlu0 4
        %1021 = vperm.xlu0 %1020, %v740
        %v1022 = vpop.permute.xlu0 %1021
        %1023 = vset.pattern.permute.xlu0 4
        %1024 = vperm.xlu0 %1023, %v741
        %v1025 = vpop.permute.xlu0 %1024
        %1026 = vset.pattern.permute.xlu0 4
        %1027 = vperm.xlu0 %1026, %v742
        %v1028 = vpop.permute.xlu0 %1027
        %1029 = vset.pattern.permute.xlu0 4
        %1030 = vperm.xlu0 %1029, %v743
        %v1031 = vpop.permute.xlu0 %1030
        %1032 = vset.pattern.permute.xlu0 4
        %1033 = vperm.xlu0 %1032, %v744
        %v1034 = vpop.permute.xlu0 %1033
        %1035 = vset.pattern.permute.xlu0 4
        %1036 = vperm.xlu0 %1035, %v745
        %v1037 = vpop.permute.xlu0 %1036
        %1038 = vset.pattern.permute.xlu0 4
        %1039 = vperm.xlu0 %1038, %v746
        %v1040 = vpop.permute.xlu0 %1039
        %1041 = vset.pattern.permute.xlu0 4
        %1042 = vperm.xlu0 %1041, %v747
        %v1043 = vpop.permute.xlu0 %1042
        %1044 = vset.pattern.permute.xlu0 4
        %1045 = vperm.xlu0 %1044, %v748
        %v1046 = vpop.permute.xlu0 %1045
        %1047 = vset.pattern.permute.xlu0 4
        %1048 = vperm.xlu0 %1047, %v749
        %v1049 = vpop.permute.xlu0 %1048
        %1050 = vset.pattern.permute.xlu0 4
        %1051 = vperm.xlu0 %1050, %v750
        %v1052 = vpop.permute.xlu0 %1051
        %1053 = vset.pattern.permute.xlu0 4
        %1054 = vperm.xlu0 %1053, %v751
        %v1055 = vpop.permute.xlu0 %1054
        %vm1056 = vcmp.eq.s32.totalorder %v1010, 1
        %vm1057 = vcmp.eq.s32.totalorder %v1013, 1
        %vm1058 = vcmp.eq.s32.totalorder %v1016, 1
        %vm1059 = vcmp.eq.s32.totalorder %v1019, 1
        %vm1060 = vcmp.eq.s32.totalorder %v1022, 1
        %vm1061 = vcmp.eq.s32.totalorder %v1025, 1
        %vm1062 = vcmp.eq.s32.totalorder %v1028, 1
        %vm1063 = vcmp.eq.s32.totalorder %v1031, 1
        %vm1064 = vcmp.eq.s32.totalorder %v1034, 1
        %vm1065 = vcmp.eq.s32.totalorder %v1037, 1
        %vm1066 = vcmp.eq.s32.totalorder %v1040, 1
        %vm1067 = vcmp.eq.s32.totalorder %v1043, 1
        %vm1068 = vcmp.eq.s32.totalorder %v1046, 1
        %vm1069 = vcmp.eq.s32.totalorder %v1049, 1
        %vm1070 = vcmp.eq.s32.totalorder %v1052, 1
        %vm1071 = vcmp.eq.s32.totalorder %v1055, 1
        %1072 = vset.pattern.permute.xlu0 5
        %1073 = vperm.xlu0 %1072, %v736
        %v1074 = vpop.permute.xlu0 %1073
        %1075 = vset.pattern.permute.xlu0 5
        %1076 = vperm.xlu0 %1075, %v737
        %v1077 = vpop.permute.xlu0 %1076
        %1078 = vset.pattern.permute.xlu0 5
        %1079 = vperm.xlu0 %1078, %v738
        %v1080 = vpop.permute.xlu0 %1079
        %1081 = vset.pattern.permute.xlu0 5
        %1082 = vperm.xlu0 %1081, %v739
        %v1083 = vpop.permute.xlu0 %1082
        %1084 = vset.pattern.permute.xlu0 5
        %1085 = vperm.xlu0 %1084, %v740
        %v1086 = vpop.permute.xlu0 %1085
        %1087 = vset.pattern.permute.xlu0 5
        %1088 = vperm.xlu0 %1087, %v741
        %v1089 = vpop.permute.xlu0 %1088
        %1090 = vset.pattern.permute.xlu0 5
        %1091 = vperm.xlu0 %1090, %v742
        %v1092 = vpop.permute.xlu0 %1091
        %1093 = vset.pattern.permute.xlu0 5
        %1094 = vperm.xlu0 %1093, %v743
        %v1095 = vpop.permute.xlu0 %1094
        %1096 = vset.pattern.permute.xlu0 5
        %1097 = vperm.xlu0 %1096, %v744
        %v1098 = vpop.permute.xlu0 %1097
        %1099 = vset.pattern.permute.xlu0 5
        %1100 = vperm.xlu0 %1099, %v745
        %v1101 = vpop.permute.xlu0 %1100
        %1102 = vset.pattern.permute.xlu0 5
        %1103 = vperm.xlu0 %1102, %v746
        %v1104 = vpop.permute.xlu0 %1103
        %1105 = vset.pattern.permute.xlu0 5
        %1106 = vperm.xlu0 %1105, %v747
        %v1107 = vpop.permute.xlu0 %1106
        %1108 = vset.pattern.permute.xlu0 5
        %1109 = vperm.xlu0 %1108, %v748
        %v1110 = vpop.permute.xlu0 %1109
        %1111 = vset.pattern.permute.xlu0 5
        %1112 = vperm.xlu0 %1111, %v749
        %v1113 = vpop.permute.xlu0 %1112
        %1114 = vset.pattern.permute.xlu0 5
        %1115 = vperm.xlu0 %1114, %v750
        %v1116 = vpop.permute.xlu0 %1115
        %1117 = vset.pattern.permute.xlu0 5
        %1118 = vperm.xlu0 %1117, %v751
        %v1119 = vpop.permute.xlu0 %1118
        %vm1120 = vcmp.eq.s32.totalorder %v1074, 1
        %vm1121 = vcmp.eq.s32.totalorder %v1077, 1
        %vm1122 = vcmp.eq.s32.totalorder %v1080, 1
        %vm1123 = vcmp.eq.s32.totalorder %v1083, 1
        %vm1124 = vcmp.eq.s32.totalorder %v1086, 1
        %vm1125 = vcmp.eq.s32.totalorder %v1089, 1
        %vm1126 = vcmp.eq.s32.totalorder %v1092, 1
        %vm1127 = vcmp.eq.s32.totalorder %v1095, 1
        %vm1128 = vcmp.eq.s32.totalorder %v1098, 1
        %vm1129 = vcmp.eq.s32.totalorder %v1101, 1
        %vm1130 = vcmp.eq.s32.totalorder %v1104, 1
        %vm1131 = vcmp.eq.s32.totalorder %v1107, 1
        %vm1132 = vcmp.eq.s32.totalorder %v1110, 1
        %vm1133 = vcmp.eq.s32.totalorder %v1113, 1
        %vm1134 = vcmp.eq.s32.totalorder %v1116, 1
        %vm1135 = vcmp.eq.s32.totalorder %v1119, 1
        %1136 = vset.pattern.permute.xlu0 6
        %1137 = vperm.xlu0 %1136, %v736
        %v1138 = vpop.permute.xlu0 %1137
        %1139 = vset.pattern.permute.xlu0 6
        %1140 = vperm.xlu0 %1139, %v737
        %v1141 = vpop.permute.xlu0 %1140
        %1142 = vset.pattern.permute.xlu0 6
        %1143 = vperm.xlu0 %1142, %v738
        %v1144 = vpop.permute.xlu0 %1143
        %1145 = vset.pattern.permute.xlu0 6
        %1146 = vperm.xlu0 %1145, %v739
        %v1147 = vpop.permute.xlu0 %1146
        %1148 = vset.pattern.permute.xlu0 6
        %1149 = vperm.xlu0 %1148, %v740
        %v1150 = vpop.permute.xlu0 %1149
        %1151 = vset.pattern.permute.xlu0 6
        %1152 = vperm.xlu0 %1151, %v741
        %v1153 = vpop.permute.xlu0 %1152
        %1154 = vset.pattern.permute.xlu0 6
        %1155 = vperm.xlu0 %1154, %v742
        %v1156 = vpop.permute.xlu0 %1155
        %1157 = vset.pattern.permute.xlu0 6
        %1158 = vperm.xlu0 %1157, %v743
        %v1159 = vpop.permute.xlu0 %1158
        %1160 = vset.pattern.permute.xlu0 6
        %1161 = vperm.xlu0 %1160, %v744
        %v1162 = vpop.permute.xlu0 %1161
        %1163 = vset.pattern.permute.xlu0 6
        %1164 = vperm.xlu0 %1163, %v745
        %v1165 = vpop.permute.xlu0 %1164
        %1166 = vset.pattern.permute.xlu0 6
        %1167 = vperm.xlu0 %1166, %v746
        %v1168 = vpop.permute.xlu0 %1167
        %1169 = vset.pattern.permute.xlu0 6
        %1170 = vperm.xlu0 %1169, %v747
        %v1171 = vpop.permute.xlu0 %1170
        %1172 = vset.pattern.permute.xlu0 6
        %1173 = vperm.xlu0 %1172, %v748
        %v1174 = vpop.permute.xlu0 %1173
        %1175 = vset.pattern.permute.xlu0 6
        %1176 = vperm.xlu0 %1175, %v749
        %v1177 = vpop.permute.xlu0 %1176
        %1178 = vset.pattern.permute.xlu0 6
        %1179 = vperm.xlu0 %1178, %v750
        %v1180 = vpop.permute.xlu0 %1179
        %1181 = vset.pattern.permute.xlu0 6
        %1182 = vperm.xlu0 %1181, %v751
        %v1183 = vpop.permute.xlu0 %1182
        %vm1184 = vcmp.eq.s32.totalorder %v1138, 1
        %vm1185 = vcmp.eq.s32.totalorder %v1141, 1
        %vm1186 = vcmp.eq.s32.totalorder %v1144, 1
        %vm1187 = vcmp.eq.s32.totalorder %v1147, 1
        %vm1188 = vcmp.eq.s32.totalorder %v1150, 1
        %vm1189 = vcmp.eq.s32.totalorder %v1153, 1
        %vm1190 = vcmp.eq.s32.totalorder %v1156, 1
        %vm1191 = vcmp.eq.s32.totalorder %v1159, 1
        %vm1192 = vcmp.eq.s32.totalorder %v1162, 1
        %vm1193 = vcmp.eq.s32.totalorder %v1165, 1
        %vm1194 = vcmp.eq.s32.totalorder %v1168, 1
        %vm1195 = vcmp.eq.s32.totalorder %v1171, 1
        %vm1196 = vcmp.eq.s32.totalorder %v1174, 1
        %vm1197 = vcmp.eq.s32.totalorder %v1177, 1
        %vm1198 = vcmp.eq.s32.totalorder %v1180, 1
        %vm1199 = vcmp.eq.s32.totalorder %v1183, 1
        %1200 = vset.pattern.permute.xlu0 7
        %1201 = vperm.xlu0 %1200, %v736
        %v1202 = vpop.permute.xlu0 %1201
        %1203 = vset.pattern.permute.xlu0 7
        %1204 = vperm.xlu0 %1203, %v737
        %v1205 = vpop.permute.xlu0 %1204
        %1206 = vset.pattern.permute.xlu0 7
        %1207 = vperm.xlu0 %1206, %v738
        %v1208 = vpop.permute.xlu0 %1207
        %1209 = vset.pattern.permute.xlu0 7
        %1210 = vperm.xlu0 %1209, %v739
        %v1211 = vpop.permute.xlu0 %1210
        %1212 = vset.pattern.permute.xlu0 7
        %1213 = vperm.xlu0 %1212, %v740
        %v1214 = vpop.permute.xlu0 %1213
        %1215 = vset.pattern.permute.xlu0 7
        %1216 = vperm.xlu0 %1215, %v741
        %v1217 = vpop.permute.xlu0 %1216
        %1218 = vset.pattern.permute.xlu0 7
        %1219 = vperm.xlu0 %1218, %v742
        %v1220 = vpop.permute.xlu0 %1219
        %1221 = vset.pattern.permute.xlu0 7
        %1222 = vperm.xlu0 %1221, %v743
        %v1223 = vpop.permute.xlu0 %1222
        %1224 = vset.pattern.permute.xlu0 7
        %1225 = vperm.xlu0 %1224, %v744
        %v1226 = vpop.permute.xlu0 %1225
        %1227 = vset.pattern.permute.xlu0 7
        %1228 = vperm.xlu0 %1227, %v745
        %v1229 = vpop.permute.xlu0 %1228
        %1230 = vset.pattern.permute.xlu0 7
        %1231 = vperm.xlu0 %1230, %v746
        %v1232 = vpop.permute.xlu0 %1231
        %1233 = vset.pattern.permute.xlu0 7
        %1234 = vperm.xlu0 %1233, %v747
        %v1235 = vpop.permute.xlu0 %1234
        %1236 = vset.pattern.permute.xlu0 7
        %1237 = vperm.xlu0 %1236, %v748
        %v1238 = vpop.permute.xlu0 %1237
        %1239 = vset.pattern.permute.xlu0 7
        %1240 = vperm.xlu0 %1239, %v749
        %v1241 = vpop.permute.xlu0 %1240
        %1242 = vset.pattern.permute.xlu0 7
        %1243 = vperm.xlu0 %1242, %v750
        %v1244 = vpop.permute.xlu0 %1243
        %1245 = vset.pattern.permute.xlu0 7
        %1246 = vperm.xlu0 %1245, %v751
        %v1247 = vpop.permute.xlu0 %1246
        %vm1248 = vcmp.eq.s32.totalorder %v1202, 1
        %vm1249 = vcmp.eq.s32.totalorder %v1205, 1
        %vm1250 = vcmp.eq.s32.totalorder %v1208, 1
        %vm1251 = vcmp.eq.s32.totalorder %v1211, 1
        %vm1252 = vcmp.eq.s32.totalorder %v1214, 1
        %vm1253 = vcmp.eq.s32.totalorder %v1217, 1
        %vm1254 = vcmp.eq.s32.totalorder %v1220, 1
        %vm1255 = vcmp.eq.s32.totalorder %v1223, 1
        %vm1256 = vcmp.eq.s32.totalorder %v1226, 1
        %vm1257 = vcmp.eq.s32.totalorder %v1229, 1
        %vm1258 = vcmp.eq.s32.totalorder %v1232, 1
        %vm1259 = vcmp.eq.s32.totalorder %v1235, 1
        %vm1260 = vcmp.eq.s32.totalorder %v1238, 1
        %vm1261 = vcmp.eq.s32.totalorder %v1241, 1
        %vm1262 = vcmp.eq.s32.totalorder %v1244, 1
        %vm1263 = vcmp.eq.s32.totalorder %v1247, 1
        %v1264 = vld [vmem:[%s4] sm:$0xff]
        %v1265 = vld [vmem:[%s4 + $0x8] sm:$0xff]
        %v1266 = vld [vmem:[%s4 + $0x10] sm:$0xff]
        %v1267 = vld [vmem:[%s4 + $0x18] sm:$0xff]
        %v1268 = vld [vmem:[%s4 + $0x20] sm:$0xff]
        %v1269 = vld [vmem:[%s4 + $0x28] sm:$0xff]
        %v1270 = vld [vmem:[%s4 + $0x30] sm:$0xff]
        %v1271 = vld [vmem:[%s4 + $0x38] sm:$0xff]
        %v1272 = vld [vmem:[%s4 + $0x40] sm:$0xff]
        %v1273 = vld [vmem:[%s4 + $0x48] sm:$0xff]
        %v1274 = vld [vmem:[%s4 + $0x50] sm:$0xff]
        %v1275 = vld [vmem:[%s4 + $0x58] sm:$0xff]
        %v1276 = vld [vmem:[%s4 + $0x60] sm:$0xff]
        %v1277 = vld [vmem:[%s4 + $0x68] sm:$0xff]
        %v1278 = vld [vmem:[%s4 + $0x70] sm:$0xff]
        %v1279 = vld [vmem:[%s4 + $0x78] sm:$0xff]
        %v1280 = vld [vmem:[%s4 + $0x80] sm:$0xff]
        %v1281 = vld [vmem:[%s4 + $0x88] sm:$0xff]
        %v1282 = vld [vmem:[%s4 + $0x90] sm:$0xff]
        %v1283 = vld [vmem:[%s4 + $0x98] sm:$0xff]
        %v1284 = vld [vmem:[%s4 + $0xa0] sm:$0xff]
        %v1285 = vld [vmem:[%s4 + $0xa8] sm:$0xff]
        %v1286 = vld [vmem:[%s4 + $0xb0] sm:$0xff]
        %v1287 = vld [vmem:[%s4 + $0xb8] sm:$0xff]
        %v1288 = vld [vmem:[%s4 + $0xc0] sm:$0xff]
        %v1289 = vld [vmem:[%s4 + $0xc8] sm:$0xff]
        %v1290 = vld [vmem:[%s4 + $0xd0] sm:$0xff]
        %v1291 = vld [vmem:[%s4 + $0xd8] sm:$0xff]
        %v1292 = vld [vmem:[%s4 + $0xe0] sm:$0xff]
        %v1293 = vld [vmem:[%s4 + $0xe8] sm:$0xff]
        %v1294 = vld [vmem:[%s4 + $0xf0] sm:$0xff]
        %v1295 = vld [vmem:[%s4 + $0xf8] sm:$0xff]
        %v1296 = vld [vmem:[%s4 + $0x100] sm:$0xff]
        %v1297 = vld [vmem:[%s4 + $0x108] sm:$0xff]
        %v1298 = vld [vmem:[%s4 + $0x110] sm:$0xff]
        %v1299 = vld [vmem:[%s4 + $0x118] sm:$0xff]
        %v1300 = vld [vmem:[%s4 + $0x120] sm:$0xff]
        %v1301 = vld [vmem:[%s4 + $0x128] sm:$0xff]
        %v1302 = vld [vmem:[%s4 + $0x130] sm:$0xff]
        %v1303 = vld [vmem:[%s4 + $0x138] sm:$0xff]
        %v1304 = vld [vmem:[%s4 + $0x140] sm:$0xff]
        %v1305 = vld [vmem:[%s4 + $0x148] sm:$0xff]
        %v1306 = vld [vmem:[%s4 + $0x150] sm:$0xff]
        %v1307 = vld [vmem:[%s4 + $0x158] sm:$0xff]
        %v1308 = vld [vmem:[%s4 + $0x160] sm:$0xff]
        %v1309 = vld [vmem:[%s4 + $0x168] sm:$0xff]
        %v1310 = vld [vmem:[%s4 + $0x170] sm:$0xff]
        %v1311 = vld [vmem:[%s4 + $0x178] sm:$0xff]
        %v1312 = vld [vmem:[%s4 + $0x180] sm:$0xff]
        %v1313 = vld [vmem:[%s4 + $0x188] sm:$0xff]
        %v1314 = vld [vmem:[%s4 + $0x190] sm:$0xff]
        %v1315 = vld [vmem:[%s4 + $0x198] sm:$0xff]
        %v1316 = vld [vmem:[%s4 + $0x1a0] sm:$0xff]
        %v1317 = vld [vmem:[%s4 + $0x1a8] sm:$0xff]
        %v1318 = vld [vmem:[%s4 + $0x1b0] sm:$0xff]
        %v1319 = vld [vmem:[%s4 + $0x1b8] sm:$0xff]
        %v1320 = vld [vmem:[%s4 + $0x1c0] sm:$0xff]
        %v1321 = vld [vmem:[%s4 + $0x1c8] sm:$0xff]
        %v1322 = vld [vmem:[%s4 + $0x1d0] sm:$0xff]
        %v1323 = vld [vmem:[%s4 + $0x1d8] sm:$0xff]
        %v1324 = vld [vmem:[%s4 + $0x1e0] sm:$0xff]
        %v1325 = vld [vmem:[%s4 + $0x1e8] sm:$0xff]
        %v1326 = vld [vmem:[%s4 + $0x1f0] sm:$0xff]
        %v1327 = vld [vmem:[%s4 + $0x1f8] sm:$0xff]
        %v1328 = vld [vmem:[%s4 + $0x200] sm:$0xff]
        %v1329 = vld [vmem:[%s4 + $0x208] sm:$0xff]
        %v1330 = vld [vmem:[%s4 + $0x210] sm:$0xff]
        %v1331 = vld [vmem:[%s4 + $0x218] sm:$0xff]
        %v1332 = vld [vmem:[%s4 + $0x220] sm:$0xff]
        %v1333 = vld [vmem:[%s4 + $0x228] sm:$0xff]
        %v1334 = vld [vmem:[%s4 + $0x230] sm:$0xff]
        %v1335 = vld [vmem:[%s4 + $0x238] sm:$0xff]
        %v1336 = vld [vmem:[%s4 + $0x240] sm:$0xff]
        %v1337 = vld [vmem:[%s4 + $0x248] sm:$0xff]
        %v1338 = vld [vmem:[%s4 + $0x250] sm:$0xff]
        %v1339 = vld [vmem:[%s4 + $0x258] sm:$0xff]
        %v1340 = vld [vmem:[%s4 + $0x260] sm:$0xff]
        %v1341 = vld [vmem:[%s4 + $0x268] sm:$0xff]
        %v1342 = vld [vmem:[%s4 + $0x270] sm:$0xff]
        %v1343 = vld [vmem:[%s4 + $0x278] sm:$0xff]
        %v1344 = vld [vmem:[%s4 + $0x280] sm:$0xff]
        %v1345 = vld [vmem:[%s4 + $0x288] sm:$0xff]
        %v1346 = vld [vmem:[%s4 + $0x290] sm:$0xff]
        %v1347 = vld [vmem:[%s4 + $0x298] sm:$0xff]
        %v1348 = vld [vmem:[%s4 + $0x2a0] sm:$0xff]
        %v1349 = vld [vmem:[%s4 + $0x2a8] sm:$0xff]
        %v1350 = vld [vmem:[%s4 + $0x2b0] sm:$0xff]
        %v1351 = vld [vmem:[%s4 + $0x2b8] sm:$0xff]
        %v1352 = vld [vmem:[%s4 + $0x2c0] sm:$0xff]
        %v1353 = vld [vmem:[%s4 + $0x2c8] sm:$0xff]
        %v1354 = vld [vmem:[%s4 + $0x2d0] sm:$0xff]
        %v1355 = vld [vmem:[%s4 + $0x2d8] sm:$0xff]
        %v1356 = vld [vmem:[%s4 + $0x2e0] sm:$0xff]
        %v1357 = vld [vmem:[%s4 + $0x2e8] sm:$0xff]
        %v1358 = vld [vmem:[%s4 + $0x2f0] sm:$0xff]
        %v1359 = vld [vmem:[%s4 + $0x2f8] sm:$0xff]
        %v1360 = vld [vmem:[%s4 + $0x300] sm:$0xff]
        %v1361 = vld [vmem:[%s4 + $0x308] sm:$0xff]
        %v1362 = vld [vmem:[%s4 + $0x310] sm:$0xff]
        %v1363 = vld [vmem:[%s4 + $0x318] sm:$0xff]
        %v1364 = vld [vmem:[%s4 + $0x320] sm:$0xff]
        %v1365 = vld [vmem:[%s4 + $0x328] sm:$0xff]
        %v1366 = vld [vmem:[%s4 + $0x330] sm:$0xff]
        %v1367 = vld [vmem:[%s4 + $0x338] sm:$0xff]
        %v1368 = vld [vmem:[%s4 + $0x340] sm:$0xff]
        %v1369 = vld [vmem:[%s4 + $0x348] sm:$0xff]
        %v1370 = vld [vmem:[%s4 + $0x350] sm:$0xff]
        %v1371 = vld [vmem:[%s4 + $0x358] sm:$0xff]
        %v1372 = vld [vmem:[%s4 + $0x360] sm:$0xff]
        %v1373 = vld [vmem:[%s4 + $0x368] sm:$0xff]
        %v1374 = vld [vmem:[%s4 + $0x370] sm:$0xff]
        %v1375 = vld [vmem:[%s4 + $0x378] sm:$0xff]
        %v1376 = vld [vmem:[%s4 + $0x380] sm:$0xff]
        %v1377 = vld [vmem:[%s4 + $0x388] sm:$0xff]
        %v1378 = vld [vmem:[%s4 + $0x390] sm:$0xff]
        %v1379 = vld [vmem:[%s4 + $0x398] sm:$0xff]
        %v1380 = vld [vmem:[%s4 + $0x3a0] sm:$0xff]
        %v1381 = vld [vmem:[%s4 + $0x3a8] sm:$0xff]
        %v1382 = vld [vmem:[%s4 + $0x3b0] sm:$0xff]
        %v1383 = vld [vmem:[%s4 + $0x3b8] sm:$0xff]
        %v1384 = vld [vmem:[%s4 + $0x3c0] sm:$0xff]
        %v1385 = vld [vmem:[%s4 + $0x3c8] sm:$0xff]
        %v1386 = vld [vmem:[%s4 + $0x3d0] sm:$0xff]
        %v1387 = vld [vmem:[%s4 + $0x3d8] sm:$0xff]
        %v1388 = vld [vmem:[%s4 + $0x3e0] sm:$0xff]
        %v1389 = vld [vmem:[%s4 + $0x3e8] sm:$0xff]
        %v1390 = vld [vmem:[%s4 + $0x3f0] sm:$0xff]
        %v1391 = vld [vmem:[%s4 + $0x3f8] sm:$0xff]
        %v1392 = vld [vmem:[%s4 + $0x400] sm:$0xff]
        %v1393 = vld [vmem:[%s4 + $0x408] sm:$0xff]
        %v1394 = vld [vmem:[%s4 + $0x410] sm:$0xff]
        %v1395 = vld [vmem:[%s4 + $0x418] sm:$0xff]
        %v1396 = vld [vmem:[%s4 + $0x420] sm:$0xff]
        %v1397 = vld [vmem:[%s4 + $0x428] sm:$0xff]
        %v1398 = vld [vmem:[%s4 + $0x430] sm:$0xff]
        %v1399 = vld [vmem:[%s4 + $0x438] sm:$0xff]
        %v1400 = vld [vmem:[%s4 + $0x440] sm:$0xff]
        %v1401 = vld [vmem:[%s4 + $0x448] sm:$0xff]
        %v1402 = vld [vmem:[%s4 + $0x450] sm:$0xff]
        %v1403 = vld [vmem:[%s4 + $0x458] sm:$0xff]
        %v1404 = vld [vmem:[%s4 + $0x460] sm:$0xff]
        %v1405 = vld [vmem:[%s4 + $0x468] sm:$0xff]
        %v1406 = vld [vmem:[%s4 + $0x470] sm:$0xff]
        %v1407 = vld [vmem:[%s4 + $0x478] sm:$0xff]
        %v1408 = vld [vmem:[%s4 + $0x480] sm:$0xff]
        %v1409 = vld [vmem:[%s4 + $0x488] sm:$0xff]
        %v1410 = vld [vmem:[%s4 + $0x490] sm:$0xff]
        %v1411 = vld [vmem:[%s4 + $0x498] sm:$0xff]
        %v1412 = vld [vmem:[%s4 + $0x4a0] sm:$0xff]
        %v1413 = vld [vmem:[%s4 + $0x4a8] sm:$0xff]
        %v1414 = vld [vmem:[%s4 + $0x4b0] sm:$0xff]
        %v1415 = vld [vmem:[%s4 + $0x4b8] sm:$0xff]
        %v1416 = vld [vmem:[%s4 + $0x4c0] sm:$0xff]
        %v1417 = vld [vmem:[%s4 + $0x4c8] sm:$0xff]
        %v1418 = vld [vmem:[%s4 + $0x4d0] sm:$0xff]
        %v1419 = vld [vmem:[%s4 + $0x4d8] sm:$0xff]
        %v1420 = vld [vmem:[%s4 + $0x4e0] sm:$0xff]
        %v1421 = vld [vmem:[%s4 + $0x4e8] sm:$0xff]
        %v1422 = vld [vmem:[%s4 + $0x4f0] sm:$0xff]
        %v1423 = vld [vmem:[%s4 + $0x4f8] sm:$0xff]
        %v1424 = vld [vmem:[%s5] sm:$0x1]
        %v1425 = vld [vmem:[%s5 + $0x1] sm:$0x1]
        %v1426 = vld [vmem:[%s5 + $0x2] sm:$0x1]
        %v1427 = vld [vmem:[%s5 + $0x3] sm:$0x1]
        %v1428 = vld [vmem:[%s5 + $0x4] sm:$0x1]
        %1429 = vmatprep.subr.mxu0 0.0
        %1430 = vmatpush1.msra.mxu0 %v1279
        %1431 = vmatprep.subr.mxu0 0.0
        %1432 = vmatpush1.msra.mxu0 %v1278
        %1433 = vmatprep.subr.mxu0 0.0
        %1434 = vmatpush1.msra.mxu0 %v1277
        %1435 = vmatprep.subr.mxu0 0.0
        %1436 = vmatpush1.msra.mxu0 %v1276
        %1437 = vmatprep.subr.mxu0 0.0
        %1438 = vmatpush1.msra.mxu0 %v1275
        %1439 = vmatprep.subr.mxu0 0.0
        %1440 = vmatpush1.msra.mxu0 %v1274
        %1441 = vmatprep.subr.mxu0 0.0
        %1442 = vmatpush1.msra.mxu0 %v1273
        %1443 = vmatprep.subr.mxu0 0.0
        %1444 = vmatpush1.msra.mxu0 %v1272
        %1445 = vmatprep.subr.mxu0 0.0
        %1446 = vmatpush1.msra.mxu0 %v1271
        %1447 = vmatprep.subr.mxu0 0.0
        %1448 = vmatpush1.msra.mxu0 %v1270
        %1449 = vmatprep.subr.mxu0 0.0
        %1450 = vmatpush1.msra.mxu0 %v1269
        %1451 = vmatprep.subr.mxu0 0.0
        %1452 = vmatpush1.msra.mxu0 %v1268
        %1453 = vmatprep.subr.mxu0 0.0
        %1454 = vmatpush1.msra.mxu0 %v1267
        %1455 = vmatprep.subr.mxu0 0.0
        %1456 = vmatpush1.msra.mxu0 %v1266
        %1457 = vmatprep.subr.mxu0 0.0
        %1458 = vmatpush1.msra.mxu0 %v1265
        %1459 = vmatprep.subr.mxu0 0.0
        %1460 = vmatpush1.msra.mxu0 %v1264
        %1461 = vmatprep.subr.mxu0 0.0
        %1462 = vmatpush2.msra.mxu0 0.0
        %1463 = vmatprep.subr.mxu0 0.0
        %1464 = vmatpush2.msra.mxu0 0.0
        %1465 = vmatprep.subr.mxu0 0.0
        %1466 = vmatpush2.msra.mxu0 0.0
        %1467 = vmatprep.subr.mxu0 0.0
        %1468 = vmatpush2.msra.mxu0 0.0
        %1469 = vmatprep.subr.mxu0 0.0
        %1470 = vmatpush2.msra.mxu0 0.0
        %1471 = vmatprep.subr.mxu0 0.0
        %1472 = vmatpush2.msra.mxu0 0.0
        %1473 = vmatprep.subr.mxu0 0.0
        %1474 = vmatpush2.msra.mxu0 0.0
        %1475 = vmatprep.subr.mxu0 0.0
        %1476 = vmatpush2.msra.mxu0 0.0
        %1477 = vmatprep.subr.mxu0 0.0
        %1478 = vmatpush2.msra.mxu0 0.0
        %1479 = vmatprep.subr.mxu0 0.0
        %1480 = vmatpush2.msra.mxu0 0.0
        %1481 = vmatprep.subr.mxu0 0.0
        %1482 = vmatpush2.msra.mxu0 0.0
        %1483 = vmatprep.subr.mxu0 0.0
        %1484 = vmatpush2.msra.mxu0 0.0
        %1485 = vmatprep.subr.mxu0 0.0
        %1486 = vmatpush2.msra.mxu0 0.0
        %1487 = vmatprep.subr.mxu0 0.0
        %1488 = vmatpush2.msra.mxu0 0.0
        %1489 = vmatprep.subr.mxu0 0.0
        %1490 = vmatpush2.msra.mxu0 0.0
        %1491 = vmatprep.subr.mxu0 0.0
        %1492 = vmatpush2.msra.mxu0 0.0
        %1493 = vmatprep.mubr.f32.mxu0 0.0
        %1494 = vmatmul.mubr.f32.gmra.mxu0 %v432
        %v1495 = vpop.f32.mrf.mxu0
        %v1496 = vadd.f32 0.0, %v1495
        %v1497 = vpop.f32.mrf.mxu0
        %1498 = vmatprep.mubr.f32.mxu0 0.0
        %1499 = vmatmul.mubr.f32.gmra.mxu0 %v437
        %v1500 = vpop.f32.mrf.mxu0
        %v1501 = vadd.f32 0.0, %v1500
        %v1502 = vpop.f32.mrf.mxu0
        %1503 = vmatprep.mubr.f32.mxu0 0.0
        %1504 = vmatmul.mubr.f32.gmra.mxu0 %v442
        %v1505 = vpop.f32.mrf.mxu0
        %v1506 = vadd.f32 0.0, %v1505
        %v1507 = vpop.f32.mrf.mxu0
        %1508 = vmatprep.mubr.f32.mxu0 0.0
        %1509 = vmatmul.mubr.f32.gmra.mxu0 %v447
        %v1510 = vpop.f32.mrf.mxu0
        %v1511 = vadd.f32 0.0, %v1510
        %v1512 = vpop.f32.mrf.mxu0
        %1513 = vmatprep.mubr.f32.mxu0 0.0
        %1514 = vmatmul.mubr.f32.gmra.mxu0 %v452
        %v1515 = vpop.f32.mrf.mxu0
        %v1516 = vadd.f32 0.0, %v1515
        %v1517 = vpop.f32.mrf.mxu0
        %1518 = vmatprep.mubr.f32.mxu0 0.0
        %1519 = vmatmul.mubr.f32.gmra.mxu0 %v457
        %v1520 = vpop.f32.mrf.mxu0
        %v1521 = vadd.f32 0.0, %v1520
        %v1522 = vpop.f32.mrf.mxu0
        %1523 = vmatprep.mubr.f32.mxu0 0.0
        %1524 = vmatmul.mubr.f32.gmra.mxu0 %v462
        %v1525 = vpop.f32.mrf.mxu0
        %v1526 = vadd.f32 0.0, %v1525
        %v1527 = vpop.f32.mrf.mxu0
        %1528 = vmatprep.mubr.f32.mxu0 0.0
        %1529 = vmatmul.mubr.f32.gmra.mxu0 %v467
        %v1530 = vpop.f32.mrf.mxu0
        %v1531 = vadd.f32 0.0, %v1530
        %v1532 = vpop.f32.mrf.mxu0
        %1533 = vmatprep.mubr.f32.mxu0 0.0
        %1534 = vmatmul.mubr.f32.gmra.mxu0 %v472
        %v1535 = vpop.f32.mrf.mxu0
        %v1536 = vadd.f32 0.0, %v1535
        %v1537 = vpop.f32.mrf.mxu0
        %1538 = vmatprep.mubr.f32.mxu0 0.0
        %1539 = vmatmul.mubr.f32.gmra.mxu0 %v477
        %v1540 = vpop.f32.mrf.mxu0
        %v1541 = vadd.f32 0.0, %v1540
        %v1542 = vpop.f32.mrf.mxu0
        %1543 = vmatprep.mubr.f32.mxu0 0.0
        %1544 = vmatmul.mubr.f32.gmra.mxu0 %v482
        %v1545 = vpop.f32.mrf.mxu0
        %v1546 = vadd.f32 0.0, %v1545
        %v1547 = vpop.f32.mrf.mxu0
        %1548 = vmatprep.mubr.f32.mxu0 0.0
        %1549 = vmatmul.mubr.f32.gmra.mxu0 %v487
        %v1550 = vpop.f32.mrf.mxu0
        %v1551 = vadd.f32 0.0, %v1550
        %v1552 = vpop.f32.mrf.mxu0
        %1553 = vmatprep.mubr.f32.mxu0 0.0
        %1554 = vmatmul.mubr.f32.gmra.mxu0 %v492
        %v1555 = vpop.f32.mrf.mxu0
        %v1556 = vadd.f32 0.0, %v1555
        %v1557 = vpop.f32.mrf.mxu0
        %1558 = vmatprep.mubr.f32.mxu0 0.0
        %1559 = vmatmul.mubr.f32.gmra.mxu0 %v497
        %v1560 = vpop.f32.mrf.mxu0
        %v1561 = vadd.f32 0.0, %v1560
        %v1562 = vpop.f32.mrf.mxu0
        %1563 = vmatprep.mubr.f32.mxu0 0.0
        %1564 = vmatmul.mubr.f32.gmra.mxu0 %v502
        %v1565 = vpop.f32.mrf.mxu0
        %v1566 = vadd.f32 0.0, %v1565
        %v1567 = vpop.f32.mrf.mxu0
        %1568 = vmatprep.mubr.f32.mxu0 0.0
        %1569 = vmatmul.mubr.f32.gmra.mxu0 %v507
        %v1570 = vpop.f32.mrf.mxu0
        %v1571 = vadd.f32 0.0, %v1570
        %v1572 = vpop.f32.mrf.mxu0
        %1573 = vdwg.mxu0
        %v1574 = vlaneseq
        %v1575 = vshrl.u32 %v1574, 7
        %v1576 = vsub.s32 0, %v1575
        %v1577 = vrot.slane %v1424, %v1576
        %1578 = vmatprep.subr.mxu0 0.0
        %1579 = vmatpush1.msra.mxu0 %v1295
        %1580 = vmatprep.subr.mxu0 0.0
        %1581 = vmatpush1.msra.mxu0 %v1294
        %1582 = vmatprep.subr.mxu0 0.0
        %1583 = vmatpush1.msra.mxu0 %v1293
        %1584 = vmatprep.subr.mxu0 0.0
        %1585 = vmatpush1.msra.mxu0 %v1292
        %1586 = vmatprep.subr.mxu0 0.0
        %1587 = vmatpush1.msra.mxu0 %v1291
        %1588 = vmatprep.subr.mxu0 0.0
        %1589 = vmatpush1.msra.mxu0 %v1290
        %1590 = vmatprep.subr.mxu0 0.0
        %1591 = vmatpush1.msra.mxu0 %v1289
        %1592 = vmatprep.subr.mxu0 0.0
        %1593 = vmatpush1.msra.mxu0 %v1288
        %1594 = vmatprep.subr.mxu0 0.0
        %1595 = vmatpush1.msra.mxu0 %v1287
        %1596 = vmatprep.subr.mxu0 0.0
        %1597 = vmatpush1.msra.mxu0 %v1286
        %1598 = vmatprep.subr.mxu0 0.0
        %1599 = vmatpush1.msra.mxu0 %v1285
        %1600 = vmatprep.subr.mxu0 0.0
        %1601 = vmatpush1.msra.mxu0 %v1284
        %1602 = vmatprep.subr.mxu0 0.0
        %1603 = vmatpush1.msra.mxu0 %v1283
        %1604 = vmatprep.subr.mxu0 0.0
        %1605 = vmatpush1.msra.mxu0 %v1282
        %1606 = vmatprep.subr.mxu0 0.0
        %1607 = vmatpush1.msra.mxu0 %v1281
        %1608 = vmatprep.subr.mxu0 0.0
        %1609 = vmatpush1.msra.mxu0 %v1280
        %1610 = vmatprep.subr.mxu0 0.0
        %1611 = vmatpush2.msra.mxu0 0.0
        %1612 = vmatprep.subr.mxu0 0.0
        %1613 = vmatpush2.msra.mxu0 0.0
        %1614 = vmatprep.subr.mxu0 0.0
        %1615 = vmatpush2.msra.mxu0 0.0
        %1616 = vmatprep.subr.mxu0 0.0
        %1617 = vmatpush2.msra.mxu0 0.0
        %1618 = vmatprep.subr.mxu0 0.0
        %1619 = vmatpush2.msra.mxu0 0.0
        %1620 = vmatprep.subr.mxu0 0.0
        %1621 = vmatpush2.msra.mxu0 0.0
        %1622 = vmatprep.subr.mxu0 0.0
        %1623 = vmatpush2.msra.mxu0 0.0
        %1624 = vmatprep.subr.mxu0 0.0
        %1625 = vmatpush2.msra.mxu0 0.0
        %1626 = vmatprep.subr.mxu0 0.0
        %1627 = vmatpush2.msra.mxu0 0.0
        %1628 = vmatprep.subr.mxu0 0.0
        %1629 = vmatpush2.msra.mxu0 0.0
        %1630 = vmatprep.subr.mxu0 0.0
        %1631 = vmatpush2.msra.mxu0 0.0
        %1632 = vmatprep.subr.mxu0 0.0
        %1633 = vmatpush2.msra.mxu0 0.0
        %1634 = vmatprep.subr.mxu0 0.0
        %1635 = vmatpush2.msra.mxu0 0.0
        %1636 = vmatprep.subr.mxu0 0.0
        %1637 = vmatpush2.msra.mxu0 0.0
        %1638 = vmatprep.subr.mxu0 0.0
        %1639 = vmatpush2.msra.mxu0 0.0
        %1640 = vmatprep.subr.mxu0 0.0
        %1641 = vmatpush2.msra.mxu0 0.0
        %1642 = vmatprep.mubr.f32.mxu0 0.0
        %1643 = vmatmul.mubr.f32.gmra.mxu0 %v432
        %v1644 = vpop.f32.mrf.mxu0
        %v1645 = vadd.f32 %v1577, %v1644
        %v1646 = vpop.f32.mrf.mxu0
        %1647 = vmatprep.mubr.f32.mxu0 0.0
        %1648 = vmatmul.mubr.f32.gmra.mxu0 %v437
        %v1649 = vpop.f32.mrf.mxu0
        %v1650 = vadd.f32 %v1577, %v1649
        %v1651 = vpop.f32.mrf.mxu0
        %1652 = vmatprep.mubr.f32.mxu0 0.0
        %1653 = vmatmul.mubr.f32.gmra.mxu0 %v442
        %v1654 = vpop.f32.mrf.mxu0
        %v1655 = vadd.f32 %v1577, %v1654
        %v1656 = vpop.f32.mrf.mxu0
        %1657 = vmatprep.mubr.f32.mxu0 0.0
        %1658 = vmatmul.mubr.f32.gmra.mxu0 %v447
        %v1659 = vpop.f32.mrf.mxu0
        %v1660 = vadd.f32 %v1577, %v1659
        %v1661 = vpop.f32.mrf.mxu0
        %1662 = vmatprep.mubr.f32.mxu0 0.0
        %1663 = vmatmul.mubr.f32.gmra.mxu0 %v452
        %v1664 = vpop.f32.mrf.mxu0
        %v1665 = vadd.f32 %v1577, %v1664
        %v1666 = vpop.f32.mrf.mxu0
        %1667 = vmatprep.mubr.f32.mxu0 0.0
        %1668 = vmatmul.mubr.f32.gmra.mxu0 %v457
        %v1669 = vpop.f32.mrf.mxu0
        %v1670 = vadd.f32 %v1577, %v1669
        %v1671 = vpop.f32.mrf.mxu0
        %1672 = vmatprep.mubr.f32.mxu0 0.0
        %1673 = vmatmul.mubr.f32.gmra.mxu0 %v462
        %v1674 = vpop.f32.mrf.mxu0
        %v1675 = vadd.f32 %v1577, %v1674
        %v1676 = vpop.f32.mrf.mxu0
        %1677 = vmatprep.mubr.f32.mxu0 0.0
        %1678 = vmatmul.mubr.f32.gmra.mxu0 %v467
        %v1679 = vpop.f32.mrf.mxu0
        %v1680 = vadd.f32 %v1577, %v1679
        %v1681 = vpop.f32.mrf.mxu0
        %1682 = vmatprep.mubr.f32.mxu0 0.0
        %1683 = vmatmul.mubr.f32.gmra.mxu0 %v472
        %v1684 = vpop.f32.mrf.mxu0
        %v1685 = vadd.f32 %v1577, %v1684
        %v1686 = vpop.f32.mrf.mxu0
        %1687 = vmatprep.mubr.f32.mxu0 0.0
        %1688 = vmatmul.mubr.f32.gmra.mxu0 %v477
        %v1689 = vpop.f32.mrf.mxu0
        %v1690 = vadd.f32 %v1577, %v1689
        %v1691 = vpop.f32.mrf.mxu0
        %1692 = vmatprep.mubr.f32.mxu0 0.0
        %1693 = vmatmul.mubr.f32.gmra.mxu0 %v482
        %v1694 = vpop.f32.mrf.mxu0
        %v1695 = vadd.f32 %v1577, %v1694
        %v1696 = vpop.f32.mrf.mxu0
        %1697 = vmatprep.mubr.f32.mxu0 0.0
        %1698 = vmatmul.mubr.f32.gmra.mxu0 %v487
        %v1699 = vpop.f32.mrf.mxu0
        %v1700 = vadd.f32 %v1577, %v1699
        %v1701 = vpop.f32.mrf.mxu0
        %1702 = vmatprep.mubr.f32.mxu0 0.0
        %1703 = vmatmul.mubr.f32.gmra.mxu0 %v492
        %v1704 = vpop.f32.mrf.mxu0
        %v1705 = vadd.f32 %v1577, %v1704
        %v1706 = vpop.f32.mrf.mxu0
        %1707 = vmatprep.mubr.f32.mxu0 0.0
        %1708 = vmatmul.mubr.f32.gmra.mxu0 %v497
        %v1709 = vpop.f32.mrf.mxu0
        %v1710 = vadd.f32 %v1577, %v1709
        %v1711 = vpop.f32.mrf.mxu0
        %1712 = vmatprep.mubr.f32.mxu0 0.0
        %1713 = vmatmul.mubr.f32.gmra.mxu0 %v502
        %v1714 = vpop.f32.mrf.mxu0
        %v1715 = vadd.f32 %v1577, %v1714
        %v1716 = vpop.f32.mrf.mxu0
        %1717 = vmatprep.mubr.f32.mxu0 0.0
        %1718 = vmatmul.mubr.f32.gmra.mxu0 %v507
        %v1719 = vpop.f32.mrf.mxu0
        %v1720 = vadd.f32 %v1577, %v1719
        %v1721 = vpop.f32.mrf.mxu0
        %1722 = vdwg.mxu0
        %v1723 = vmul.f32 %v513, %v1645
        %v1724 = vmul.f32 %v516, %v1650
        %v1725 = vmul.f32 %v519, %v1655
        %v1726 = vmul.f32 %v522, %v1660
        %v1727 = vmul.f32 %v525, %v1665
        %v1728 = vmul.f32 %v528, %v1670
        %v1729 = vmul.f32 %v531, %v1675
        %v1730 = vmul.f32 %v534, %v1680
        %v1731 = vmul.f32 %v537, %v1685
        %v1732 = vmul.f32 %v540, %v1690
        %v1733 = vmul.f32 %v543, %v1695
        %v1734 = vmul.f32 %v546, %v1700
        %v1735 = vmul.f32 %v549, %v1705
        %v1736 = vmul.f32 %v552, %v1710
        %v1737 = vmul.f32 %v555, %v1715
        %v1738 = vmul.f32 %v558, %v1720
        %v1740 = vsel %vm510, %v275, 0
        %1742 = vmatprep.subr.mxu0 0.0
        %1743 = vmatpush1.msra.mxu0 0.0
        %1744 = vmatprep.subr.mxu0 0.0
        %1745 = vmatpush1.msra.mxu0 0.0
        %1746 = vmatprep.subr.mxu0 0.0
        %1747 = vmatpush1.msra.mxu0 0.0
        %1748 = vmatprep.subr.mxu0 0.0
        %1749 = vmatpush1.msra.mxu0 0.0
        %1750 = vmatprep.subr.mxu0 0.0
        %1751 = vmatpush1.msra.mxu0 0.0
        %1752 = vmatprep.subr.mxu0 0.0
        %1753 = vmatpush1.msra.mxu0 0.0
        %1754 = vmatprep.subr.mxu0 0.0
        %1755 = vmatpush1.msra.mxu0 0.0
        %1756 = vmatprep.subr.mxu0 0.0
        %1757 = vmatpush1.msra.mxu0 0.0
        %1758 = vmatprep.subr.mxu0 0.0
        %1759 = vmatpush1.msra.mxu0 0.0
        %1760 = vmatprep.subr.mxu0 0.0
        %1761 = vmatpush1.msra.mxu0 0.0
        %1762 = vmatprep.subr.mxu0 0.0
        %1763 = vmatpush1.msra.mxu0 0.0
        %1764 = vmatprep.subr.mxu0 0.0
        %1765 = vmatpush1.msra.mxu0 0.0
        %1766 = vmatprep.subr.mxu0 0.0
        %1767 = vmatpush1.msra.mxu0 0.0
        %1768 = vmatprep.subr.mxu0 0.0
        %1769 = vmatpush1.msra.mxu0 0.0
        %1770 = vmatprep.subr.mxu0 0.0
        %1771 = vmatpush1.msra.mxu0 0.0
        %1772 = vmatprep.subr.mxu0 0.0
        %1773 = vmatpush1.msra.mxu0 %v1496
        %1774 = vmatprep.subr.mxu0 0.0
        %1775 = vmatpush2.msra.mxu0 0.0
        %1776 = vmatprep.subr.mxu0 0.0
        %1777 = vmatpush2.msra.mxu0 0.0
        %1778 = vmatprep.subr.mxu0 0.0
        %1779 = vmatpush2.msra.mxu0 0.0
        %1780 = vmatprep.subr.mxu0 0.0
        %1781 = vmatpush2.msra.mxu0 0.0
        %1782 = vmatprep.subr.mxu0 0.0
        %1783 = vmatpush2.msra.mxu0 0.0
        %1784 = vmatprep.subr.mxu0 0.0
        %1785 = vmatpush2.msra.mxu0 0.0
        %1786 = vmatprep.subr.mxu0 0.0
        %1787 = vmatpush2.msra.mxu0 0.0
        %1788 = vmatprep.subr.mxu0 0.0
        %1789 = vmatpush2.msra.mxu0 0.0
        %1790 = vmatprep.subr.mxu0 0.0
        %1791 = vmatpush2.msra.mxu0 0.0
        %1792 = vmatprep.subr.mxu0 0.0
        %1793 = vmatpush2.msra.mxu0 0.0
        %1794 = vmatprep.subr.mxu0 0.0
        %1795 = vmatpush2.msra.mxu0 0.0
        %1796 = vmatprep.subr.mxu0 0.0
        %1797 = vmatpush2.msra.mxu0 0.0
        %1798 = vmatprep.subr.mxu0 0.0
        %1799 = vmatpush2.msra.mxu0 0.0
        %1800 = vmatprep.subr.mxu0 0.0
        %1801 = vmatpush2.msra.mxu0 0.0
        %1802 = vmatprep.subr.mxu0 0.0
        %1803 = vmatpush2.msra.mxu0 0.0
        %1804 = vmatprep.subr.mxu0 0.0
        %1805 = vmatpush2.msra.mxu0 0.0
        %1806 = vmatprep.mubr.f32.mxu0 0.0
        %1807 = vmatmul.mubr.f32.gmra.mxu0 %v1740
        %v1808 = vpop.f32.mrf.mxu0
        %v1809 = vadd.f32 %v1723, %v1808
        %v1810 = vpop.f32.mrf.mxu0
        %1811 = vdwg.mxu0
        %v1813 = vsel %vm510, %v276, 0
        %1815 = vmatprep.subr.mxu0 0.0
        %1816 = vmatpush1.msra.mxu0 0.0
        %1817 = vmatprep.subr.mxu0 0.0
        %1818 = vmatpush1.msra.mxu0 0.0
        %1819 = vmatprep.subr.mxu0 0.0
        %1820 = vmatpush1.msra.mxu0 0.0
        %1821 = vmatprep.subr.mxu0 0.0
        %1822 = vmatpush1.msra.mxu0 0.0
        %1823 = vmatprep.subr.mxu0 0.0
        %1824 = vmatpush1.msra.mxu0 0.0
        %1825 = vmatprep.subr.mxu0 0.0
        %1826 = vmatpush1.msra.mxu0 0.0
        %1827 = vmatprep.subr.mxu0 0.0
        %1828 = vmatpush1.msra.mxu0 0.0
        %1829 = vmatprep.subr.mxu0 0.0
        %1830 = vmatpush1.msra.mxu0 0.0
        %1831 = vmatprep.subr.mxu0 0.0
        %1832 = vmatpush1.msra.mxu0 0.0
        %1833 = vmatprep.subr.mxu0 0.0
        %1834 = vmatpush1.msra.mxu0 0.0
        %1835 = vmatprep.subr.mxu0 0.0
        %1836 = vmatpush1.msra.mxu0 0.0
        %1837 = vmatprep.subr.mxu0 0.0
        %1838 = vmatpush1.msra.mxu0 0.0
        %1839 = vmatprep.subr.mxu0 0.0
        %1840 = vmatpush1.msra.mxu0 0.0
        %1841 = vmatprep.subr.mxu0 0.0
        %1842 = vmatpush1.msra.mxu0 0.0
        %1843 = vmatprep.subr.mxu0 0.0
        %1844 = vmatpush1.msra.mxu0 0.0
        %1845 = vmatprep.subr.mxu0 0.0
        %1846 = vmatpush1.msra.mxu0 %v1501
        %1847 = vmatprep.subr.mxu0 0.0
        %1848 = vmatpush2.msra.mxu0 0.0
        %1849 = vmatprep.subr.mxu0 0.0
        %1850 = vmatpush2.msra.mxu0 0.0
        %1851 = vmatprep.subr.mxu0 0.0
        %1852 = vmatpush2.msra.mxu0 0.0
        %1853 = vmatprep.subr.mxu0 0.0
        %1854 = vmatpush2.msra.mxu0 0.0
        %1855 = vmatprep.subr.mxu0 0.0
        %1856 = vmatpush2.msra.mxu0 0.0
        %1857 = vmatprep.subr.mxu0 0.0
        %1858 = vmatpush2.msra.mxu0 0.0
        %1859 = vmatprep.subr.mxu0 0.0
        %1860 = vmatpush2.msra.mxu0 0.0
        %1861 = vmatprep.subr.mxu0 0.0
        %1862 = vmatpush2.msra.mxu0 0.0
        %1863 = vmatprep.subr.mxu0 0.0
        %1864 = vmatpush2.msra.mxu0 0.0
        %1865 = vmatprep.subr.mxu0 0.0
        %1866 = vmatpush2.msra.mxu0 0.0
        %1867 = vmatprep.subr.mxu0 0.0
        %1868 = vmatpush2.msra.mxu0 0.0
        %1869 = vmatprep.subr.mxu0 0.0
        %1870 = vmatpush2.msra.mxu0 0.0
        %1871 = vmatprep.subr.mxu0 0.0
        %1872 = vmatpush2.msra.mxu0 0.0
        %1873 = vmatprep.subr.mxu0 0.0
        %1874 = vmatpush2.msra.mxu0 0.0
        %1875 = vmatprep.subr.mxu0 0.0
        %1876 = vmatpush2.msra.mxu0 0.0
        %1877 = vmatprep.subr.mxu0 0.0
        %1878 = vmatpush2.msra.mxu0 0.0
        %1879 = vmatprep.mubr.f32.mxu0 0.0
        %1880 = vmatmul.mubr.f32.gmra.mxu0 %v1813
        %v1881 = vpop.f32.mrf.mxu0
        %v1882 = vadd.f32 %v1724, %v1881
        %v1883 = vpop.f32.mrf.mxu0
        %1884 = vdwg.mxu0
        %v1886 = vsel %vm510, %v277, 0
        %1888 = vmatprep.subr.mxu0 0.0
        %1889 = vmatpush1.msra.mxu0 0.0
        %1890 = vmatprep.subr.mxu0 0.0
        %1891 = vmatpush1.msra.mxu0 0.0
        %1892 = vmatprep.subr.mxu0 0.0
        %1893 = vmatpush1.msra.mxu0 0.0
        %1894 = vmatprep.subr.mxu0 0.0
        %1895 = vmatpush1.msra.mxu0 0.0
        %1896 = vmatprep.subr.mxu0 0.0
        %1897 = vmatpush1.msra.mxu0 0.0
        %1898 = vmatprep.subr.mxu0 0.0
        %1899 = vmatpush1.msra.mxu0 0.0
        %1900 = vmatprep.subr.mxu0 0.0
        %1901 = vmatpush1.msra.mxu0 0.0
        %1902 = vmatprep.subr.mxu0 0.0
        %1903 = vmatpush1.msra.mxu0 0.0
        %1904 = vmatprep.subr.mxu0 0.0
        %1905 = vmatpush1.msra.mxu0 0.0
        %1906 = vmatprep.subr.mxu0 0.0
        %1907 = vmatpush1.msra.mxu0 0.0
        %1908 = vmatprep.subr.mxu0 0.0
        %1909 = vmatpush1.msra.mxu0 0.0
        %1910 = vmatprep.subr.mxu0 0.0
        %1911 = vmatpush1.msra.mxu0 0.0
        %1912 = vmatprep.subr.mxu0 0.0
        %1913 = vmatpush1.msra.mxu0 0.0
        %1914 = vmatprep.subr.mxu0 0.0
        %1915 = vmatpush1.msra.mxu0 0.0
        %1916 = vmatprep.subr.mxu0 0.0
        %1917 = vmatpush1.msra.mxu0 0.0
        %1918 = vmatprep.subr.mxu0 0.0
        %1919 = vmatpush1.msra.mxu0 %v1506
        %1920 = vmatprep.subr.mxu0 0.0
        %1921 = vmatpush2.msra.mxu0 0.0
        %1922 = vmatprep.subr.mxu0 0.0
        %1923 = vmatpush2.msra.mxu0 0.0
        %1924 = vmatprep.subr.mxu0 0.0
        %1925 = vmatpush2.msra.mxu0 0.0
        %1926 = vmatprep.subr.mxu0 0.0
        %1927 = vmatpush2.msra.mxu0 0.0
        %1928 = vmatprep.subr.mxu0 0.0
        %1929 = vmatpush2.msra.mxu0 0.0
        %1930 = vmatprep.subr.mxu0 0.0
        %1931 = vmatpush2.msra.mxu0 0.0
        %1932 = vmatprep.subr.mxu0 0.0
        %1933 = vmatpush2.msra.mxu0 0.0
        %1934 = vmatprep.subr.mxu0 0.0
        %1935 = vmatpush2.msra.mxu0 0.0
        %1936 = vmatprep.subr.mxu0 0.0
        %1937 = vmatpush2.msra.mxu0 0.0
        %1938 = vmatprep.subr.mxu0 0.0
        %1939 = vmatpush2.msra.mxu0 0.0
        %1940 = vmatprep.subr.mxu0 0.0
        %1941 = vmatpush2.msra.mxu0 0.0
        %1942 = vmatprep.subr.mxu0 0.0
        %1943 = vmatpush2.msra.mxu0 0.0
        %1944 = vmatprep.subr.mxu0 0.0
        %1945 = vmatpush2.msra.mxu0 0.0
        %1946 = vmatprep.subr.mxu0 0.0
        %1947 = vmatpush2.msra.mxu0 0.0
        %1948 = vmatprep.subr.mxu0 0.0
        %1949 = vmatpush2.msra.mxu0 0.0
        %1950 = vmatprep.subr.mxu0 0.0
        %1951 = vmatpush2.msra.mxu0 0.0
        %1952 = vmatprep.mubr.f32.mxu0 0.0
        %1953 = vmatmul.mubr.f32.gmra.mxu0 %v1886
        %v1954 = vpop.f32.mrf.mxu0
        %v1955 = vadd.f32 %v1725, %v1954
        %v1956 = vpop.f32.mrf.mxu0
        %1957 = vdwg.mxu0
        %v1959 = vsel %vm510, %v278, 0
        %1961 = vmatprep.subr.mxu0 0.0
        %1962 = vmatpush1.msra.mxu0 0.0
        %1963 = vmatprep.subr.mxu0 0.0
        %1964 = vmatpush1.msra.mxu0 0.0
        %1965 = vmatprep.subr.mxu0 0.0
        %1966 = vmatpush1.msra.mxu0 0.0
        %1967 = vmatprep.subr.mxu0 0.0
        %1968 = vmatpush1.msra.mxu0 0.0
        %1969 = vmatprep.subr.mxu0 0.0
        %1970 = vmatpush1.msra.mxu0 0.0
        %1971 = vmatprep.subr.mxu0 0.0
        %1972 = vmatpush1.msra.mxu0 0.0
        %1973 = vmatprep.subr.mxu0 0.0
        %1974 = vmatpush1.msra.mxu0 0.0
        %1975 = vmatprep.subr.mxu0 0.0
        %1976 = vmatpush1.msra.mxu0 0.0
        %1977 = vmatprep.subr.mxu0 0.0
        %1978 = vmatpush1.msra.mxu0 0.0
        %1979 = vmatprep.subr.mxu0 0.0
        %1980 = vmatpush1.msra.mxu0 0.0
        %1981 = vmatprep.subr.mxu0 0.0
        %1982 = vmatpush1.msra.mxu0 0.0
        %1983 = vmatprep.subr.mxu0 0.0
        %1984 = vmatpush1.msra.mxu0 0.0
        %1985 = vmatprep.subr.mxu0 0.0
        %1986 = vmatpush1.msra.mxu0 0.0
        %1987 = vmatprep.subr.mxu0 0.0
        %1988 = vmatpush1.msra.mxu0 0.0
        %1989 = vmatprep.subr.mxu0 0.0
        %1990 = vmatpush1.msra.mxu0 0.0
        %1991 = vmatprep.subr.mxu0 0.0
        %1992 = vmatpush1.msra.mxu0 %v1511
        %1993 = vmatprep.subr.mxu0 0.0
        %1994 = vmatpush2.msra.mxu0 0.0
        %1995 = vmatprep.subr.mxu0 0.0
        %1996 = vmatpush2.msra.mxu0 0.0
        %1997 = vmatprep.subr.mxu0 0.0
        %1998 = vmatpush2.msra.mxu0 0.0
        %1999 = vmatprep.subr.mxu0 0.0
        %2000 = vmatpush2.msra.mxu0 0.0
        %2001 = vmatprep.subr.mxu0 0.0
        %2002 = vmatpush2.msra.mxu0 0.0
        %2003 = vmatprep.subr.mxu0 0.0
        %2004 = vmatpush2.msra.mxu0 0.0
        %2005 = vmatprep.subr.mxu0 0.0
        %2006 = vmatpush2.msra.mxu0 0.0
        %2007 = vmatprep.subr.mxu0 0.0
        %2008 = vmatpush2.msra.mxu0 0.0
        %2009 = vmatprep.subr.mxu0 0.0
        %2010 = vmatpush2.msra.mxu0 0.0
        %2011 = vmatprep.subr.mxu0 0.0
        %2012 = vmatpush2.msra.mxu0 0.0
        %2013 = vmatprep.subr.mxu0 0.0
        %2014 = vmatpush2.msra.mxu0 0.0
        %2015 = vmatprep.subr.mxu0 0.0
        %2016 = vmatpush2.msra.mxu0 0.0
        %2017 = vmatprep.subr.mxu0 0.0
        %2018 = vmatpush2.msra.mxu0 0.0
        %2019 = vmatprep.subr.mxu0 0.0
        %2020 = vmatpush2.msra.mxu0 0.0
        %2021 = vmatprep.subr.mxu0 0.0
        %2022 = vmatpush2.msra.mxu0 0.0
        %2023 = vmatprep.subr.mxu0 0.0
        %2024 = vmatpush2.msra.mxu0 0.0
        %2025 = vmatprep.mubr.f32.mxu0 0.0
        %2026 = vmatmul.mubr.f32.gmra.mxu0 %v1959
        %v2027 = vpop.f32.mrf.mxu0
        %v2028 = vadd.f32 %v1726, %v2027
        %v2029 = vpop.f32.mrf.mxu0
        %2030 = vdwg.mxu0
        %v2032 = vsel %vm510, %v279, 0
        %2034 = vmatprep.subr.mxu0 0.0
        %2035 = vmatpush1.msra.mxu0 0.0
        %2036 = vmatprep.subr.mxu0 0.0
        %2037 = vmatpush1.msra.mxu0 0.0
        %2038 = vmatprep.subr.mxu0 0.0
        %2039 = vmatpush1.msra.mxu0 0.0
        %2040 = vmatprep.subr.mxu0 0.0
        %2041 = vmatpush1.msra.mxu0 0.0
        %2042 = vmatprep.subr.mxu0 0.0
        %2043 = vmatpush1.msra.mxu0 0.0
        %2044 = vmatprep.subr.mxu0 0.0
        %2045 = vmatpush1.msra.mxu0 0.0
        %2046 = vmatprep.subr.mxu0 0.0
        %2047 = vmatpush1.msra.mxu0 0.0
        %2048 = vmatprep.subr.mxu0 0.0
        %2049 = vmatpush1.msra.mxu0 0.0
        %2050 = vmatprep.subr.mxu0 0.0
        %2051 = vmatpush1.msra.mxu0 0.0
        %2052 = vmatprep.subr.mxu0 0.0
        %2053 = vmatpush1.msra.mxu0 0.0
        %2054 = vmatprep.subr.mxu0 0.0
        %2055 = vmatpush1.msra.mxu0 0.0
        %2056 = vmatprep.subr.mxu0 0.0
        %2057 = vmatpush1.msra.mxu0 0.0
        %2058 = vmatprep.subr.mxu0 0.0
        %2059 = vmatpush1.msra.mxu0 0.0
        %2060 = vmatprep.subr.mxu0 0.0
        %2061 = vmatpush1.msra.mxu0 0.0
        %2062 = vmatprep.subr.mxu0 0.0
        %2063 = vmatpush1.msra.mxu0 0.0
        %2064 = vmatprep.subr.mxu0 0.0
        %2065 = vmatpush1.msra.mxu0 %v1516
        %2066 = vmatprep.subr.mxu0 0.0
        %2067 = vmatpush2.msra.mxu0 0.0
        %2068 = vmatprep.subr.mxu0 0.0
        %2069 = vmatpush2.msra.mxu0 0.0
        %2070 = vmatprep.subr.mxu0 0.0
        %2071 = vmatpush2.msra.mxu0 0.0
        %2072 = vmatprep.subr.mxu0 0.0
        %2073 = vmatpush2.msra.mxu0 0.0
        %2074 = vmatprep.subr.mxu0 0.0
        %2075 = vmatpush2.msra.mxu0 0.0
        %2076 = vmatprep.subr.mxu0 0.0
        %2077 = vmatpush2.msra.mxu0 0.0
        %2078 = vmatprep.subr.mxu0 0.0
        %2079 = vmatpush2.msra.mxu0 0.0
        %2080 = vmatprep.subr.mxu0 0.0
        %2081 = vmatpush2.msra.mxu0 0.0
        %2082 = vmatprep.subr.mxu0 0.0
        %2083 = vmatpush2.msra.mxu0 0.0
        %2084 = vmatprep.subr.mxu0 0.0
        %2085 = vmatpush2.msra.mxu0 0.0
        %2086 = vmatprep.subr.mxu0 0.0
        %2087 = vmatpush2.msra.mxu0 0.0
        %2088 = vmatprep.subr.mxu0 0.0
        %2089 = vmatpush2.msra.mxu0 0.0
        %2090 = vmatprep.subr.mxu0 0.0
        %2091 = vmatpush2.msra.mxu0 0.0
        %2092 = vmatprep.subr.mxu0 0.0
        %2093 = vmatpush2.msra.mxu0 0.0
        %2094 = vmatprep.subr.mxu0 0.0
        %2095 = vmatpush2.msra.mxu0 0.0
        %2096 = vmatprep.subr.mxu0 0.0
        %2097 = vmatpush2.msra.mxu0 0.0
        %2098 = vmatprep.mubr.f32.mxu0 0.0
        %2099 = vmatmul.mubr.f32.gmra.mxu0 %v2032
        %v2100 = vpop.f32.mrf.mxu0
        %v2101 = vadd.f32 %v1727, %v2100
        %v2102 = vpop.f32.mrf.mxu0
        %2103 = vdwg.mxu0
        %v2105 = vsel %vm510, %v280, 0
        %2107 = vmatprep.subr.mxu0 0.0
        %2108 = vmatpush1.msra.mxu0 0.0
        %2109 = vmatprep.subr.mxu0 0.0
        %2110 = vmatpush1.msra.mxu0 0.0
        %2111 = vmatprep.subr.mxu0 0.0
        %2112 = vmatpush1.msra.mxu0 0.0
        %2113 = vmatprep.subr.mxu0 0.0
        %2114 = vmatpush1.msra.mxu0 0.0
        %2115 = vmatprep.subr.mxu0 0.0
        %2116 = vmatpush1.msra.mxu0 0.0
        %2117 = vmatprep.subr.mxu0 0.0
        %2118 = vmatpush1.msra.mxu0 0.0
        %2119 = vmatprep.subr.mxu0 0.0
        %2120 = vmatpush1.msra.mxu0 0.0
        %2121 = vmatprep.subr.mxu0 0.0
        %2122 = vmatpush1.msra.mxu0 0.0
        %2123 = vmatprep.subr.mxu0 0.0
        %2124 = vmatpush1.msra.mxu0 0.0
        %2125 = vmatprep.subr.mxu0 0.0
        %2126 = vmatpush1.msra.mxu0 0.0
        %2127 = vmatprep.subr.mxu0 0.0
        %2128 = vmatpush1.msra.mxu0 0.0
        %2129 = vmatprep.subr.mxu0 0.0
        %2130 = vmatpush1.msra.mxu0 0.0
        %2131 = vmatprep.subr.mxu0 0.0
        %2132 = vmatpush1.msra.mxu0 0.0
        %2133 = vmatprep.subr.mxu0 0.0
        %2134 = vmatpush1.msra.mxu0 0.0
        %2135 = vmatprep.subr.mxu0 0.0
        %2136 = vmatpush1.msra.mxu0 0.0
        %2137 = vmatprep.subr.mxu0 0.0
        %2138 = vmatpush1.msra.mxu0 %v1521
        %2139 = vmatprep.subr.mxu0 0.0
        %2140 = vmatpush2.msra.mxu0 0.0
        %2141 = vmatprep.subr.mxu0 0.0
        %2142 = vmatpush2.msra.mxu0 0.0
        %2143 = vmatprep.subr.mxu0 0.0
        %2144 = vmatpush2.msra.mxu0 0.0
        %2145 = vmatprep.subr.mxu0 0.0
        %2146 = vmatpush2.msra.mxu0 0.0
        %2147 = vmatprep.subr.mxu0 0.0
        %2148 = vmatpush2.msra.mxu0 0.0
        %2149 = vmatprep.subr.mxu0 0.0
        %2150 = vmatpush2.msra.mxu0 0.0
        %2151 = vmatprep.subr.mxu0 0.0
        %2152 = vmatpush2.msra.mxu0 0.0
        %2153 = vmatprep.subr.mxu0 0.0
        %2154 = vmatpush2.msra.mxu0 0.0
        %2155 = vmatprep.subr.mxu0 0.0
        %2156 = vmatpush2.msra.mxu0 0.0
        %2157 = vmatprep.subr.mxu0 0.0
        %2158 = vmatpush2.msra.mxu0 0.0
        %2159 = vmatprep.subr.mxu0 0.0
        %2160 = vmatpush2.msra.mxu0 0.0
        %2161 = vmatprep.subr.mxu0 0.0
        %2162 = vmatpush2.msra.mxu0 0.0
        %2163 = vmatprep.subr.mxu0 0.0
        %2164 = vmatpush2.msra.mxu0 0.0
        %2165 = vmatprep.subr.mxu0 0.0
        %2166 = vmatpush2.msra.mxu0 0.0
        %2167 = vmatprep.subr.mxu0 0.0
        %2168 = vmatpush2.msra.mxu0 0.0
        %2169 = vmatprep.subr.mxu0 0.0
        %2170 = vmatpush2.msra.mxu0 0.0
        %2171 = vmatprep.mubr.f32.mxu0 0.0
        %2172 = vmatmul.mubr.f32.gmra.mxu0 %v2105
        %v2173 = vpop.f32.mrf.mxu0
        %v2174 = vadd.f32 %v1728, %v2173
        %v2175 = vpop.f32.mrf.mxu0
        %2176 = vdwg.mxu0
        %v2178 = vsel %vm510, %v281, 0
        %2180 = vmatprep.subr.mxu0 0.0
        %2181 = vmatpush1.msra.mxu0 0.0
        %2182 = vmatprep.subr.mxu0 0.0
        %2183 = vmatpush1.msra.mxu0 0.0
        %2184 = vmatprep.subr.mxu0 0.0
        %2185 = vmatpush1.msra.mxu0 0.0
        %2186 = vmatprep.subr.mxu0 0.0
        %2187 = vmatpush1.msra.mxu0 0.0
        %2188 = vmatprep.subr.mxu0 0.0
        %2189 = vmatpush1.msra.mxu0 0.0
        %2190 = vmatprep.subr.mxu0 0.0
        %2191 = vmatpush1.msra.mxu0 0.0
        %2192 = vmatprep.subr.mxu0 0.0
        %2193 = vmatpush1.msra.mxu0 0.0
        %2194 = vmatprep.subr.mxu0 0.0
        %2195 = vmatpush1.msra.mxu0 0.0
        %2196 = vmatprep.subr.mxu0 0.0
        %2197 = vmatpush1.msra.mxu0 0.0
        %2198 = vmatprep.subr.mxu0 0.0
        %2199 = vmatpush1.msra.mxu0 0.0
        %2200 = vmatprep.subr.mxu0 0.0
        %2201 = vmatpush1.msra.mxu0 0.0
        %2202 = vmatprep.subr.mxu0 0.0
        %2203 = vmatpush1.msra.mxu0 0.0
        %2204 = vmatprep.subr.mxu0 0.0
        %2205 = vmatpush1.msra.mxu0 0.0
        %2206 = vmatprep.subr.mxu0 0.0
        %2207 = vmatpush1.msra.mxu0 0.0
        %2208 = vmatprep.subr.mxu0 0.0
        %2209 = vmatpush1.msra.mxu0 0.0
        %2210 = vmatprep.subr.mxu0 0.0
        %2211 = vmatpush1.msra.mxu0 %v1526
        %2212 = vmatprep.subr.mxu0 0.0
        %2213 = vmatpush2.msra.mxu0 0.0
        %2214 = vmatprep.subr.mxu0 0.0
        %2215 = vmatpush2.msra.mxu0 0.0
        %2216 = vmatprep.subr.mxu0 0.0
        %2217 = vmatpush2.msra.mxu0 0.0
        %2218 = vmatprep.subr.mxu0 0.0
        %2219 = vmatpush2.msra.mxu0 0.0
        %2220 = vmatprep.subr.mxu0 0.0
        %2221 = vmatpush2.msra.mxu0 0.0
        %2222 = vmatprep.subr.mxu0 0.0
        %2223 = vmatpush2.msra.mxu0 0.0
        %2224 = vmatprep.subr.mxu0 0.0
        %2225 = vmatpush2.msra.mxu0 0.0
        %2226 = vmatprep.subr.mxu0 0.0
        %2227 = vmatpush2.msra.mxu0 0.0
        %2228 = vmatprep.subr.mxu0 0.0
        %2229 = vmatpush2.msra.mxu0 0.0
        %2230 = vmatprep.subr.mxu0 0.0
        %2231 = vmatpush2.msra.mxu0 0.0
        %2232 = vmatprep.subr.mxu0 0.0
        %2233 = vmatpush2.msra.mxu0 0.0
        %2234 = vmatprep.subr.mxu0 0.0
        %2235 = vmatpush2.msra.mxu0 0.0
        %2236 = vmatprep.subr.mxu0 0.0
        %2237 = vmatpush2.msra.mxu0 0.0
        %2238 = vmatprep.subr.mxu0 0.0
        %2239 = vmatpush2.msra.mxu0 0.0
        %2240 = vmatprep.subr.mxu0 0.0
        %2241 = vmatpush2.msra.mxu0 0.0
        %2242 = vmatprep.subr.mxu0 0.0
        %2243 = vmatpush2.msra.mxu0 0.0
        %2244 = vmatprep.mubr.f32.mxu0 0.0
        %2245 = vmatmul.mubr.f32.gmra.mxu0 %v2178
        %v2246 = vpop.f32.mrf.mxu0
        %v2247 = vadd.f32 %v1729, %v2246
        %v2248 = vpop.f32.mrf.mxu0
        %2249 = vdwg.mxu0
        %v2251 = vsel %vm510, %v282, 0
        %2253 = vmatprep.subr.mxu0 0.0
        %2254 = vmatpush1.msra.mxu0 0.0
        %2255 = vmatprep.subr.mxu0 0.0
        %2256 = vmatpush1.msra.mxu0 0.0
        %2257 = vmatprep.subr.mxu0 0.0
        %2258 = vmatpush1.msra.mxu0 0.0
        %2259 = vmatprep.subr.mxu0 0.0
        %2260 = vmatpush1.msra.mxu0 0.0
        %2261 = vmatprep.subr.mxu0 0.0
        %2262 = vmatpush1.msra.mxu0 0.0
        %2263 = vmatprep.subr.mxu0 0.0
        %2264 = vmatpush1.msra.mxu0 0.0
        %2265 = vmatprep.subr.mxu0 0.0
        %2266 = vmatpush1.msra.mxu0 0.0
        %2267 = vmatprep.subr.mxu0 0.0
        %2268 = vmatpush1.msra.mxu0 0.0
        %2269 = vmatprep.subr.mxu0 0.0
        %2270 = vmatpush1.msra.mxu0 0.0
        %2271 = vmatprep.subr.mxu0 0.0
        %2272 = vmatpush1.msra.mxu0 0.0
        %2273 = vmatprep.subr.mxu0 0.0
        %2274 = vmatpush1.msra.mxu0 0.0
        %2275 = vmatprep.subr.mxu0 0.0
        %2276 = vmatpush1.msra.mxu0 0.0
        %2277 = vmatprep.subr.mxu0 0.0
        %2278 = vmatpush1.msra.mxu0 0.0
        %2279 = vmatprep.subr.mxu0 0.0
        %2280 = vmatpush1.msra.mxu0 0.0
        %2281 = vmatprep.subr.mxu0 0.0
        %2282 = vmatpush1.msra.mxu0 0.0
        %2283 = vmatprep.subr.mxu0 0.0
        %2284 = vmatpush1.msra.mxu0 %v1531
        %2285 = vmatprep.subr.mxu0 0.0
        %2286 = vmatpush2.msra.mxu0 0.0
        %2287 = vmatprep.subr.mxu0 0.0
        %2288 = vmatpush2.msra.mxu0 0.0
        %2289 = vmatprep.subr.mxu0 0.0
        %2290 = vmatpush2.msra.mxu0 0.0
        %2291 = vmatprep.subr.mxu0 0.0
        %2292 = vmatpush2.msra.mxu0 0.0
        %2293 = vmatprep.subr.mxu0 0.0
        %2294 = vmatpush2.msra.mxu0 0.0
        %2295 = vmatprep.subr.mxu0 0.0
        %2296 = vmatpush2.msra.mxu0 0.0
        %2297 = vmatprep.subr.mxu0 0.0
        %2298 = vmatpush2.msra.mxu0 0.0
        %2299 = vmatprep.subr.mxu0 0.0
        %2300 = vmatpush2.msra.mxu0 0.0
        %2301 = vmatprep.subr.mxu0 0.0
        %2302 = vmatpush2.msra.mxu0 0.0
        %2303 = vmatprep.subr.mxu0 0.0
        %2304 = vmatpush2.msra.mxu0 0.0
        %2305 = vmatprep.subr.mxu0 0.0
        %2306 = vmatpush2.msra.mxu0 0.0
        %2307 = vmatprep.subr.mxu0 0.0
        %2308 = vmatpush2.msra.mxu0 0.0
        %2309 = vmatprep.subr.mxu0 0.0
        %2310 = vmatpush2.msra.mxu0 0.0
        %2311 = vmatprep.subr.mxu0 0.0
        %2312 = vmatpush2.msra.mxu0 0.0
        %2313 = vmatprep.subr.mxu0 0.0
        %2314 = vmatpush2.msra.mxu0 0.0
        %2315 = vmatprep.subr.mxu0 0.0
        %2316 = vmatpush2.msra.mxu0 0.0
        %2317 = vmatprep.mubr.f32.mxu0 0.0
        %2318 = vmatmul.mubr.f32.gmra.mxu0 %v2251
        %v2319 = vpop.f32.mrf.mxu0
        %v2320 = vadd.f32 %v1730, %v2319
        %v2321 = vpop.f32.mrf.mxu0
        %2322 = vdwg.mxu0
        %v2324 = vsel %vm510, %v283, 0
        %2326 = vmatprep.subr.mxu0 0.0
        %2327 = vmatpush1.msra.mxu0 0.0
        %2328 = vmatprep.subr.mxu0 0.0
        %2329 = vmatpush1.msra.mxu0 0.0
        %2330 = vmatprep.subr.mxu0 0.0
        %2331 = vmatpush1.msra.mxu0 0.0
        %2332 = vmatprep.subr.mxu0 0.0
        %2333 = vmatpush1.msra.mxu0 0.0
        %2334 = vmatprep.subr.mxu0 0.0
        %2335 = vmatpush1.msra.mxu0 0.0
        %2336 = vmatprep.subr.mxu0 0.0
        %2337 = vmatpush1.msra.mxu0 0.0
        %2338 = vmatprep.subr.mxu0 0.0
        %2339 = vmatpush1.msra.mxu0 0.0
        %2340 = vmatprep.subr.mxu0 0.0
        %2341 = vmatpush1.msra.mxu0 0.0
        %2342 = vmatprep.subr.mxu0 0.0
        %2343 = vmatpush1.msra.mxu0 0.0
        %2344 = vmatprep.subr.mxu0 0.0
        %2345 = vmatpush1.msra.mxu0 0.0
        %2346 = vmatprep.subr.mxu0 0.0
        %2347 = vmatpush1.msra.mxu0 0.0
        %2348 = vmatprep.subr.mxu0 0.0
        %2349 = vmatpush1.msra.mxu0 0.0
        %2350 = vmatprep.subr.mxu0 0.0
        %2351 = vmatpush1.msra.mxu0 0.0
        %2352 = vmatprep.subr.mxu0 0.0
        %2353 = vmatpush1.msra.mxu0 0.0
        %2354 = vmatprep.subr.mxu0 0.0
        %2355 = vmatpush1.msra.mxu0 0.0
        %2356 = vmatprep.subr.mxu0 0.0
        %2357 = vmatpush1.msra.mxu0 %v1536
        %2358 = vmatprep.subr.mxu0 0.0
        %2359 = vmatpush2.msra.mxu0 0.0
        %2360 = vmatprep.subr.mxu0 0.0
        %2361 = vmatpush2.msra.mxu0 0.0
        %2362 = vmatprep.subr.mxu0 0.0
        %2363 = vmatpush2.msra.mxu0 0.0
        %2364 = vmatprep.subr.mxu0 0.0
        %2365 = vmatpush2.msra.mxu0 0.0
        %2366 = vmatprep.subr.mxu0 0.0
        %2367 = vmatpush2.msra.mxu0 0.0
        %2368 = vmatprep.subr.mxu0 0.0
        %2369 = vmatpush2.msra.mxu0 0.0
        %2370 = vmatprep.subr.mxu0 0.0
        %2371 = vmatpush2.msra.mxu0 0.0
        %2372 = vmatprep.subr.mxu0 0.0
        %2373 = vmatpush2.msra.mxu0 0.0
        %2374 = vmatprep.subr.mxu0 0.0
        %2375 = vmatpush2.msra.mxu0 0.0
        %2376 = vmatprep.subr.mxu0 0.0
        %2377 = vmatpush2.msra.mxu0 0.0
        %2378 = vmatprep.subr.mxu0 0.0
        %2379 = vmatpush2.msra.mxu0 0.0
        %2380 = vmatprep.subr.mxu0 0.0
        %2381 = vmatpush2.msra.mxu0 0.0
        %2382 = vmatprep.subr.mxu0 0.0
        %2383 = vmatpush2.msra.mxu0 0.0
        %2384 = vmatprep.subr.mxu0 0.0
        %2385 = vmatpush2.msra.mxu0 0.0
        %2386 = vmatprep.subr.mxu0 0.0
        %2387 = vmatpush2.msra.mxu0 0.0
        %2388 = vmatprep.subr.mxu0 0.0
        %2389 = vmatpush2.msra.mxu0 0.0
        %2390 = vmatprep.mubr.f32.mxu0 0.0
        %2391 = vmatmul.mubr.f32.gmra.mxu0 %v2324
        %v2392 = vpop.f32.mrf.mxu0
        %v2393 = vadd.f32 %v1731, %v2392
        %v2394 = vpop.f32.mrf.mxu0
        %2395 = vdwg.mxu0
        %v2397 = vsel %vm510, %v284, 0
        %2399 = vmatprep.subr.mxu0 0.0
        %2400 = vmatpush1.msra.mxu0 0.0
        %2401 = vmatprep.subr.mxu0 0.0
        %2402 = vmatpush1.msra.mxu0 0.0
        %2403 = vmatprep.subr.mxu0 0.0
        %2404 = vmatpush1.msra.mxu0 0.0
        %2405 = vmatprep.subr.mxu0 0.0
        %2406 = vmatpush1.msra.mxu0 0.0
        %2407 = vmatprep.subr.mxu0 0.0
        %2408 = vmatpush1.msra.mxu0 0.0
        %2409 = vmatprep.subr.mxu0 0.0
        %2410 = vmatpush1.msra.mxu0 0.0
        %2411 = vmatprep.subr.mxu0 0.0
        %2412 = vmatpush1.msra.mxu0 0.0
        %2413 = vmatprep.subr.mxu0 0.0
        %2414 = vmatpush1.msra.mxu0 0.0
        %2415 = vmatprep.subr.mxu0 0.0
        %2416 = vmatpush1.msra.mxu0 0.0
        %2417 = vmatprep.subr.mxu0 0.0
        %2418 = vmatpush1.msra.mxu0 0.0
        %2419 = vmatprep.subr.mxu0 0.0
        %2420 = vmatpush1.msra.mxu0 0.0
        %2421 = vmatprep.subr.mxu0 0.0
        %2422 = vmatpush1.msra.mxu0 0.0
        %2423 = vmatprep.subr.mxu0 0.0
        %2424 = vmatpush1.msra.mxu0 0.0
        %2425 = vmatprep.subr.mxu0 0.0
        %2426 = vmatpush1.msra.mxu0 0.0
        %2427 = vmatprep.subr.mxu0 0.0
        %2428 = vmatpush1.msra.mxu0 0.0
        %2429 = vmatprep.subr.mxu0 0.0
        %2430 = vmatpush1.msra.mxu0 %v1541
        %2431 = vmatprep.subr.mxu0 0.0
        %2432 = vmatpush2.msra.mxu0 0.0
        %2433 = vmatprep.subr.mxu0 0.0
        %2434 = vmatpush2.msra.mxu0 0.0
        %2435 = vmatprep.subr.mxu0 0.0
        %2436 = vmatpush2.msra.mxu0 0.0
        %2437 = vmatprep.subr.mxu0 0.0
        %2438 = vmatpush2.msra.mxu0 0.0
        %2439 = vmatprep.subr.mxu0 0.0
        %2440 = vmatpush2.msra.mxu0 0.0
        %2441 = vmatprep.subr.mxu0 0.0
        %2442 = vmatpush2.msra.mxu0 0.0
        %2443 = vmatprep.subr.mxu0 0.0
        %2444 = vmatpush2.msra.mxu0 0.0
        %2445 = vmatprep.subr.mxu0 0.0
        %2446 = vmatpush2.msra.mxu0 0.0
        %2447 = vmatprep.subr.mxu0 0.0
        %2448 = vmatpush2.msra.mxu0 0.0
        %2449 = vmatprep.subr.mxu0 0.0
        %2450 = vmatpush2.msra.mxu0 0.0
        %2451 = vmatprep.subr.mxu0 0.0
        %2452 = vmatpush2.msra.mxu0 0.0
        %2453 = vmatprep.subr.mxu0 0.0
        %2454 = vmatpush2.msra.mxu0 0.0
        %2455 = vmatprep.subr.mxu0 0.0
        %2456 = vmatpush2.msra.mxu0 0.0
        %2457 = vmatprep.subr.mxu0 0.0
        %2458 = vmatpush2.msra.mxu0 0.0
        %2459 = vmatprep.subr.mxu0 0.0
        %2460 = vmatpush2.msra.mxu0 0.0
        %2461 = vmatprep.subr.mxu0 0.0
        %2462 = vmatpush2.msra.mxu0 0.0
        %2463 = vmatprep.mubr.f32.mxu0 0.0
        %2464 = vmatmul.mubr.f32.gmra.mxu0 %v2397
        %v2465 = vpop.f32.mrf.mxu0
        %v2466 = vadd.f32 %v1732, %v2465
        %v2467 = vpop.f32.mrf.mxu0
        %2468 = vdwg.mxu0
        %v2470 = vsel %vm510, %v285, 0
        %2472 = vmatprep.subr.mxu0 0.0
        %2473 = vmatpush1.msra.mxu0 0.0
        %2474 = vmatprep.subr.mxu0 0.0
        %2475 = vmatpush1.msra.mxu0 0.0
        %2476 = vmatprep.subr.mxu0 0.0
        %2477 = vmatpush1.msra.mxu0 0.0
        %2478 = vmatprep.subr.mxu0 0.0
        %2479 = vmatpush1.msra.mxu0 0.0
        %2480 = vmatprep.subr.mxu0 0.0
        %2481 = vmatpush1.msra.mxu0 0.0
        %2482 = vmatprep.subr.mxu0 0.0
        %2483 = vmatpush1.msra.mxu0 0.0
        %2484 = vmatprep.subr.mxu0 0.0
        %2485 = vmatpush1.msra.mxu0 0.0
        %2486 = vmatprep.subr.mxu0 0.0
        %2487 = vmatpush1.msra.mxu0 0.0
        %2488 = vmatprep.subr.mxu0 0.0
        %2489 = vmatpush1.msra.mxu0 0.0
        %2490 = vmatprep.subr.mxu0 0.0
        %2491 = vmatpush1.msra.mxu0 0.0
        %2492 = vmatprep.subr.mxu0 0.0
        %2493 = vmatpush1.msra.mxu0 0.0
        %2494 = vmatprep.subr.mxu0 0.0
        %2495 = vmatpush1.msra.mxu0 0.0
        %2496 = vmatprep.subr.mxu0 0.0
        %2497 = vmatpush1.msra.mxu0 0.0
        %2498 = vmatprep.subr.mxu0 0.0
        %2499 = vmatpush1.msra.mxu0 0.0
        %2500 = vmatprep.subr.mxu0 0.0
        %2501 = vmatpush1.msra.mxu0 0.0
        %2502 = vmatprep.subr.mxu0 0.0
        %2503 = vmatpush1.msra.mxu0 %v1546
        %2504 = vmatprep.subr.mxu0 0.0
        %2505 = vmatpush2.msra.mxu0 0.0
        %2506 = vmatprep.subr.mxu0 0.0
        %2507 = vmatpush2.msra.mxu0 0.0
        %2508 = vmatprep.subr.mxu0 0.0
        %2509 = vmatpush2.msra.mxu0 0.0
        %2510 = vmatprep.subr.mxu0 0.0
        %2511 = vmatpush2.msra.mxu0 0.0
        %2512 = vmatprep.subr.mxu0 0.0
        %2513 = vmatpush2.msra.mxu0 0.0
        %2514 = vmatprep.subr.mxu0 0.0
        %2515 = vmatpush2.msra.mxu0 0.0
        %2516 = vmatprep.subr.mxu0 0.0
        %2517 = vmatpush2.msra.mxu0 0.0
        %2518 = vmatprep.subr.mxu0 0.0
        %2519 = vmatpush2.msra.mxu0 0.0
        %2520 = vmatprep.subr.mxu0 0.0
        %2521 = vmatpush2.msra.mxu0 0.0
        %2522 = vmatprep.subr.mxu0 0.0
        %2523 = vmatpush2.msra.mxu0 0.0
        %2524 = vmatprep.subr.mxu0 0.0
        %2525 = vmatpush2.msra.mxu0 0.0
        %2526 = vmatprep.subr.mxu0 0.0
        %2527 = vmatpush2.msra.mxu0 0.0
        %2528 = vmatprep.subr.mxu0 0.0
        %2529 = vmatpush2.msra.mxu0 0.0
        %2530 = vmatprep.subr.mxu0 0.0
        %2531 = vmatpush2.msra.mxu0 0.0
        %2532 = vmatprep.subr.mxu0 0.0
        %2533 = vmatpush2.msra.mxu0 0.0
        %2534 = vmatprep.subr.mxu0 0.0
        %2535 = vmatpush2.msra.mxu0 0.0
        %2536 = vmatprep.mubr.f32.mxu0 0.0
        %2537 = vmatmul.mubr.f32.gmra.mxu0 %v2470
        %v2538 = vpop.f32.mrf.mxu0
        %v2539 = vadd.f32 %v1733, %v2538
        %v2540 = vpop.f32.mrf.mxu0
        %2541 = vdwg.mxu0
        %v2543 = vsel %vm510, %v286, 0
        %2545 = vmatprep.subr.mxu0 0.0
        %2546 = vmatpush1.msra.mxu0 0.0
        %2547 = vmatprep.subr.mxu0 0.0
        %2548 = vmatpush1.msra.mxu0 0.0
        %2549 = vmatprep.subr.mxu0 0.0
        %2550 = vmatpush1.msra.mxu0 0.0
        %2551 = vmatprep.subr.mxu0 0.0
        %2552 = vmatpush1.msra.mxu0 0.0
        %2553 = vmatprep.subr.mxu0 0.0
        %2554 = vmatpush1.msra.mxu0 0.0
        %2555 = vmatprep.subr.mxu0 0.0
        %2556 = vmatpush1.msra.mxu0 0.0
        %2557 = vmatprep.subr.mxu0 0.0
        %2558 = vmatpush1.msra.mxu0 0.0
        %2559 = vmatprep.subr.mxu0 0.0
        %2560 = vmatpush1.msra.mxu0 0.0
        %2561 = vmatprep.subr.mxu0 0.0
        %2562 = vmatpush1.msra.mxu0 0.0
        %2563 = vmatprep.subr.mxu0 0.0
        %2564 = vmatpush1.msra.mxu0 0.0
        %2565 = vmatprep.subr.mxu0 0.0
        %2566 = vmatpush1.msra.mxu0 0.0
        %2567 = vmatprep.subr.mxu0 0.0
        %2568 = vmatpush1.msra.mxu0 0.0
        %2569 = vmatprep.subr.mxu0 0.0
        %2570 = vmatpush1.msra.mxu0 0.0
        %2571 = vmatprep.subr.mxu0 0.0
        %2572 = vmatpush1.msra.mxu0 0.0
        %2573 = vmatprep.subr.mxu0 0.0
        %2574 = vmatpush1.msra.mxu0 0.0
        %2575 = vmatprep.subr.mxu0 0.0
        %2576 = vmatpush1.msra.mxu0 %v1551
        %2577 = vmatprep.subr.mxu0 0.0
        %2578 = vmatpush2.msra.mxu0 0.0
        %2579 = vmatprep.subr.mxu0 0.0
        %2580 = vmatpush2.msra.mxu0 0.0
        %2581 = vmatprep.subr.mxu0 0.0
        %2582 = vmatpush2.msra.mxu0 0.0
        %2583 = vmatprep.subr.mxu0 0.0
        %2584 = vmatpush2.msra.mxu0 0.0
        %2585 = vmatprep.subr.mxu0 0.0
        %2586 = vmatpush2.msra.mxu0 0.0
        %2587 = vmatprep.subr.mxu0 0.0
        %2588 = vmatpush2.msra.mxu0 0.0
        %2589 = vmatprep.subr.mxu0 0.0
        %2590 = vmatpush2.msra.mxu0 0.0
        %2591 = vmatprep.subr.mxu0 0.0
        %2592 = vmatpush2.msra.mxu0 0.0
        %2593 = vmatprep.subr.mxu0 0.0
        %2594 = vmatpush2.msra.mxu0 0.0
        %2595 = vmatprep.subr.mxu0 0.0
        %2596 = vmatpush2.msra.mxu0 0.0
        %2597 = vmatprep.subr.mxu0 0.0
        %2598 = vmatpush2.msra.mxu0 0.0
        %2599 = vmatprep.subr.mxu0 0.0
        %2600 = vmatpush2.msra.mxu0 0.0
        %2601 = vmatprep.subr.mxu0 0.0
        %2602 = vmatpush2.msra.mxu0 0.0
        %2603 = vmatprep.subr.mxu0 0.0
        %2604 = vmatpush2.msra.mxu0 0.0
        %2605 = vmatprep.subr.mxu0 0.0
        %2606 = vmatpush2.msra.mxu0 0.0
        %2607 = vmatprep.subr.mxu0 0.0
        %2608 = vmatpush2.msra.mxu0 0.0
        %2609 = vmatprep.mubr.f32.mxu0 0.0
        %2610 = vmatmul.mubr.f32.gmra.mxu0 %v2543
        %v2611 = vpop.f32.mrf.mxu0
        %v2612 = vadd.f32 %v1734, %v2611
        %v2613 = vpop.f32.mrf.mxu0
        %2614 = vdwg.mxu0
        %v2616 = vsel %vm510, %v287, 0
        %2618 = vmatprep.subr.mxu0 0.0
        %2619 = vmatpush1.msra.mxu0 0.0
        %2620 = vmatprep.subr.mxu0 0.0
        %2621 = vmatpush1.msra.mxu0 0.0
        %2622 = vmatprep.subr.mxu0 0.0
        %2623 = vmatpush1.msra.mxu0 0.0
        %2624 = vmatprep.subr.mxu0 0.0
        %2625 = vmatpush1.msra.mxu0 0.0
        %2626 = vmatprep.subr.mxu0 0.0
        %2627 = vmatpush1.msra.mxu0 0.0
        %2628 = vmatprep.subr.mxu0 0.0
        %2629 = vmatpush1.msra.mxu0 0.0
        %2630 = vmatprep.subr.mxu0 0.0
        %2631 = vmatpush1.msra.mxu0 0.0
        %2632 = vmatprep.subr.mxu0 0.0
        %2633 = vmatpush1.msra.mxu0 0.0
        %2634 = vmatprep.subr.mxu0 0.0
        %2635 = vmatpush1.msra.mxu0 0.0
        %2636 = vmatprep.subr.mxu0 0.0
        %2637 = vmatpush1.msra.mxu0 0.0
        %2638 = vmatprep.subr.mxu0 0.0
        %2639 = vmatpush1.msra.mxu0 0.0
        %2640 = vmatprep.subr.mxu0 0.0
        %2641 = vmatpush1.msra.mxu0 0.0
        %2642 = vmatprep.subr.mxu0 0.0
        %2643 = vmatpush1.msra.mxu0 0.0
        %2644 = vmatprep.subr.mxu0 0.0
        %2645 = vmatpush1.msra.mxu0 0.0
        %2646 = vmatprep.subr.mxu0 0.0
        %2647 = vmatpush1.msra.mxu0 0.0
        %2648 = vmatprep.subr.mxu0 0.0
        %2649 = vmatpush1.msra.mxu0 %v1556
        %2650 = vmatprep.subr.mxu0 0.0
        %2651 = vmatpush2.msra.mxu0 0.0
        %2652 = vmatprep.subr.mxu0 0.0
        %2653 = vmatpush2.msra.mxu0 0.0
        %2654 = vmatprep.subr.mxu0 0.0
        %2655 = vmatpush2.msra.mxu0 0.0
        %2656 = vmatprep.subr.mxu0 0.0
        %2657 = vmatpush2.msra.mxu0 0.0
        %2658 = vmatprep.subr.mxu0 0.0
        %2659 = vmatpush2.msra.mxu0 0.0
        %2660 = vmatprep.subr.mxu0 0.0
        %2661 = vmatpush2.msra.mxu0 0.0
        %2662 = vmatprep.subr.mxu0 0.0
        %2663 = vmatpush2.msra.mxu0 0.0
        %2664 = vmatprep.subr.mxu0 0.0
        %2665 = vmatpush2.msra.mxu0 0.0
        %2666 = vmatprep.subr.mxu0 0.0
        %2667 = vmatpush2.msra.mxu0 0.0
        %2668 = vmatprep.subr.mxu0 0.0
        %2669 = vmatpush2.msra.mxu0 0.0
        %2670 = vmatprep.subr.mxu0 0.0
        %2671 = vmatpush2.msra.mxu0 0.0
        %2672 = vmatprep.subr.mxu0 0.0
        %2673 = vmatpush2.msra.mxu0 0.0
        %2674 = vmatprep.subr.mxu0 0.0
        %2675 = vmatpush2.msra.mxu0 0.0
        %2676 = vmatprep.subr.mxu0 0.0
        %2677 = vmatpush2.msra.mxu0 0.0
        %2678 = vmatprep.subr.mxu0 0.0
        %2679 = vmatpush2.msra.mxu0 0.0
        %2680 = vmatprep.subr.mxu0 0.0
        %2681 = vmatpush2.msra.mxu0 0.0
        %2682 = vmatprep.mubr.f32.mxu0 0.0
        %2683 = vmatmul.mubr.f32.gmra.mxu0 %v2616
        %v2684 = vpop.f32.mrf.mxu0
        %v2685 = vadd.f32 %v1735, %v2684
        %v2686 = vpop.f32.mrf.mxu0
        %2687 = vdwg.mxu0
        %v2689 = vsel %vm510, %v288, 0
        %2691 = vmatprep.subr.mxu0 0.0
        %2692 = vmatpush1.msra.mxu0 0.0
        %2693 = vmatprep.subr.mxu0 0.0
        %2694 = vmatpush1.msra.mxu0 0.0
        %2695 = vmatprep.subr.mxu0 0.0
        %2696 = vmatpush1.msra.mxu0 0.0
        %2697 = vmatprep.subr.mxu0 0.0
        %2698 = vmatpush1.msra.mxu0 0.0
        %2699 = vmatprep.subr.mxu0 0.0
        %2700 = vmatpush1.msra.mxu0 0.0
        %2701 = vmatprep.subr.mxu0 0.0
        %2702 = vmatpush1.msra.mxu0 0.0
        %2703 = vmatprep.subr.mxu0 0.0
        %2704 = vmatpush1.msra.mxu0 0.0
        %2705 = vmatprep.subr.mxu0 0.0
        %2706 = vmatpush1.msra.mxu0 0.0
        %2707 = vmatprep.subr.mxu0 0.0
        %2708 = vmatpush1.msra.mxu0 0.0
        %2709 = vmatprep.subr.mxu0 0.0
        %2710 = vmatpush1.msra.mxu0 0.0
        %2711 = vmatprep.subr.mxu0 0.0
        %2712 = vmatpush1.msra.mxu0 0.0
        %2713 = vmatprep.subr.mxu0 0.0
        %2714 = vmatpush1.msra.mxu0 0.0
        %2715 = vmatprep.subr.mxu0 0.0
        %2716 = vmatpush1.msra.mxu0 0.0
        %2717 = vmatprep.subr.mxu0 0.0
        %2718 = vmatpush1.msra.mxu0 0.0
        %2719 = vmatprep.subr.mxu0 0.0
        %2720 = vmatpush1.msra.mxu0 0.0
        %2721 = vmatprep.subr.mxu0 0.0
        %2722 = vmatpush1.msra.mxu0 %v1561
        %2723 = vmatprep.subr.mxu0 0.0
        %2724 = vmatpush2.msra.mxu0 0.0
        %2725 = vmatprep.subr.mxu0 0.0
        %2726 = vmatpush2.msra.mxu0 0.0
        %2727 = vmatprep.subr.mxu0 0.0
        %2728 = vmatpush2.msra.mxu0 0.0
        %2729 = vmatprep.subr.mxu0 0.0
        %2730 = vmatpush2.msra.mxu0 0.0
        %2731 = vmatprep.subr.mxu0 0.0
        %2732 = vmatpush2.msra.mxu0 0.0
        %2733 = vmatprep.subr.mxu0 0.0
        %2734 = vmatpush2.msra.mxu0 0.0
        %2735 = vmatprep.subr.mxu0 0.0
        %2736 = vmatpush2.msra.mxu0 0.0
        %2737 = vmatprep.subr.mxu0 0.0
        %2738 = vmatpush2.msra.mxu0 0.0
        %2739 = vmatprep.subr.mxu0 0.0
        %2740 = vmatpush2.msra.mxu0 0.0
        %2741 = vmatprep.subr.mxu0 0.0
        %2742 = vmatpush2.msra.mxu0 0.0
        %2743 = vmatprep.subr.mxu0 0.0
        %2744 = vmatpush2.msra.mxu0 0.0
        %2745 = vmatprep.subr.mxu0 0.0
        %2746 = vmatpush2.msra.mxu0 0.0
        %2747 = vmatprep.subr.mxu0 0.0
        %2748 = vmatpush2.msra.mxu0 0.0
        %2749 = vmatprep.subr.mxu0 0.0
        %2750 = vmatpush2.msra.mxu0 0.0
        %2751 = vmatprep.subr.mxu0 0.0
        %2752 = vmatpush2.msra.mxu0 0.0
        %2753 = vmatprep.subr.mxu0 0.0
        %2754 = vmatpush2.msra.mxu0 0.0
        %2755 = vmatprep.mubr.f32.mxu0 0.0
        %2756 = vmatmul.mubr.f32.gmra.mxu0 %v2689
        %v2757 = vpop.f32.mrf.mxu0
        %v2758 = vadd.f32 %v1736, %v2757
        %v2759 = vpop.f32.mrf.mxu0
        %2760 = vdwg.mxu0
        %v2762 = vsel %vm510, %v289, 0
        %2764 = vmatprep.subr.mxu0 0.0
        %2765 = vmatpush1.msra.mxu0 0.0
        %2766 = vmatprep.subr.mxu0 0.0
        %2767 = vmatpush1.msra.mxu0 0.0
        %2768 = vmatprep.subr.mxu0 0.0
        %2769 = vmatpush1.msra.mxu0 0.0
        %2770 = vmatprep.subr.mxu0 0.0
        %2771 = vmatpush1.msra.mxu0 0.0
        %2772 = vmatprep.subr.mxu0 0.0
        %2773 = vmatpush1.msra.mxu0 0.0
        %2774 = vmatprep.subr.mxu0 0.0
        %2775 = vmatpush1.msra.mxu0 0.0
        %2776 = vmatprep.subr.mxu0 0.0
        %2777 = vmatpush1.msra.mxu0 0.0
        %2778 = vmatprep.subr.mxu0 0.0
        %2779 = vmatpush1.msra.mxu0 0.0
        %2780 = vmatprep.subr.mxu0 0.0
        %2781 = vmatpush1.msra.mxu0 0.0
        %2782 = vmatprep.subr.mxu0 0.0
        %2783 = vmatpush1.msra.mxu0 0.0
        %2784 = vmatprep.subr.mxu0 0.0
        %2785 = vmatpush1.msra.mxu0 0.0
        %2786 = vmatprep.subr.mxu0 0.0
        %2787 = vmatpush1.msra.mxu0 0.0
        %2788 = vmatprep.subr.mxu0 0.0
        %2789 = vmatpush1.msra.mxu0 0.0
        %2790 = vmatprep.subr.mxu0 0.0
        %2791 = vmatpush1.msra.mxu0 0.0
        %2792 = vmatprep.subr.mxu0 0.0
        %2793 = vmatpush1.msra.mxu0 0.0
        %2794 = vmatprep.subr.mxu0 0.0
        %2795 = vmatpush1.msra.mxu0 %v1566
        %2796 = vmatprep.subr.mxu0 0.0
        %2797 = vmatpush2.msra.mxu0 0.0
        %2798 = vmatprep.subr.mxu0 0.0
        %2799 = vmatpush2.msra.mxu0 0.0
        %2800 = vmatprep.subr.mxu0 0.0
        %2801 = vmatpush2.msra.mxu0 0.0
        %2802 = vmatprep.subr.mxu0 0.0
        %2803 = vmatpush2.msra.mxu0 0.0
        %2804 = vmatprep.subr.mxu0 0.0
        %2805 = vmatpush2.msra.mxu0 0.0
        %2806 = vmatprep.subr.mxu0 0.0
        %2807 = vmatpush2.msra.mxu0 0.0
        %2808 = vmatprep.subr.mxu0 0.0
        %2809 = vmatpush2.msra.mxu0 0.0
        %2810 = vmatprep.subr.mxu0 0.0
        %2811 = vmatpush2.msra.mxu0 0.0
        %2812 = vmatprep.subr.mxu0 0.0
        %2813 = vmatpush2.msra.mxu0 0.0
        %2814 = vmatprep.subr.mxu0 0.0
        %2815 = vmatpush2.msra.mxu0 0.0
        %2816 = vmatprep.subr.mxu0 0.0
        %2817 = vmatpush2.msra.mxu0 0.0
        %2818 = vmatprep.subr.mxu0 0.0
        %2819 = vmatpush2.msra.mxu0 0.0
        %2820 = vmatprep.subr.mxu0 0.0
        %2821 = vmatpush2.msra.mxu0 0.0
        %2822 = vmatprep.subr.mxu0 0.0
        %2823 = vmatpush2.msra.mxu0 0.0
        %2824 = vmatprep.subr.mxu0 0.0
        %2825 = vmatpush2.msra.mxu0 0.0
        %2826 = vmatprep.subr.mxu0 0.0
        %2827 = vmatpush2.msra.mxu0 0.0
        %2828 = vmatprep.mubr.f32.mxu0 0.0
        %2829 = vmatmul.mubr.f32.gmra.mxu0 %v2762
        %v2830 = vpop.f32.mrf.mxu0
        %v2831 = vadd.f32 %v1737, %v2830
        %v2832 = vpop.f32.mrf.mxu0
        %2833 = vdwg.mxu0
        %v2835 = vsel %vm510, %v290, 0
        %2837 = vmatprep.subr.mxu0 0.0
        %2838 = vmatpush1.msra.mxu0 0.0
        %2839 = vmatprep.subr.mxu0 0.0
        %2840 = vmatpush1.msra.mxu0 0.0
        %2841 = vmatprep.subr.mxu0 0.0
        %2842 = vmatpush1.msra.mxu0 0.0
        %2843 = vmatprep.subr.mxu0 0.0
        %2844 = vmatpush1.msra.mxu0 0.0
        %2845 = vmatprep.subr.mxu0 0.0
        %2846 = vmatpush1.msra.mxu0 0.0
        %2847 = vmatprep.subr.mxu0 0.0
        %2848 = vmatpush1.msra.mxu0 0.0
        %2849 = vmatprep.subr.mxu0 0.0
        %2850 = vmatpush1.msra.mxu0 0.0
        %2851 = vmatprep.subr.mxu0 0.0
        %2852 = vmatpush1.msra.mxu0 0.0
        %2853 = vmatprep.subr.mxu0 0.0
        %2854 = vmatpush1.msra.mxu0 0.0
        %2855 = vmatprep.subr.mxu0 0.0
        %2856 = vmatpush1.msra.mxu0 0.0
        %2857 = vmatprep.subr.mxu0 0.0
        %2858 = vmatpush1.msra.mxu0 0.0
        %2859 = vmatprep.subr.mxu0 0.0
        %2860 = vmatpush1.msra.mxu0 0.0
        %2861 = vmatprep.subr.mxu0 0.0
        %2862 = vmatpush1.msra.mxu0 0.0
        %2863 = vmatprep.subr.mxu0 0.0
        %2864 = vmatpush1.msra.mxu0 0.0
        %2865 = vmatprep.subr.mxu0 0.0
        %2866 = vmatpush1.msra.mxu0 0.0
        %2867 = vmatprep.subr.mxu0 0.0
        %2868 = vmatpush1.msra.mxu0 %v1571
        %2869 = vmatprep.subr.mxu0 0.0
        %2870 = vmatpush2.msra.mxu0 0.0
        %2871 = vmatprep.subr.mxu0 0.0
        %2872 = vmatpush2.msra.mxu0 0.0
        %2873 = vmatprep.subr.mxu0 0.0
        %2874 = vmatpush2.msra.mxu0 0.0
        %2875 = vmatprep.subr.mxu0 0.0
        %2876 = vmatpush2.msra.mxu0 0.0
        %2877 = vmatprep.subr.mxu0 0.0
        %2878 = vmatpush2.msra.mxu0 0.0
        %2879 = vmatprep.subr.mxu0 0.0
        %2880 = vmatpush2.msra.mxu0 0.0
        %2881 = vmatprep.subr.mxu0 0.0
        %2882 = vmatpush2.msra.mxu0 0.0
        %2883 = vmatprep.subr.mxu0 0.0
        %2884 = vmatpush2.msra.mxu0 0.0
        %2885 = vmatprep.subr.mxu0 0.0
        %2886 = vmatpush2.msra.mxu0 0.0
        %2887 = vmatprep.subr.mxu0 0.0
        %2888 = vmatpush2.msra.mxu0 0.0
        %2889 = vmatprep.subr.mxu0 0.0
        %2890 = vmatpush2.msra.mxu0 0.0
        %2891 = vmatprep.subr.mxu0 0.0
        %2892 = vmatpush2.msra.mxu0 0.0
        %2893 = vmatprep.subr.mxu0 0.0
        %2894 = vmatpush2.msra.mxu0 0.0
        %2895 = vmatprep.subr.mxu0 0.0
        %2896 = vmatpush2.msra.mxu0 0.0
        %2897 = vmatprep.subr.mxu0 0.0
        %2898 = vmatpush2.msra.mxu0 0.0
        %2899 = vmatprep.subr.mxu0 0.0
        %2900 = vmatpush2.msra.mxu0 0.0
        %2901 = vmatprep.mubr.f32.mxu0 0.0
        %2902 = vmatmul.mubr.f32.gmra.mxu0 %v2835
        %v2903 = vpop.f32.mrf.mxu0
        %v2904 = vadd.f32 %v1738, %v2903
        %v2905 = vpop.f32.mrf.mxu0
        %2906 = vdwg.mxu0
        %v2907 = vsel %vm704, %v1809, 0.0
        %v2908 = vsel %vm705, %v1882, 0.0
        %v2909 = vsel %vm706, %v1955, 0.0
        %v2910 = vsel %vm707, %v2028, 0.0
        %v2911 = vsel %vm708, %v2101, 0.0
        %v2912 = vsel %vm709, %v2174, 0.0
        %v2913 = vsel %vm710, %v2247, 0.0
        %v2914 = vsel %vm711, %v2320, 0.0
        %v2915 = vsel %vm712, %v2393, 0.0
        %v2916 = vsel %vm713, %v2466, 0.0
        %v2917 = vsel %vm714, %v2539, 0.0
        %v2918 = vsel %vm715, %v2612, 0.0
        %v2919 = vsel %vm716, %v2685, 0.0
        %v2920 = vsel %vm717, %v2758, 0.0
        %v2921 = vsel %vm718, %v2831, 0.0
        %v2922 = vsel %vm719, %v2904, 0.0
        %v2923 = vmul.f32 %v2907, %v592
        %v2924 = vmul.f32 %v2908, %v594
        %v2925 = vmul.f32 %v2909, %v596
        %v2926 = vmul.f32 %v2910, %v598
        %v2927 = vmul.f32 %v2911, %v600
        %v2928 = vmul.f32 %v2912, %v602
        %v2929 = vmul.f32 %v2913, %v604
        %v2930 = vmul.f32 %v2914, %v606
        %v2931 = vmul.f32 %v2915, %v608
        %v2932 = vmul.f32 %v2916, %v610
        %v2933 = vmul.f32 %v2917, %v612
        %v2934 = vmul.f32 %v2918, %v614
        %v2935 = vmul.f32 %v2919, %v616
        %v2936 = vmul.f32 %v2920, %v618
        %v2937 = vmul.f32 %v2921, %v620
        %v2938 = vmul.f32 %v2922, %v622
        %v2939 = vlaneseq
        %v2940 = vshrl.u32 %v2939, 7
        %v2941 = vsub.s32 0, %v2940
        %v2942 = vrot.slane %v1496, %v2941
        %v2943 = vlaneseq
        %v2944 = vshrl.u32 %v2943, 7
        %v2945 = vsub.s32 0, %v2944
        %v2946 = vrot.slane %v1501, %v2945
        %v2947 = vlaneseq
        %v2948 = vshrl.u32 %v2947, 7
        %v2949 = vsub.s32 0, %v2948
        %v2950 = vrot.slane %v1506, %v2949
        %v2951 = vlaneseq
        %v2952 = vshrl.u32 %v2951, 7
        %v2953 = vsub.s32 0, %v2952
        %v2954 = vrot.slane %v1511, %v2953
        %v2955 = vlaneseq
        %v2956 = vshrl.u32 %v2955, 7
        %v2957 = vsub.s32 0, %v2956
        %v2958 = vrot.slane %v1516, %v2957
        %v2959 = vlaneseq
        %v2960 = vshrl.u32 %v2959, 7
        %v2961 = vsub.s32 0, %v2960
        %v2962 = vrot.slane %v1521, %v2961
        %v2963 = vlaneseq
        %v2964 = vshrl.u32 %v2963, 7
        %v2965 = vsub.s32 0, %v2964
        %v2966 = vrot.slane %v1526, %v2965
        %v2967 = vlaneseq
        %v2968 = vshrl.u32 %v2967, 7
        %v2969 = vsub.s32 0, %v2968
        %v2970 = vrot.slane %v1531, %v2969
        %v2971 = vlaneseq
        %v2972 = vshrl.u32 %v2971, 7
        %v2973 = vsub.s32 0, %v2972
        %v2974 = vrot.slane %v1536, %v2973
        %v2975 = vlaneseq
        %v2976 = vshrl.u32 %v2975, 7
        %v2977 = vsub.s32 0, %v2976
        %v2978 = vrot.slane %v1541, %v2977
        %v2979 = vlaneseq
        %v2980 = vshrl.u32 %v2979, 7
        %v2981 = vsub.s32 0, %v2980
        %v2982 = vrot.slane %v1546, %v2981
        %v2983 = vlaneseq
        %v2984 = vshrl.u32 %v2983, 7
        %v2985 = vsub.s32 0, %v2984
        %v2986 = vrot.slane %v1551, %v2985
        %v2987 = vlaneseq
        %v2988 = vshrl.u32 %v2987, 7
        %v2989 = vsub.s32 0, %v2988
        %v2990 = vrot.slane %v1556, %v2989
        %v2991 = vlaneseq
        %v2992 = vshrl.u32 %v2991, 7
        %v2993 = vsub.s32 0, %v2992
        %v2994 = vrot.slane %v1561, %v2993
        %v2995 = vlaneseq
        %v2996 = vshrl.u32 %v2995, 7
        %v2997 = vsub.s32 0, %v2996
        %v2998 = vrot.slane %v1566, %v2997
        %v2999 = vlaneseq
        %v3000 = vshrl.u32 %v2999, 7
        %v3001 = vsub.s32 0, %v3000
        %v3002 = vrot.slane %v1571, %v3001
        %v3003 = vmax.f32 %v2942, -1e+30
        %v3004 = vmax.f32 %v2946, -1e+30
        %v3005 = vmax.f32 %v2950, -1e+30
        %v3006 = vmax.f32 %v2954, -1e+30
        %v3007 = vmax.f32 %v2958, -1e+30
        %v3008 = vmax.f32 %v2962, -1e+30
        %v3009 = vmax.f32 %v2966, -1e+30
        %v3010 = vmax.f32 %v2970, -1e+30
        %v3011 = vmax.f32 %v2974, -1e+30
        %v3012 = vmax.f32 %v2978, -1e+30
        %v3013 = vmax.f32 %v2982, -1e+30
        %v3014 = vmax.f32 %v2986, -1e+30
        %v3015 = vmax.f32 %v2990, -1e+30
        %v3016 = vmax.f32 %v2994, -1e+30
        %v3017 = vmax.f32 %v2998, -1e+30
        %v3018 = vmax.f32 %v3002, -1e+30
        %v3019 = vsel %vm800, %v3003, -1e+30
        %v3020 = vsel %vm801, %v3004, -1e+30
        %v3021 = vsel %vm802, %v3005, -1e+30
        %v3022 = vsel %vm803, %v3006, -1e+30
        %v3023 = vsel %vm804, %v3007, -1e+30
        %v3024 = vsel %vm805, %v3008, -1e+30
        %v3025 = vsel %vm806, %v3009, -1e+30
        %v3026 = vsel %vm807, %v3010, -1e+30
        %v3027 = vsel %vm808, %v3011, -1e+30
        %v3028 = vsel %vm809, %v3012, -1e+30
        %v3029 = vsel %vm810, %v3013, -1e+30
        %v3030 = vsel %vm811, %v3014, -1e+30
        %v3031 = vsel %vm812, %v3015, -1e+30
        %v3032 = vsel %vm813, %v3016, -1e+30
        %v3033 = vsel %vm814, %v3017, -1e+30
        %v3034 = vsel %vm815, %v3018, -1e+30
        %v3035 = vlaneseq
        %v3036 = vshrl.u32 %v3035, 7
        %v3037 = vsub.s32 1, %v3036
        %v3038 = vrot.slane %v1496, %v3037
        %v3039 = vlaneseq
        %v3040 = vshrl.u32 %v3039, 7
        %v3041 = vsub.s32 1, %v3040
        %v3042 = vrot.slane %v1501, %v3041
        %v3043 = vlaneseq
        %v3044 = vshrl.u32 %v3043, 7
        %v3045 = vsub.s32 1, %v3044
        %v3046 = vrot.slane %v1506, %v3045
        %v3047 = vlaneseq
        %v3048 = vshrl.u32 %v3047, 7
        %v3049 = vsub.s32 1, %v3048
        %v3050 = vrot.slane %v1511, %v3049
        %v3051 = vlaneseq
        %v3052 = vshrl.u32 %v3051, 7
        %v3053 = vsub.s32 1, %v3052
        %v3054 = vrot.slane %v1516, %v3053
        %v3055 = vlaneseq
        %v3056 = vshrl.u32 %v3055, 7
        %v3057 = vsub.s32 1, %v3056
        %v3058 = vrot.slane %v1521, %v3057
        %v3059 = vlaneseq
        %v3060 = vshrl.u32 %v3059, 7
        %v3061 = vsub.s32 1, %v3060
        %v3062 = vrot.slane %v1526, %v3061
        %v3063 = vlaneseq
        %v3064 = vshrl.u32 %v3063, 7
        %v3065 = vsub.s32 1, %v3064
        %v3066 = vrot.slane %v1531, %v3065
        %v3067 = vlaneseq
        %v3068 = vshrl.u32 %v3067, 7
        %v3069 = vsub.s32 1, %v3068
        %v3070 = vrot.slane %v1536, %v3069
        %v3071 = vlaneseq
        %v3072 = vshrl.u32 %v3071, 7
        %v3073 = vsub.s32 1, %v3072
        %v3074 = vrot.slane %v1541, %v3073
        %v3075 = vlaneseq
        %v3076 = vshrl.u32 %v3075, 7
        %v3077 = vsub.s32 1, %v3076
        %v3078 = vrot.slane %v1546, %v3077
        %v3079 = vlaneseq
        %v3080 = vshrl.u32 %v3079, 7
        %v3081 = vsub.s32 1, %v3080
        %v3082 = vrot.slane %v1551, %v3081
        %v3083 = vlaneseq
        %v3084 = vshrl.u32 %v3083, 7
        %v3085 = vsub.s32 1, %v3084
        %v3086 = vrot.slane %v1556, %v3085
        %v3087 = vlaneseq
        %v3088 = vshrl.u32 %v3087, 7
        %v3089 = vsub.s32 1, %v3088
        %v3090 = vrot.slane %v1561, %v3089
        %v3091 = vlaneseq
        %v3092 = vshrl.u32 %v3091, 7
        %v3093 = vsub.s32 1, %v3092
        %v3094 = vrot.slane %v1566, %v3093
        %v3095 = vlaneseq
        %v3096 = vshrl.u32 %v3095, 7
        %v3097 = vsub.s32 1, %v3096
        %v3098 = vrot.slane %v1571, %v3097
        %v3099 = vmax.f32 %v3019, %v3038
        %v3100 = vmax.f32 %v3020, %v3042
        %v3101 = vmax.f32 %v3021, %v3046
        %v3102 = vmax.f32 %v3022, %v3050
        %v3103 = vmax.f32 %v3023, %v3054
        %v3104 = vmax.f32 %v3024, %v3058
        %v3105 = vmax.f32 %v3025, %v3062
        %v3106 = vmax.f32 %v3026, %v3066
        %v3107 = vmax.f32 %v3027, %v3070
        %v3108 = vmax.f32 %v3028, %v3074
        %v3109 = vmax.f32 %v3029, %v3078
        %v3110 = vmax.f32 %v3030, %v3082
        %v3111 = vmax.f32 %v3031, %v3086
        %v3112 = vmax.f32 %v3032, %v3090
        %v3113 = vmax.f32 %v3033, %v3094
        %v3114 = vmax.f32 %v3034, %v3098
        %v3115 = vsel %vm864, %v3099, %v3019
        %v3116 = vsel %vm865, %v3100, %v3020
        %v3117 = vsel %vm866, %v3101, %v3021
        %v3118 = vsel %vm867, %v3102, %v3022
        %v3119 = vsel %vm868, %v3103, %v3023
        %v3120 = vsel %vm869, %v3104, %v3024
        %v3121 = vsel %vm870, %v3105, %v3025
        %v3122 = vsel %vm871, %v3106, %v3026
        %v3123 = vsel %vm872, %v3107, %v3027
        %v3124 = vsel %vm873, %v3108, %v3028
        %v3125 = vsel %vm874, %v3109, %v3029
        %v3126 = vsel %vm875, %v3110, %v3030
        %v3127 = vsel %vm876, %v3111, %v3031
        %v3128 = vsel %vm877, %v3112, %v3032
        %v3129 = vsel %vm878, %v3113, %v3033
        %v3130 = vsel %vm879, %v3114, %v3034
        %v3131 = vlaneseq
        %v3132 = vshrl.u32 %v3131, 7
        %v3133 = vsub.s32 2, %v3132
        %v3134 = vrot.slane %v1496, %v3133
        %v3135 = vlaneseq
        %v3136 = vshrl.u32 %v3135, 7
        %v3137 = vsub.s32 2, %v3136
        %v3138 = vrot.slane %v1501, %v3137
        %v3139 = vlaneseq
        %v3140 = vshrl.u32 %v3139, 7
        %v3141 = vsub.s32 2, %v3140
        %v3142 = vrot.slane %v1506, %v3141
        %v3143 = vlaneseq
        %v3144 = vshrl.u32 %v3143, 7
        %v3145 = vsub.s32 2, %v3144
        %v3146 = vrot.slane %v1511, %v3145
        %v3147 = vlaneseq
        %v3148 = vshrl.u32 %v3147, 7
        %v3149 = vsub.s32 2, %v3148
        %v3150 = vrot.slane %v1516, %v3149
        %v3151 = vlaneseq
        %v3152 = vshrl.u32 %v3151, 7
        %v3153 = vsub.s32 2, %v3152
        %v3154 = vrot.slane %v1521, %v3153
        %v3155 = vlaneseq
        %v3156 = vshrl.u32 %v3155, 7
        %v3157 = vsub.s32 2, %v3156
        %v3158 = vrot.slane %v1526, %v3157
        %v3159 = vlaneseq
        %v3160 = vshrl.u32 %v3159, 7
        %v3161 = vsub.s32 2, %v3160
        %v3162 = vrot.slane %v1531, %v3161
        %v3163 = vlaneseq
        %v3164 = vshrl.u32 %v3163, 7
        %v3165 = vsub.s32 2, %v3164
        %v3166 = vrot.slane %v1536, %v3165
        %v3167 = vlaneseq
        %v3168 = vshrl.u32 %v3167, 7
        %v3169 = vsub.s32 2, %v3168
        %v3170 = vrot.slane %v1541, %v3169
        %v3171 = vlaneseq
        %v3172 = vshrl.u32 %v3171, 7
        %v3173 = vsub.s32 2, %v3172
        %v3174 = vrot.slane %v1546, %v3173
        %v3175 = vlaneseq
        %v3176 = vshrl.u32 %v3175, 7
        %v3177 = vsub.s32 2, %v3176
        %v3178 = vrot.slane %v1551, %v3177
        %v3179 = vlaneseq
        %v3180 = vshrl.u32 %v3179, 7
        %v3181 = vsub.s32 2, %v3180
        %v3182 = vrot.slane %v1556, %v3181
        %v3183 = vlaneseq
        %v3184 = vshrl.u32 %v3183, 7
        %v3185 = vsub.s32 2, %v3184
        %v3186 = vrot.slane %v1561, %v3185
        %v3187 = vlaneseq
        %v3188 = vshrl.u32 %v3187, 7
        %v3189 = vsub.s32 2, %v3188
        %v3190 = vrot.slane %v1566, %v3189
        %v3191 = vlaneseq
        %v3192 = vshrl.u32 %v3191, 7
        %v3193 = vsub.s32 2, %v3192
        %v3194 = vrot.slane %v1571, %v3193
        %v3195 = vmax.f32 %v3115, %v3134
        %v3196 = vmax.f32 %v3116, %v3138
        %v3197 = vmax.f32 %v3117, %v3142
        %v3198 = vmax.f32 %v3118, %v3146
        %v3199 = vmax.f32 %v3119, %v3150
        %v3200 = vmax.f32 %v3120, %v3154
        %v3201 = vmax.f32 %v3121, %v3158
        %v3202 = vmax.f32 %v3122, %v3162
        %v3203 = vmax.f32 %v3123, %v3166
        %v3204 = vmax.f32 %v3124, %v3170
        %v3205 = vmax.f32 %v3125, %v3174
        %v3206 = vmax.f32 %v3126, %v3178
        %v3207 = vmax.f32 %v3127, %v3182
        %v3208 = vmax.f32 %v3128, %v3186
        %v3209 = vmax.f32 %v3129, %v3190
        %v3210 = vmax.f32 %v3130, %v3194
        %v3211 = vsel %vm928, %v3195, %v3115
        %v3212 = vsel %vm929, %v3196, %v3116
        %v3213 = vsel %vm930, %v3197, %v3117
        %v3214 = vsel %vm931, %v3198, %v3118
        %v3215 = vsel %vm932, %v3199, %v3119
        %v3216 = vsel %vm933, %v3200, %v3120
        %v3217 = vsel %vm934, %v3201, %v3121
        %v3218 = vsel %vm935, %v3202, %v3122
        %v3219 = vsel %vm936, %v3203, %v3123
        %v3220 = vsel %vm937, %v3204, %v3124
        %v3221 = vsel %vm938, %v3205, %v3125
        %v3222 = vsel %vm939, %v3206, %v3126
        %v3223 = vsel %vm940, %v3207, %v3127
        %v3224 = vsel %vm941, %v3208, %v3128
        %v3225 = vsel %vm942, %v3209, %v3129
        %v3226 = vsel %vm943, %v3210, %v3130
        %v3227 = vlaneseq
        %v3228 = vshrl.u32 %v3227, 7
        %v3229 = vsub.s32 3, %v3228
        %v3230 = vrot.slane %v1496, %v3229
        %v3231 = vlaneseq
        %v3232 = vshrl.u32 %v3231, 7
        %v3233 = vsub.s32 3, %v3232
        %v3234 = vrot.slane %v1501, %v3233
        %v3235 = vlaneseq
        %v3236 = vshrl.u32 %v3235, 7
        %v3237 = vsub.s32 3, %v3236
        %v3238 = vrot.slane %v1506, %v3237
        %v3239 = vlaneseq
        %v3240 = vshrl.u32 %v3239, 7
        %v3241 = vsub.s32 3, %v3240
        %v3242 = vrot.slane %v1511, %v3241
        %v3243 = vlaneseq
        %v3244 = vshrl.u32 %v3243, 7
        %v3245 = vsub.s32 3, %v3244
        %v3246 = vrot.slane %v1516, %v3245
        %v3247 = vlaneseq
        %v3248 = vshrl.u32 %v3247, 7
        %v3249 = vsub.s32 3, %v3248
        %v3250 = vrot.slane %v1521, %v3249
        %v3251 = vlaneseq
        %v3252 = vshrl.u32 %v3251, 7
        %v3253 = vsub.s32 3, %v3252
        %v3254 = vrot.slane %v1526, %v3253
        %v3255 = vlaneseq
        %v3256 = vshrl.u32 %v3255, 7
        %v3257 = vsub.s32 3, %v3256
        %v3258 = vrot.slane %v1531, %v3257
        %v3259 = vlaneseq
        %v3260 = vshrl.u32 %v3259, 7
        %v3261 = vsub.s32 3, %v3260
        %v3262 = vrot.slane %v1536, %v3261
        %v3263 = vlaneseq
        %v3264 = vshrl.u32 %v3263, 7
        %v3265 = vsub.s32 3, %v3264
        %v3266 = vrot.slane %v1541, %v3265
        %v3267 = vlaneseq
        %v3268 = vshrl.u32 %v3267, 7
        %v3269 = vsub.s32 3, %v3268
        %v3270 = vrot.slane %v1546, %v3269
        %v3271 = vlaneseq
        %v3272 = vshrl.u32 %v3271, 7
        %v3273 = vsub.s32 3, %v3272
        %v3274 = vrot.slane %v1551, %v3273
        %v3275 = vlaneseq
        %v3276 = vshrl.u32 %v3275, 7
        %v3277 = vsub.s32 3, %v3276
        %v3278 = vrot.slane %v1556, %v3277
        %v3279 = vlaneseq
        %v3280 = vshrl.u32 %v3279, 7
        %v3281 = vsub.s32 3, %v3280
        %v3282 = vrot.slane %v1561, %v3281
        %v3283 = vlaneseq
        %v3284 = vshrl.u32 %v3283, 7
        %v3285 = vsub.s32 3, %v3284
        %v3286 = vrot.slane %v1566, %v3285
        %v3287 = vlaneseq
        %v3288 = vshrl.u32 %v3287, 7
        %v3289 = vsub.s32 3, %v3288
        %v3290 = vrot.slane %v1571, %v3289
        %v3291 = vmax.f32 %v3211, %v3230
        %v3292 = vmax.f32 %v3212, %v3234
        %v3293 = vmax.f32 %v3213, %v3238
        %v3294 = vmax.f32 %v3214, %v3242
        %v3295 = vmax.f32 %v3215, %v3246
        %v3296 = vmax.f32 %v3216, %v3250
        %v3297 = vmax.f32 %v3217, %v3254
        %v3298 = vmax.f32 %v3218, %v3258
        %v3299 = vmax.f32 %v3219, %v3262
        %v3300 = vmax.f32 %v3220, %v3266
        %v3301 = vmax.f32 %v3221, %v3270
        %v3302 = vmax.f32 %v3222, %v3274
        %v3303 = vmax.f32 %v3223, %v3278
        %v3304 = vmax.f32 %v3224, %v3282
        %v3305 = vmax.f32 %v3225, %v3286
        %v3306 = vmax.f32 %v3226, %v3290
        %v3307 = vsel %vm992, %v3291, %v3211
        %v3308 = vsel %vm993, %v3292, %v3212
        %v3309 = vsel %vm994, %v3293, %v3213
        %v3310 = vsel %vm995, %v3294, %v3214
        %v3311 = vsel %vm996, %v3295, %v3215
        %v3312 = vsel %vm997, %v3296, %v3216
        %v3313 = vsel %vm998, %v3297, %v3217
        %v3314 = vsel %vm999, %v3298, %v3218
        %v3315 = vsel %vm1000, %v3299, %v3219
        %v3316 = vsel %vm1001, %v3300, %v3220
        %v3317 = vsel %vm1002, %v3301, %v3221
        %v3318 = vsel %vm1003, %v3302, %v3222
        %v3319 = vsel %vm1004, %v3303, %v3223
        %v3320 = vsel %vm1005, %v3304, %v3224
        %v3321 = vsel %vm1006, %v3305, %v3225
        %v3322 = vsel %vm1007, %v3306, %v3226
        %v3323 = vlaneseq
        %v3324 = vshrl.u32 %v3323, 7
        %v3325 = vsub.s32 4, %v3324
        %v3326 = vrot.slane %v1496, %v3325
        %v3327 = vlaneseq
        %v3328 = vshrl.u32 %v3327, 7
        %v3329 = vsub.s32 4, %v3328
        %v3330 = vrot.slane %v1501, %v3329
        %v3331 = vlaneseq
        %v3332 = vshrl.u32 %v3331, 7
        %v3333 = vsub.s32 4, %v3332
        %v3334 = vrot.slane %v1506, %v3333
        %v3335 = vlaneseq
        %v3336 = vshrl.u32 %v3335, 7
        %v3337 = vsub.s32 4, %v3336
        %v3338 = vrot.slane %v1511, %v3337
        %v3339 = vlaneseq
        %v3340 = vshrl.u32 %v3339, 7
        %v3341 = vsub.s32 4, %v3340
        %v3342 = vrot.slane %v1516, %v3341
        %v3343 = vlaneseq
        %v3344 = vshrl.u32 %v3343, 7
        %v3345 = vsub.s32 4, %v3344
        %v3346 = vrot.slane %v1521, %v3345
        %v3347 = vlaneseq
        %v3348 = vshrl.u32 %v3347, 7
        %v3349 = vsub.s32 4, %v3348
        %v3350 = vrot.slane %v1526, %v3349
        %v3351 = vlaneseq
        %v3352 = vshrl.u32 %v3351, 7
        %v3353 = vsub.s32 4, %v3352
        %v3354 = vrot.slane %v1531, %v3353
        %v3355 = vlaneseq
        %v3356 = vshrl.u32 %v3355, 7
        %v3357 = vsub.s32 4, %v3356
        %v3358 = vrot.slane %v1536, %v3357
        %v3359 = vlaneseq
        %v3360 = vshrl.u32 %v3359, 7
        %v3361 = vsub.s32 4, %v3360
        %v3362 = vrot.slane %v1541, %v3361
        %v3363 = vlaneseq
        %v3364 = vshrl.u32 %v3363, 7
        %v3365 = vsub.s32 4, %v3364
        %v3366 = vrot.slane %v1546, %v3365
        %v3367 = vlaneseq
        %v3368 = vshrl.u32 %v3367, 7
        %v3369 = vsub.s32 4, %v3368
        %v3370 = vrot.slane %v1551, %v3369
        %v3371 = vlaneseq
        %v3372 = vshrl.u32 %v3371, 7
        %v3373 = vsub.s32 4, %v3372
        %v3374 = vrot.slane %v1556, %v3373
        %v3375 = vlaneseq
        %v3376 = vshrl.u32 %v3375, 7
        %v3377 = vsub.s32 4, %v3376
        %v3378 = vrot.slane %v1561, %v3377
        %v3379 = vlaneseq
        %v3380 = vshrl.u32 %v3379, 7
        %v3381 = vsub.s32 4, %v3380
        %v3382 = vrot.slane %v1566, %v3381
        %v3383 = vlaneseq
        %v3384 = vshrl.u32 %v3383, 7
        %v3385 = vsub.s32 4, %v3384
        %v3386 = vrot.slane %v1571, %v3385
        %v3387 = vmax.f32 %v3307, %v3326
        %v3388 = vmax.f32 %v3308, %v3330
        %v3389 = vmax.f32 %v3309, %v3334
        %v3390 = vmax.f32 %v3310, %v3338
        %v3391 = vmax.f32 %v3311, %v3342
        %v3392 = vmax.f32 %v3312, %v3346
        %v3393 = vmax.f32 %v3313, %v3350
        %v3394 = vmax.f32 %v3314, %v3354
        %v3395 = vmax.f32 %v3315, %v3358
        %v3396 = vmax.f32 %v3316, %v3362
        %v3397 = vmax.f32 %v3317, %v3366
        %v3398 = vmax.f32 %v3318, %v3370
        %v3399 = vmax.f32 %v3319, %v3374
        %v3400 = vmax.f32 %v3320, %v3378
        %v3401 = vmax.f32 %v3321, %v3382
        %v3402 = vmax.f32 %v3322, %v3386
        %v3403 = vsel %vm1056, %v3387, %v3307
        %v3404 = vsel %vm1057, %v3388, %v3308
        %v3405 = vsel %vm1058, %v3389, %v3309
        %v3406 = vsel %vm1059, %v3390, %v3310
        %v3407 = vsel %vm1060, %v3391, %v3311
        %v3408 = vsel %vm1061, %v3392, %v3312
        %v3409 = vsel %vm1062, %v3393, %v3313
        %v3410 = vsel %vm1063, %v3394, %v3314
        %v3411 = vsel %vm1064, %v3395, %v3315
        %v3412 = vsel %vm1065, %v3396, %v3316
        %v3413 = vsel %vm1066, %v3397, %v3317
        %v3414 = vsel %vm1067, %v3398, %v3318
        %v3415 = vsel %vm1068, %v3399, %v3319
        %v3416 = vsel %vm1069, %v3400, %v3320
        %v3417 = vsel %vm1070, %v3401, %v3321
        %v3418 = vsel %vm1071, %v3402, %v3322
        %v3419 = vlaneseq
        %v3420 = vshrl.u32 %v3419, 7
        %v3421 = vsub.s32 5, %v3420
        %v3422 = vrot.slane %v1496, %v3421
        %v3423 = vlaneseq
        %v3424 = vshrl.u32 %v3423, 7
        %v3425 = vsub.s32 5, %v3424
        %v3426 = vrot.slane %v1501, %v3425
        %v3427 = vlaneseq
        %v3428 = vshrl.u32 %v3427, 7
        %v3429 = vsub.s32 5, %v3428
        %v3430 = vrot.slane %v1506, %v3429
        %v3431 = vlaneseq
        %v3432 = vshrl.u32 %v3431, 7
        %v3433 = vsub.s32 5, %v3432
        %v3434 = vrot.slane %v1511, %v3433
        %v3435 = vlaneseq
        %v3436 = vshrl.u32 %v3435, 7
        %v3437 = vsub.s32 5, %v3436
        %v3438 = vrot.slane %v1516, %v3437
        %v3439 = vlaneseq
        %v3440 = vshrl.u32 %v3439, 7
        %v3441 = vsub.s32 5, %v3440
        %v3442 = vrot.slane %v1521, %v3441
        %v3443 = vlaneseq
        %v3444 = vshrl.u32 %v3443, 7
        %v3445 = vsub.s32 5, %v3444
        %v3446 = vrot.slane %v1526, %v3445
        %v3447 = vlaneseq
        %v3448 = vshrl.u32 %v3447, 7
        %v3449 = vsub.s32 5, %v3448
        %v3450 = vrot.slane %v1531, %v3449
        %v3451 = vlaneseq
        %v3452 = vshrl.u32 %v3451, 7
        %v3453 = vsub.s32 5, %v3452
        %v3454 = vrot.slane %v1536, %v3453
        %v3455 = vlaneseq
        %v3456 = vshrl.u32 %v3455, 7
        %v3457 = vsub.s32 5, %v3456
        %v3458 = vrot.slane %v1541, %v3457
        %v3459 = vlaneseq
        %v3460 = vshrl.u32 %v3459, 7
        %v3461 = vsub.s32 5, %v3460
        %v3462 = vrot.slane %v1546, %v3461
        %v3463 = vlaneseq
        %v3464 = vshrl.u32 %v3463, 7
        %v3465 = vsub.s32 5, %v3464
        %v3466 = vrot.slane %v1551, %v3465
        %v3467 = vlaneseq
        %v3468 = vshrl.u32 %v3467, 7
        %v3469 = vsub.s32 5, %v3468
        %v3470 = vrot.slane %v1556, %v3469
        %v3471 = vlaneseq
        %v3472 = vshrl.u32 %v3471, 7
        %v3473 = vsub.s32 5, %v3472
        %v3474 = vrot.slane %v1561, %v3473
        %v3475 = vlaneseq
        %v3476 = vshrl.u32 %v3475, 7
        %v3477 = vsub.s32 5, %v3476
        %v3478 = vrot.slane %v1566, %v3477
        %v3479 = vlaneseq
        %v3480 = vshrl.u32 %v3479, 7
        %v3481 = vsub.s32 5, %v3480
        %v3482 = vrot.slane %v1571, %v3481
        %v3483 = vmax.f32 %v3403, %v3422
        %v3484 = vmax.f32 %v3404, %v3426
        %v3485 = vmax.f32 %v3405, %v3430
        %v3486 = vmax.f32 %v3406, %v3434
        %v3487 = vmax.f32 %v3407, %v3438
        %v3488 = vmax.f32 %v3408, %v3442
        %v3489 = vmax.f32 %v3409, %v3446
        %v3490 = vmax.f32 %v3410, %v3450
        %v3491 = vmax.f32 %v3411, %v3454
        %v3492 = vmax.f32 %v3412, %v3458
        %v3493 = vmax.f32 %v3413, %v3462
        %v3494 = vmax.f32 %v3414, %v3466
        %v3495 = vmax.f32 %v3415, %v3470
        %v3496 = vmax.f32 %v3416, %v3474
        %v3497 = vmax.f32 %v3417, %v3478
        %v3498 = vmax.f32 %v3418, %v3482
        %v3499 = vsel %vm1120, %v3483, %v3403
        %v3500 = vsel %vm1121, %v3484, %v3404
        %v3501 = vsel %vm1122, %v3485, %v3405
        %v3502 = vsel %vm1123, %v3486, %v3406
        %v3503 = vsel %vm1124, %v3487, %v3407
        %v3504 = vsel %vm1125, %v3488, %v3408
        %v3505 = vsel %vm1126, %v3489, %v3409
        %v3506 = vsel %vm1127, %v3490, %v3410
        %v3507 = vsel %vm1128, %v3491, %v3411
        %v3508 = vsel %vm1129, %v3492, %v3412
        %v3509 = vsel %vm1130, %v3493, %v3413
        %v3510 = vsel %vm1131, %v3494, %v3414
        %v3511 = vsel %vm1132, %v3495, %v3415
        %v3512 = vsel %vm1133, %v3496, %v3416
        %v3513 = vsel %vm1134, %v3497, %v3417
        %v3514 = vsel %vm1135, %v3498, %v3418
        %v3515 = vlaneseq
        %v3516 = vshrl.u32 %v3515, 7
        %v3517 = vsub.s32 6, %v3516
        %v3518 = vrot.slane %v1496, %v3517
        %v3519 = vlaneseq
        %v3520 = vshrl.u32 %v3519, 7
        %v3521 = vsub.s32 6, %v3520
        %v3522 = vrot.slane %v1501, %v3521
        %v3523 = vlaneseq
        %v3524 = vshrl.u32 %v3523, 7
        %v3525 = vsub.s32 6, %v3524
        %v3526 = vrot.slane %v1506, %v3525
        %v3527 = vlaneseq
        %v3528 = vshrl.u32 %v3527, 7
        %v3529 = vsub.s32 6, %v3528
        %v3530 = vrot.slane %v1511, %v3529
        %v3531 = vlaneseq
        %v3532 = vshrl.u32 %v3531, 7
        %v3533 = vsub.s32 6, %v3532
        %v3534 = vrot.slane %v1516, %v3533
        %v3535 = vlaneseq
        %v3536 = vshrl.u32 %v3535, 7
        %v3537 = vsub.s32 6, %v3536
        %v3538 = vrot.slane %v1521, %v3537
        %v3539 = vlaneseq
        %v3540 = vshrl.u32 %v3539, 7
        %v3541 = vsub.s32 6, %v3540
        %v3542 = vrot.slane %v1526, %v3541
        %v3543 = vlaneseq
        %v3544 = vshrl.u32 %v3543, 7
        %v3545 = vsub.s32 6, %v3544
        %v3546 = vrot.slane %v1531, %v3545
        %v3547 = vlaneseq
        %v3548 = vshrl.u32 %v3547, 7
        %v3549 = vsub.s32 6, %v3548
        %v3550 = vrot.slane %v1536, %v3549
        %v3551 = vlaneseq
        %v3552 = vshrl.u32 %v3551, 7
        %v3553 = vsub.s32 6, %v3552
        %v3554 = vrot.slane %v1541, %v3553
        %v3555 = vlaneseq
        %v3556 = vshrl.u32 %v3555, 7
        %v3557 = vsub.s32 6, %v3556
        %v3558 = vrot.slane %v1546, %v3557
        %v3559 = vlaneseq
        %v3560 = vshrl.u32 %v3559, 7
        %v3561 = vsub.s32 6, %v3560
        %v3562 = vrot.slane %v1551, %v3561
        %v3563 = vlaneseq
        %v3564 = vshrl.u32 %v3563, 7
        %v3565 = vsub.s32 6, %v3564
        %v3566 = vrot.slane %v1556, %v3565
        %v3567 = vlaneseq
        %v3568 = vshrl.u32 %v3567, 7
        %v3569 = vsub.s32 6, %v3568
        %v3570 = vrot.slane %v1561, %v3569
        %v3571 = vlaneseq
        %v3572 = vshrl.u32 %v3571, 7
        %v3573 = vsub.s32 6, %v3572
        %v3574 = vrot.slane %v1566, %v3573
        %v3575 = vlaneseq
        %v3576 = vshrl.u32 %v3575, 7
        %v3577 = vsub.s32 6, %v3576
        %v3578 = vrot.slane %v1571, %v3577
        %v3579 = vmax.f32 %v3499, %v3518
        %v3580 = vmax.f32 %v3500, %v3522
        %v3581 = vmax.f32 %v3501, %v3526
        %v3582 = vmax.f32 %v3502, %v3530
        %v3583 = vmax.f32 %v3503, %v3534
        %v3584 = vmax.f32 %v3504, %v3538
        %v3585 = vmax.f32 %v3505, %v3542
        %v3586 = vmax.f32 %v3506, %v3546
        %v3587 = vmax.f32 %v3507, %v3550
        %v3588 = vmax.f32 %v3508, %v3554
        %v3589 = vmax.f32 %v3509, %v3558
        %v3590 = vmax.f32 %v3510, %v3562
        %v3591 = vmax.f32 %v3511, %v3566
        %v3592 = vmax.f32 %v3512, %v3570
        %v3593 = vmax.f32 %v3513, %v3574
        %v3594 = vmax.f32 %v3514, %v3578
        %v3595 = vsel %vm1184, %v3579, %v3499
        %v3596 = vsel %vm1185, %v3580, %v3500
        %v3597 = vsel %vm1186, %v3581, %v3501
        %v3598 = vsel %vm1187, %v3582, %v3502
        %v3599 = vsel %vm1188, %v3583, %v3503
        %v3600 = vsel %vm1189, %v3584, %v3504
        %v3601 = vsel %vm1190, %v3585, %v3505
        %v3602 = vsel %vm1191, %v3586, %v3506
        %v3603 = vsel %vm1192, %v3587, %v3507
        %v3604 = vsel %vm1193, %v3588, %v3508
        %v3605 = vsel %vm1194, %v3589, %v3509
        %v3606 = vsel %vm1195, %v3590, %v3510
        %v3607 = vsel %vm1196, %v3591, %v3511
        %v3608 = vsel %vm1197, %v3592, %v3512
        %v3609 = vsel %vm1198, %v3593, %v3513
        %v3610 = vsel %vm1199, %v3594, %v3514
        %v3611 = vlaneseq
        %v3612 = vshrl.u32 %v3611, 7
        %v3613 = vsub.s32 7, %v3612
        %v3614 = vrot.slane %v1496, %v3613
        %v3615 = vlaneseq
        %v3616 = vshrl.u32 %v3615, 7
        %v3617 = vsub.s32 7, %v3616
        %v3618 = vrot.slane %v1501, %v3617
        %v3619 = vlaneseq
        %v3620 = vshrl.u32 %v3619, 7
        %v3621 = vsub.s32 7, %v3620
        %v3622 = vrot.slane %v1506, %v3621
        %v3623 = vlaneseq
        %v3624 = vshrl.u32 %v3623, 7
        %v3625 = vsub.s32 7, %v3624
        %v3626 = vrot.slane %v1511, %v3625
        %v3627 = vlaneseq
        %v3628 = vshrl.u32 %v3627, 7
        %v3629 = vsub.s32 7, %v3628
        %v3630 = vrot.slane %v1516, %v3629
        %v3631 = vlaneseq
        %v3632 = vshrl.u32 %v3631, 7
        %v3633 = vsub.s32 7, %v3632
        %v3634 = vrot.slane %v1521, %v3633
        %v3635 = vlaneseq
        %v3636 = vshrl.u32 %v3635, 7
        %v3637 = vsub.s32 7, %v3636
        %v3638 = vrot.slane %v1526, %v3637
        %v3639 = vlaneseq
        %v3640 = vshrl.u32 %v3639, 7
        %v3641 = vsub.s32 7, %v3640
        %v3642 = vrot.slane %v1531, %v3641
        %v3643 = vlaneseq
        %v3644 = vshrl.u32 %v3643, 7
        %v3645 = vsub.s32 7, %v3644
        %v3646 = vrot.slane %v1536, %v3645
        %v3647 = vlaneseq
        %v3648 = vshrl.u32 %v3647, 7
        %v3649 = vsub.s32 7, %v3648
        %v3650 = vrot.slane %v1541, %v3649
        %v3651 = vlaneseq
        %v3652 = vshrl.u32 %v3651, 7
        %v3653 = vsub.s32 7, %v3652
        %v3654 = vrot.slane %v1546, %v3653
        %v3655 = vlaneseq
        %v3656 = vshrl.u32 %v3655, 7
        %v3657 = vsub.s32 7, %v3656
        %v3658 = vrot.slane %v1551, %v3657
        %v3659 = vlaneseq
        %v3660 = vshrl.u32 %v3659, 7
        %v3661 = vsub.s32 7, %v3660
        %v3662 = vrot.slane %v1556, %v3661
        %v3663 = vlaneseq
        %v3664 = vshrl.u32 %v3663, 7
        %v3665 = vsub.s32 7, %v3664
        %v3666 = vrot.slane %v1561, %v3665
        %v3667 = vlaneseq
        %v3668 = vshrl.u32 %v3667, 7
        %v3669 = vsub.s32 7, %v3668
        %v3670 = vrot.slane %v1566, %v3669
        %v3671 = vlaneseq
        %v3672 = vshrl.u32 %v3671, 7
        %v3673 = vsub.s32 7, %v3672
        %v3674 = vrot.slane %v1571, %v3673
        %v3675 = vmax.f32 %v3595, %v3614
        %v3676 = vmax.f32 %v3596, %v3618
        %v3677 = vmax.f32 %v3597, %v3622
        %v3678 = vmax.f32 %v3598, %v3626
        %v3679 = vmax.f32 %v3599, %v3630
        %v3680 = vmax.f32 %v3600, %v3634
        %v3681 = vmax.f32 %v3601, %v3638
        %v3682 = vmax.f32 %v3602, %v3642
        %v3683 = vmax.f32 %v3603, %v3646
        %v3684 = vmax.f32 %v3604, %v3650
        %v3685 = vmax.f32 %v3605, %v3654
        %v3686 = vmax.f32 %v3606, %v3658
        %v3687 = vmax.f32 %v3607, %v3662
        %v3688 = vmax.f32 %v3608, %v3666
        %v3689 = vmax.f32 %v3609, %v3670
        %v3690 = vmax.f32 %v3610, %v3674
        %v3691 = vsel %vm1248, %v3675, %v3595
        %v3692 = vsel %vm1249, %v3676, %v3596
        %v3693 = vsel %vm1250, %v3677, %v3597
        %v3694 = vsel %vm1251, %v3678, %v3598
        %v3695 = vsel %vm1252, %v3679, %v3599
        %v3696 = vsel %vm1253, %v3680, %v3600
        %v3697 = vsel %vm1254, %v3681, %v3601
        %v3698 = vsel %vm1255, %v3682, %v3602
        %v3699 = vsel %vm1256, %v3683, %v3603
        %v3700 = vsel %vm1257, %v3684, %v3604
        %v3701 = vsel %vm1258, %v3685, %v3605
        %v3702 = vsel %vm1259, %v3686, %v3606
        %v3703 = vsel %vm1260, %v3687, %v3607
        %v3704 = vsel %vm1261, %v3688, %v3608
        %v3705 = vsel %vm1262, %v3689, %v3609
        %v3706 = vsel %vm1263, %v3690, %v3610
        %v3707 = vadd.f32 %v3691, %v1645
        %v3708 = vadd.f32 %v3692, %v1650
        %v3709 = vadd.f32 %v3693, %v1655
        %v3710 = vadd.f32 %v3694, %v1660
        %v3711 = vadd.f32 %v3695, %v1665
        %v3712 = vadd.f32 %v3696, %v1670
        %v3713 = vadd.f32 %v3697, %v1675
        %v3714 = vadd.f32 %v3698, %v1680
        %v3715 = vadd.f32 %v3699, %v1685
        %v3716 = vadd.f32 %v3700, %v1690
        %v3717 = vadd.f32 %v3701, %v1695
        %v3718 = vadd.f32 %v3702, %v1700
        %v3719 = vadd.f32 %v3703, %v1705
        %v3720 = vadd.f32 %v3704, %v1710
        %v3721 = vadd.f32 %v3705, %v1715
        %v3722 = vadd.f32 %v3706, %v1720
        %v3723 = vsel %vm704, %v3707, 0.0
        %v3724 = vsel %vm705, %v3708, 0.0
        %v3725 = vsel %vm706, %v3709, 0.0
        %v3726 = vsel %vm707, %v3710, 0.0
        %v3727 = vsel %vm708, %v3711, 0.0
        %v3728 = vsel %vm709, %v3712, 0.0
        %v3729 = vsel %vm710, %v3713, 0.0
        %v3730 = vsel %vm711, %v3714, 0.0
        %v3731 = vsel %vm712, %v3715, 0.0
        %v3732 = vsel %vm713, %v3716, 0.0
        %v3733 = vsel %vm714, %v3717, 0.0
        %v3734 = vsel %vm715, %v3718, 0.0
        %v3735 = vsel %vm716, %v3719, 0.0
        %v3736 = vsel %vm717, %v3720, 0.0
        %v3737 = vsel %vm718, %v3721, 0.0
        %v3738 = vsel %vm719, %v3722, 0.0
        %v3739 = vmul.f32 %v2923, %v672
        %v3740 = vmul.f32 %v2924, %v673
        %v3741 = vmul.f32 %v2925, %v674
        %v3742 = vmul.f32 %v2926, %v675
        %v3743 = vmul.f32 %v2927, %v676
        %v3744 = vmul.f32 %v2928, %v677
        %v3745 = vmul.f32 %v2929, %v678
        %v3746 = vmul.f32 %v2930, %v679
        %v3747 = vmul.f32 %v2931, %v680
        %v3748 = vmul.f32 %v2932, %v681
        %v3749 = vmul.f32 %v2933, %v682
        %v3750 = vmul.f32 %v2934, %v683
        %v3751 = vmul.f32 %v2935, %v684
        %v3752 = vmul.f32 %v2936, %v685
        %v3753 = vmul.f32 %v2937, %v686
        %v3754 = vmul.f32 %v2938, %v687
        %v3755 = vmul.f32 %v3723, %v672
        %v3756 = vmul.f32 %v3724, %v673
        %v3757 = vmul.f32 %v3725, %v674
        %v3758 = vmul.f32 %v3726, %v675
        %v3759 = vmul.f32 %v3727, %v676
        %v3760 = vmul.f32 %v3728, %v677
        %v3761 = vmul.f32 %v3729, %v678
        %v3762 = vmul.f32 %v3730, %v679
        %v3763 = vmul.f32 %v3731, %v680
        %v3764 = vmul.f32 %v3732, %v681
        %v3765 = vmul.f32 %v3733, %v682
        %v3766 = vmul.f32 %v3734, %v683
        %v3767 = vmul.f32 %v3735, %v684
        %v3768 = vmul.f32 %v3736, %v685
        %v3769 = vmul.f32 %v3737, %v686
        %v3770 = vmul.f32 %v3738, %v687
        %v3771 = vmul.f32 %v2907, %v672
        %v3772 = vmul.f32 %v2908, %v673
        %v3773 = vmul.f32 %v2909, %v674
        %v3774 = vmul.f32 %v2910, %v675
        %v3775 = vmul.f32 %v2911, %v676
        %v3776 = vmul.f32 %v2912, %v677
        %v3777 = vmul.f32 %v2913, %v678
        %v3778 = vmul.f32 %v2914, %v679
        %v3779 = vmul.f32 %v2915, %v680
        %v3780 = vmul.f32 %v2916, %v681
        %v3781 = vmul.f32 %v2917, %v682
        %v3782 = vmul.f32 %v2918, %v683
        %v3783 = vmul.f32 %v2919, %v684
        %v3784 = vmul.f32 %v2920, %v685
        %v3785 = vmul.f32 %v2921, %v686
        %v3786 = vmul.f32 %v2922, %v687
        %v3787 = vlaneseq
        %v3788 = vshrl.u32 %v3787, 7
        %v3789 = vsub.s32 0, %v3788
        %v3790 = vrot.slane %v1425, %v3789
        %3791 = vmatprep.subr.mxu0 0.0
        %3792 = vmatpush1.msra.mxu0 %v1311
        %3793 = vmatprep.subr.mxu0 0.0
        %3794 = vmatpush1.msra.mxu0 %v1310
        %3795 = vmatprep.subr.mxu0 0.0
        %3796 = vmatpush1.msra.mxu0 %v1309
        %3797 = vmatprep.subr.mxu0 0.0
        %3798 = vmatpush1.msra.mxu0 %v1308
        %3799 = vmatprep.subr.mxu0 0.0
        %3800 = vmatpush1.msra.mxu0 %v1307
        %3801 = vmatprep.subr.mxu0 0.0
        %3802 = vmatpush1.msra.mxu0 %v1306
        %3803 = vmatprep.subr.mxu0 0.0
        %3804 = vmatpush1.msra.mxu0 %v1305
        %3805 = vmatprep.subr.mxu0 0.0
        %3806 = vmatpush1.msra.mxu0 %v1304
        %3807 = vmatprep.subr.mxu0 0.0
        %3808 = vmatpush1.msra.mxu0 %v1303
        %3809 = vmatprep.subr.mxu0 0.0
        %3810 = vmatpush1.msra.mxu0 %v1302
        %3811 = vmatprep.subr.mxu0 0.0
        %3812 = vmatpush1.msra.mxu0 %v1301
        %3813 = vmatprep.subr.mxu0 0.0
        %3814 = vmatpush1.msra.mxu0 %v1300
        %3815 = vmatprep.subr.mxu0 0.0
        %3816 = vmatpush1.msra.mxu0 %v1299
        %3817 = vmatprep.subr.mxu0 0.0
        %3818 = vmatpush1.msra.mxu0 %v1298
        %3819 = vmatprep.subr.mxu0 0.0
        %3820 = vmatpush1.msra.mxu0 %v1297
        %3821 = vmatprep.subr.mxu0 0.0
        %3822 = vmatpush1.msra.mxu0 %v1296
        %3823 = vmatprep.subr.mxu0 0.0
        %3824 = vmatpush2.msra.mxu0 %v1327
        %3825 = vmatprep.subr.mxu0 0.0
        %3826 = vmatpush2.msra.mxu0 %v1326
        %3827 = vmatprep.subr.mxu0 0.0
        %3828 = vmatpush2.msra.mxu0 %v1325
        %3829 = vmatprep.subr.mxu0 0.0
        %3830 = vmatpush2.msra.mxu0 %v1324
        %3831 = vmatprep.subr.mxu0 0.0
        %3832 = vmatpush2.msra.mxu0 %v1323
        %3833 = vmatprep.subr.mxu0 0.0
        %3834 = vmatpush2.msra.mxu0 %v1322
        %3835 = vmatprep.subr.mxu0 0.0
        %3836 = vmatpush2.msra.mxu0 %v1321
        %3837 = vmatprep.subr.mxu0 0.0
        %3838 = vmatpush2.msra.mxu0 %v1320
        %3839 = vmatprep.subr.mxu0 0.0
        %3840 = vmatpush2.msra.mxu0 %v1319
        %3841 = vmatprep.subr.mxu0 0.0
        %3842 = vmatpush2.msra.mxu0 %v1318
        %3843 = vmatprep.subr.mxu0 0.0
        %3844 = vmatpush2.msra.mxu0 %v1317
        %3845 = vmatprep.subr.mxu0 0.0
        %3846 = vmatpush2.msra.mxu0 %v1316
        %3847 = vmatprep.subr.mxu0 0.0
        %3848 = vmatpush2.msra.mxu0 %v1315
        %3849 = vmatprep.subr.mxu0 0.0
        %3850 = vmatpush2.msra.mxu0 %v1314
        %3851 = vmatprep.subr.mxu0 0.0
        %3852 = vmatpush2.msra.mxu0 %v1313
        %3853 = vmatprep.subr.mxu0 0.0
        %3854 = vmatpush2.msra.mxu0 %v1312
        %3855 = vmatprep.mubr.f32.mxu0 %v2923
        %3856 = vmatmul.mubr.f32.gmra.mxu0 %v432
        %v3857 = vpop.f32.mrf.mxu0
        %v3858 = vadd.f32 %v3790, %v3857
        %v3859 = vpop.f32.mrf.mxu0
        %3860 = vmatprep.mubr.f32.mxu0 %v2924
        %3861 = vmatmul.mubr.f32.gmra.mxu0 %v437
        %v3862 = vpop.f32.mrf.mxu0
        %v3863 = vadd.f32 %v3790, %v3862
        %v3864 = vpop.f32.mrf.mxu0
        %3865 = vmatprep.mubr.f32.mxu0 %v2925
        %3866 = vmatmul.mubr.f32.gmra.mxu0 %v442
        %v3867 = vpop.f32.mrf.mxu0
        %v3868 = vadd.f32 %v3790, %v3867
        %v3869 = vpop.f32.mrf.mxu0
        %3870 = vmatprep.mubr.f32.mxu0 %v2926
        %3871 = vmatmul.mubr.f32.gmra.mxu0 %v447
        %v3872 = vpop.f32.mrf.mxu0
        %v3873 = vadd.f32 %v3790, %v3872
        %v3874 = vpop.f32.mrf.mxu0
        %3875 = vmatprep.mubr.f32.mxu0 %v2927
        %3876 = vmatmul.mubr.f32.gmra.mxu0 %v452
        %v3877 = vpop.f32.mrf.mxu0
        %v3878 = vadd.f32 %v3790, %v3877
        %v3879 = vpop.f32.mrf.mxu0
        %3880 = vmatprep.mubr.f32.mxu0 %v2928
        %3881 = vmatmul.mubr.f32.gmra.mxu0 %v457
        %v3882 = vpop.f32.mrf.mxu0
        %v3883 = vadd.f32 %v3790, %v3882
        %v3884 = vpop.f32.mrf.mxu0
        %3885 = vmatprep.mubr.f32.mxu0 %v2929
        %3886 = vmatmul.mubr.f32.gmra.mxu0 %v462
        %v3887 = vpop.f32.mrf.mxu0
        %v3888 = vadd.f32 %v3790, %v3887
        %v3889 = vpop.f32.mrf.mxu0
        %3890 = vmatprep.mubr.f32.mxu0 %v2930
        %3891 = vmatmul.mubr.f32.gmra.mxu0 %v467
        %v3892 = vpop.f32.mrf.mxu0
        %v3893 = vadd.f32 %v3790, %v3892
        %v3894 = vpop.f32.mrf.mxu0
        %3895 = vmatprep.mubr.f32.mxu0 %v2931
        %3896 = vmatmul.mubr.f32.gmra.mxu0 %v472
        %v3897 = vpop.f32.mrf.mxu0
        %v3898 = vadd.f32 %v3790, %v3897
        %v3899 = vpop.f32.mrf.mxu0
        %3900 = vmatprep.mubr.f32.mxu0 %v2932
        %3901 = vmatmul.mubr.f32.gmra.mxu0 %v477
        %v3902 = vpop.f32.mrf.mxu0
        %v3903 = vadd.f32 %v3790, %v3902
        %v3904 = vpop.f32.mrf.mxu0
        %3905 = vmatprep.mubr.f32.mxu0 %v2933
        %3906 = vmatmul.mubr.f32.gmra.mxu0 %v482
        %v3907 = vpop.f32.mrf.mxu0
        %v3908 = vadd.f32 %v3790, %v3907
        %v3909 = vpop.f32.mrf.mxu0
        %3910 = vmatprep.mubr.f32.mxu0 %v2934
        %3911 = vmatmul.mubr.f32.gmra.mxu0 %v487
        %v3912 = vpop.f32.mrf.mxu0
        %v3913 = vadd.f32 %v3790, %v3912
        %v3914 = vpop.f32.mrf.mxu0
        %3915 = vmatprep.mubr.f32.mxu0 %v2935
        %3916 = vmatmul.mubr.f32.gmra.mxu0 %v492
        %v3917 = vpop.f32.mrf.mxu0
        %v3918 = vadd.f32 %v3790, %v3917
        %v3919 = vpop.f32.mrf.mxu0
        %3920 = vmatprep.mubr.f32.mxu0 %v2936
        %3921 = vmatmul.mubr.f32.gmra.mxu0 %v497
        %v3922 = vpop.f32.mrf.mxu0
        %v3923 = vadd.f32 %v3790, %v3922
        %v3924 = vpop.f32.mrf.mxu0
        %3925 = vmatprep.mubr.f32.mxu0 %v2937
        %3926 = vmatmul.mubr.f32.gmra.mxu0 %v502
        %v3927 = vpop.f32.mrf.mxu0
        %v3928 = vadd.f32 %v3790, %v3927
        %v3929 = vpop.f32.mrf.mxu0
        %3930 = vmatprep.mubr.f32.mxu0 %v2938
        %3931 = vmatmul.mubr.f32.gmra.mxu0 %v507
        %v3932 = vpop.f32.mrf.mxu0
        %v3933 = vadd.f32 %v3790, %v3932
        %v3934 = vpop.f32.mrf.mxu0
        %3935 = vdwg.mxu0
        %3936 = vmatprep.subr.mxu0 0.0
        %3937 = vmatpush1.msra.mxu0 %v1343
        %3938 = vmatprep.subr.mxu0 0.0
        %3939 = vmatpush1.msra.mxu0 %v1342
        %3940 = vmatprep.subr.mxu0 0.0
        %3941 = vmatpush1.msra.mxu0 %v1341
        %3942 = vmatprep.subr.mxu0 0.0
        %3943 = vmatpush1.msra.mxu0 %v1340
        %3944 = vmatprep.subr.mxu0 0.0
        %3945 = vmatpush1.msra.mxu0 %v1339
        %3946 = vmatprep.subr.mxu0 0.0
        %3947 = vmatpush1.msra.mxu0 %v1338
        %3948 = vmatprep.subr.mxu0 0.0
        %3949 = vmatpush1.msra.mxu0 %v1337
        %3950 = vmatprep.subr.mxu0 0.0
        %3951 = vmatpush1.msra.mxu0 %v1336
        %3952 = vmatprep.subr.mxu0 0.0
        %3953 = vmatpush1.msra.mxu0 %v1335
        %3954 = vmatprep.subr.mxu0 0.0
        %3955 = vmatpush1.msra.mxu0 %v1334
        %3956 = vmatprep.subr.mxu0 0.0
        %3957 = vmatpush1.msra.mxu0 %v1333
        %3958 = vmatprep.subr.mxu0 0.0
        %3959 = vmatpush1.msra.mxu0 %v1332
        %3960 = vmatprep.subr.mxu0 0.0
        %3961 = vmatpush1.msra.mxu0 %v1331
        %3962 = vmatprep.subr.mxu0 0.0
        %3963 = vmatpush1.msra.mxu0 %v1330
        %3964 = vmatprep.subr.mxu0 0.0
        %3965 = vmatpush1.msra.mxu0 %v1329
        %3966 = vmatprep.subr.mxu0 0.0
        %3967 = vmatpush1.msra.mxu0 %v1328
        %3968 = vmatprep.subr.mxu0 0.0
        %3969 = vmatpush2.msra.mxu0 %v1359
        %3970 = vmatprep.subr.mxu0 0.0
        %3971 = vmatpush2.msra.mxu0 %v1358
        %3972 = vmatprep.subr.mxu0 0.0
        %3973 = vmatpush2.msra.mxu0 %v1357
        %3974 = vmatprep.subr.mxu0 0.0
        %3975 = vmatpush2.msra.mxu0 %v1356
        %3976 = vmatprep.subr.mxu0 0.0
        %3977 = vmatpush2.msra.mxu0 %v1355
        %3978 = vmatprep.subr.mxu0 0.0
        %3979 = vmatpush2.msra.mxu0 %v1354
        %3980 = vmatprep.subr.mxu0 0.0
        %3981 = vmatpush2.msra.mxu0 %v1353
        %3982 = vmatprep.subr.mxu0 0.0
        %3983 = vmatpush2.msra.mxu0 %v1352
        %3984 = vmatprep.subr.mxu0 0.0
        %3985 = vmatpush2.msra.mxu0 %v1351
        %3986 = vmatprep.subr.mxu0 0.0
        %3987 = vmatpush2.msra.mxu0 %v1350
        %3988 = vmatprep.subr.mxu0 0.0
        %3989 = vmatpush2.msra.mxu0 %v1349
        %3990 = vmatprep.subr.mxu0 0.0
        %3991 = vmatpush2.msra.mxu0 %v1348
        %3992 = vmatprep.subr.mxu0 0.0
        %3993 = vmatpush2.msra.mxu0 %v1347
        %3994 = vmatprep.subr.mxu0 0.0
        %3995 = vmatpush2.msra.mxu0 %v1346
        %3996 = vmatprep.subr.mxu0 0.0
        %3997 = vmatpush2.msra.mxu0 %v1345
        %3998 = vmatprep.subr.mxu0 0.0
        %3999 = vmatpush2.msra.mxu0 %v1344
        %4000 = vmatprep.mubr.f32.mxu0 %v2907
        %4001 = vmatmul.mubr.f32.gmra.mxu0 %v3723
        %v4002 = vpop.f32.mrf.mxu0
        %v4003 = vadd.f32 %v3858, %v4002
        %v4004 = vpop.f32.mrf.mxu0
        %4005 = vmatprep.mubr.f32.mxu0 %v2908
        %4006 = vmatmul.mubr.f32.gmra.mxu0 %v3724
        %v4007 = vpop.f32.mrf.mxu0
        %v4008 = vadd.f32 %v3863, %v4007
        %v4009 = vpop.f32.mrf.mxu0
        %4010 = vmatprep.mubr.f32.mxu0 %v2909
        %4011 = vmatmul.mubr.f32.gmra.mxu0 %v3725
        %v4012 = vpop.f32.mrf.mxu0
        %v4013 = vadd.f32 %v3868, %v4012
        %v4014 = vpop.f32.mrf.mxu0
        %4015 = vmatprep.mubr.f32.mxu0 %v2910
        %4016 = vmatmul.mubr.f32.gmra.mxu0 %v3726
        %v4017 = vpop.f32.mrf.mxu0
        %v4018 = vadd.f32 %v3873, %v4017
        %v4019 = vpop.f32.mrf.mxu0
        %4020 = vmatprep.mubr.f32.mxu0 %v2911
        %4021 = vmatmul.mubr.f32.gmra.mxu0 %v3727
        %v4022 = vpop.f32.mrf.mxu0
        %v4023 = vadd.f32 %v3878, %v4022
        %v4024 = vpop.f32.mrf.mxu0
        %4025 = vmatprep.mubr.f32.mxu0 %v2912
        %4026 = vmatmul.mubr.f32.gmra.mxu0 %v3728
        %v4027 = vpop.f32.mrf.mxu0
        %v4028 = vadd.f32 %v3883, %v4027
        %v4029 = vpop.f32.mrf.mxu0
        %4030 = vmatprep.mubr.f32.mxu0 %v2913
        %4031 = vmatmul.mubr.f32.gmra.mxu0 %v3729
        %v4032 = vpop.f32.mrf.mxu0
        %v4033 = vadd.f32 %v3888, %v4032
        %v4034 = vpop.f32.mrf.mxu0
        %4035 = vmatprep.mubr.f32.mxu0 %v2914
        %4036 = vmatmul.mubr.f32.gmra.mxu0 %v3730
        %v4037 = vpop.f32.mrf.mxu0
        %v4038 = vadd.f32 %v3893, %v4037
        %v4039 = vpop.f32.mrf.mxu0
        %4040 = vmatprep.mubr.f32.mxu0 %v2915
        %4041 = vmatmul.mubr.f32.gmra.mxu0 %v3731
        %v4042 = vpop.f32.mrf.mxu0
        %v4043 = vadd.f32 %v3898, %v4042
        %v4044 = vpop.f32.mrf.mxu0
        %4045 = vmatprep.mubr.f32.mxu0 %v2916
        %4046 = vmatmul.mubr.f32.gmra.mxu0 %v3732
        %v4047 = vpop.f32.mrf.mxu0
        %v4048 = vadd.f32 %v3903, %v4047
        %v4049 = vpop.f32.mrf.mxu0
        %4050 = vmatprep.mubr.f32.mxu0 %v2917
        %4051 = vmatmul.mubr.f32.gmra.mxu0 %v3733
        %v4052 = vpop.f32.mrf.mxu0
        %v4053 = vadd.f32 %v3908, %v4052
        %v4054 = vpop.f32.mrf.mxu0
        %4055 = vmatprep.mubr.f32.mxu0 %v2918
        %4056 = vmatmul.mubr.f32.gmra.mxu0 %v3734
        %v4057 = vpop.f32.mrf.mxu0
        %v4058 = vadd.f32 %v3913, %v4057
        %v4059 = vpop.f32.mrf.mxu0
        %4060 = vmatprep.mubr.f32.mxu0 %v2919
        %4061 = vmatmul.mubr.f32.gmra.mxu0 %v3735
        %v4062 = vpop.f32.mrf.mxu0
        %v4063 = vadd.f32 %v3918, %v4062
        %v4064 = vpop.f32.mrf.mxu0
        %4065 = vmatprep.mubr.f32.mxu0 %v2920
        %4066 = vmatmul.mubr.f32.gmra.mxu0 %v3736
        %v4067 = vpop.f32.mrf.mxu0
        %v4068 = vadd.f32 %v3923, %v4067
        %v4069 = vpop.f32.mrf.mxu0
        %4070 = vmatprep.mubr.f32.mxu0 %v2921
        %4071 = vmatmul.mubr.f32.gmra.mxu0 %v3737
        %v4072 = vpop.f32.mrf.mxu0
        %v4073 = vadd.f32 %v3928, %v4072
        %v4074 = vpop.f32.mrf.mxu0
        %4075 = vmatprep.mubr.f32.mxu0 %v2922
        %4076 = vmatmul.mubr.f32.gmra.mxu0 %v3738
        %v4077 = vpop.f32.mrf.mxu0
        %v4078 = vadd.f32 %v3933, %v4077
        %v4079 = vpop.f32.mrf.mxu0
        %4080 = vdwg.mxu0
        %4081 = vmatprep.subr.mxu0 0.0
        %4082 = vmatpush1.msra.mxu0 %v1375
        %4083 = vmatprep.subr.mxu0 0.0
        %4084 = vmatpush1.msra.mxu0 %v1374
        %4085 = vmatprep.subr.mxu0 0.0
        %4086 = vmatpush1.msra.mxu0 %v1373
        %4087 = vmatprep.subr.mxu0 0.0
        %4088 = vmatpush1.msra.mxu0 %v1372
        %4089 = vmatprep.subr.mxu0 0.0
        %4090 = vmatpush1.msra.mxu0 %v1371
        %4091 = vmatprep.subr.mxu0 0.0
        %4092 = vmatpush1.msra.mxu0 %v1370
        %4093 = vmatprep.subr.mxu0 0.0
        %4094 = vmatpush1.msra.mxu0 %v1369
        %4095 = vmatprep.subr.mxu0 0.0
        %4096 = vmatpush1.msra.mxu0 %v1368
        %4097 = vmatprep.subr.mxu0 0.0
        %4098 = vmatpush1.msra.mxu0 %v1367
        %4099 = vmatprep.subr.mxu0 0.0
        %4100 = vmatpush1.msra.mxu0 %v1366
        %4101 = vmatprep.subr.mxu0 0.0
        %4102 = vmatpush1.msra.mxu0 %v1365
        %4103 = vmatprep.subr.mxu0 0.0
        %4104 = vmatpush1.msra.mxu0 %v1364
        %4105 = vmatprep.subr.mxu0 0.0
        %4106 = vmatpush1.msra.mxu0 %v1363
        %4107 = vmatprep.subr.mxu0 0.0
        %4108 = vmatpush1.msra.mxu0 %v1362
        %4109 = vmatprep.subr.mxu0 0.0
        %4110 = vmatpush1.msra.mxu0 %v1361
        %4111 = vmatprep.subr.mxu0 0.0
        %4112 = vmatpush1.msra.mxu0 %v1360
        %4113 = vmatprep.subr.mxu0 0.0
        %4114 = vmatpush2.msra.mxu0 %v1391
        %4115 = vmatprep.subr.mxu0 0.0
        %4116 = vmatpush2.msra.mxu0 %v1390
        %4117 = vmatprep.subr.mxu0 0.0
        %4118 = vmatpush2.msra.mxu0 %v1389
        %4119 = vmatprep.subr.mxu0 0.0
        %4120 = vmatpush2.msra.mxu0 %v1388
        %4121 = vmatprep.subr.mxu0 0.0
        %4122 = vmatpush2.msra.mxu0 %v1387
        %4123 = vmatprep.subr.mxu0 0.0
        %4124 = vmatpush2.msra.mxu0 %v1386
        %4125 = vmatprep.subr.mxu0 0.0
        %4126 = vmatpush2.msra.mxu0 %v1385
        %4127 = vmatprep.subr.mxu0 0.0
        %4128 = vmatpush2.msra.mxu0 %v1384
        %4129 = vmatprep.subr.mxu0 0.0
        %4130 = vmatpush2.msra.mxu0 %v1383
        %4131 = vmatprep.subr.mxu0 0.0
        %4132 = vmatpush2.msra.mxu0 %v1382
        %4133 = vmatprep.subr.mxu0 0.0
        %4134 = vmatpush2.msra.mxu0 %v1381
        %4135 = vmatprep.subr.mxu0 0.0
        %4136 = vmatpush2.msra.mxu0 %v1380
        %4137 = vmatprep.subr.mxu0 0.0
        %4138 = vmatpush2.msra.mxu0 %v1379
        %4139 = vmatprep.subr.mxu0 0.0
        %4140 = vmatpush2.msra.mxu0 %v1378
        %4141 = vmatprep.subr.mxu0 0.0
        %4142 = vmatpush2.msra.mxu0 %v1377
        %4143 = vmatprep.subr.mxu0 0.0
        %4144 = vmatpush2.msra.mxu0 %v1376
        %4145 = vmatprep.mubr.f32.mxu0 %v3755
        %4146 = vmatmul.mubr.f32.gmra.mxu0 %v3739
        %v4147 = vpop.f32.mrf.mxu0
        %v4148 = vadd.f32 %v4003, %v4147
        %v4149 = vpop.f32.mrf.mxu0
        %4150 = vmatprep.mubr.f32.mxu0 %v3756
        %4151 = vmatmul.mubr.f32.gmra.mxu0 %v3740
        %v4152 = vpop.f32.mrf.mxu0
        %v4153 = vadd.f32 %v4008, %v4152
        %v4154 = vpop.f32.mrf.mxu0
        %4155 = vmatprep.mubr.f32.mxu0 %v3757
        %4156 = vmatmul.mubr.f32.gmra.mxu0 %v3741
        %v4157 = vpop.f32.mrf.mxu0
        %v4158 = vadd.f32 %v4013, %v4157
        %v4159 = vpop.f32.mrf.mxu0
        %4160 = vmatprep.mubr.f32.mxu0 %v3758
        %4161 = vmatmul.mubr.f32.gmra.mxu0 %v3742
        %v4162 = vpop.f32.mrf.mxu0
        %v4163 = vadd.f32 %v4018, %v4162
        %v4164 = vpop.f32.mrf.mxu0
        %4165 = vmatprep.mubr.f32.mxu0 %v3759
        %4166 = vmatmul.mubr.f32.gmra.mxu0 %v3743
        %v4167 = vpop.f32.mrf.mxu0
        %v4168 = vadd.f32 %v4023, %v4167
        %v4169 = vpop.f32.mrf.mxu0
        %4170 = vmatprep.mubr.f32.mxu0 %v3760
        %4171 = vmatmul.mubr.f32.gmra.mxu0 %v3744
        %v4172 = vpop.f32.mrf.mxu0
        %v4173 = vadd.f32 %v4028, %v4172
        %v4174 = vpop.f32.mrf.mxu0
        %4175 = vmatprep.mubr.f32.mxu0 %v3761
        %4176 = vmatmul.mubr.f32.gmra.mxu0 %v3745
        %v4177 = vpop.f32.mrf.mxu0
        %v4178 = vadd.f32 %v4033, %v4177
        %v4179 = vpop.f32.mrf.mxu0
        %4180 = vmatprep.mubr.f32.mxu0 %v3762
        %4181 = vmatmul.mubr.f32.gmra.mxu0 %v3746
        %v4182 = vpop.f32.mrf.mxu0
        %v4183 = vadd.f32 %v4038, %v4182
        %v4184 = vpop.f32.mrf.mxu0
        %4185 = vmatprep.mubr.f32.mxu0 %v3763
        %4186 = vmatmul.mubr.f32.gmra.mxu0 %v3747
        %v4187 = vpop.f32.mrf.mxu0
        %v4188 = vadd.f32 %v4043, %v4187
        %v4189 = vpop.f32.mrf.mxu0
        %4190 = vmatprep.mubr.f32.mxu0 %v3764
        %4191 = vmatmul.mubr.f32.gmra.mxu0 %v3748
        %v4192 = vpop.f32.mrf.mxu0
        %v4193 = vadd.f32 %v4048, %v4192
        %v4194 = vpop.f32.mrf.mxu0
        %4195 = vmatprep.mubr.f32.mxu0 %v3765
        %4196 = vmatmul.mubr.f32.gmra.mxu0 %v3749
        %v4197 = vpop.f32.mrf.mxu0
        %v4198 = vadd.f32 %v4053, %v4197
        %v4199 = vpop.f32.mrf.mxu0
        %4200 = vmatprep.mubr.f32.mxu0 %v3766
        %4201 = vmatmul.mubr.f32.gmra.mxu0 %v3750
        %v4202 = vpop.f32.mrf.mxu0
        %v4203 = vadd.f32 %v4058, %v4202
        %v4204 = vpop.f32.mrf.mxu0
        %4205 = vmatprep.mubr.f32.mxu0 %v3767
        %4206 = vmatmul.mubr.f32.gmra.mxu0 %v3751
        %v4207 = vpop.f32.mrf.mxu0
        %v4208 = vadd.f32 %v4063, %v4207
        %v4209 = vpop.f32.mrf.mxu0
        %4210 = vmatprep.mubr.f32.mxu0 %v3768
        %4211 = vmatmul.mubr.f32.gmra.mxu0 %v3752
        %v4212 = vpop.f32.mrf.mxu0
        %v4213 = vadd.f32 %v4068, %v4212
        %v4214 = vpop.f32.mrf.mxu0
        %4215 = vmatprep.mubr.f32.mxu0 %v3769
        %4216 = vmatmul.mubr.f32.gmra.mxu0 %v3753
        %v4217 = vpop.f32.mrf.mxu0
        %v4218 = vadd.f32 %v4073, %v4217
        %v4219 = vpop.f32.mrf.mxu0
        %4220 = vmatprep.mubr.f32.mxu0 %v3770
        %4221 = vmatmul.mubr.f32.gmra.mxu0 %v3754
        %v4222 = vpop.f32.mrf.mxu0
        %v4223 = vadd.f32 %v4078, %v4222
        %v4224 = vpop.f32.mrf.mxu0
        %4225 = vdwg.mxu0
        %4226 = vmatprep.subr.mxu0 0.0
        %4227 = vmatpush1.msra.mxu0 %v1407
        %4228 = vmatprep.subr.mxu0 0.0
        %4229 = vmatpush1.msra.mxu0 %v1406
        %4230 = vmatprep.subr.mxu0 0.0
        %4231 = vmatpush1.msra.mxu0 %v1405
        %4232 = vmatprep.subr.mxu0 0.0
        %4233 = vmatpush1.msra.mxu0 %v1404
        %4234 = vmatprep.subr.mxu0 0.0
        %4235 = vmatpush1.msra.mxu0 %v1403
        %4236 = vmatprep.subr.mxu0 0.0
        %4237 = vmatpush1.msra.mxu0 %v1402
        %4238 = vmatprep.subr.mxu0 0.0
        %4239 = vmatpush1.msra.mxu0 %v1401
        %4240 = vmatprep.subr.mxu0 0.0
        %4241 = vmatpush1.msra.mxu0 %v1400
        %4242 = vmatprep.subr.mxu0 0.0
        %4243 = vmatpush1.msra.mxu0 %v1399
        %4244 = vmatprep.subr.mxu0 0.0
        %4245 = vmatpush1.msra.mxu0 %v1398
        %4246 = vmatprep.subr.mxu0 0.0
        %4247 = vmatpush1.msra.mxu0 %v1397
        %4248 = vmatprep.subr.mxu0 0.0
        %4249 = vmatpush1.msra.mxu0 %v1396
        %4250 = vmatprep.subr.mxu0 0.0
        %4251 = vmatpush1.msra.mxu0 %v1395
        %4252 = vmatprep.subr.mxu0 0.0
        %4253 = vmatpush1.msra.mxu0 %v1394
        %4254 = vmatprep.subr.mxu0 0.0
        %4255 = vmatpush1.msra.mxu0 %v1393
        %4256 = vmatprep.subr.mxu0 0.0
        %4257 = vmatpush1.msra.mxu0 %v1392
        %4258 = vmatprep.subr.mxu0 0.0
        %4259 = vmatpush2.msra.mxu0 0.0
        %4260 = vmatprep.subr.mxu0 0.0
        %4261 = vmatpush2.msra.mxu0 0.0
        %4262 = vmatprep.subr.mxu0 0.0
        %4263 = vmatpush2.msra.mxu0 0.0
        %4264 = vmatprep.subr.mxu0 0.0
        %4265 = vmatpush2.msra.mxu0 0.0
        %4266 = vmatprep.subr.mxu0 0.0
        %4267 = vmatpush2.msra.mxu0 0.0
        %4268 = vmatprep.subr.mxu0 0.0
        %4269 = vmatpush2.msra.mxu0 0.0
        %4270 = vmatprep.subr.mxu0 0.0
        %4271 = vmatpush2.msra.mxu0 0.0
        %4272 = vmatprep.subr.mxu0 0.0
        %4273 = vmatpush2.msra.mxu0 0.0
        %4274 = vmatprep.subr.mxu0 0.0
        %4275 = vmatpush2.msra.mxu0 0.0
        %4276 = vmatprep.subr.mxu0 0.0
        %4277 = vmatpush2.msra.mxu0 0.0
        %4278 = vmatprep.subr.mxu0 0.0
        %4279 = vmatpush2.msra.mxu0 0.0
        %4280 = vmatprep.subr.mxu0 0.0
        %4281 = vmatpush2.msra.mxu0 0.0
        %4282 = vmatprep.subr.mxu0 0.0
        %4283 = vmatpush2.msra.mxu0 0.0
        %4284 = vmatprep.subr.mxu0 0.0
        %4285 = vmatpush2.msra.mxu0 0.0
        %4286 = vmatprep.subr.mxu0 0.0
        %4287 = vmatpush2.msra.mxu0 0.0
        %4288 = vmatprep.subr.mxu0 0.0
        %4289 = vmatpush2.msra.mxu0 0.0
        %4290 = vmatprep.mubr.f32.mxu0 0.0
        %4291 = vmatmul.mubr.f32.gmra.mxu0 %v3771
        %v4292 = vpop.f32.mrf.mxu0
        %v4293 = vadd.f32 %v4148, %v4292
        %v4294 = vpop.f32.mrf.mxu0
        %4295 = vmatprep.mubr.f32.mxu0 0.0
        %4296 = vmatmul.mubr.f32.gmra.mxu0 %v3772
        %v4297 = vpop.f32.mrf.mxu0
        %v4298 = vadd.f32 %v4153, %v4297
        %v4299 = vpop.f32.mrf.mxu0
        %4300 = vmatprep.mubr.f32.mxu0 0.0
        %4301 = vmatmul.mubr.f32.gmra.mxu0 %v3773
        %v4302 = vpop.f32.mrf.mxu0
        %v4303 = vadd.f32 %v4158, %v4302
        %v4304 = vpop.f32.mrf.mxu0
        %4305 = vmatprep.mubr.f32.mxu0 0.0
        %4306 = vmatmul.mubr.f32.gmra.mxu0 %v3774
        %v4307 = vpop.f32.mrf.mxu0
        %v4308 = vadd.f32 %v4163, %v4307
        %v4309 = vpop.f32.mrf.mxu0
        %4310 = vmatprep.mubr.f32.mxu0 0.0
        %4311 = vmatmul.mubr.f32.gmra.mxu0 %v3775
        %v4312 = vpop.f32.mrf.mxu0
        %v4313 = vadd.f32 %v4168, %v4312
        %v4314 = vpop.f32.mrf.mxu0
        %4315 = vmatprep.mubr.f32.mxu0 0.0
        %4316 = vmatmul.mubr.f32.gmra.mxu0 %v3776
        %v4317 = vpop.f32.mrf.mxu0
        %v4318 = vadd.f32 %v4173, %v4317
        %v4319 = vpop.f32.mrf.mxu0
        %4320 = vmatprep.mubr.f32.mxu0 0.0
        %4321 = vmatmul.mubr.f32.gmra.mxu0 %v3777
        %v4322 = vpop.f32.mrf.mxu0
        %v4323 = vadd.f32 %v4178, %v4322
        %v4324 = vpop.f32.mrf.mxu0
        %4325 = vmatprep.mubr.f32.mxu0 0.0
        %4326 = vmatmul.mubr.f32.gmra.mxu0 %v3778
        %v4327 = vpop.f32.mrf.mxu0
        %v4328 = vadd.f32 %v4183, %v4327
        %v4329 = vpop.f32.mrf.mxu0
        %4330 = vmatprep.mubr.f32.mxu0 0.0
        %4331 = vmatmul.mubr.f32.gmra.mxu0 %v3779
        %v4332 = vpop.f32.mrf.mxu0
        %v4333 = vadd.f32 %v4188, %v4332
        %v4334 = vpop.f32.mrf.mxu0
        %4335 = vmatprep.mubr.f32.mxu0 0.0
        %4336 = vmatmul.mubr.f32.gmra.mxu0 %v3780
        %v4337 = vpop.f32.mrf.mxu0
        %v4338 = vadd.f32 %v4193, %v4337
        %v4339 = vpop.f32.mrf.mxu0
        %4340 = vmatprep.mubr.f32.mxu0 0.0
        %4341 = vmatmul.mubr.f32.gmra.mxu0 %v3781
        %v4342 = vpop.f32.mrf.mxu0
        %v4343 = vadd.f32 %v4198, %v4342
        %v4344 = vpop.f32.mrf.mxu0
        %4345 = vmatprep.mubr.f32.mxu0 0.0
        %4346 = vmatmul.mubr.f32.gmra.mxu0 %v3782
        %v4347 = vpop.f32.mrf.mxu0
        %v4348 = vadd.f32 %v4203, %v4347
        %v4349 = vpop.f32.mrf.mxu0
        %4350 = vmatprep.mubr.f32.mxu0 0.0
        %4351 = vmatmul.mubr.f32.gmra.mxu0 %v3783
        %v4352 = vpop.f32.mrf.mxu0
        %v4353 = vadd.f32 %v4208, %v4352
        %v4354 = vpop.f32.mrf.mxu0
        %4355 = vmatprep.mubr.f32.mxu0 0.0
        %4356 = vmatmul.mubr.f32.gmra.mxu0 %v3784
        %v4357 = vpop.f32.mrf.mxu0
        %v4358 = vadd.f32 %v4213, %v4357
        %v4359 = vpop.f32.mrf.mxu0
        %4360 = vmatprep.mubr.f32.mxu0 0.0
        %4361 = vmatmul.mubr.f32.gmra.mxu0 %v3785
        %v4362 = vpop.f32.mrf.mxu0
        %v4363 = vadd.f32 %v4218, %v4362
        %v4364 = vpop.f32.mrf.mxu0
        %4365 = vmatprep.mubr.f32.mxu0 0.0
        %4366 = vmatmul.mubr.f32.gmra.mxu0 %v3786
        %v4367 = vpop.f32.mrf.mxu0
        %v4368 = vadd.f32 %v4223, %v4367
        %v4369 = vpop.f32.mrf.mxu0
        %4370 = vdwg.mxu0
        %v4371 = vmul.f32 %v4293, 0.35355338
        %v4372 = vmul.f32 %v4298, 0.35355338
        %v4373 = vmul.f32 %v4303, 0.35355338
        %v4374 = vmul.f32 %v4308, 0.35355338
        %v4375 = vmul.f32 %v4313, 0.35355338
        %v4376 = vmul.f32 %v4318, 0.35355338
        %v4377 = vmul.f32 %v4323, 0.35355338
        %v4378 = vmul.f32 %v4328, 0.35355338
        %v4379 = vmul.f32 %v4333, 0.35355338
        %v4380 = vmul.f32 %v4338, 0.35355338
        %v4381 = vmul.f32 %v4343, 0.35355338
        %v4382 = vmul.f32 %v4348, 0.35355338
        %v4383 = vmul.f32 %v4353, 0.35355338
        %v4384 = vmul.f32 %v4358, 0.35355338
        %v4385 = vmul.f32 %v4363, 0.35355338
        %v4386 = vmul.f32 %v4368, 0.35355338
        %v4387 = vrot.slane %v4371, 4
        %v4388 = vadd.f32 %v4371, %v4387
        %v4389 = vrot.slane %v4388, 2
        %v4390 = vadd.f32 %v4388, %v4389
        %v4391 = vrot.slane %v4390, 1
        %v4392 = vadd.f32 %v4390, %v4391
        %v4393 = vrot.slane %v4372, 4
        %v4394 = vadd.f32 %v4372, %v4393
        %v4395 = vrot.slane %v4394, 2
        %v4396 = vadd.f32 %v4394, %v4395
        %v4397 = vrot.slane %v4396, 1
        %v4398 = vadd.f32 %v4396, %v4397
        %v4399 = vrot.slane %v4373, 4
        %v4400 = vadd.f32 %v4373, %v4399
        %v4401 = vrot.slane %v4400, 2
        %v4402 = vadd.f32 %v4400, %v4401
        %v4403 = vrot.slane %v4402, 1
        %v4404 = vadd.f32 %v4402, %v4403
        %v4405 = vrot.slane %v4374, 4
        %v4406 = vadd.f32 %v4374, %v4405
        %v4407 = vrot.slane %v4406, 2
        %v4408 = vadd.f32 %v4406, %v4407
        %v4409 = vrot.slane %v4408, 1
        %v4410 = vadd.f32 %v4408, %v4409
        %v4411 = vrot.slane %v4375, 4
        %v4412 = vadd.f32 %v4375, %v4411
        %v4413 = vrot.slane %v4412, 2
        %v4414 = vadd.f32 %v4412, %v4413
        %v4415 = vrot.slane %v4414, 1
        %v4416 = vadd.f32 %v4414, %v4415
        %v4417 = vrot.slane %v4376, 4
        %v4418 = vadd.f32 %v4376, %v4417
        %v4419 = vrot.slane %v4418, 2
        %v4420 = vadd.f32 %v4418, %v4419
        %v4421 = vrot.slane %v4420, 1
        %v4422 = vadd.f32 %v4420, %v4421
        %v4423 = vrot.slane %v4377, 4
        %v4424 = vadd.f32 %v4377, %v4423
        %v4425 = vrot.slane %v4424, 2
        %v4426 = vadd.f32 %v4424, %v4425
        %v4427 = vrot.slane %v4426, 1
        %v4428 = vadd.f32 %v4426, %v4427
        %v4429 = vrot.slane %v4378, 4
        %v4430 = vadd.f32 %v4378, %v4429
        %v4431 = vrot.slane %v4430, 2
        %v4432 = vadd.f32 %v4430, %v4431
        %v4433 = vrot.slane %v4432, 1
        %v4434 = vadd.f32 %v4432, %v4433
        %v4435 = vrot.slane %v4379, 4
        %v4436 = vadd.f32 %v4379, %v4435
        %v4437 = vrot.slane %v4436, 2
        %v4438 = vadd.f32 %v4436, %v4437
        %v4439 = vrot.slane %v4438, 1
        %v4440 = vadd.f32 %v4438, %v4439
        %v4441 = vrot.slane %v4380, 4
        %v4442 = vadd.f32 %v4380, %v4441
        %v4443 = vrot.slane %v4442, 2
        %v4444 = vadd.f32 %v4442, %v4443
        %v4445 = vrot.slane %v4444, 1
        %v4446 = vadd.f32 %v4444, %v4445
        %v4447 = vrot.slane %v4381, 4
        %v4448 = vadd.f32 %v4381, %v4447
        %v4449 = vrot.slane %v4448, 2
        %v4450 = vadd.f32 %v4448, %v4449
        %v4451 = vrot.slane %v4450, 1
        %v4452 = vadd.f32 %v4450, %v4451
        %v4453 = vrot.slane %v4382, 4
        %v4454 = vadd.f32 %v4382, %v4453
        %v4455 = vrot.slane %v4454, 2
        %v4456 = vadd.f32 %v4454, %v4455
        %v4457 = vrot.slane %v4456, 1
        %v4458 = vadd.f32 %v4456, %v4457
        %v4459 = vrot.slane %v4383, 4
        %v4460 = vadd.f32 %v4383, %v4459
        %v4461 = vrot.slane %v4460, 2
        %v4462 = vadd.f32 %v4460, %v4461
        %v4463 = vrot.slane %v4462, 1
        %v4464 = vadd.f32 %v4462, %v4463
        %v4465 = vrot.slane %v4384, 4
        %v4466 = vadd.f32 %v4384, %v4465
        %v4467 = vrot.slane %v4466, 2
        %v4468 = vadd.f32 %v4466, %v4467
        %v4469 = vrot.slane %v4468, 1
        %v4470 = vadd.f32 %v4468, %v4469
        %v4471 = vrot.slane %v4385, 4
        %v4472 = vadd.f32 %v4385, %v4471
        %v4473 = vrot.slane %v4472, 2
        %v4474 = vadd.f32 %v4472, %v4473
        %v4475 = vrot.slane %v4474, 1
        %v4476 = vadd.f32 %v4474, %v4475
        %v4477 = vrot.slane %v4386, 4
        %v4478 = vadd.f32 %v4386, %v4477
        %v4479 = vrot.slane %v4478, 2
        %v4480 = vadd.f32 %v4478, %v4479
        %v4481 = vrot.slane %v4480, 1
        %v4482 = vadd.f32 %v4480, %v4481
        %v4483 = vrcp.pop 8.0
        %v4484 = vmul.f32 %v4392, %v4483
        %v4485 = vmul.f32 %v4398, %v4483
        %v4486 = vmul.f32 %v4404, %v4483
        %v4487 = vmul.f32 %v4410, %v4483
        %v4488 = vmul.f32 %v4416, %v4483
        %v4489 = vmul.f32 %v4422, %v4483
        %v4490 = vmul.f32 %v4428, %v4483
        %v4491 = vmul.f32 %v4434, %v4483
        %v4492 = vmul.f32 %v4440, %v4483
        %v4493 = vmul.f32 %v4446, %v4483
        %v4494 = vmul.f32 %v4452, %v4483
        %v4495 = vmul.f32 %v4458, %v4483
        %v4496 = vmul.f32 %v4464, %v4483
        %v4497 = vmul.f32 %v4470, %v4483
        %v4498 = vmul.f32 %v4476, %v4483
        %v4499 = vmul.f32 %v4482, %v4483
        %v4500 = vsub.f32 %v4371, %v4484
        %v4501 = vsub.f32 %v4372, %v4485
        %v4502 = vsub.f32 %v4373, %v4486
        %v4503 = vsub.f32 %v4374, %v4487
        %v4504 = vsub.f32 %v4375, %v4488
        %v4505 = vsub.f32 %v4376, %v4489
        %v4506 = vsub.f32 %v4377, %v4490
        %v4507 = vsub.f32 %v4378, %v4491
        %v4508 = vsub.f32 %v4379, %v4492
        %v4509 = vsub.f32 %v4380, %v4493
        %v4510 = vsub.f32 %v4381, %v4494
        %v4511 = vsub.f32 %v4382, %v4495
        %v4512 = vsub.f32 %v4383, %v4496
        %v4513 = vsub.f32 %v4384, %v4497
        %v4514 = vsub.f32 %v4385, %v4498
        %v4515 = vsub.f32 %v4386, %v4499
        %v4516 = vmul.f32 %v4500, %v4500
        %v4517 = vmul.f32 %v4501, %v4501
        %v4518 = vmul.f32 %v4502, %v4502
        %v4519 = vmul.f32 %v4503, %v4503
        %v4520 = vmul.f32 %v4504, %v4504
        %v4521 = vmul.f32 %v4505, %v4505
        %v4522 = vmul.f32 %v4506, %v4506
        %v4523 = vmul.f32 %v4507, %v4507
        %v4524 = vmul.f32 %v4508, %v4508
        %v4525 = vmul.f32 %v4509, %v4509
        %v4526 = vmul.f32 %v4510, %v4510
        %v4527 = vmul.f32 %v4511, %v4511
        %v4528 = vmul.f32 %v4512, %v4512
        %v4529 = vmul.f32 %v4513, %v4513
        %v4530 = vmul.f32 %v4514, %v4514
        %v4531 = vmul.f32 %v4515, %v4515
        %v4532 = vrot.slane %v4516, 4
        %v4533 = vadd.f32 %v4516, %v4532
        %v4534 = vrot.slane %v4533, 2
        %v4535 = vadd.f32 %v4533, %v4534
        %v4536 = vrot.slane %v4535, 1
        %v4537 = vadd.f32 %v4535, %v4536
        %v4538 = vrot.slane %v4517, 4
        %v4539 = vadd.f32 %v4517, %v4538
        %v4540 = vrot.slane %v4539, 2
        %v4541 = vadd.f32 %v4539, %v4540
        %v4542 = vrot.slane %v4541, 1
        %v4543 = vadd.f32 %v4541, %v4542
        %v4544 = vrot.slane %v4518, 4
        %v4545 = vadd.f32 %v4518, %v4544
        %v4546 = vrot.slane %v4545, 2
        %v4547 = vadd.f32 %v4545, %v4546
        %v4548 = vrot.slane %v4547, 1
        %v4549 = vadd.f32 %v4547, %v4548
        %v4550 = vrot.slane %v4519, 4
        %v4551 = vadd.f32 %v4519, %v4550
        %v4552 = vrot.slane %v4551, 2
        %v4553 = vadd.f32 %v4551, %v4552
        %v4554 = vrot.slane %v4553, 1
        %v4555 = vadd.f32 %v4553, %v4554
        %v4556 = vrot.slane %v4520, 4
        %v4557 = vadd.f32 %v4520, %v4556
        %v4558 = vrot.slane %v4557, 2
        %v4559 = vadd.f32 %v4557, %v4558
        %v4560 = vrot.slane %v4559, 1
        %v4561 = vadd.f32 %v4559, %v4560
        %v4562 = vrot.slane %v4521, 4
        %v4563 = vadd.f32 %v4521, %v4562
        %v4564 = vrot.slane %v4563, 2
        %v4565 = vadd.f32 %v4563, %v4564
        %v4566 = vrot.slane %v4565, 1
        %v4567 = vadd.f32 %v4565, %v4566
        %v4568 = vrot.slane %v4522, 4
        %v4569 = vadd.f32 %v4522, %v4568
        %v4570 = vrot.slane %v4569, 2
        %v4571 = vadd.f32 %v4569, %v4570
        %v4572 = vrot.slane %v4571, 1
        %v4573 = vadd.f32 %v4571, %v4572
        %v4574 = vrot.slane %v4523, 4
        %v4575 = vadd.f32 %v4523, %v4574
        %v4576 = vrot.slane %v4575, 2
        %v4577 = vadd.f32 %v4575, %v4576
        %v4578 = vrot.slane %v4577, 1
        %v4579 = vadd.f32 %v4577, %v4578
        %v4580 = vrot.slane %v4524, 4
        %v4581 = vadd.f32 %v4524, %v4580
        %v4582 = vrot.slane %v4581, 2
        %v4583 = vadd.f32 %v4581, %v4582
        %v4584 = vrot.slane %v4583, 1
        %v4585 = vadd.f32 %v4583, %v4584
        %v4586 = vrot.slane %v4525, 4
        %v4587 = vadd.f32 %v4525, %v4586
        %v4588 = vrot.slane %v4587, 2
        %v4589 = vadd.f32 %v4587, %v4588
        %v4590 = vrot.slane %v4589, 1
        %v4591 = vadd.f32 %v4589, %v4590
        %v4592 = vrot.slane %v4526, 4
        %v4593 = vadd.f32 %v4526, %v4592
        %v4594 = vrot.slane %v4593, 2
        %v4595 = vadd.f32 %v4593, %v4594
        %v4596 = vrot.slane %v4595, 1
        %v4597 = vadd.f32 %v4595, %v4596
        %v4598 = vrot.slane %v4527, 4
        %v4599 = vadd.f32 %v4527, %v4598
        %v4600 = vrot.slane %v4599, 2
        %v4601 = vadd.f32 %v4599, %v4600
        %v4602 = vrot.slane %v4601, 1
        %v4603 = vadd.f32 %v4601, %v4602
        %v4604 = vrot.slane %v4528, 4
        %v4605 = vadd.f32 %v4528, %v4604
        %v4606 = vrot.slane %v4605, 2
        %v4607 = vadd.f32 %v4605, %v4606
        %v4608 = vrot.slane %v4607, 1
        %v4609 = vadd.f32 %v4607, %v4608
        %v4610 = vrot.slane %v4529, 4
        %v4611 = vadd.f32 %v4529, %v4610
        %v4612 = vrot.slane %v4611, 2
        %v4613 = vadd.f32 %v4611, %v4612
        %v4614 = vrot.slane %v4613, 1
        %v4615 = vadd.f32 %v4613, %v4614
        %v4616 = vrot.slane %v4530, 4
        %v4617 = vadd.f32 %v4530, %v4616
        %v4618 = vrot.slane %v4617, 2
        %v4619 = vadd.f32 %v4617, %v4618
        %v4620 = vrot.slane %v4619, 1
        %v4621 = vadd.f32 %v4619, %v4620
        %v4622 = vrot.slane %v4531, 4
        %v4623 = vadd.f32 %v4531, %v4622
        %v4624 = vrot.slane %v4623, 2
        %v4625 = vadd.f32 %v4623, %v4624
        %v4626 = vrot.slane %v4625, 1
        %v4627 = vadd.f32 %v4625, %v4626
        %v4628 = vmul.f32 %v4537, %v4483
        %v4629 = vmul.f32 %v4543, %v4483
        %v4630 = vmul.f32 %v4549, %v4483
        %v4631 = vmul.f32 %v4555, %v4483
        %v4632 = vmul.f32 %v4561, %v4483
        %v4633 = vmul.f32 %v4567, %v4483
        %v4634 = vmul.f32 %v4573, %v4483
        %v4635 = vmul.f32 %v4579, %v4483
        %v4636 = vmul.f32 %v4585, %v4483
        %v4637 = vmul.f32 %v4591, %v4483
        %v4638 = vmul.f32 %v4597, %v4483
        %v4639 = vmul.f32 %v4603, %v4483
        %v4640 = vmul.f32 %v4609, %v4483
        %v4641 = vmul.f32 %v4615, %v4483
        %v4642 = vmul.f32 %v4621, %v4483
        %v4643 = vmul.f32 %v4627, %v4483
        %v4644 = vadd.f32 %v4628, 1e-05
        %v4645 = vadd.f32 %v4629, 1e-05
        %v4646 = vadd.f32 %v4630, 1e-05
        %v4647 = vadd.f32 %v4631, 1e-05
        %v4648 = vadd.f32 %v4632, 1e-05
        %v4649 = vadd.f32 %v4633, 1e-05
        %v4650 = vadd.f32 %v4634, 1e-05
        %v4651 = vadd.f32 %v4635, 1e-05
        %v4652 = vadd.f32 %v4636, 1e-05
        %v4653 = vadd.f32 %v4637, 1e-05
        %v4654 = vadd.f32 %v4638, 1e-05
        %v4655 = vadd.f32 %v4639, 1e-05
        %v4656 = vadd.f32 %v4640, 1e-05
        %v4657 = vadd.f32 %v4641, 1e-05
        %v4658 = vadd.f32 %v4642, 1e-05
        %v4659 = vadd.f32 %v4643, 1e-05
        %v4660 = vrsqrt.pop %v4644
        %v4661 = vrsqrt.pop %v4645
        %v4662 = vrsqrt.pop %v4646
        %v4663 = vrsqrt.pop %v4647
        %v4664 = vrsqrt.pop %v4648
        %v4665 = vrsqrt.pop %v4649
        %v4666 = vrsqrt.pop %v4650
        %v4667 = vrsqrt.pop %v4651
        %v4668 = vrsqrt.pop %v4652
        %v4669 = vrsqrt.pop %v4653
        %v4670 = vrsqrt.pop %v4654
        %v4671 = vrsqrt.pop %v4655
        %v4672 = vrsqrt.pop %v4656
        %v4673 = vrsqrt.pop %v4657
        %v4674 = vrsqrt.pop %v4658
        %v4675 = vrsqrt.pop %v4659
        %v4676 = vmul.f32 %v4500, %v4660
        %v4677 = vmul.f32 %v4501, %v4661
        %v4678 = vmul.f32 %v4502, %v4662
        %v4679 = vmul.f32 %v4503, %v4663
        %v4680 = vmul.f32 %v4504, %v4664
        %v4681 = vmul.f32 %v4505, %v4665
        %v4682 = vmul.f32 %v4506, %v4666
        %v4683 = vmul.f32 %v4507, %v4667
        %v4684 = vmul.f32 %v4508, %v4668
        %v4685 = vmul.f32 %v4509, %v4669
        %v4686 = vmul.f32 %v4510, %v4670
        %v4687 = vmul.f32 %v4511, %v4671
        %v4688 = vmul.f32 %v4512, %v4672
        %v4689 = vmul.f32 %v4513, %v4673
        %v4690 = vmul.f32 %v4514, %v4674
        %v4691 = vmul.f32 %v4515, %v4675
        %v4692 = vlaneseq
        %v4693 = vshrl.u32 %v4692, 7
        %v4694 = vsub.s32 0, %v4693
        %v4695 = vrot.slane %v1426, %v4694
        %v4696 = vmul.f32 %v4676, %v4695
        %v4697 = vmul.f32 %v4677, %v4695
        %v4698 = vmul.f32 %v4678, %v4695
        %v4699 = vmul.f32 %v4679, %v4695
        %v4700 = vmul.f32 %v4680, %v4695
        %v4701 = vmul.f32 %v4681, %v4695
        %v4702 = vmul.f32 %v4682, %v4695
        %v4703 = vmul.f32 %v4683, %v4695
        %v4704 = vmul.f32 %v4684, %v4695
        %v4705 = vmul.f32 %v4685, %v4695
        %v4706 = vmul.f32 %v4686, %v4695
        %v4707 = vmul.f32 %v4687, %v4695
        %v4708 = vmul.f32 %v4688, %v4695
        %v4709 = vmul.f32 %v4689, %v4695
        %v4710 = vmul.f32 %v4690, %v4695
        %v4711 = vmul.f32 %v4691, %v4695
        %v4712 = vlaneseq
        %v4713 = vshrl.u32 %v4712, 7
        %v4714 = vsub.s32 0, %v4713
        %v4715 = vrot.slane %v1427, %v4714
        %v4716 = vadd.f32 %v4696, %v4715
        %v4717 = vadd.f32 %v4697, %v4715
        %v4718 = vadd.f32 %v4698, %v4715
        %v4719 = vadd.f32 %v4699, %v4715
        %v4720 = vadd.f32 %v4700, %v4715
        %v4721 = vadd.f32 %v4701, %v4715
        %v4722 = vadd.f32 %v4702, %v4715
        %v4723 = vadd.f32 %v4703, %v4715
        %v4724 = vadd.f32 %v4704, %v4715
        %v4725 = vadd.f32 %v4705, %v4715
        %v4726 = vadd.f32 %v4706, %v4715
        %v4727 = vadd.f32 %v4707, %v4715
        %v4728 = vadd.f32 %v4708, %v4715
        %v4729 = vadd.f32 %v4709, %v4715
        %v4730 = vadd.f32 %v4710, %v4715
        %v4731 = vadd.f32 %v4711, %v4715
        %v4732 = vlaneseq
        %v4733 = vshrl.u32 %v4732, 7
        %v4734 = vsub.s32 0, %v4733
        %v4735 = vrot.slane %v1428, %v4734
        %4736 = vmatprep.subr.mxu0 0.0
        %4737 = vmatpush1.msra.mxu0 %v1423
        %4738 = vmatprep.subr.mxu0 0.0
        %4739 = vmatpush1.msra.mxu0 %v1422
        %4740 = vmatprep.subr.mxu0 0.0
        %4741 = vmatpush1.msra.mxu0 %v1421
        %4742 = vmatprep.subr.mxu0 0.0
        %4743 = vmatpush1.msra.mxu0 %v1420
        %4744 = vmatprep.subr.mxu0 0.0
        %4745 = vmatpush1.msra.mxu0 %v1419
        %4746 = vmatprep.subr.mxu0 0.0
        %4747 = vmatpush1.msra.mxu0 %v1418
        %4748 = vmatprep.subr.mxu0 0.0
        %4749 = vmatpush1.msra.mxu0 %v1417
        %4750 = vmatprep.subr.mxu0 0.0
        %4751 = vmatpush1.msra.mxu0 %v1416
        %4752 = vmatprep.subr.mxu0 0.0
        %4753 = vmatpush1.msra.mxu0 %v1415
        %4754 = vmatprep.subr.mxu0 0.0
        %4755 = vmatpush1.msra.mxu0 %v1414
        %4756 = vmatprep.subr.mxu0 0.0
        %4757 = vmatpush1.msra.mxu0 %v1413
        %4758 = vmatprep.subr.mxu0 0.0
        %4759 = vmatpush1.msra.mxu0 %v1412
        %4760 = vmatprep.subr.mxu0 0.0
        %4761 = vmatpush1.msra.mxu0 %v1411
        %4762 = vmatprep.subr.mxu0 0.0
        %4763 = vmatpush1.msra.mxu0 %v1410
        %4764 = vmatprep.subr.mxu0 0.0
        %4765 = vmatpush1.msra.mxu0 %v1409
        %4766 = vmatprep.subr.mxu0 0.0
        %4767 = vmatpush1.msra.mxu0 %v1408
        %4768 = vmatprep.subr.mxu0 0.0
        %4769 = vmatpush2.msra.mxu0 0.0
        %4770 = vmatprep.subr.mxu0 0.0
        %4771 = vmatpush2.msra.mxu0 0.0
        %4772 = vmatprep.subr.mxu0 0.0
        %4773 = vmatpush2.msra.mxu0 0.0
        %4774 = vmatprep.subr.mxu0 0.0
        %4775 = vmatpush2.msra.mxu0 0.0
        %4776 = vmatprep.subr.mxu0 0.0
        %4777 = vmatpush2.msra.mxu0 0.0
        %4778 = vmatprep.subr.mxu0 0.0
        %4779 = vmatpush2.msra.mxu0 0.0
        %4780 = vmatprep.subr.mxu0 0.0
        %4781 = vmatpush2.msra.mxu0 0.0
        %4782 = vmatprep.subr.mxu0 0.0
        %4783 = vmatpush2.msra.mxu0 0.0
        %4784 = vmatprep.subr.mxu0 0.0
        %4785 = vmatpush2.msra.mxu0 0.0
        %4786 = vmatprep.subr.mxu0 0.0
        %4787 = vmatpush2.msra.mxu0 0.0
        %4788 = vmatprep.subr.mxu0 0.0
        %4789 = vmatpush2.msra.mxu0 0.0
        %4790 = vmatprep.subr.mxu0 0.0
        %4791 = vmatpush2.msra.mxu0 0.0
        %4792 = vmatprep.subr.mxu0 0.0
        %4793 = vmatpush2.msra.mxu0 0.0
        %4794 = vmatprep.subr.mxu0 0.0
        %4795 = vmatpush2.msra.mxu0 0.0
        %4796 = vmatprep.subr.mxu0 0.0
        %4797 = vmatpush2.msra.mxu0 0.0
        %4798 = vmatprep.subr.mxu0 0.0
        %4799 = vmatpush2.msra.mxu0 0.0
        %4800 = vmatprep.mubr.f32.mxu0 0.0
        %4801 = vmatmul.mubr.f32.gmra.mxu0 %v4716
        %v4802 = vpop.f32.mrf.mxu0
        %v4803 = vadd.f32 %v4735, %v4802
        %v4804 = vpop.f32.mrf.mxu0
        %4805 = vmatprep.mubr.f32.mxu0 0.0
        %4806 = vmatmul.mubr.f32.gmra.mxu0 %v4717
        %v4807 = vpop.f32.mrf.mxu0
        %v4808 = vadd.f32 %v4735, %v4807
        %v4809 = vpop.f32.mrf.mxu0
        %4810 = vmatprep.mubr.f32.mxu0 0.0
        %4811 = vmatmul.mubr.f32.gmra.mxu0 %v4718
        %v4812 = vpop.f32.mrf.mxu0
        %v4813 = vadd.f32 %v4735, %v4812
        %v4814 = vpop.f32.mrf.mxu0
        %4815 = vmatprep.mubr.f32.mxu0 0.0
        %4816 = vmatmul.mubr.f32.gmra.mxu0 %v4719
        %v4817 = vpop.f32.mrf.mxu0
        %v4818 = vadd.f32 %v4735, %v4817
        %v4819 = vpop.f32.mrf.mxu0
        %4820 = vmatprep.mubr.f32.mxu0 0.0
        %4821 = vmatmul.mubr.f32.gmra.mxu0 %v4720
        %v4822 = vpop.f32.mrf.mxu0
        %v4823 = vadd.f32 %v4735, %v4822
        %v4824 = vpop.f32.mrf.mxu0
        %4825 = vmatprep.mubr.f32.mxu0 0.0
        %4826 = vmatmul.mubr.f32.gmra.mxu0 %v4721
        %v4827 = vpop.f32.mrf.mxu0
        %v4828 = vadd.f32 %v4735, %v4827
        %v4829 = vpop.f32.mrf.mxu0
        %4830 = vmatprep.mubr.f32.mxu0 0.0
        %4831 = vmatmul.mubr.f32.gmra.mxu0 %v4722
        %v4832 = vpop.f32.mrf.mxu0
        %v4833 = vadd.f32 %v4735, %v4832
        %v4834 = vpop.f32.mrf.mxu0
        %4835 = vmatprep.mubr.f32.mxu0 0.0
        %4836 = vmatmul.mubr.f32.gmra.mxu0 %v4723
        %v4837 = vpop.f32.mrf.mxu0
        %v4838 = vadd.f32 %v4735, %v4837
        %v4839 = vpop.f32.mrf.mxu0
        %4840 = vmatprep.mubr.f32.mxu0 0.0
        %4841 = vmatmul.mubr.f32.gmra.mxu0 %v4724
        %v4842 = vpop.f32.mrf.mxu0
        %v4843 = vadd.f32 %v4735, %v4842
        %v4844 = vpop.f32.mrf.mxu0
        %4845 = vmatprep.mubr.f32.mxu0 0.0
        %4846 = vmatmul.mubr.f32.gmra.mxu0 %v4725
        %v4847 = vpop.f32.mrf.mxu0
        %v4848 = vadd.f32 %v4735, %v4847
        %v4849 = vpop.f32.mrf.mxu0
        %4850 = vmatprep.mubr.f32.mxu0 0.0
        %4851 = vmatmul.mubr.f32.gmra.mxu0 %v4726
        %v4852 = vpop.f32.mrf.mxu0
        %v4853 = vadd.f32 %v4735, %v4852
        %v4854 = vpop.f32.mrf.mxu0
        %4855 = vmatprep.mubr.f32.mxu0 0.0
        %4856 = vmatmul.mubr.f32.gmra.mxu0 %v4727
        %v4857 = vpop.f32.mrf.mxu0
        %v4858 = vadd.f32 %v4735, %v4857
        %v4859 = vpop.f32.mrf.mxu0
        %4860 = vmatprep.mubr.f32.mxu0 0.0
        %4861 = vmatmul.mubr.f32.gmra.mxu0 %v4728
        %v4862 = vpop.f32.mrf.mxu0
        %v4863 = vadd.f32 %v4735, %v4862
        %v4864 = vpop.f32.mrf.mxu0
        %4865 = vmatprep.mubr.f32.mxu0 0.0
        %4866 = vmatmul.mubr.f32.gmra.mxu0 %v4729
        %v4867 = vpop.f32.mrf.mxu0
        %v4868 = vadd.f32 %v4735, %v4867
        %v4869 = vpop.f32.mrf.mxu0
        %4870 = vmatprep.mubr.f32.mxu0 0.0
        %4871 = vmatmul.mubr.f32.gmra.mxu0 %v4730
        %v4872 = vpop.f32.mrf.mxu0
        %v4873 = vadd.f32 %v4735, %v4872
        %v4874 = vpop.f32.mrf.mxu0
        %4875 = vmatprep.mubr.f32.mxu0 0.0
        %4876 = vmatmul.mubr.f32.gmra.mxu0 %v4731
        %v4877 = vpop.f32.mrf.mxu0
        %v4878 = vadd.f32 %v4735, %v4877
        %v4879 = vpop.f32.mrf.mxu0
        %4880 = vdwg.mxu0
        %v4881 = vmul.f32 %v4803, 0.01
        %v4882 = vmul.f32 %v4808, 0.01
        %v4883 = vmul.f32 %v4813, 0.01
        %v4884 = vmul.f32 %v4818, 0.01
        %v4885 = vmul.f32 %v4823, 0.01
        %v4886 = vmul.f32 %v4828, 0.01
        %v4887 = vmul.f32 %v4833, 0.01
        %v4888 = vmul.f32 %v4838, 0.01
        %v4889 = vmul.f32 %v4843, 0.01
        %v4890 = vmul.f32 %v4848, 0.01
        %v4891 = vmul.f32 %v4853, 0.01
        %v4892 = vmul.f32 %v4858, 0.01
        %v4893 = vmul.f32 %v4863, 0.01
        %v4894 = vmul.f32 %v4868, 0.01
        %v4895 = vmul.f32 %v4873, 0.01
        %v4896 = vmul.f32 %v4878, 0.01
        %v4897 = vmax.f32 %v4803, %v4881
        %v4898 = vmax.f32 %v4808, %v4882
        %v4899 = vmax.f32 %v4813, %v4883
        %v4900 = vmax.f32 %v4818, %v4884
        %v4901 = vmax.f32 %v4823, %v4885
        %v4902 = vmax.f32 %v4828, %v4886
        %v4903 = vmax.f32 %v4833, %v4887
        %v4904 = vmax.f32 %v4838, %v4888
        %v4905 = vmax.f32 %v4843, %v4889
        %v4906 = vmax.f32 %v4848, %v4890
        %v4907 = vmax.f32 %v4853, %v4891
        %v4908 = vmax.f32 %v4858, %v4892
        %v4909 = vmax.f32 %v4863, %v4893
        %v4910 = vmax.f32 %v4868, %v4894
        %v4911 = vmax.f32 %v4873, %v4895
        %v4912 = vmax.f32 %v4878, %v4896
        %v4913 = vadd.f32 %v4897, %v432
        %v4914 = vadd.f32 %v4898, %v437
        %v4915 = vadd.f32 %v4899, %v442
        %v4916 = vadd.f32 %v4900, %v447
        %v4917 = vadd.f32 %v4901, %v452
        %v4918 = vadd.f32 %v4902, %v457
        %v4919 = vadd.f32 %v4903, %v462
        %v4920 = vadd.f32 %v4904, %v467
        %v4921 = vadd.f32 %v4905, %v472
        %v4922 = vadd.f32 %v4906, %v477
        %v4923 = vadd.f32 %v4907, %v482
        %v4924 = vadd.f32 %v4908, %v487
        %v4925 = vadd.f32 %v4909, %v492
        %v4926 = vadd.f32 %v4910, %v497
        %v4927 = vadd.f32 %v4911, %v502
        %v4928 = vadd.f32 %v4912, %v507
        %s4929 = scalar_lea.vmem %s4, 1280
        %v4930 = vld [vmem:[%s4929] sm:$0xff]
        %v4931 = vld [vmem:[%s4929 + $0x8] sm:$0xff]
        %v4932 = vld [vmem:[%s4929 + $0x10] sm:$0xff]
        %v4933 = vld [vmem:[%s4929 + $0x18] sm:$0xff]
        %v4934 = vld [vmem:[%s4929 + $0x20] sm:$0xff]
        %v4935 = vld [vmem:[%s4929 + $0x28] sm:$0xff]
        %v4936 = vld [vmem:[%s4929 + $0x30] sm:$0xff]
        %v4937 = vld [vmem:[%s4929 + $0x38] sm:$0xff]
        %v4938 = vld [vmem:[%s4929 + $0x40] sm:$0xff]
        %v4939 = vld [vmem:[%s4929 + $0x48] sm:$0xff]
        %v4940 = vld [vmem:[%s4929 + $0x50] sm:$0xff]
        %v4941 = vld [vmem:[%s4929 + $0x58] sm:$0xff]
        %v4942 = vld [vmem:[%s4929 + $0x60] sm:$0xff]
        %v4943 = vld [vmem:[%s4929 + $0x68] sm:$0xff]
        %v4944 = vld [vmem:[%s4929 + $0x70] sm:$0xff]
        %v4945 = vld [vmem:[%s4929 + $0x78] sm:$0xff]
        %v4946 = vld [vmem:[%s4929 + $0x80] sm:$0xff]
        %v4947 = vld [vmem:[%s4929 + $0x88] sm:$0xff]
        %v4948 = vld [vmem:[%s4929 + $0x90] sm:$0xff]
        %v4949 = vld [vmem:[%s4929 + $0x98] sm:$0xff]
        %v4950 = vld [vmem:[%s4929 + $0xa0] sm:$0xff]
        %v4951 = vld [vmem:[%s4929 + $0xa8] sm:$0xff]
        %v4952 = vld [vmem:[%s4929 + $0xb0] sm:$0xff]
        %v4953 = vld [vmem:[%s4929 + $0xb8] sm:$0xff]
        %v4954 = vld [vmem:[%s4929 + $0xc0] sm:$0xff]
        %v4955 = vld [vmem:[%s4929 + $0xc8] sm:$0xff]
        %v4956 = vld [vmem:[%s4929 + $0xd0] sm:$0xff]
        %v4957 = vld [vmem:[%s4929 + $0xd8] sm:$0xff]
        %v4958 = vld [vmem:[%s4929 + $0xe0] sm:$0xff]
        %v4959 = vld [vmem:[%s4929 + $0xe8] sm:$0xff]
        %v4960 = vld [vmem:[%s4929 + $0xf0] sm:$0xff]
        %v4961 = vld [vmem:[%s4929 + $0xf8] sm:$0xff]
        %v4962 = vld [vmem:[%s4929 + $0x100] sm:$0xff]
        %v4963 = vld [vmem:[%s4929 + $0x108] sm:$0xff]
        %v4964 = vld [vmem:[%s4929 + $0x110] sm:$0xff]
        %v4965 = vld [vmem:[%s4929 + $0x118] sm:$0xff]
        %v4966 = vld [vmem:[%s4929 + $0x120] sm:$0xff]
        %v4967 = vld [vmem:[%s4929 + $0x128] sm:$0xff]
        %v4968 = vld [vmem:[%s4929 + $0x130] sm:$0xff]
        %v4969 = vld [vmem:[%s4929 + $0x138] sm:$0xff]
        %v4970 = vld [vmem:[%s4929 + $0x140] sm:$0xff]
        %v4971 = vld [vmem:[%s4929 + $0x148] sm:$0xff]
        %v4972 = vld [vmem:[%s4929 + $0x150] sm:$0xff]
        %v4973 = vld [vmem:[%s4929 + $0x158] sm:$0xff]
        %v4974 = vld [vmem:[%s4929 + $0x160] sm:$0xff]
        %v4975 = vld [vmem:[%s4929 + $0x168] sm:$0xff]
        %v4976 = vld [vmem:[%s4929 + $0x170] sm:$0xff]
        %v4977 = vld [vmem:[%s4929 + $0x178] sm:$0xff]
        %v4978 = vld [vmem:[%s4929 + $0x180] sm:$0xff]
        %v4979 = vld [vmem:[%s4929 + $0x188] sm:$0xff]
        %v4980 = vld [vmem:[%s4929 + $0x190] sm:$0xff]
        %v4981 = vld [vmem:[%s4929 + $0x198] sm:$0xff]
        %v4982 = vld [vmem:[%s4929 + $0x1a0] sm:$0xff]
        %v4983 = vld [vmem:[%s4929 + $0x1a8] sm:$0xff]
        %v4984 = vld [vmem:[%s4929 + $0x1b0] sm:$0xff]
        %v4985 = vld [vmem:[%s4929 + $0x1b8] sm:$0xff]
        %v4986 = vld [vmem:[%s4929 + $0x1c0] sm:$0xff]
        %v4987 = vld [vmem:[%s4929 + $0x1c8] sm:$0xff]
        %v4988 = vld [vmem:[%s4929 + $0x1d0] sm:$0xff]
        %v4989 = vld [vmem:[%s4929 + $0x1d8] sm:$0xff]
        %v4990 = vld [vmem:[%s4929 + $0x1e0] sm:$0xff]
        %v4991 = vld [vmem:[%s4929 + $0x1e8] sm:$0xff]
        %v4992 = vld [vmem:[%s4929 + $0x1f0] sm:$0xff]
        %v4993 = vld [vmem:[%s4929 + $0x1f8] sm:$0xff]
        %v4994 = vld [vmem:[%s4929 + $0x200] sm:$0xff]
        %v4995 = vld [vmem:[%s4929 + $0x208] sm:$0xff]
        %v4996 = vld [vmem:[%s4929 + $0x210] sm:$0xff]
        %v4997 = vld [vmem:[%s4929 + $0x218] sm:$0xff]
        %v4998 = vld [vmem:[%s4929 + $0x220] sm:$0xff]
        %v4999 = vld [vmem:[%s4929 + $0x228] sm:$0xff]
        %v5000 = vld [vmem:[%s4929 + $0x230] sm:$0xff]
        %v5001 = vld [vmem:[%s4929 + $0x238] sm:$0xff]
        %v5002 = vld [vmem:[%s4929 + $0x240] sm:$0xff]
        %v5003 = vld [vmem:[%s4929 + $0x248] sm:$0xff]
        %v5004 = vld [vmem:[%s4929 + $0x250] sm:$0xff]
        %v5005 = vld [vmem:[%s4929 + $0x258] sm:$0xff]
        %v5006 = vld [vmem:[%s4929 + $0x260] sm:$0xff]
        %v5007 = vld [vmem:[%s4929 + $0x268] sm:$0xff]
        %v5008 = vld [vmem:[%s4929 + $0x270] sm:$0xff]
        %v5009 = vld [vmem:[%s4929 + $0x278] sm:$0xff]
        %v5010 = vld [vmem:[%s4929 + $0x280] sm:$0xff]
        %v5011 = vld [vmem:[%s4929 + $0x288] sm:$0xff]
        %v5012 = vld [vmem:[%s4929 + $0x290] sm:$0xff]
        %v5013 = vld [vmem:[%s4929 + $0x298] sm:$0xff]
        %v5014 = vld [vmem:[%s4929 + $0x2a0] sm:$0xff]
        %v5015 = vld [vmem:[%s4929 + $0x2a8] sm:$0xff]
        %v5016 = vld [vmem:[%s4929 + $0x2b0] sm:$0xff]
        %v5017 = vld [vmem:[%s4929 + $0x2b8] sm:$0xff]
        %v5018 = vld [vmem:[%s4929 + $0x2c0] sm:$0xff]
        %v5019 = vld [vmem:[%s4929 + $0x2c8] sm:$0xff]
        %v5020 = vld [vmem:[%s4929 + $0x2d0] sm:$0xff]
        %v5021 = vld [vmem:[%s4929 + $0x2d8] sm:$0xff]
        %v5022 = vld [vmem:[%s4929 + $0x2e0] sm:$0xff]
        %v5023 = vld [vmem:[%s4929 + $0x2e8] sm:$0xff]
        %v5024 = vld [vmem:[%s4929 + $0x2f0] sm:$0xff]
        %v5025 = vld [vmem:[%s4929 + $0x2f8] sm:$0xff]
        %v5026 = vld [vmem:[%s4929 + $0x300] sm:$0xff]
        %v5027 = vld [vmem:[%s4929 + $0x308] sm:$0xff]
        %v5028 = vld [vmem:[%s4929 + $0x310] sm:$0xff]
        %v5029 = vld [vmem:[%s4929 + $0x318] sm:$0xff]
        %v5030 = vld [vmem:[%s4929 + $0x320] sm:$0xff]
        %v5031 = vld [vmem:[%s4929 + $0x328] sm:$0xff]
        %v5032 = vld [vmem:[%s4929 + $0x330] sm:$0xff]
        %v5033 = vld [vmem:[%s4929 + $0x338] sm:$0xff]
        %v5034 = vld [vmem:[%s4929 + $0x340] sm:$0xff]
        %v5035 = vld [vmem:[%s4929 + $0x348] sm:$0xff]
        %v5036 = vld [vmem:[%s4929 + $0x350] sm:$0xff]
        %v5037 = vld [vmem:[%s4929 + $0x358] sm:$0xff]
        %v5038 = vld [vmem:[%s4929 + $0x360] sm:$0xff]
        %v5039 = vld [vmem:[%s4929 + $0x368] sm:$0xff]
        %v5040 = vld [vmem:[%s4929 + $0x370] sm:$0xff]
        %v5041 = vld [vmem:[%s4929 + $0x378] sm:$0xff]
        %v5042 = vld [vmem:[%s4929 + $0x380] sm:$0xff]
        %v5043 = vld [vmem:[%s4929 + $0x388] sm:$0xff]
        %v5044 = vld [vmem:[%s4929 + $0x390] sm:$0xff]
        %v5045 = vld [vmem:[%s4929 + $0x398] sm:$0xff]
        %v5046 = vld [vmem:[%s4929 + $0x3a0] sm:$0xff]
        %v5047 = vld [vmem:[%s4929 + $0x3a8] sm:$0xff]
        %v5048 = vld [vmem:[%s4929 + $0x3b0] sm:$0xff]
        %v5049 = vld [vmem:[%s4929 + $0x3b8] sm:$0xff]
        %v5050 = vld [vmem:[%s4929 + $0x3c0] sm:$0xff]
        %v5051 = vld [vmem:[%s4929 + $0x3c8] sm:$0xff]
        %v5052 = vld [vmem:[%s4929 + $0x3d0] sm:$0xff]
        %v5053 = vld [vmem:[%s4929 + $0x3d8] sm:$0xff]
        %v5054 = vld [vmem:[%s4929 + $0x3e0] sm:$0xff]
        %v5055 = vld [vmem:[%s4929 + $0x3e8] sm:$0xff]
        %v5056 = vld [vmem:[%s4929 + $0x3f0] sm:$0xff]
        %v5057 = vld [vmem:[%s4929 + $0x3f8] sm:$0xff]
        %v5058 = vld [vmem:[%s4929 + $0x400] sm:$0xff]
        %v5059 = vld [vmem:[%s4929 + $0x408] sm:$0xff]
        %v5060 = vld [vmem:[%s4929 + $0x410] sm:$0xff]
        %v5061 = vld [vmem:[%s4929 + $0x418] sm:$0xff]
        %v5062 = vld [vmem:[%s4929 + $0x420] sm:$0xff]
        %v5063 = vld [vmem:[%s4929 + $0x428] sm:$0xff]
        %v5064 = vld [vmem:[%s4929 + $0x430] sm:$0xff]
        %v5065 = vld [vmem:[%s4929 + $0x438] sm:$0xff]
        %v5066 = vld [vmem:[%s4929 + $0x440] sm:$0xff]
        %v5067 = vld [vmem:[%s4929 + $0x448] sm:$0xff]
        %v5068 = vld [vmem:[%s4929 + $0x450] sm:$0xff]
        %v5069 = vld [vmem:[%s4929 + $0x458] sm:$0xff]
        %v5070 = vld [vmem:[%s4929 + $0x460] sm:$0xff]
        %v5071 = vld [vmem:[%s4929 + $0x468] sm:$0xff]
        %v5072 = vld [vmem:[%s4929 + $0x470] sm:$0xff]
        %v5073 = vld [vmem:[%s4929 + $0x478] sm:$0xff]
        %v5074 = vld [vmem:[%s4929 + $0x480] sm:$0xff]
        %v5075 = vld [vmem:[%s4929 + $0x488] sm:$0xff]
        %v5076 = vld [vmem:[%s4929 + $0x490] sm:$0xff]
        %v5077 = vld [vmem:[%s4929 + $0x498] sm:$0xff]
        %v5078 = vld [vmem:[%s4929 + $0x4a0] sm:$0xff]
        %v5079 = vld [vmem:[%s4929 + $0x4a8] sm:$0xff]
        %v5080 = vld [vmem:[%s4929 + $0x4b0] sm:$0xff]
        %v5081 = vld [vmem:[%s4929 + $0x4b8] sm:$0xff]
        %v5082 = vld [vmem:[%s4929 + $0x4c0] sm:$0xff]
        %v5083 = vld [vmem:[%s4929 + $0x4c8] sm:$0xff]
        %v5084 = vld [vmem:[%s4929 + $0x4d0] sm:$0xff]
        %v5085 = vld [vmem:[%s4929 + $0x4d8] sm:$0xff]
        %v5086 = vld [vmem:[%s4929 + $0x4e0] sm:$0xff]
        %v5087 = vld [vmem:[%s4929 + $0x4e8] sm:$0xff]
        %v5088 = vld [vmem:[%s4929 + $0x4f0] sm:$0xff]
        %v5089 = vld [vmem:[%s4929 + $0x4f8] sm:$0xff]
        %s5090 = scalar_lea.vmem %s5, 8
        %v5091 = vld [vmem:[%s5090] sm:$0x1]
        %v5092 = vld [vmem:[%s5090 + $0x1] sm:$0x1]
        %v5093 = vld [vmem:[%s5090 + $0x2] sm:$0x1]
        %v5094 = vld [vmem:[%s5090 + $0x3] sm:$0x1]
        %v5095 = vld [vmem:[%s5090 + $0x4] sm:$0x1]
        %5096 = vmatprep.subr.mxu0 0.0
        %5097 = vmatpush1.msra.mxu0 %v4945
        %5098 = vmatprep.subr.mxu0 0.0
        %5099 = vmatpush1.msra.mxu0 %v4944
        %5100 = vmatprep.subr.mxu0 0.0
        %5101 = vmatpush1.msra.mxu0 %v4943
        %5102 = vmatprep.subr.mxu0 0.0
        %5103 = vmatpush1.msra.mxu0 %v4942
        %5104 = vmatprep.subr.mxu0 0.0
        %5105 = vmatpush1.msra.mxu0 %v4941
        %5106 = vmatprep.subr.mxu0 0.0
        %5107 = vmatpush1.msra.mxu0 %v4940
        %5108 = vmatprep.subr.mxu0 0.0
        %5109 = vmatpush1.msra.mxu0 %v4939
        %5110 = vmatprep.subr.mxu0 0.0
        %5111 = vmatpush1.msra.mxu0 %v4938
        %5112 = vmatprep.subr.mxu0 0.0
        %5113 = vmatpush1.msra.mxu0 %v4937
        %5114 = vmatprep.subr.mxu0 0.0
        %5115 = vmatpush1.msra.mxu0 %v4936
        %5116 = vmatprep.subr.mxu0 0.0
        %5117 = vmatpush1.msra.mxu0 %v4935
        %5118 = vmatprep.subr.mxu0 0.0
        %5119 = vmatpush1.msra.mxu0 %v4934
        %5120 = vmatprep.subr.mxu0 0.0
        %5121 = vmatpush1.msra.mxu0 %v4933
        %5122 = vmatprep.subr.mxu0 0.0
        %5123 = vmatpush1.msra.mxu0 %v4932
        %5124 = vmatprep.subr.mxu0 0.0
        %5125 = vmatpush1.msra.mxu0 %v4931
        %5126 = vmatprep.subr.mxu0 0.0
        %5127 = vmatpush1.msra.mxu0 %v4930
        %5128 = vmatprep.subr.mxu0 0.0
        %5129 = vmatpush2.msra.mxu0 0.0
        %5130 = vmatprep.subr.mxu0 0.0
        %5131 = vmatpush2.msra.mxu0 0.0
        %5132 = vmatprep.subr.mxu0 0.0
        %5133 = vmatpush2.msra.mxu0 0.0
        %5134 = vmatprep.subr.mxu0 0.0
        %5135 = vmatpush2.msra.mxu0 0.0
        %5136 = vmatprep.subr.mxu0 0.0
        %5137 = vmatpush2.msra.mxu0 0.0
        %5138 = vmatprep.subr.mxu0 0.0
        %5139 = vmatpush2.msra.mxu0 0.0
        %5140 = vmatprep.subr.mxu0 0.0
        %5141 = vmatpush2.msra.mxu0 0.0
        %5142 = vmatprep.subr.mxu0 0.0
        %5143 = vmatpush2.msra.mxu0 0.0
        %5144 = vmatprep.subr.mxu0 0.0
        %5145 = vmatpush2.msra.mxu0 0.0
        %5146 = vmatprep.subr.mxu0 0.0
        %5147 = vmatpush2.msra.mxu0 0.0
        %5148 = vmatprep.subr.mxu0 0.0
        %5149 = vmatpush2.msra.mxu0 0.0
        %5150 = vmatprep.subr.mxu0 0.0
        %5151 = vmatpush2.msra.mxu0 0.0
        %5152 = vmatprep.subr.mxu0 0.0
        %5153 = vmatpush2.msra.mxu0 0.0
        %5154 = vmatprep.subr.mxu0 0.0
        %5155 = vmatpush2.msra.mxu0 0.0
        %5156 = vmatprep.subr.mxu0 0.0
        %5157 = vmatpush2.msra.mxu0 0.0
        %5158 = vmatprep.subr.mxu0 0.0
        %5159 = vmatpush2.msra.mxu0 0.0
        %5160 = vmatprep.mubr.f32.mxu0 0.0
        %5161 = vmatmul.mubr.f32.gmra.mxu0 %v4913
        %v5162 = vpop.f32.mrf.mxu0
        %v5163 = vadd.f32 0.0, %v5162
        %v5164 = vpop.f32.mrf.mxu0
        %5165 = vmatprep.mubr.f32.mxu0 0.0
        %5166 = vmatmul.mubr.f32.gmra.mxu0 %v4914
        %v5167 = vpop.f32.mrf.mxu0
        %v5168 = vadd.f32 0.0, %v5167
        %v5169 = vpop.f32.mrf.mxu0
        %5170 = vmatprep.mubr.f32.mxu0 0.0
        %5171 = vmatmul.mubr.f32.gmra.mxu0 %v4915
        %v5172 = vpop.f32.mrf.mxu0
        %v5173 = vadd.f32 0.0, %v5172
        %v5174 = vpop.f32.mrf.mxu0
        %5175 = vmatprep.mubr.f32.mxu0 0.0
        %5176 = vmatmul.mubr.f32.gmra.mxu0 %v4916
        %v5177 = vpop.f32.mrf.mxu0
        %v5178 = vadd.f32 0.0, %v5177
        %v5179 = vpop.f32.mrf.mxu0
        %5180 = vmatprep.mubr.f32.mxu0 0.0
        %5181 = vmatmul.mubr.f32.gmra.mxu0 %v4917
        %v5182 = vpop.f32.mrf.mxu0
        %v5183 = vadd.f32 0.0, %v5182
        %v5184 = vpop.f32.mrf.mxu0
        %5185 = vmatprep.mubr.f32.mxu0 0.0
        %5186 = vmatmul.mubr.f32.gmra.mxu0 %v4918
        %v5187 = vpop.f32.mrf.mxu0
        %v5188 = vadd.f32 0.0, %v5187
        %v5189 = vpop.f32.mrf.mxu0
        %5190 = vmatprep.mubr.f32.mxu0 0.0
        %5191 = vmatmul.mubr.f32.gmra.mxu0 %v4919
        %v5192 = vpop.f32.mrf.mxu0
        %v5193 = vadd.f32 0.0, %v5192
        %v5194 = vpop.f32.mrf.mxu0
        %5195 = vmatprep.mubr.f32.mxu0 0.0
        %5196 = vmatmul.mubr.f32.gmra.mxu0 %v4920
        %v5197 = vpop.f32.mrf.mxu0
        %v5198 = vadd.f32 0.0, %v5197
        %v5199 = vpop.f32.mrf.mxu0
        %5200 = vmatprep.mubr.f32.mxu0 0.0
        %5201 = vmatmul.mubr.f32.gmra.mxu0 %v4921
        %v5202 = vpop.f32.mrf.mxu0
        %v5203 = vadd.f32 0.0, %v5202
        %v5204 = vpop.f32.mrf.mxu0
        %5205 = vmatprep.mubr.f32.mxu0 0.0
        %5206 = vmatmul.mubr.f32.gmra.mxu0 %v4922
        %v5207 = vpop.f32.mrf.mxu0
        %v5208 = vadd.f32 0.0, %v5207
        %v5209 = vpop.f32.mrf.mxu0
        %5210 = vmatprep.mubr.f32.mxu0 0.0
        %5211 = vmatmul.mubr.f32.gmra.mxu0 %v4923
        %v5212 = vpop.f32.mrf.mxu0
        %v5213 = vadd.f32 0.0, %v5212
        %v5214 = vpop.f32.mrf.mxu0
        %5215 = vmatprep.mubr.f32.mxu0 0.0
        %5216 = vmatmul.mubr.f32.gmra.mxu0 %v4924
        %v5217 = vpop.f32.mrf.mxu0
        %v5218 = vadd.f32 0.0, %v5217
        %v5219 = vpop.f32.mrf.mxu0
        %5220 = vmatprep.mubr.f32.mxu0 0.0
        %5221 = vmatmul.mubr.f32.gmra.mxu0 %v4925
        %v5222 = vpop.f32.mrf.mxu0
        %v5223 = vadd.f32 0.0, %v5222
        %v5224 = vpop.f32.mrf.mxu0
        %5225 = vmatprep.mubr.f32.mxu0 0.0
        %5226 = vmatmul.mubr.f32.gmra.mxu0 %v4926
        %v5227 = vpop.f32.mrf.mxu0
        %v5228 = vadd.f32 0.0, %v5227
        %v5229 = vpop.f32.mrf.mxu0
        %5230 = vmatprep.mubr.f32.mxu0 0.0
        %5231 = vmatmul.mubr.f32.gmra.mxu0 %v4927
        %v5232 = vpop.f32.mrf.mxu0
        %v5233 = vadd.f32 0.0, %v5232
        %v5234 = vpop.f32.mrf.mxu0
        %5235 = vmatprep.mubr.f32.mxu0 0.0
        %5236 = vmatmul.mubr.f32.gmra.mxu0 %v4928
        %v5237 = vpop.f32.mrf.mxu0
        %v5238 = vadd.f32 0.0, %v5237
        %v5239 = vpop.f32.mrf.mxu0
        %5240 = vdwg.mxu0
        %v5241 = vlaneseq
        %v5242 = vshrl.u32 %v5241, 7
        %v5243 = vsub.s32 0, %v5242
        %v5244 = vrot.slane %v5091, %v5243
        %5245 = vmatprep.subr.mxu0 0.0
        %5246 = vmatpush1.msra.mxu0 %v4961
        %5247 = vmatprep.subr.mxu0 0.0
        %5248 = vmatpush1.msra.mxu0 %v4960
        %5249 = vmatprep.subr.mxu0 0.0
        %5250 = vmatpush1.msra.mxu0 %v4959
        %5251 = vmatprep.subr.mxu0 0.0
        %5252 = vmatpush1.msra.mxu0 %v4958
        %5253 = vmatprep.subr.mxu0 0.0
        %5254 = vmatpush1.msra.mxu0 %v4957
        %5255 = vmatprep.subr.mxu0 0.0
        %5256 = vmatpush1.msra.mxu0 %v4956
        %5257 = vmatprep.subr.mxu0 0.0
        %5258 = vmatpush1.msra.mxu0 %v4955
        %5259 = vmatprep.subr.mxu0 0.0
        %5260 = vmatpush1.msra.mxu0 %v4954
        %5261 = vmatprep.subr.mxu0 0.0
        %5262 = vmatpush1.msra.mxu0 %v4953
        %5263 = vmatprep.subr.mxu0 0.0
        %5264 = vmatpush1.msra.mxu0 %v4952
        %5265 = vmatprep.subr.mxu0 0.0
        %5266 = vmatpush1.msra.mxu0 %v4951
        %5267 = vmatprep.subr.mxu0 0.0
        %5268 = vmatpush1.msra.mxu0 %v4950
        %5269 = vmatprep.subr.mxu0 0.0
        %5270 = vmatpush1.msra.mxu0 %v4949
        %5271 = vmatprep.subr.mxu0 0.0
        %5272 = vmatpush1.msra.mxu0 %v4948
        %5273 = vmatprep.subr.mxu0 0.0
        %5274 = vmatpush1.msra.mxu0 %v4947
        %5275 = vmatprep.subr.mxu0 0.0
        %5276 = vmatpush1.msra.mxu0 %v4946
        %5277 = vmatprep.subr.mxu0 0.0
        %5278 = vmatpush2.msra.mxu0 0.0
        %5279 = vmatprep.subr.mxu0 0.0
        %5280 = vmatpush2.msra.mxu0 0.0
        %5281 = vmatprep.subr.mxu0 0.0
        %5282 = vmatpush2.msra.mxu0 0.0
        %5283 = vmatprep.subr.mxu0 0.0
        %5284 = vmatpush2.msra.mxu0 0.0
        %5285 = vmatprep.subr.mxu0 0.0
        %5286 = vmatpush2.msra.mxu0 0.0
        %5287 = vmatprep.subr.mxu0 0.0
        %5288 = vmatpush2.msra.mxu0 0.0
        %5289 = vmatprep.subr.mxu0 0.0
        %5290 = vmatpush2.msra.mxu0 0.0
        %5291 = vmatprep.subr.mxu0 0.0
        %5292 = vmatpush2.msra.mxu0 0.0
        %5293 = vmatprep.subr.mxu0 0.0
        %5294 = vmatpush2.msra.mxu0 0.0
        %5295 = vmatprep.subr.mxu0 0.0
        %5296 = vmatpush2.msra.mxu0 0.0
        %5297 = vmatprep.subr.mxu0 0.0
        %5298 = vmatpush2.msra.mxu0 0.0
        %5299 = vmatprep.subr.mxu0 0.0
        %5300 = vmatpush2.msra.mxu0 0.0
        %5301 = vmatprep.subr.mxu0 0.0
        %5302 = vmatpush2.msra.mxu0 0.0
        %5303 = vmatprep.subr.mxu0 0.0
        %5304 = vmatpush2.msra.mxu0 0.0
        %5305 = vmatprep.subr.mxu0 0.0
        %5306 = vmatpush2.msra.mxu0 0.0
        %5307 = vmatprep.subr.mxu0 0.0
        %5308 = vmatpush2.msra.mxu0 0.0
        %5309 = vmatprep.mubr.f32.mxu0 0.0
        %5310 = vmatmul.mubr.f32.gmra.mxu0 %v4913
        %v5311 = vpop.f32.mrf.mxu0
        %v5312 = vadd.f32 %v5244, %v5311
        %v5313 = vpop.f32.mrf.mxu0
        %5314 = vmatprep.mubr.f32.mxu0 0.0
        %5315 = vmatmul.mubr.f32.gmra.mxu0 %v4914
        %v5316 = vpop.f32.mrf.mxu0
        %v5317 = vadd.f32 %v5244, %v5316
        %v5318 = vpop.f32.mrf.mxu0
        %5319 = vmatprep.mubr.f32.mxu0 0.0
        %5320 = vmatmul.mubr.f32.gmra.mxu0 %v4915
        %v5321 = vpop.f32.mrf.mxu0
        %v5322 = vadd.f32 %v5244, %v5321
        %v5323 = vpop.f32.mrf.mxu0
        %5324 = vmatprep.mubr.f32.mxu0 0.0
        %5325 = vmatmul.mubr.f32.gmra.mxu0 %v4916
        %v5326 = vpop.f32.mrf.mxu0
        %v5327 = vadd.f32 %v5244, %v5326
        %v5328 = vpop.f32.mrf.mxu0
        %5329 = vmatprep.mubr.f32.mxu0 0.0
        %5330 = vmatmul.mubr.f32.gmra.mxu0 %v4917
        %v5331 = vpop.f32.mrf.mxu0
        %v5332 = vadd.f32 %v5244, %v5331
        %v5333 = vpop.f32.mrf.mxu0
        %5334 = vmatprep.mubr.f32.mxu0 0.0
        %5335 = vmatmul.mubr.f32.gmra.mxu0 %v4918
        %v5336 = vpop.f32.mrf.mxu0
        %v5337 = vadd.f32 %v5244, %v5336
        %v5338 = vpop.f32.mrf.mxu0
        %5339 = vmatprep.mubr.f32.mxu0 0.0
        %5340 = vmatmul.mubr.f32.gmra.mxu0 %v4919
        %v5341 = vpop.f32.mrf.mxu0
        %v5342 = vadd.f32 %v5244, %v5341
        %v5343 = vpop.f32.mrf.mxu0
        %5344 = vmatprep.mubr.f32.mxu0 0.0
        %5345 = vmatmul.mubr.f32.gmra.mxu0 %v4920
        %v5346 = vpop.f32.mrf.mxu0
        %v5347 = vadd.f32 %v5244, %v5346
        %v5348 = vpop.f32.mrf.mxu0
        %5349 = vmatprep.mubr.f32.mxu0 0.0
        %5350 = vmatmul.mubr.f32.gmra.mxu0 %v4921
        %v5351 = vpop.f32.mrf.mxu0
        %v5352 = vadd.f32 %v5244, %v5351
        %v5353 = vpop.f32.mrf.mxu0
        %5354 = vmatprep.mubr.f32.mxu0 0.0
        %5355 = vmatmul.mubr.f32.gmra.mxu0 %v4922
        %v5356 = vpop.f32.mrf.mxu0
        %v5357 = vadd.f32 %v5244, %v5356
        %v5358 = vpop.f32.mrf.mxu0
        %5359 = vmatprep.mubr.f32.mxu0 0.0
        %5360 = vmatmul.mubr.f32.gmra.mxu0 %v4923
        %v5361 = vpop.f32.mrf.mxu0
        %v5362 = vadd.f32 %v5244, %v5361
        %v5363 = vpop.f32.mrf.mxu0
        %5364 = vmatprep.mubr.f32.mxu0 0.0
        %5365 = vmatmul.mubr.f32.gmra.mxu0 %v4924
        %v5366 = vpop.f32.mrf.mxu0
        %v5367 = vadd.f32 %v5244, %v5366
        %v5368 = vpop.f32.mrf.mxu0
        %5369 = vmatprep.mubr.f32.mxu0 0.0
        %5370 = vmatmul.mubr.f32.gmra.mxu0 %v4925
        %v5371 = vpop.f32.mrf.mxu0
        %v5372 = vadd.f32 %v5244, %v5371
        %v5373 = vpop.f32.mrf.mxu0
        %5374 = vmatprep.mubr.f32.mxu0 0.0
        %5375 = vmatmul.mubr.f32.gmra.mxu0 %v4926
        %v5376 = vpop.f32.mrf.mxu0
        %v5377 = vadd.f32 %v5244, %v5376
        %v5378 = vpop.f32.mrf.mxu0
        %5379 = vmatprep.mubr.f32.mxu0 0.0
        %5380 = vmatmul.mubr.f32.gmra.mxu0 %v4927
        %v5381 = vpop.f32.mrf.mxu0
        %v5382 = vadd.f32 %v5244, %v5381
        %v5383 = vpop.f32.mrf.mxu0
        %5384 = vmatprep.mubr.f32.mxu0 0.0
        %5385 = vmatmul.mubr.f32.gmra.mxu0 %v4928
        %v5386 = vpop.f32.mrf.mxu0
        %v5387 = vadd.f32 %v5244, %v5386
        %v5388 = vpop.f32.mrf.mxu0
        %5389 = vdwg.mxu0
        %v5390 = vmul.f32 %v513, %v5312
        %v5391 = vmul.f32 %v516, %v5317
        %v5392 = vmul.f32 %v519, %v5322
        %v5393 = vmul.f32 %v522, %v5327
        %v5394 = vmul.f32 %v525, %v5332
        %v5395 = vmul.f32 %v528, %v5337
        %v5396 = vmul.f32 %v531, %v5342
        %v5397 = vmul.f32 %v534, %v5347
        %v5398 = vmul.f32 %v537, %v5352
        %v5399 = vmul.f32 %v540, %v5357
        %v5400 = vmul.f32 %v543, %v5362
        %v5401 = vmul.f32 %v546, %v5367
        %v5402 = vmul.f32 %v549, %v5372
        %v5403 = vmul.f32 %v552, %v5377
        %v5404 = vmul.f32 %v555, %v5382
        %v5405 = vmul.f32 %v558, %v5387
        %5406 = vmatprep.subr.mxu0 0.0
        %5407 = vmatpush1.msra.mxu0 0.0
        %5408 = vmatprep.subr.mxu0 0.0
        %5409 = vmatpush1.msra.mxu0 0.0
        %5410 = vmatprep.subr.mxu0 0.0
        %5411 = vmatpush1.msra.mxu0 0.0
        %5412 = vmatprep.subr.mxu0 0.0
        %5413 = vmatpush1.msra.mxu0 0.0
        %5414 = vmatprep.subr.mxu0 0.0
        %5415 = vmatpush1.msra.mxu0 0.0
        %5416 = vmatprep.subr.mxu0 0.0
        %5417 = vmatpush1.msra.mxu0 0.0
        %5418 = vmatprep.subr.mxu0 0.0
        %5419 = vmatpush1.msra.mxu0 0.0
        %5420 = vmatprep.subr.mxu0 0.0
        %5421 = vmatpush1.msra.mxu0 0.0
        %5422 = vmatprep.subr.mxu0 0.0
        %5423 = vmatpush1.msra.mxu0 0.0
        %5424 = vmatprep.subr.mxu0 0.0
        %5425 = vmatpush1.msra.mxu0 0.0
        %5426 = vmatprep.subr.mxu0 0.0
        %5427 = vmatpush1.msra.mxu0 0.0
        %5428 = vmatprep.subr.mxu0 0.0
        %5429 = vmatpush1.msra.mxu0 0.0
        %5430 = vmatprep.subr.mxu0 0.0
        %5431 = vmatpush1.msra.mxu0 0.0
        %5432 = vmatprep.subr.mxu0 0.0
        %5433 = vmatpush1.msra.mxu0 0.0
        %5434 = vmatprep.subr.mxu0 0.0
        %5435 = vmatpush1.msra.mxu0 0.0
        %5436 = vmatprep.subr.mxu0 0.0
        %5437 = vmatpush1.msra.mxu0 %v5163
        %5438 = vmatprep.subr.mxu0 0.0
        %5439 = vmatpush2.msra.mxu0 0.0
        %5440 = vmatprep.subr.mxu0 0.0
        %5441 = vmatpush2.msra.mxu0 0.0
        %5442 = vmatprep.subr.mxu0 0.0
        %5443 = vmatpush2.msra.mxu0 0.0
        %5444 = vmatprep.subr.mxu0 0.0
        %5445 = vmatpush2.msra.mxu0 0.0
        %5446 = vmatprep.subr.mxu0 0.0
        %5447 = vmatpush2.msra.mxu0 0.0
        %5448 = vmatprep.subr.mxu0 0.0
        %5449 = vmatpush2.msra.mxu0 0.0
        %5450 = vmatprep.subr.mxu0 0.0
        %5451 = vmatpush2.msra.mxu0 0.0
        %5452 = vmatprep.subr.mxu0 0.0
        %5453 = vmatpush2.msra.mxu0 0.0
        %5454 = vmatprep.subr.mxu0 0.0
        %5455 = vmatpush2.msra.mxu0 0.0
        %5456 = vmatprep.subr.mxu0 0.0
        %5457 = vmatpush2.msra.mxu0 0.0
        %5458 = vmatprep.subr.mxu0 0.0
        %5459 = vmatpush2.msra.mxu0 0.0
        %5460 = vmatprep.subr.mxu0 0.0
        %5461 = vmatpush2.msra.mxu0 0.0
        %5462 = vmatprep.subr.mxu0 0.0
        %5463 = vmatpush2.msra.mxu0 0.0
        %5464 = vmatprep.subr.mxu0 0.0
        %5465 = vmatpush2.msra.mxu0 0.0
        %5466 = vmatprep.subr.mxu0 0.0
        %5467 = vmatpush2.msra.mxu0 0.0
        %5468 = vmatprep.subr.mxu0 0.0
        %5469 = vmatpush2.msra.mxu0 0.0
        %5470 = vmatprep.mubr.f32.mxu0 0.0
        %5471 = vmatmul.mubr.f32.gmra.mxu0 %v1740
        %v5472 = vpop.f32.mrf.mxu0
        %v5473 = vadd.f32 %v5390, %v5472
        %v5474 = vpop.f32.mrf.mxu0
        %5475 = vdwg.mxu0
        %5476 = vmatprep.subr.mxu0 0.0
        %5477 = vmatpush1.msra.mxu0 0.0
        %5478 = vmatprep.subr.mxu0 0.0
        %5479 = vmatpush1.msra.mxu0 0.0
        %5480 = vmatprep.subr.mxu0 0.0
        %5481 = vmatpush1.msra.mxu0 0.0
        %5482 = vmatprep.subr.mxu0 0.0
        %5483 = vmatpush1.msra.mxu0 0.0
        %5484 = vmatprep.subr.mxu0 0.0
        %5485 = vmatpush1.msra.mxu0 0.0
        %5486 = vmatprep.subr.mxu0 0.0
        %5487 = vmatpush1.msra.mxu0 0.0
        %5488 = vmatprep.subr.mxu0 0.0
        %5489 = vmatpush1.msra.mxu0 0.0
        %5490 = vmatprep.subr.mxu0 0.0
        %5491 = vmatpush1.msra.mxu0 0.0
        %5492 = vmatprep.subr.mxu0 0.0
        %5493 = vmatpush1.msra.mxu0 0.0
        %5494 = vmatprep.subr.mxu0 0.0
        %5495 = vmatpush1.msra.mxu0 0.0
        %5496 = vmatprep.subr.mxu0 0.0
        %5497 = vmatpush1.msra.mxu0 0.0
        %5498 = vmatprep.subr.mxu0 0.0
        %5499 = vmatpush1.msra.mxu0 0.0
        %5500 = vmatprep.subr.mxu0 0.0
        %5501 = vmatpush1.msra.mxu0 0.0
        %5502 = vmatprep.subr.mxu0 0.0
        %5503 = vmatpush1.msra.mxu0 0.0
        %5504 = vmatprep.subr.mxu0 0.0
        %5505 = vmatpush1.msra.mxu0 0.0
        %5506 = vmatprep.subr.mxu0 0.0
        %5507 = vmatpush1.msra.mxu0 %v5168
        %5508 = vmatprep.subr.mxu0 0.0
        %5509 = vmatpush2.msra.mxu0 0.0
        %5510 = vmatprep.subr.mxu0 0.0
        %5511 = vmatpush2.msra.mxu0 0.0
        %5512 = vmatprep.subr.mxu0 0.0
        %5513 = vmatpush2.msra.mxu0 0.0
        %5514 = vmatprep.subr.mxu0 0.0
        %5515 = vmatpush2.msra.mxu0 0.0
        %5516 = vmatprep.subr.mxu0 0.0
        %5517 = vmatpush2.msra.mxu0 0.0
        %5518 = vmatprep.subr.mxu0 0.0
        %5519 = vmatpush2.msra.mxu0 0.0
        %5520 = vmatprep.subr.mxu0 0.0
        %5521 = vmatpush2.msra.mxu0 0.0
        %5522 = vmatprep.subr.mxu0 0.0
        %5523 = vmatpush2.msra.mxu0 0.0
        %5524 = vmatprep.subr.mxu0 0.0
        %5525 = vmatpush2.msra.mxu0 0.0
        %5526 = vmatprep.subr.mxu0 0.0
        %5527 = vmatpush2.msra.mxu0 0.0
        %5528 = vmatprep.subr.mxu0 0.0
        %5529 = vmatpush2.msra.mxu0 0.0
        %5530 = vmatprep.subr.mxu0 0.0
        %5531 = vmatpush2.msra.mxu0 0.0
        %5532 = vmatprep.subr.mxu0 0.0
        %5533 = vmatpush2.msra.mxu0 0.0
        %5534 = vmatprep.subr.mxu0 0.0
        %5535 = vmatpush2.msra.mxu0 0.0
        %5536 = vmatprep.subr.mxu0 0.0
        %5537 = vmatpush2.msra.mxu0 0.0
        %5538 = vmatprep.subr.mxu0 0.0
        %5539 = vmatpush2.msra.mxu0 0.0
        %5540 = vmatprep.mubr.f32.mxu0 0.0
        %5541 = vmatmul.mubr.f32.gmra.mxu0 %v1813
        %v5542 = vpop.f32.mrf.mxu0
        %v5543 = vadd.f32 %v5391, %v5542
        %v5544 = vpop.f32.mrf.mxu0
        %5545 = vdwg.mxu0
        %5546 = vmatprep.subr.mxu0 0.0
        %5547 = vmatpush1.msra.mxu0 0.0
        %5548 = vmatprep.subr.mxu0 0.0
        %5549 = vmatpush1.msra.mxu0 0.0
        %5550 = vmatprep.subr.mxu0 0.0
        %5551 = vmatpush1.msra.mxu0 0.0
        %5552 = vmatprep.subr.mxu0 0.0
        %5553 = vmatpush1.msra.mxu0 0.0
        %5554 = vmatprep.subr.mxu0 0.0
        %5555 = vmatpush1.msra.mxu0 0.0
        %5556 = vmatprep.subr.mxu0 0.0
        %5557 = vmatpush1.msra.mxu0 0.0
        %5558 = vmatprep.subr.mxu0 0.0
        %5559 = vmatpush1.msra.mxu0 0.0
        %5560 = vmatprep.subr.mxu0 0.0
        %5561 = vmatpush1.msra.mxu0 0.0
        %5562 = vmatprep.subr.mxu0 0.0
        %5563 = vmatpush1.msra.mxu0 0.0
        %5564 = vmatprep.subr.mxu0 0.0
        %5565 = vmatpush1.msra.mxu0 0.0
        %5566 = vmatprep.subr.mxu0 0.0
        %5567 = vmatpush1.msra.mxu0 0.0
        %5568 = vmatprep.subr.mxu0 0.0
        %5569 = vmatpush1.msra.mxu0 0.0
        %5570 = vmatprep.subr.mxu0 0.0
        %5571 = vmatpush1.msra.mxu0 0.0
        %5572 = vmatprep.subr.mxu0 0.0
        %5573 = vmatpush1.msra.mxu0 0.0
        %5574 = vmatprep.subr.mxu0 0.0
        %5575 = vmatpush1.msra.mxu0 0.0
        %5576 = vmatprep.subr.mxu0 0.0
        %5577 = vmatpush1.msra.mxu0 %v5173
        %5578 = vmatprep.subr.mxu0 0.0
        %5579 = vmatpush2.msra.mxu0 0.0
        %5580 = vmatprep.subr.mxu0 0.0
        %5581 = vmatpush2.msra.mxu0 0.0
        %5582 = vmatprep.subr.mxu0 0.0
        %5583 = vmatpush2.msra.mxu0 0.0
        %5584 = vmatprep.subr.mxu0 0.0
        %5585 = vmatpush2.msra.mxu0 0.0
        %5586 = vmatprep.subr.mxu0 0.0
        %5587 = vmatpush2.msra.mxu0 0.0
        %5588 = vmatprep.subr.mxu0 0.0
        %5589 = vmatpush2.msra.mxu0 0.0
        %5590 = vmatprep.subr.mxu0 0.0
        %5591 = vmatpush2.msra.mxu0 0.0
        %5592 = vmatprep.subr.mxu0 0.0
        %5593 = vmatpush2.msra.mxu0 0.0
        %5594 = vmatprep.subr.mxu0 0.0
        %5595 = vmatpush2.msra.mxu0 0.0
        %5596 = vmatprep.subr.mxu0 0.0
        %5597 = vmatpush2.msra.mxu0 0.0
        %5598 = vmatprep.subr.mxu0 0.0
        %5599 = vmatpush2.msra.mxu0 0.0
        %5600 = vmatprep.subr.mxu0 0.0
        %5601 = vmatpush2.msra.mxu0 0.0
        %5602 = vmatprep.subr.mxu0 0.0
        %5603 = vmatpush2.msra.mxu0 0.0
        %5604 = vmatprep.subr.mxu0 0.0
        %5605 = vmatpush2.msra.mxu0 0.0
        %5606 = vmatprep.subr.mxu0 0.0
        %5607 = vmatpush2.msra.mxu0 0.0
        %5608 = vmatprep.subr.mxu0 0.0
        %5609 = vmatpush2.msra.mxu0 0.0
        %5610 = vmatprep.mubr.f32.mxu0 0.0
        %5611 = vmatmul.mubr.f32.gmra.mxu0 %v1886
        %v5612 = vpop.f32.mrf.mxu0
        %v5613 = vadd.f32 %v5392, %v5612
        %v5614 = vpop.f32.mrf.mxu0
        %5615 = vdwg.mxu0
        %5616 = vmatprep.subr.mxu0 0.0
        %5617 = vmatpush1.msra.mxu0 0.0
        %5618 = vmatprep.subr.mxu0 0.0
        %5619 = vmatpush1.msra.mxu0 0.0
        %5620 = vmatprep.subr.mxu0 0.0
        %5621 = vmatpush1.msra.mxu0 0.0
        %5622 = vmatprep.subr.mxu0 0.0
        %5623 = vmatpush1.msra.mxu0 0.0
        %5624 = vmatprep.subr.mxu0 0.0
        %5625 = vmatpush1.msra.mxu0 0.0
        %5626 = vmatprep.subr.mxu0 0.0
        %5627 = vmatpush1.msra.mxu0 0.0
        %5628 = vmatprep.subr.mxu0 0.0
        %5629 = vmatpush1.msra.mxu0 0.0
        %5630 = vmatprep.subr.mxu0 0.0
        %5631 = vmatpush1.msra.mxu0 0.0
        %5632 = vmatprep.subr.mxu0 0.0
        %5633 = vmatpush1.msra.mxu0 0.0
        %5634 = vmatprep.subr.mxu0 0.0
        %5635 = vmatpush1.msra.mxu0 0.0
        %5636 = vmatprep.subr.mxu0 0.0
        %5637 = vmatpush1.msra.mxu0 0.0
        %5638 = vmatprep.subr.mxu0 0.0
        %5639 = vmatpush1.msra.mxu0 0.0
        %5640 = vmatprep.subr.mxu0 0.0
        %5641 = vmatpush1.msra.mxu0 0.0
        %5642 = vmatprep.subr.mxu0 0.0
        %5643 = vmatpush1.msra.mxu0 0.0
        %5644 = vmatprep.subr.mxu0 0.0
        %5645 = vmatpush1.msra.mxu0 0.0
        %5646 = vmatprep.subr.mxu0 0.0
        %5647 = vmatpush1.msra.mxu0 %v5178
        %5648 = vmatprep.subr.mxu0 0.0
        %5649 = vmatpush2.msra.mxu0 0.0
        %5650 = vmatprep.subr.mxu0 0.0
        %5651 = vmatpush2.msra.mxu0 0.0
        %5652 = vmatprep.subr.mxu0 0.0
        %5653 = vmatpush2.msra.mxu0 0.0
        %5654 = vmatprep.subr.mxu0 0.0
        %5655 = vmatpush2.msra.mxu0 0.0
        %5656 = vmatprep.subr.mxu0 0.0
        %5657 = vmatpush2.msra.mxu0 0.0
        %5658 = vmatprep.subr.mxu0 0.0
        %5659 = vmatpush2.msra.mxu0 0.0
        %5660 = vmatprep.subr.mxu0 0.0
        %5661 = vmatpush2.msra.mxu0 0.0
        %5662 = vmatprep.subr.mxu0 0.0
        %5663 = vmatpush2.msra.mxu0 0.0
        %5664 = vmatprep.subr.mxu0 0.0
        %5665 = vmatpush2.msra.mxu0 0.0
        %5666 = vmatprep.subr.mxu0 0.0
        %5667 = vmatpush2.msra.mxu0 0.0
        %5668 = vmatprep.subr.mxu0 0.0
        %5669 = vmatpush2.msra.mxu0 0.0
        %5670 = vmatprep.subr.mxu0 0.0
        %5671 = vmatpush2.msra.mxu0 0.0
        %5672 = vmatprep.subr.mxu0 0.0
        %5673 = vmatpush2.msra.mxu0 0.0
        %5674 = vmatprep.subr.mxu0 0.0
        %5675 = vmatpush2.msra.mxu0 0.0
        %5676 = vmatprep.subr.mxu0 0.0
        %5677 = vmatpush2.msra.mxu0 0.0
        %5678 = vmatprep.subr.mxu0 0.0
        %5679 = vmatpush2.msra.mxu0 0.0
        %5680 = vmatprep.mubr.f32.mxu0 0.0
        %5681 = vmatmul.mubr.f32.gmra.mxu0 %v1959
        %v5682 = vpop.f32.mrf.mxu0
        %v5683 = vadd.f32 %v5393, %v5682
        %v5684 = vpop.f32.mrf.mxu0
        %5685 = vdwg.mxu0
        %5686 = vmatprep.subr.mxu0 0.0
        %5687 = vmatpush1.msra.mxu0 0.0
        %5688 = vmatprep.subr.mxu0 0.0
        %5689 = vmatpush1.msra.mxu0 0.0
        %5690 = vmatprep.subr.mxu0 0.0
        %5691 = vmatpush1.msra.mxu0 0.0
        %5692 = vmatprep.subr.mxu0 0.0
        %5693 = vmatpush1.msra.mxu0 0.0
        %5694 = vmatprep.subr.mxu0 0.0
        %5695 = vmatpush1.msra.mxu0 0.0
        %5696 = vmatprep.subr.mxu0 0.0
        %5697 = vmatpush1.msra.mxu0 0.0
        %5698 = vmatprep.subr.mxu0 0.0
        %5699 = vmatpush1.msra.mxu0 0.0
        %5700 = vmatprep.subr.mxu0 0.0
        %5701 = vmatpush1.msra.mxu0 0.0
        %5702 = vmatprep.subr.mxu0 0.0
        %5703 = vmatpush1.msra.mxu0 0.0
        %5704 = vmatprep.subr.mxu0 0.0
        %5705 = vmatpush1.msra.mxu0 0.0
        %5706 = vmatprep.subr.mxu0 0.0
        %5707 = vmatpush1.msra.mxu0 0.0
        %5708 = vmatprep.subr.mxu0 0.0
        %5709 = vmatpush1.msra.mxu0 0.0
        %5710 = vmatprep.subr.mxu0 0.0
        %5711 = vmatpush1.msra.mxu0 0.0
        %5712 = vmatprep.subr.mxu0 0.0
        %5713 = vmatpush1.msra.mxu0 0.0
        %5714 = vmatprep.subr.mxu0 0.0
        %5715 = vmatpush1.msra.mxu0 0.0
        %5716 = vmatprep.subr.mxu0 0.0
        %5717 = vmatpush1.msra.mxu0 %v5183
        %5718 = vmatprep.subr.mxu0 0.0
        %5719 = vmatpush2.msra.mxu0 0.0
        %5720 = vmatprep.subr.mxu0 0.0
        %5721 = vmatpush2.msra.mxu0 0.0
        %5722 = vmatprep.subr.mxu0 0.0
        %5723 = vmatpush2.msra.mxu0 0.0
        %5724 = vmatprep.subr.mxu0 0.0
        %5725 = vmatpush2.msra.mxu0 0.0
        %5726 = vmatprep.subr.mxu0 0.0
        %5727 = vmatpush2.msra.mxu0 0.0
        %5728 = vmatprep.subr.mxu0 0.0
        %5729 = vmatpush2.msra.mxu0 0.0
        %5730 = vmatprep.subr.mxu0 0.0
        %5731 = vmatpush2.msra.mxu0 0.0
        %5732 = vmatprep.subr.mxu0 0.0
        %5733 = vmatpush2.msra.mxu0 0.0
        %5734 = vmatprep.subr.mxu0 0.0
        %5735 = vmatpush2.msra.mxu0 0.0
        %5736 = vmatprep.subr.mxu0 0.0
        %5737 = vmatpush2.msra.mxu0 0.0
        %5738 = vmatprep.subr.mxu0 0.0
        %5739 = vmatpush2.msra.mxu0 0.0
        %5740 = vmatprep.subr.mxu0 0.0
        %5741 = vmatpush2.msra.mxu0 0.0
        %5742 = vmatprep.subr.mxu0 0.0
        %5743 = vmatpush2.msra.mxu0 0.0
        %5744 = vmatprep.subr.mxu0 0.0
        %5745 = vmatpush2.msra.mxu0 0.0
        %5746 = vmatprep.subr.mxu0 0.0
        %5747 = vmatpush2.msra.mxu0 0.0
        %5748 = vmatprep.subr.mxu0 0.0
        %5749 = vmatpush2.msra.mxu0 0.0
        %5750 = vmatprep.mubr.f32.mxu0 0.0
        %5751 = vmatmul.mubr.f32.gmra.mxu0 %v2032
        %v5752 = vpop.f32.mrf.mxu0
        %v5753 = vadd.f32 %v5394, %v5752
        %v5754 = vpop.f32.mrf.mxu0
        %5755 = vdwg.mxu0
        %5756 = vmatprep.subr.mxu0 0.0
        %5757 = vmatpush1.msra.mxu0 0.0
        %5758 = vmatprep.subr.mxu0 0.0
        %5759 = vmatpush1.msra.mxu0 0.0
        %5760 = vmatprep.subr.mxu0 0.0
        %5761 = vmatpush1.msra.mxu0 0.0
        %5762 = vmatprep.subr.mxu0 0.0
        %5763 = vmatpush1.msra.mxu0 0.0
        %5764 = vmatprep.subr.mxu0 0.0
        %5765 = vmatpush1.msra.mxu0 0.0
        %5766 = vmatprep.subr.mxu0 0.0
        %5767 = vmatpush1.msra.mxu0 0.0
        %5768 = vmatprep.subr.mxu0 0.0
        %5769 = vmatpush1.msra.mxu0 0.0
        %5770 = vmatprep.subr.mxu0 0.0
        %5771 = vmatpush1.msra.mxu0 0.0
        %5772 = vmatprep.subr.mxu0 0.0
        %5773 = vmatpush1.msra.mxu0 0.0
        %5774 = vmatprep.subr.mxu0 0.0
        %5775 = vmatpush1.msra.mxu0 0.0
        %5776 = vmatprep.subr.mxu0 0.0
        %5777 = vmatpush1.msra.mxu0 0.0
        %5778 = vmatprep.subr.mxu0 0.0
        %5779 = vmatpush1.msra.mxu0 0.0
        %5780 = vmatprep.subr.mxu0 0.0
        %5781 = vmatpush1.msra.mxu0 0.0
        %5782 = vmatprep.subr.mxu0 0.0
        %5783 = vmatpush1.msra.mxu0 0.0
        %5784 = vmatprep.subr.mxu0 0.0
        %5785 = vmatpush1.msra.mxu0 0.0
        %5786 = vmatprep.subr.mxu0 0.0
        %5787 = vmatpush1.msra.mxu0 %v5188
        %5788 = vmatprep.subr.mxu0 0.0
        %5789 = vmatpush2.msra.mxu0 0.0
        %5790 = vmatprep.subr.mxu0 0.0
        %5791 = vmatpush2.msra.mxu0 0.0
        %5792 = vmatprep.subr.mxu0 0.0
        %5793 = vmatpush2.msra.mxu0 0.0
        %5794 = vmatprep.subr.mxu0 0.0
        %5795 = vmatpush2.msra.mxu0 0.0
        %5796 = vmatprep.subr.mxu0 0.0
        %5797 = vmatpush2.msra.mxu0 0.0
        %5798 = vmatprep.subr.mxu0 0.0
        %5799 = vmatpush2.msra.mxu0 0.0
        %5800 = vmatprep.subr.mxu0 0.0
        %5801 = vmatpush2.msra.mxu0 0.0
        %5802 = vmatprep.subr.mxu0 0.0
        %5803 = vmatpush2.msra.mxu0 0.0
        %5804 = vmatprep.subr.mxu0 0.0
        %5805 = vmatpush2.msra.mxu0 0.0
        %5806 = vmatprep.subr.mxu0 0.0
        %5807 = vmatpush2.msra.mxu0 0.0
        %5808 = vmatprep.subr.mxu0 0.0
        %5809 = vmatpush2.msra.mxu0 0.0
        %5810 = vmatprep.subr.mxu0 0.0
        %5811 = vmatpush2.msra.mxu0 0.0
        %5812 = vmatprep.subr.mxu0 0.0
        %5813 = vmatpush2.msra.mxu0 0.0
        %5814 = vmatprep.subr.mxu0 0.0
        %5815 = vmatpush2.msra.mxu0 0.0
        %5816 = vmatprep.subr.mxu0 0.0
        %5817 = vmatpush2.msra.mxu0 0.0
        %5818 = vmatprep.subr.mxu0 0.0
        %5819 = vmatpush2.msra.mxu0 0.0
        %5820 = vmatprep.mubr.f32.mxu0 0.0
        %5821 = vmatmul.mubr.f32.gmra.mxu0 %v2105
        %v5822 = vpop.f32.mrf.mxu0
        %v5823 = vadd.f32 %v5395, %v5822
        %v5824 = vpop.f32.mrf.mxu0
        %5825 = vdwg.mxu0
        %5826 = vmatprep.subr.mxu0 0.0
        %5827 = vmatpush1.msra.mxu0 0.0
        %5828 = vmatprep.subr.mxu0 0.0
        %5829 = vmatpush1.msra.mxu0 0.0
        %5830 = vmatprep.subr.mxu0 0.0
        %5831 = vmatpush1.msra.mxu0 0.0
        %5832 = vmatprep.subr.mxu0 0.0
        %5833 = vmatpush1.msra.mxu0 0.0
        %5834 = vmatprep.subr.mxu0 0.0
        %5835 = vmatpush1.msra.mxu0 0.0
        %5836 = vmatprep.subr.mxu0 0.0
        %5837 = vmatpush1.msra.mxu0 0.0
        %5838 = vmatprep.subr.mxu0 0.0
        %5839 = vmatpush1.msra.mxu0 0.0
        %5840 = vmatprep.subr.mxu0 0.0
        %5841 = vmatpush1.msra.mxu0 0.0
        %5842 = vmatprep.subr.mxu0 0.0
        %5843 = vmatpush1.msra.mxu0 0.0
        %5844 = vmatprep.subr.mxu0 0.0
        %5845 = vmatpush1.msra.mxu0 0.0
        %5846 = vmatprep.subr.mxu0 0.0
        %5847 = vmatpush1.msra.mxu0 0.0
        %5848 = vmatprep.subr.mxu0 0.0
        %5849 = vmatpush1.msra.mxu0 0.0
        %5850 = vmatprep.subr.mxu0 0.0
        %5851 = vmatpush1.msra.mxu0 0.0
        %5852 = vmatprep.subr.mxu0 0.0
        %5853 = vmatpush1.msra.mxu0 0.0
        %5854 = vmatprep.subr.mxu0 0.0
        %5855 = vmatpush1.msra.mxu0 0.0
        %5856 = vmatprep.subr.mxu0 0.0
        %5857 = vmatpush1.msra.mxu0 %v5193
        %5858 = vmatprep.subr.mxu0 0.0
        %5859 = vmatpush2.msra.mxu0 0.0
        %5860 = vmatprep.subr.mxu0 0.0
        %5861 = vmatpush2.msra.mxu0 0.0
        %5862 = vmatprep.subr.mxu0 0.0
        %5863 = vmatpush2.msra.mxu0 0.0
        %5864 = vmatprep.subr.mxu0 0.0
        %5865 = vmatpush2.msra.mxu0 0.0
        %5866 = vmatprep.subr.mxu0 0.0
        %5867 = vmatpush2.msra.mxu0 0.0
        %5868 = vmatprep.subr.mxu0 0.0
        %5869 = vmatpush2.msra.mxu0 0.0
        %5870 = vmatprep.subr.mxu0 0.0
        %5871 = vmatpush2.msra.mxu0 0.0
        %5872 = vmatprep.subr.mxu0 0.0
        %5873 = vmatpush2.msra.mxu0 0.0
        %5874 = vmatprep.subr.mxu0 0.0
        %5875 = vmatpush2.msra.mxu0 0.0
        %5876 = vmatprep.subr.mxu0 0.0
        %5877 = vmatpush2.msra.mxu0 0.0
        %5878 = vmatprep.subr.mxu0 0.0
        %5879 = vmatpush2.msra.mxu0 0.0
        %5880 = vmatprep.subr.mxu0 0.0
        %5881 = vmatpush2.msra.mxu0 0.0
        %5882 = vmatprep.subr.mxu0 0.0
        %5883 = vmatpush2.msra.mxu0 0.0
        %5884 = vmatprep.subr.mxu0 0.0
        %5885 = vmatpush2.msra.mxu0 0.0
        %5886 = vmatprep.subr.mxu0 0.0
        %5887 = vmatpush2.msra.mxu0 0.0
        %5888 = vmatprep.subr.mxu0 0.0
        %5889 = vmatpush2.msra.mxu0 0.0
        %5890 = vmatprep.mubr.f32.mxu0 0.0
        %5891 = vmatmul.mubr.f32.gmra.mxu0 %v2178
        %v5892 = vpop.f32.mrf.mxu0
        %v5893 = vadd.f32 %v5396, %v5892
        %v5894 = vpop.f32.mrf.mxu0
        %5895 = vdwg.mxu0
        %5896 = vmatprep.subr.mxu0 0.0
        %5897 = vmatpush1.msra.mxu0 0.0
        %5898 = vmatprep.subr.mxu0 0.0
        %5899 = vmatpush1.msra.mxu0 0.0
        %5900 = vmatprep.subr.mxu0 0.0
        %5901 = vmatpush1.msra.mxu0 0.0
        %5902 = vmatprep.subr.mxu0 0.0
        %5903 = vmatpush1.msra.mxu0 0.0
        %5904 = vmatprep.subr.mxu0 0.0
        %5905 = vmatpush1.msra.mxu0 0.0
        %5906 = vmatprep.subr.mxu0 0.0
        %5907 = vmatpush1.msra.mxu0 0.0
        %5908 = vmatprep.subr.mxu0 0.0
        %5909 = vmatpush1.msra.mxu0 0.0
        %5910 = vmatprep.subr.mxu0 0.0
        %5911 = vmatpush1.msra.mxu0 0.0
        %5912 = vmatprep.subr.mxu0 0.0
        %5913 = vmatpush1.msra.mxu0 0.0
        %5914 = vmatprep.subr.mxu0 0.0
        %5915 = vmatpush1.msra.mxu0 0.0
        %5916 = vmatprep.subr.mxu0 0.0
        %5917 = vmatpush1.msra.mxu0 0.0
        %5918 = vmatprep.subr.mxu0 0.0
        %5919 = vmatpush1.msra.mxu0 0.0
        %5920 = vmatprep.subr.mxu0 0.0
        %5921 = vmatpush1.msra.mxu0 0.0
        %5922 = vmatprep.subr.mxu0 0.0
        %5923 = vmatpush1.msra.mxu0 0.0
        %5924 = vmatprep.subr.mxu0 0.0
        %5925 = vmatpush1.msra.mxu0 0.0
        %5926 = vmatprep.subr.mxu0 0.0
        %5927 = vmatpush1.msra.mxu0 %v5198
        %5928 = vmatprep.subr.mxu0 0.0
        %5929 = vmatpush2.msra.mxu0 0.0
        %5930 = vmatprep.subr.mxu0 0.0
        %5931 = vmatpush2.msra.mxu0 0.0
        %5932 = vmatprep.subr.mxu0 0.0
        %5933 = vmatpush2.msra.mxu0 0.0
        %5934 = vmatprep.subr.mxu0 0.0
        %5935 = vmatpush2.msra.mxu0 0.0
        %5936 = vmatprep.subr.mxu0 0.0
        %5937 = vmatpush2.msra.mxu0 0.0
        %5938 = vmatprep.subr.mxu0 0.0
        %5939 = vmatpush2.msra.mxu0 0.0
        %5940 = vmatprep.subr.mxu0 0.0
        %5941 = vmatpush2.msra.mxu0 0.0
        %5942 = vmatprep.subr.mxu0 0.0
        %5943 = vmatpush2.msra.mxu0 0.0
        %5944 = vmatprep.subr.mxu0 0.0
        %5945 = vmatpush2.msra.mxu0 0.0
        %5946 = vmatprep.subr.mxu0 0.0
        %5947 = vmatpush2.msra.mxu0 0.0
        %5948 = vmatprep.subr.mxu0 0.0
        %5949 = vmatpush2.msra.mxu0 0.0
        %5950 = vmatprep.subr.mxu0 0.0
        %5951 = vmatpush2.msra.mxu0 0.0
        %5952 = vmatprep.subr.mxu0 0.0
        %5953 = vmatpush2.msra.mxu0 0.0
        %5954 = vmatprep.subr.mxu0 0.0
        %5955 = vmatpush2.msra.mxu0 0.0
        %5956 = vmatprep.subr.mxu0 0.0
        %5957 = vmatpush2.msra.mxu0 0.0
        %5958 = vmatprep.subr.mxu0 0.0
        %5959 = vmatpush2.msra.mxu0 0.0
        %5960 = vmatprep.mubr.f32.mxu0 0.0
        %5961 = vmatmul.mubr.f32.gmra.mxu0 %v2251
        %v5962 = vpop.f32.mrf.mxu0
        %v5963 = vadd.f32 %v5397, %v5962
        %v5964 = vpop.f32.mrf.mxu0
        %5965 = vdwg.mxu0
        %5966 = vmatprep.subr.mxu0 0.0
        %5967 = vmatpush1.msra.mxu0 0.0
        %5968 = vmatprep.subr.mxu0 0.0
        %5969 = vmatpush1.msra.mxu0 0.0
        %5970 = vmatprep.subr.mxu0 0.0
        %5971 = vmatpush1.msra.mxu0 0.0
        %5972 = vmatprep.subr.mxu0 0.0
        %5973 = vmatpush1.msra.mxu0 0.0
        %5974 = vmatprep.subr.mxu0 0.0
        %5975 = vmatpush1.msra.mxu0 0.0
        %5976 = vmatprep.subr.mxu0 0.0
        %5977 = vmatpush1.msra.mxu0 0.0
        %5978 = vmatprep.subr.mxu0 0.0
        %5979 = vmatpush1.msra.mxu0 0.0
        %5980 = vmatprep.subr.mxu0 0.0
        %5981 = vmatpush1.msra.mxu0 0.0
        %5982 = vmatprep.subr.mxu0 0.0
        %5983 = vmatpush1.msra.mxu0 0.0
        %5984 = vmatprep.subr.mxu0 0.0
        %5985 = vmatpush1.msra.mxu0 0.0
        %5986 = vmatprep.subr.mxu0 0.0
        %5987 = vmatpush1.msra.mxu0 0.0
        %5988 = vmatprep.subr.mxu0 0.0
        %5989 = vmatpush1.msra.mxu0 0.0
        %5990 = vmatprep.subr.mxu0 0.0
        %5991 = vmatpush1.msra.mxu0 0.0
        %5992 = vmatprep.subr.mxu0 0.0
        %5993 = vmatpush1.msra.mxu0 0.0
        %5994 = vmatprep.subr.mxu0 0.0
        %5995 = vmatpush1.msra.mxu0 0.0
        %5996 = vmatprep.subr.mxu0 0.0
        %5997 = vmatpush1.msra.mxu0 %v5203
        %5998 = vmatprep.subr.mxu0 0.0
        %5999 = vmatpush2.msra.mxu0 0.0
        %6000 = vmatprep.subr.mxu0 0.0
        %6001 = vmatpush2.msra.mxu0 0.0
        %6002 = vmatprep.subr.mxu0 0.0
        %6003 = vmatpush2.msra.mxu0 0.0
        %6004 = vmatprep.subr.mxu0 0.0
        %6005 = vmatpush2.msra.mxu0 0.0
        %6006 = vmatprep.subr.mxu0 0.0
        %6007 = vmatpush2.msra.mxu0 0.0
        %6008 = vmatprep.subr.mxu0 0.0
        %6009 = vmatpush2.msra.mxu0 0.0
        %6010 = vmatprep.subr.mxu0 0.0
        %6011 = vmatpush2.msra.mxu0 0.0
        %6012 = vmatprep.subr.mxu0 0.0
        %6013 = vmatpush2.msra.mxu0 0.0
        %6014 = vmatprep.subr.mxu0 0.0
        %6015 = vmatpush2.msra.mxu0 0.0
        %6016 = vmatprep.subr.mxu0 0.0
        %6017 = vmatpush2.msra.mxu0 0.0
        %6018 = vmatprep.subr.mxu0 0.0
        %6019 = vmatpush2.msra.mxu0 0.0
        %6020 = vmatprep.subr.mxu0 0.0
        %6021 = vmatpush2.msra.mxu0 0.0
        %6022 = vmatprep.subr.mxu0 0.0
        %6023 = vmatpush2.msra.mxu0 0.0
        %6024 = vmatprep.subr.mxu0 0.0
        %6025 = vmatpush2.msra.mxu0 0.0
        %6026 = vmatprep.subr.mxu0 0.0
        %6027 = vmatpush2.msra.mxu0 0.0
        %6028 = vmatprep.subr.mxu0 0.0
        %6029 = vmatpush2.msra.mxu0 0.0
        %6030 = vmatprep.mubr.f32.mxu0 0.0
        %6031 = vmatmul.mubr.f32.gmra.mxu0 %v2324
        %v6032 = vpop.f32.mrf.mxu0
        %v6033 = vadd.f32 %v5398, %v6032
        %v6034 = vpop.f32.mrf.mxu0
        %6035 = vdwg.mxu0
        %6036 = vmatprep.subr.mxu0 0.0
        %6037 = vmatpush1.msra.mxu0 0.0
        %6038 = vmatprep.subr.mxu0 0.0
        %6039 = vmatpush1.msra.mxu0 0.0
        %6040 = vmatprep.subr.mxu0 0.0
        %6041 = vmatpush1.msra.mxu0 0.0
        %6042 = vmatprep.subr.mxu0 0.0
        %6043 = vmatpush1.msra.mxu0 0.0
        %6044 = vmatprep.subr.mxu0 0.0
        %6045 = vmatpush1.msra.mxu0 0.0
        %6046 = vmatprep.subr.mxu0 0.0
        %6047 = vmatpush1.msra.mxu0 0.0
        %6048 = vmatprep.subr.mxu0 0.0
        %6049 = vmatpush1.msra.mxu0 0.0
        %6050 = vmatprep.subr.mxu0 0.0
        %6051 = vmatpush1.msra.mxu0 0.0
        %6052 = vmatprep.subr.mxu0 0.0
        %6053 = vmatpush1.msra.mxu0 0.0
        %6054 = vmatprep.subr.mxu0 0.0
        %6055 = vmatpush1.msra.mxu0 0.0
        %6056 = vmatprep.subr.mxu0 0.0
        %6057 = vmatpush1.msra.mxu0 0.0
        %6058 = vmatprep.subr.mxu0 0.0
        %6059 = vmatpush1.msra.mxu0 0.0
        %6060 = vmatprep.subr.mxu0 0.0
        %6061 = vmatpush1.msra.mxu0 0.0
        %6062 = vmatprep.subr.mxu0 0.0
        %6063 = vmatpush1.msra.mxu0 0.0
        %6064 = vmatprep.subr.mxu0 0.0
        %6065 = vmatpush1.msra.mxu0 0.0
        %6066 = vmatprep.subr.mxu0 0.0
        %6067 = vmatpush1.msra.mxu0 %v5208
        %6068 = vmatprep.subr.mxu0 0.0
        %6069 = vmatpush2.msra.mxu0 0.0
        %6070 = vmatprep.subr.mxu0 0.0
        %6071 = vmatpush2.msra.mxu0 0.0
        %6072 = vmatprep.subr.mxu0 0.0
        %6073 = vmatpush2.msra.mxu0 0.0
        %6074 = vmatprep.subr.mxu0 0.0
        %6075 = vmatpush2.msra.mxu0 0.0
        %6076 = vmatprep.subr.mxu0 0.0
        %6077 = vmatpush2.msra.mxu0 0.0
        %6078 = vmatprep.subr.mxu0 0.0
        %6079 = vmatpush2.msra.mxu0 0.0
        %6080 = vmatprep.subr.mxu0 0.0
        %6081 = vmatpush2.msra.mxu0 0.0
        %6082 = vmatprep.subr.mxu0 0.0
        %6083 = vmatpush2.msra.mxu0 0.0
        %6084 = vmatprep.subr.mxu0 0.0
        %6085 = vmatpush2.msra.mxu0 0.0
        %6086 = vmatprep.subr.mxu0 0.0
        %6087 = vmatpush2.msra.mxu0 0.0
        %6088 = vmatprep.subr.mxu0 0.0
        %6089 = vmatpush2.msra.mxu0 0.0
        %6090 = vmatprep.subr.mxu0 0.0
        %6091 = vmatpush2.msra.mxu0 0.0
        %6092 = vmatprep.subr.mxu0 0.0
        %6093 = vmatpush2.msra.mxu0 0.0
        %6094 = vmatprep.subr.mxu0 0.0
        %6095 = vmatpush2.msra.mxu0 0.0
        %6096 = vmatprep.subr.mxu0 0.0
        %6097 = vmatpush2.msra.mxu0 0.0
        %6098 = vmatprep.subr.mxu0 0.0
        %6099 = vmatpush2.msra.mxu0 0.0
        %6100 = vmatprep.mubr.f32.mxu0 0.0
        %6101 = vmatmul.mubr.f32.gmra.mxu0 %v2397
        %v6102 = vpop.f32.mrf.mxu0
        %v6103 = vadd.f32 %v5399, %v6102
        %v6104 = vpop.f32.mrf.mxu0
        %6105 = vdwg.mxu0
        %6106 = vmatprep.subr.mxu0 0.0
        %6107 = vmatpush1.msra.mxu0 0.0
        %6108 = vmatprep.subr.mxu0 0.0
        %6109 = vmatpush1.msra.mxu0 0.0
        %6110 = vmatprep.subr.mxu0 0.0
        %6111 = vmatpush1.msra.mxu0 0.0
        %6112 = vmatprep.subr.mxu0 0.0
        %6113 = vmatpush1.msra.mxu0 0.0
        %6114 = vmatprep.subr.mxu0 0.0
        %6115 = vmatpush1.msra.mxu0 0.0
        %6116 = vmatprep.subr.mxu0 0.0
        %6117 = vmatpush1.msra.mxu0 0.0
        %6118 = vmatprep.subr.mxu0 0.0
        %6119 = vmatpush1.msra.mxu0 0.0
        %6120 = vmatprep.subr.mxu0 0.0
        %6121 = vmatpush1.msra.mxu0 0.0
        %6122 = vmatprep.subr.mxu0 0.0
        %6123 = vmatpush1.msra.mxu0 0.0
        %6124 = vmatprep.subr.mxu0 0.0
        %6125 = vmatpush1.msra.mxu0 0.0
        %6126 = vmatprep.subr.mxu0 0.0
        %6127 = vmatpush1.msra.mxu0 0.0
        %6128 = vmatprep.subr.mxu0 0.0
        %6129 = vmatpush1.msra.mxu0 0.0
        %6130 = vmatprep.subr.mxu0 0.0
        %6131 = vmatpush1.msra.mxu0 0.0
        %6132 = vmatprep.subr.mxu0 0.0
        %6133 = vmatpush1.msra.mxu0 0.0
        %6134 = vmatprep.subr.mxu0 0.0
        %6135 = vmatpush1.msra.mxu0 0.0
        %6136 = vmatprep.subr.mxu0 0.0
        %6137 = vmatpush1.msra.mxu0 %v5213
        %6138 = vmatprep.subr.mxu0 0.0
        %6139 = vmatpush2.msra.mxu0 0.0
        %6140 = vmatprep.subr.mxu0 0.0
        %6141 = vmatpush2.msra.mxu0 0.0
        %6142 = vmatprep.subr.mxu0 0.0
        %6143 = vmatpush2.msra.mxu0 0.0
        %6144 = vmatprep.subr.mxu0 0.0
        %6145 = vmatpush2.msra.mxu0 0.0
        %6146 = vmatprep.subr.mxu0 0.0
        %6147 = vmatpush2.msra.mxu0 0.0
        %6148 = vmatprep.subr.mxu0 0.0
        %6149 = vmatpush2.msra.mxu0 0.0
        %6150 = vmatprep.subr.mxu0 0.0
        %6151 = vmatpush2.msra.mxu0 0.0
        %6152 = vmatprep.subr.mxu0 0.0
        %6153 = vmatpush2.msra.mxu0 0.0
        %6154 = vmatprep.subr.mxu0 0.0
        %6155 = vmatpush2.msra.mxu0 0.0
        %6156 = vmatprep.subr.mxu0 0.0
        %6157 = vmatpush2.msra.mxu0 0.0
        %6158 = vmatprep.subr.mxu0 0.0
        %6159 = vmatpush2.msra.mxu0 0.0
        %6160 = vmatprep.subr.mxu0 0.0
        %6161 = vmatpush2.msra.mxu0 0.0
        %6162 = vmatprep.subr.mxu0 0.0
        %6163 = vmatpush2.msra.mxu0 0.0
        %6164 = vmatprep.subr.mxu0 0.0
        %6165 = vmatpush2.msra.mxu0 0.0
        %6166 = vmatprep.subr.mxu0 0.0
        %6167 = vmatpush2.msra.mxu0 0.0
        %6168 = vmatprep.subr.mxu0 0.0
        %6169 = vmatpush2.msra.mxu0 0.0
        %6170 = vmatprep.mubr.f32.mxu0 0.0
        %6171 = vmatmul.mubr.f32.gmra.mxu0 %v2470
        %v6172 = vpop.f32.mrf.mxu0
        %v6173 = vadd.f32 %v5400, %v6172
        %v6174 = vpop.f32.mrf.mxu0
        %6175 = vdwg.mxu0
        %6176 = vmatprep.subr.mxu0 0.0
        %6177 = vmatpush1.msra.mxu0 0.0
        %6178 = vmatprep.subr.mxu0 0.0
        %6179 = vmatpush1.msra.mxu0 0.0
        %6180 = vmatprep.subr.mxu0 0.0
        %6181 = vmatpush1.msra.mxu0 0.0
        %6182 = vmatprep.subr.mxu0 0.0
        %6183 = vmatpush1.msra.mxu0 0.0
        %6184 = vmatprep.subr.mxu0 0.0
        %6185 = vmatpush1.msra.mxu0 0.0
        %6186 = vmatprep.subr.mxu0 0.0
        %6187 = vmatpush1.msra.mxu0 0.0
        %6188 = vmatprep.subr.mxu0 0.0
        %6189 = vmatpush1.msra.mxu0 0.0
        %6190 = vmatprep.subr.mxu0 0.0
        %6191 = vmatpush1.msra.mxu0 0.0
        %6192 = vmatprep.subr.mxu0 0.0
        %6193 = vmatpush1.msra.mxu0 0.0
        %6194 = vmatprep.subr.mxu0 0.0
        %6195 = vmatpush1.msra.mxu0 0.0
        %6196 = vmatprep.subr.mxu0 0.0
        %6197 = vmatpush1.msra.mxu0 0.0
        %6198 = vmatprep.subr.mxu0 0.0
        %6199 = vmatpush1.msra.mxu0 0.0
        %6200 = vmatprep.subr.mxu0 0.0
        %6201 = vmatpush1.msra.mxu0 0.0
        %6202 = vmatprep.subr.mxu0 0.0
        %6203 = vmatpush1.msra.mxu0 0.0
        %6204 = vmatprep.subr.mxu0 0.0
        %6205 = vmatpush1.msra.mxu0 0.0
        %6206 = vmatprep.subr.mxu0 0.0
        %6207 = vmatpush1.msra.mxu0 %v5218
        %6208 = vmatprep.subr.mxu0 0.0
        %6209 = vmatpush2.msra.mxu0 0.0
        %6210 = vmatprep.subr.mxu0 0.0
        %6211 = vmatpush2.msra.mxu0 0.0
        %6212 = vmatprep.subr.mxu0 0.0
        %6213 = vmatpush2.msra.mxu0 0.0
        %6214 = vmatprep.subr.mxu0 0.0
        %6215 = vmatpush2.msra.mxu0 0.0
        %6216 = vmatprep.subr.mxu0 0.0
        %6217 = vmatpush2.msra.mxu0 0.0
        %6218 = vmatprep.subr.mxu0 0.0
        %6219 = vmatpush2.msra.mxu0 0.0
        %6220 = vmatprep.subr.mxu0 0.0
        %6221 = vmatpush2.msra.mxu0 0.0
        %6222 = vmatprep.subr.mxu0 0.0
        %6223 = vmatpush2.msra.mxu0 0.0
        %6224 = vmatprep.subr.mxu0 0.0
        %6225 = vmatpush2.msra.mxu0 0.0
        %6226 = vmatprep.subr.mxu0 0.0
        %6227 = vmatpush2.msra.mxu0 0.0
        %6228 = vmatprep.subr.mxu0 0.0
        %6229 = vmatpush2.msra.mxu0 0.0
        %6230 = vmatprep.subr.mxu0 0.0
        %6231 = vmatpush2.msra.mxu0 0.0
        %6232 = vmatprep.subr.mxu0 0.0
        %6233 = vmatpush2.msra.mxu0 0.0
        %6234 = vmatprep.subr.mxu0 0.0
        %6235 = vmatpush2.msra.mxu0 0.0
        %6236 = vmatprep.subr.mxu0 0.0
        %6237 = vmatpush2.msra.mxu0 0.0
        %6238 = vmatprep.subr.mxu0 0.0
        %6239 = vmatpush2.msra.mxu0 0.0
        %6240 = vmatprep.mubr.f32.mxu0 0.0
        %6241 = vmatmul.mubr.f32.gmra.mxu0 %v2543
        %v6242 = vpop.f32.mrf.mxu0
        %v6243 = vadd.f32 %v5401, %v6242
        %v6244 = vpop.f32.mrf.mxu0
        %6245 = vdwg.mxu0
        %6246 = vmatprep.subr.mxu0 0.0
        %6247 = vmatpush1.msra.mxu0 0.0
        %6248 = vmatprep.subr.mxu0 0.0
        %6249 = vmatpush1.msra.mxu0 0.0
        %6250 = vmatprep.subr.mxu0 0.0
        %6251 = vmatpush1.msra.mxu0 0.0
        %6252 = vmatprep.subr.mxu0 0.0
        %6253 = vmatpush1.msra.mxu0 0.0
        %6254 = vmatprep.subr.mxu0 0.0
        %6255 = vmatpush1.msra.mxu0 0.0
        %6256 = vmatprep.subr.mxu0 0.0
        %6257 = vmatpush1.msra.mxu0 0.0
        %6258 = vmatprep.subr.mxu0 0.0
        %6259 = vmatpush1.msra.mxu0 0.0
        %6260 = vmatprep.subr.mxu0 0.0
        %6261 = vmatpush1.msra.mxu0 0.0
        %6262 = vmatprep.subr.mxu0 0.0
        %6263 = vmatpush1.msra.mxu0 0.0
        %6264 = vmatprep.subr.mxu0 0.0
        %6265 = vmatpush1.msra.mxu0 0.0
        %6266 = vmatprep.subr.mxu0 0.0
        %6267 = vmatpush1.msra.mxu0 0.0
        %6268 = vmatprep.subr.mxu0 0.0
        %6269 = vmatpush1.msra.mxu0 0.0
        %6270 = vmatprep.subr.mxu0 0.0
        %6271 = vmatpush1.msra.mxu0 0.0
        %6272 = vmatprep.subr.mxu0 0.0
        %6273 = vmatpush1.msra.mxu0 0.0
        %6274 = vmatprep.subr.mxu0 0.0
        %6275 = vmatpush1.msra.mxu0 0.0
        %6276 = vmatprep.subr.mxu0 0.0
        %6277 = vmatpush1.msra.mxu0 %v5223
        %6278 = vmatprep.subr.mxu0 0.0
        %6279 = vmatpush2.msra.mxu0 0.0
        %6280 = vmatprep.subr.mxu0 0.0
        %6281 = vmatpush2.msra.mxu0 0.0
        %6282 = vmatprep.subr.mxu0 0.0
        %6283 = vmatpush2.msra.mxu0 0.0
        %6284 = vmatprep.subr.mxu0 0.0
        %6285 = vmatpush2.msra.mxu0 0.0
        %6286 = vmatprep.subr.mxu0 0.0
        %6287 = vmatpush2.msra.mxu0 0.0
        %6288 = vmatprep.subr.mxu0 0.0
        %6289 = vmatpush2.msra.mxu0 0.0
        %6290 = vmatprep.subr.mxu0 0.0
        %6291 = vmatpush2.msra.mxu0 0.0
        %6292 = vmatprep.subr.mxu0 0.0
        %6293 = vmatpush2.msra.mxu0 0.0
        %6294 = vmatprep.subr.mxu0 0.0
        %6295 = vmatpush2.msra.mxu0 0.0
        %6296 = vmatprep.subr.mxu0 0.0
        %6297 = vmatpush2.msra.mxu0 0.0
        %6298 = vmatprep.subr.mxu0 0.0
        %6299 = vmatpush2.msra.mxu0 0.0
        %6300 = vmatprep.subr.mxu0 0.0
        %6301 = vmatpush2.msra.mxu0 0.0
        %6302 = vmatprep.subr.mxu0 0.0
        %6303 = vmatpush2.msra.mxu0 0.0
        %6304 = vmatprep.subr.mxu0 0.0
        %6305 = vmatpush2.msra.mxu0 0.0
        %6306 = vmatprep.subr.mxu0 0.0
        %6307 = vmatpush2.msra.mxu0 0.0
        %6308 = vmatprep.subr.mxu0 0.0
        %6309 = vmatpush2.msra.mxu0 0.0
        %6310 = vmatprep.mubr.f32.mxu0 0.0
        %6311 = vmatmul.mubr.f32.gmra.mxu0 %v2616
        %v6312 = vpop.f32.mrf.mxu0
        %v6313 = vadd.f32 %v5402, %v6312
        %v6314 = vpop.f32.mrf.mxu0
        %6315 = vdwg.mxu0
        %6316 = vmatprep.subr.mxu0 0.0
        %6317 = vmatpush1.msra.mxu0 0.0
        %6318 = vmatprep.subr.mxu0 0.0
        %6319 = vmatpush1.msra.mxu0 0.0
        %6320 = vmatprep.subr.mxu0 0.0
        %6321 = vmatpush1.msra.mxu0 0.0
        %6322 = vmatprep.subr.mxu0 0.0
        %6323 = vmatpush1.msra.mxu0 0.0
        %6324 = vmatprep.subr.mxu0 0.0
        %6325 = vmatpush1.msra.mxu0 0.0
        %6326 = vmatprep.subr.mxu0 0.0
        %6327 = vmatpush1.msra.mxu0 0.0
        %6328 = vmatprep.subr.mxu0 0.0
        %6329 = vmatpush1.msra.mxu0 0.0
        %6330 = vmatprep.subr.mxu0 0.0
        %6331 = vmatpush1.msra.mxu0 0.0
        %6332 = vmatprep.subr.mxu0 0.0
        %6333 = vmatpush1.msra.mxu0 0.0
        %6334 = vmatprep.subr.mxu0 0.0
        %6335 = vmatpush1.msra.mxu0 0.0
        %6336 = vmatprep.subr.mxu0 0.0
        %6337 = vmatpush1.msra.mxu0 0.0
        %6338 = vmatprep.subr.mxu0 0.0
        %6339 = vmatpush1.msra.mxu0 0.0
        %6340 = vmatprep.subr.mxu0 0.0
        %6341 = vmatpush1.msra.mxu0 0.0
        %6342 = vmatprep.subr.mxu0 0.0
        %6343 = vmatpush1.msra.mxu0 0.0
        %6344 = vmatprep.subr.mxu0 0.0
        %6345 = vmatpush1.msra.mxu0 0.0
        %6346 = vmatprep.subr.mxu0 0.0
        %6347 = vmatpush1.msra.mxu0 %v5228
        %6348 = vmatprep.subr.mxu0 0.0
        %6349 = vmatpush2.msra.mxu0 0.0
        %6350 = vmatprep.subr.mxu0 0.0
        %6351 = vmatpush2.msra.mxu0 0.0
        %6352 = vmatprep.subr.mxu0 0.0
        %6353 = vmatpush2.msra.mxu0 0.0
        %6354 = vmatprep.subr.mxu0 0.0
        %6355 = vmatpush2.msra.mxu0 0.0
        %6356 = vmatprep.subr.mxu0 0.0
        %6357 = vmatpush2.msra.mxu0 0.0
        %6358 = vmatprep.subr.mxu0 0.0
        %6359 = vmatpush2.msra.mxu0 0.0
        %6360 = vmatprep.subr.mxu0 0.0
        %6361 = vmatpush2.msra.mxu0 0.0
        %6362 = vmatprep.subr.mxu0 0.0
        %6363 = vmatpush2.msra.mxu0 0.0
        %6364 = vmatprep.subr.mxu0 0.0
        %6365 = vmatpush2.msra.mxu0 0.0
        %6366 = vmatprep.subr.mxu0 0.0
        %6367 = vmatpush2.msra.mxu0 0.0
        %6368 = vmatprep.subr.mxu0 0.0
        %6369 = vmatpush2.msra.mxu0 0.0
        %6370 = vmatprep.subr.mxu0 0.0
        %6371 = vmatpush2.msra.mxu0 0.0
        %6372 = vmatprep.subr.mxu0 0.0
        %6373 = vmatpush2.msra.mxu0 0.0
        %6374 = vmatprep.subr.mxu0 0.0
        %6375 = vmatpush2.msra.mxu0 0.0
        %6376 = vmatprep.subr.mxu0 0.0
        %6377 = vmatpush2.msra.mxu0 0.0
        %6378 = vmatprep.subr.mxu0 0.0
        %6379 = vmatpush2.msra.mxu0 0.0
        %6380 = vmatprep.mubr.f32.mxu0 0.0
        %6381 = vmatmul.mubr.f32.gmra.mxu0 %v2689
        %v6382 = vpop.f32.mrf.mxu0
        %v6383 = vadd.f32 %v5403, %v6382
        %v6384 = vpop.f32.mrf.mxu0
        %6385 = vdwg.mxu0
        %6386 = vmatprep.subr.mxu0 0.0
        %6387 = vmatpush1.msra.mxu0 0.0
        %6388 = vmatprep.subr.mxu0 0.0
        %6389 = vmatpush1.msra.mxu0 0.0
        %6390 = vmatprep.subr.mxu0 0.0
        %6391 = vmatpush1.msra.mxu0 0.0
        %6392 = vmatprep.subr.mxu0 0.0
        %6393 = vmatpush1.msra.mxu0 0.0
        %6394 = vmatprep.subr.mxu0 0.0
        %6395 = vmatpush1.msra.mxu0 0.0
        %6396 = vmatprep.subr.mxu0 0.0
        %6397 = vmatpush1.msra.mxu0 0.0
        %6398 = vmatprep.subr.mxu0 0.0
        %6399 = vmatpush1.msra.mxu0 0.0
        %6400 = vmatprep.subr.mxu0 0.0
        %6401 = vmatpush1.msra.mxu0 0.0
        %6402 = vmatprep.subr.mxu0 0.0
        %6403 = vmatpush1.msra.mxu0 0.0
        %6404 = vmatprep.subr.mxu0 0.0
        %6405 = vmatpush1.msra.mxu0 0.0
        %6406 = vmatprep.subr.mxu0 0.0
        %6407 = vmatpush1.msra.mxu0 0.0
        %6408 = vmatprep.subr.mxu0 0.0
        %6409 = vmatpush1.msra.mxu0 0.0
        %6410 = vmatprep.subr.mxu0 0.0
        %6411 = vmatpush1.msra.mxu0 0.0
        %6412 = vmatprep.subr.mxu0 0.0
        %6413 = vmatpush1.msra.mxu0 0.0
        %6414 = vmatprep.subr.mxu0 0.0
        %6415 = vmatpush1.msra.mxu0 0.0
        %6416 = vmatprep.subr.mxu0 0.0
        %6417 = vmatpush1.msra.mxu0 %v5233
        %6418 = vmatprep.subr.mxu0 0.0
        %6419 = vmatpush2.msra.mxu0 0.0
        %6420 = vmatprep.subr.mxu0 0.0
        %6421 = vmatpush2.msra.mxu0 0.0
        %6422 = vmatprep.subr.mxu0 0.0
        %6423 = vmatpush2.msra.mxu0 0.0
        %6424 = vmatprep.subr.mxu0 0.0
        %6425 = vmatpush2.msra.mxu0 0.0
        %6426 = vmatprep.subr.mxu0 0.0
        %6427 = vmatpush2.msra.mxu0 0.0
        %6428 = vmatprep.subr.mxu0 0.0
        %6429 = vmatpush2.msra.mxu0 0.0
        %6430 = vmatprep.subr.mxu0 0.0
        %6431 = vmatpush2.msra.mxu0 0.0
        %6432 = vmatprep.subr.mxu0 0.0
        %6433 = vmatpush2.msra.mxu0 0.0
        %6434 = vmatprep.subr.mxu0 0.0
        %6435 = vmatpush2.msra.mxu0 0.0
        %6436 = vmatprep.subr.mxu0 0.0
        %6437 = vmatpush2.msra.mxu0 0.0
        %6438 = vmatprep.subr.mxu0 0.0
        %6439 = vmatpush2.msra.mxu0 0.0
        %6440 = vmatprep.subr.mxu0 0.0
        %6441 = vmatpush2.msra.mxu0 0.0
        %6442 = vmatprep.subr.mxu0 0.0
        %6443 = vmatpush2.msra.mxu0 0.0
        %6444 = vmatprep.subr.mxu0 0.0
        %6445 = vmatpush2.msra.mxu0 0.0
        %6446 = vmatprep.subr.mxu0 0.0
        %6447 = vmatpush2.msra.mxu0 0.0
        %6448 = vmatprep.subr.mxu0 0.0
        %6449 = vmatpush2.msra.mxu0 0.0
        %6450 = vmatprep.mubr.f32.mxu0 0.0
        %6451 = vmatmul.mubr.f32.gmra.mxu0 %v2762
        %v6452 = vpop.f32.mrf.mxu0
        %v6453 = vadd.f32 %v5404, %v6452
        %v6454 = vpop.f32.mrf.mxu0
        %6455 = vdwg.mxu0
        %6456 = vmatprep.subr.mxu0 0.0
        %6457 = vmatpush1.msra.mxu0 0.0
        %6458 = vmatprep.subr.mxu0 0.0
        %6459 = vmatpush1.msra.mxu0 0.0
        %6460 = vmatprep.subr.mxu0 0.0
        %6461 = vmatpush1.msra.mxu0 0.0
        %6462 = vmatprep.subr.mxu0 0.0
        %6463 = vmatpush1.msra.mxu0 0.0
        %6464 = vmatprep.subr.mxu0 0.0
        %6465 = vmatpush1.msra.mxu0 0.0
        %6466 = vmatprep.subr.mxu0 0.0
        %6467 = vmatpush1.msra.mxu0 0.0
        %6468 = vmatprep.subr.mxu0 0.0
        %6469 = vmatpush1.msra.mxu0 0.0
        %6470 = vmatprep.subr.mxu0 0.0
        %6471 = vmatpush1.msra.mxu0 0.0
        %6472 = vmatprep.subr.mxu0 0.0
        %6473 = vmatpush1.msra.mxu0 0.0
        %6474 = vmatprep.subr.mxu0 0.0
        %6475 = vmatpush1.msra.mxu0 0.0
        %6476 = vmatprep.subr.mxu0 0.0
        %6477 = vmatpush1.msra.mxu0 0.0
        %6478 = vmatprep.subr.mxu0 0.0
        %6479 = vmatpush1.msra.mxu0 0.0
        %6480 = vmatprep.subr.mxu0 0.0
        %6481 = vmatpush1.msra.mxu0 0.0
        %6482 = vmatprep.subr.mxu0 0.0
        %6483 = vmatpush1.msra.mxu0 0.0
        %6484 = vmatprep.subr.mxu0 0.0
        %6485 = vmatpush1.msra.mxu0 0.0
        %6486 = vmatprep.subr.mxu0 0.0
        %6487 = vmatpush1.msra.mxu0 %v5238
        %6488 = vmatprep.subr.mxu0 0.0
        %6489 = vmatpush2.msra.mxu0 0.0
        %6490 = vmatprep.subr.mxu0 0.0
        %6491 = vmatpush2.msra.mxu0 0.0
        %6492 = vmatprep.subr.mxu0 0.0
        %6493 = vmatpush2.msra.mxu0 0.0
        %6494 = vmatprep.subr.mxu0 0.0
        %6495 = vmatpush2.msra.mxu0 0.0
        %6496 = vmatprep.subr.mxu0 0.0
        %6497 = vmatpush2.msra.mxu0 0.0
        %6498 = vmatprep.subr.mxu0 0.0
        %6499 = vmatpush2.msra.mxu0 0.0
        %6500 = vmatprep.subr.mxu0 0.0
        %6501 = vmatpush2.msra.mxu0 0.0
        %6502 = vmatprep.subr.mxu0 0.0
        %6503 = vmatpush2.msra.mxu0 0.0
        %6504 = vmatprep.subr.mxu0 0.0
        %6505 = vmatpush2.msra.mxu0 0.0
        %6506 = vmatprep.subr.mxu0 0.0
        %6507 = vmatpush2.msra.mxu0 0.0
        %6508 = vmatprep.subr.mxu0 0.0
        %6509 = vmatpush2.msra.mxu0 0.0
        %6510 = vmatprep.subr.mxu0 0.0
        %6511 = vmatpush2.msra.mxu0 0.0
        %6512 = vmatprep.subr.mxu0 0.0
        %6513 = vmatpush2.msra.mxu0 0.0
        %6514 = vmatprep.subr.mxu0 0.0
        %6515 = vmatpush2.msra.mxu0 0.0
        %6516 = vmatprep.subr.mxu0 0.0
        %6517 = vmatpush2.msra.mxu0 0.0
        %6518 = vmatprep.subr.mxu0 0.0
        %6519 = vmatpush2.msra.mxu0 0.0
        %6520 = vmatprep.mubr.f32.mxu0 0.0
        %6521 = vmatmul.mubr.f32.gmra.mxu0 %v2835
        %v6522 = vpop.f32.mrf.mxu0
        %v6523 = vadd.f32 %v5405, %v6522
        %v6524 = vpop.f32.mrf.mxu0
        %6525 = vdwg.mxu0
        %v6526 = vsel %vm704, %v5473, 0.0
        %v6527 = vsel %vm705, %v5543, 0.0
        %v6528 = vsel %vm706, %v5613, 0.0
        %v6529 = vsel %vm707, %v5683, 0.0
        %v6530 = vsel %vm708, %v5753, 0.0
        %v6531 = vsel %vm709, %v5823, 0.0
        %v6532 = vsel %vm710, %v5893, 0.0
        %v6533 = vsel %vm711, %v5963, 0.0
        %v6534 = vsel %vm712, %v6033, 0.0
        %v6535 = vsel %vm713, %v6103, 0.0
        %v6536 = vsel %vm714, %v6173, 0.0
        %v6537 = vsel %vm715, %v6243, 0.0
        %v6538 = vsel %vm716, %v6313, 0.0
        %v6539 = vsel %vm717, %v6383, 0.0
        %v6540 = vsel %vm718, %v6453, 0.0
        %v6541 = vsel %vm719, %v6523, 0.0
        %v6542 = vmul.f32 %v6526, %v592
        %v6543 = vmul.f32 %v6527, %v594
        %v6544 = vmul.f32 %v6528, %v596
        %v6545 = vmul.f32 %v6529, %v598
        %v6546 = vmul.f32 %v6530, %v600
        %v6547 = vmul.f32 %v6531, %v602
        %v6548 = vmul.f32 %v6532, %v604
        %v6549 = vmul.f32 %v6533, %v606
        %v6550 = vmul.f32 %v6534, %v608
        %v6551 = vmul.f32 %v6535, %v610
        %v6552 = vmul.f32 %v6536, %v612
        %v6553 = vmul.f32 %v6537, %v614
        %v6554 = vmul.f32 %v6538, %v616
        %v6555 = vmul.f32 %v6539, %v618
        %v6556 = vmul.f32 %v6540, %v620
        %v6557 = vmul.f32 %v6541, %v622
        %v6558 = vlaneseq
        %v6559 = vshrl.u32 %v6558, 7
        %v6560 = vsub.s32 0, %v6559
        %v6561 = vrot.slane %v5163, %v6560
        %v6562 = vlaneseq
        %v6563 = vshrl.u32 %v6562, 7
        %v6564 = vsub.s32 0, %v6563
        %v6565 = vrot.slane %v5168, %v6564
        %v6566 = vlaneseq
        %v6567 = vshrl.u32 %v6566, 7
        %v6568 = vsub.s32 0, %v6567
        %v6569 = vrot.slane %v5173, %v6568
        %v6570 = vlaneseq
        %v6571 = vshrl.u32 %v6570, 7
        %v6572 = vsub.s32 0, %v6571
        %v6573 = vrot.slane %v5178, %v6572
        %v6574 = vlaneseq
        %v6575 = vshrl.u32 %v6574, 7
        %v6576 = vsub.s32 0, %v6575
        %v6577 = vrot.slane %v5183, %v6576
        %v6578 = vlaneseq
        %v6579 = vshrl.u32 %v6578, 7
        %v6580 = vsub.s32 0, %v6579
        %v6581 = vrot.slane %v5188, %v6580
        %v6582 = vlaneseq
        %v6583 = vshrl.u32 %v6582, 7
        %v6584 = vsub.s32 0, %v6583
        %v6585 = vrot.slane %v5193, %v6584
        %v6586 = vlaneseq
        %v6587 = vshrl.u32 %v6586, 7
        %v6588 = vsub.s32 0, %v6587
        %v6589 = vrot.slane %v5198, %v6588
        %v6590 = vlaneseq
        %v6591 = vshrl.u32 %v6590, 7
        %v6592 = vsub.s32 0, %v6591
        %v6593 = vrot.slane %v5203, %v6592
        %v6594 = vlaneseq
        %v6595 = vshrl.u32 %v6594, 7
        %v6596 = vsub.s32 0, %v6595
        %v6597 = vrot.slane %v5208, %v6596
        %v6598 = vlaneseq
        %v6599 = vshrl.u32 %v6598, 7
        %v6600 = vsub.s32 0, %v6599
        %v6601 = vrot.slane %v5213, %v6600
        %v6602 = vlaneseq
        %v6603 = vshrl.u32 %v6602, 7
        %v6604 = vsub.s32 0, %v6603
        %v6605 = vrot.slane %v5218, %v6604
        %v6606 = vlaneseq
        %v6607 = vshrl.u32 %v6606, 7
        %v6608 = vsub.s32 0, %v6607
        %v6609 = vrot.slane %v5223, %v6608
        %v6610 = vlaneseq
        %v6611 = vshrl.u32 %v6610, 7
        %v6612 = vsub.s32 0, %v6611
        %v6613 = vrot.slane %v5228, %v6612
        %v6614 = vlaneseq
        %v6615 = vshrl.u32 %v6614, 7
        %v6616 = vsub.s32 0, %v6615
        %v6617 = vrot.slane %v5233, %v6616
        %v6618 = vlaneseq
        %v6619 = vshrl.u32 %v6618, 7
        %v6620 = vsub.s32 0, %v6619
        %v6621 = vrot.slane %v5238, %v6620
        %v6622 = vmax.f32 %v6561, -1e+30
        %v6623 = vmax.f32 %v6565, -1e+30
        %v6624 = vmax.f32 %v6569, -1e+30
        %v6625 = vmax.f32 %v6573, -1e+30
        %v6626 = vmax.f32 %v6577, -1e+30
        %v6627 = vmax.f32 %v6581, -1e+30
        %v6628 = vmax.f32 %v6585, -1e+30
        %v6629 = vmax.f32 %v6589, -1e+30
        %v6630 = vmax.f32 %v6593, -1e+30
        %v6631 = vmax.f32 %v6597, -1e+30
        %v6632 = vmax.f32 %v6601, -1e+30
        %v6633 = vmax.f32 %v6605, -1e+30
        %v6634 = vmax.f32 %v6609, -1e+30
        %v6635 = vmax.f32 %v6613, -1e+30
        %v6636 = vmax.f32 %v6617, -1e+30
        %v6637 = vmax.f32 %v6621, -1e+30
        %v6638 = vsel %vm800, %v6622, -1e+30
        %v6639 = vsel %vm801, %v6623, -1e+30
        %v6640 = vsel %vm802, %v6624, -1e+30
        %v6641 = vsel %vm803, %v6625, -1e+30
        %v6642 = vsel %vm804, %v6626, -1e+30
        %v6643 = vsel %vm805, %v6627, -1e+30
        %v6644 = vsel %vm806, %v6628, -1e+30
        %v6645 = vsel %vm807, %v6629, -1e+30
        %v6646 = vsel %vm808, %v6630, -1e+30
        %v6647 = vsel %vm809, %v6631, -1e+30
        %v6648 = vsel %vm810, %v6632, -1e+30
        %v6649 = vsel %vm811, %v6633, -1e+30
        %v6650 = vsel %vm812, %v6634, -1e+30
        %v6651 = vsel %vm813, %v6635, -1e+30
        %v6652 = vsel %vm814, %v6636, -1e+30
        %v6653 = vsel %vm815, %v6637, -1e+30
        %v6654 = vlaneseq
        %v6655 = vshrl.u32 %v6654, 7
        %v6656 = vsub.s32 1, %v6655
        %v6657 = vrot.slane %v5163, %v6656
        %v6658 = vlaneseq
        %v6659 = vshrl.u32 %v6658, 7
        %v6660 = vsub.s32 1, %v6659
        %v6661 = vrot.slane %v5168, %v6660
        %v6662 = vlaneseq
        %v6663 = vshrl.u32 %v6662, 7
        %v6664 = vsub.s32 1, %v6663
        %v6665 = vrot.slane %v5173, %v6664
        %v6666 = vlaneseq
        %v6667 = vshrl.u32 %v6666, 7
        %v6668 = vsub.s32 1, %v6667
        %v6669 = vrot.slane %v5178, %v6668
        %v6670 = vlaneseq
        %v6671 = vshrl.u32 %v6670, 7
        %v6672 = vsub.s32 1, %v6671
        %v6673 = vrot.slane %v5183, %v6672
        %v6674 = vlaneseq
        %v6675 = vshrl.u32 %v6674, 7
        %v6676 = vsub.s32 1, %v6675
        %v6677 = vrot.slane %v5188, %v6676
        %v6678 = vlaneseq
        %v6679 = vshrl.u32 %v6678, 7
        %v6680 = vsub.s32 1, %v6679
        %v6681 = vrot.slane %v5193, %v6680
        %v6682 = vlaneseq
        %v6683 = vshrl.u32 %v6682, 7
        %v6684 = vsub.s32 1, %v6683
        %v6685 = vrot.slane %v5198, %v6684
        %v6686 = vlaneseq
        %v6687 = vshrl.u32 %v6686, 7
        %v6688 = vsub.s32 1, %v6687
        %v6689 = vrot.slane %v5203, %v6688
        %v6690 = vlaneseq
        %v6691 = vshrl.u32 %v6690, 7
        %v6692 = vsub.s32 1, %v6691
        %v6693 = vrot.slane %v5208, %v6692
        %v6694 = vlaneseq
        %v6695 = vshrl.u32 %v6694, 7
        %v6696 = vsub.s32 1, %v6695
        %v6697 = vrot.slane %v5213, %v6696
        %v6698 = vlaneseq
        %v6699 = vshrl.u32 %v6698, 7
        %v6700 = vsub.s32 1, %v6699
        %v6701 = vrot.slane %v5218, %v6700
        %v6702 = vlaneseq
        %v6703 = vshrl.u32 %v6702, 7
        %v6704 = vsub.s32 1, %v6703
        %v6705 = vrot.slane %v5223, %v6704
        %v6706 = vlaneseq
        %v6707 = vshrl.u32 %v6706, 7
        %v6708 = vsub.s32 1, %v6707
        %v6709 = vrot.slane %v5228, %v6708
        %v6710 = vlaneseq
        %v6711 = vshrl.u32 %v6710, 7
        %v6712 = vsub.s32 1, %v6711
        %v6713 = vrot.slane %v5233, %v6712
        %v6714 = vlaneseq
        %v6715 = vshrl.u32 %v6714, 7
        %v6716 = vsub.s32 1, %v6715
        %v6717 = vrot.slane %v5238, %v6716
        %v6718 = vmax.f32 %v6638, %v6657
        %v6719 = vmax.f32 %v6639, %v6661
        %v6720 = vmax.f32 %v6640, %v6665
        %v6721 = vmax.f32 %v6641, %v6669
        %v6722 = vmax.f32 %v6642, %v6673
        %v6723 = vmax.f32 %v6643, %v6677
        %v6724 = vmax.f32 %v6644, %v6681
        %v6725 = vmax.f32 %v6645, %v6685
        %v6726 = vmax.f32 %v6646, %v6689
        %v6727 = vmax.f32 %v6647, %v6693
        %v6728 = vmax.f32 %v6648, %v6697
        %v6729 = vmax.f32 %v6649, %v6701
        %v6730 = vmax.f32 %v6650, %v6705
        %v6731 = vmax.f32 %v6651, %v6709
        %v6732 = vmax.f32 %v6652, %v6713
        %v6733 = vmax.f32 %v6653, %v6717
        %v6734 = vsel %vm864, %v6718, %v6638
        %v6735 = vsel %vm865, %v6719, %v6639
        %v6736 = vsel %vm866, %v6720, %v6640
        %v6737 = vsel %vm867, %v6721, %v6641
        %v6738 = vsel %vm868, %v6722, %v6642
        %v6739 = vsel %vm869, %v6723, %v6643
        %v6740 = vsel %vm870, %v6724, %v6644
        %v6741 = vsel %vm871, %v6725, %v6645
        %v6742 = vsel %vm872, %v6726, %v6646
        %v6743 = vsel %vm873, %v6727, %v6647
        %v6744 = vsel %vm874, %v6728, %v6648
        %v6745 = vsel %vm875, %v6729, %v6649
        %v6746 = vsel %vm876, %v6730, %v6650
        %v6747 = vsel %vm877, %v6731, %v6651
        %v6748 = vsel %vm878, %v6732, %v6652
        %v6749 = vsel %vm879, %v6733, %v6653
        %v6750 = vlaneseq
        %v6751 = vshrl.u32 %v6750, 7
        %v6752 = vsub.s32 2, %v6751
        %v6753 = vrot.slane %v5163, %v6752
        %v6754 = vlaneseq
        %v6755 = vshrl.u32 %v6754, 7
        %v6756 = vsub.s32 2, %v6755
        %v6757 = vrot.slane %v5168, %v6756
        %v6758 = vlaneseq
        %v6759 = vshrl.u32 %v6758, 7
        %v6760 = vsub.s32 2, %v6759
        %v6761 = vrot.slane %v5173, %v6760
        %v6762 = vlaneseq
        %v6763 = vshrl.u32 %v6762, 7
        %v6764 = vsub.s32 2, %v6763
        %v6765 = vrot.slane %v5178, %v6764
        %v6766 = vlaneseq
        %v6767 = vshrl.u32 %v6766, 7
        %v6768 = vsub.s32 2, %v6767
        %v6769 = vrot.slane %v5183, %v6768
        %v6770 = vlaneseq
        %v6771 = vshrl.u32 %v6770, 7
        %v6772 = vsub.s32 2, %v6771
        %v6773 = vrot.slane %v5188, %v6772
        %v6774 = vlaneseq
        %v6775 = vshrl.u32 %v6774, 7
        %v6776 = vsub.s32 2, %v6775
        %v6777 = vrot.slane %v5193, %v6776
        %v6778 = vlaneseq
        %v6779 = vshrl.u32 %v6778, 7
        %v6780 = vsub.s32 2, %v6779
        %v6781 = vrot.slane %v5198, %v6780
        %v6782 = vlaneseq
        %v6783 = vshrl.u32 %v6782, 7
        %v6784 = vsub.s32 2, %v6783
        %v6785 = vrot.slane %v5203, %v6784
        %v6786 = vlaneseq
        %v6787 = vshrl.u32 %v6786, 7
        %v6788 = vsub.s32 2, %v6787
        %v6789 = vrot.slane %v5208, %v6788
        %v6790 = vlaneseq
        %v6791 = vshrl.u32 %v6790, 7
        %v6792 = vsub.s32 2, %v6791
        %v6793 = vrot.slane %v5213, %v6792
        %v6794 = vlaneseq
        %v6795 = vshrl.u32 %v6794, 7
        %v6796 = vsub.s32 2, %v6795
        %v6797 = vrot.slane %v5218, %v6796
        %v6798 = vlaneseq
        %v6799 = vshrl.u32 %v6798, 7
        %v6800 = vsub.s32 2, %v6799
        %v6801 = vrot.slane %v5223, %v6800
        %v6802 = vlaneseq
        %v6803 = vshrl.u32 %v6802, 7
        %v6804 = vsub.s32 2, %v6803
        %v6805 = vrot.slane %v5228, %v6804
        %v6806 = vlaneseq
        %v6807 = vshrl.u32 %v6806, 7
        %v6808 = vsub.s32 2, %v6807
        %v6809 = vrot.slane %v5233, %v6808
        %v6810 = vlaneseq
        %v6811 = vshrl.u32 %v6810, 7
        %v6812 = vsub.s32 2, %v6811
        %v6813 = vrot.slane %v5238, %v6812
        %v6814 = vmax.f32 %v6734, %v6753
        %v6815 = vmax.f32 %v6735, %v6757
        %v6816 = vmax.f32 %v6736, %v6761
        %v6817 = vmax.f32 %v6737, %v6765
        %v6818 = vmax.f32 %v6738, %v6769
        %v6819 = vmax.f32 %v6739, %v6773
        %v6820 = vmax.f32 %v6740, %v6777
        %v6821 = vmax.f32 %v6741, %v6781
        %v6822 = vmax.f32 %v6742, %v6785
        %v6823 = vmax.f32 %v6743, %v6789
        %v6824 = vmax.f32 %v6744, %v6793
        %v6825 = vmax.f32 %v6745, %v6797
        %v6826 = vmax.f32 %v6746, %v6801
        %v6827 = vmax.f32 %v6747, %v6805
        %v6828 = vmax.f32 %v6748, %v6809
        %v6829 = vmax.f32 %v6749, %v6813
        %v6830 = vsel %vm928, %v6814, %v6734
        %v6831 = vsel %vm929, %v6815, %v6735
        %v6832 = vsel %vm930, %v6816, %v6736
        %v6833 = vsel %vm931, %v6817, %v6737
        %v6834 = vsel %vm932, %v6818, %v6738
        %v6835 = vsel %vm933, %v6819, %v6739
        %v6836 = vsel %vm934, %v6820, %v6740
        %v6837 = vsel %vm935, %v6821, %v6741
        %v6838 = vsel %vm936, %v6822, %v6742
        %v6839 = vsel %vm937, %v6823, %v6743
        %v6840 = vsel %vm938, %v6824, %v6744
        %v6841 = vsel %vm939, %v6825, %v6745
        %v6842 = vsel %vm940, %v6826, %v6746
        %v6843 = vsel %vm941, %v6827, %v6747
        %v6844 = vsel %vm942, %v6828, %v6748
        %v6845 = vsel %vm943, %v6829, %v6749
        %v6846 = vlaneseq
        %v6847 = vshrl.u32 %v6846, 7
        %v6848 = vsub.s32 3, %v6847
        %v6849 = vrot.slane %v5163, %v6848
        %v6850 = vlaneseq
        %v6851 = vshrl.u32 %v6850, 7
        %v6852 = vsub.s32 3, %v6851
        %v6853 = vrot.slane %v5168, %v6852
        %v6854 = vlaneseq
        %v6855 = vshrl.u32 %v6854, 7
        %v6856 = vsub.s32 3, %v6855
        %v6857 = vrot.slane %v5173, %v6856
        %v6858 = vlaneseq
        %v6859 = vshrl.u32 %v6858, 7
        %v6860 = vsub.s32 3, %v6859
        %v6861 = vrot.slane %v5178, %v6860
        %v6862 = vlaneseq
        %v6863 = vshrl.u32 %v6862, 7
        %v6864 = vsub.s32 3, %v6863
        %v6865 = vrot.slane %v5183, %v6864
        %v6866 = vlaneseq
        %v6867 = vshrl.u32 %v6866, 7
        %v6868 = vsub.s32 3, %v6867
        %v6869 = vrot.slane %v5188, %v6868
        %v6870 = vlaneseq
        %v6871 = vshrl.u32 %v6870, 7
        %v6872 = vsub.s32 3, %v6871
        %v6873 = vrot.slane %v5193, %v6872
        %v6874 = vlaneseq
        %v6875 = vshrl.u32 %v6874, 7
        %v6876 = vsub.s32 3, %v6875
        %v6877 = vrot.slane %v5198, %v6876
        %v6878 = vlaneseq
        %v6879 = vshrl.u32 %v6878, 7
        %v6880 = vsub.s32 3, %v6879
        %v6881 = vrot.slane %v5203, %v6880
        %v6882 = vlaneseq
        %v6883 = vshrl.u32 %v6882, 7
        %v6884 = vsub.s32 3, %v6883
        %v6885 = vrot.slane %v5208, %v6884
        %v6886 = vlaneseq
        %v6887 = vshrl.u32 %v6886, 7
        %v6888 = vsub.s32 3, %v6887
        %v6889 = vrot.slane %v5213, %v6888
        %v6890 = vlaneseq
        %v6891 = vshrl.u32 %v6890, 7
        %v6892 = vsub.s32 3, %v6891
        %v6893 = vrot.slane %v5218, %v6892
        %v6894 = vlaneseq
        %v6895 = vshrl.u32 %v6894, 7
        %v6896 = vsub.s32 3, %v6895
        %v6897 = vrot.slane %v5223, %v6896
        %v6898 = vlaneseq
        %v6899 = vshrl.u32 %v6898, 7
        %v6900 = vsub.s32 3, %v6899
        %v6901 = vrot.slane %v5228, %v6900
        %v6902 = vlaneseq
        %v6903 = vshrl.u32 %v6902, 7
        %v6904 = vsub.s32 3, %v6903
        %v6905 = vrot.slane %v5233, %v6904
        %v6906 = vlaneseq
        %v6907 = vshrl.u32 %v6906, 7
        %v6908 = vsub.s32 3, %v6907
        %v6909 = vrot.slane %v5238, %v6908
        %v6910 = vmax.f32 %v6830, %v6849
        %v6911 = vmax.f32 %v6831, %v6853
        %v6912 = vmax.f32 %v6832, %v6857
        %v6913 = vmax.f32 %v6833, %v6861
        %v6914 = vmax.f32 %v6834, %v6865
        %v6915 = vmax.f32 %v6835, %v6869
        %v6916 = vmax.f32 %v6836, %v6873
        %v6917 = vmax.f32 %v6837, %v6877
        %v6918 = vmax.f32 %v6838, %v6881
        %v6919 = vmax.f32 %v6839, %v6885
        %v6920 = vmax.f32 %v6840, %v6889
        %v6921 = vmax.f32 %v6841, %v6893
        %v6922 = vmax.f32 %v6842, %v6897
        %v6923 = vmax.f32 %v6843, %v6901
        %v6924 = vmax.f32 %v6844, %v6905
        %v6925 = vmax.f32 %v6845, %v6909
        %v6926 = vsel %vm992, %v6910, %v6830
        %v6927 = vsel %vm993, %v6911, %v6831
        %v6928 = vsel %vm994, %v6912, %v6832
        %v6929 = vsel %vm995, %v6913, %v6833
        %v6930 = vsel %vm996, %v6914, %v6834
        %v6931 = vsel %vm997, %v6915, %v6835
        %v6932 = vsel %vm998, %v6916, %v6836
        %v6933 = vsel %vm999, %v6917, %v6837
        %v6934 = vsel %vm1000, %v6918, %v6838
        %v6935 = vsel %vm1001, %v6919, %v6839
        %v6936 = vsel %vm1002, %v6920, %v6840
        %v6937 = vsel %vm1003, %v6921, %v6841
        %v6938 = vsel %vm1004, %v6922, %v6842
        %v6939 = vsel %vm1005, %v6923, %v6843
        %v6940 = vsel %vm1006, %v6924, %v6844
        %v6941 = vsel %vm1007, %v6925, %v6845
        %v6942 = vlaneseq
        %v6943 = vshrl.u32 %v6942, 7
        %v6944 = vsub.s32 4, %v6943
        %v6945 = vrot.slane %v5163, %v6944
        %v6946 = vlaneseq
        %v6947 = vshrl.u32 %v6946, 7
        %v6948 = vsub.s32 4, %v6947
        %v6949 = vrot.slane %v5168, %v6948
        %v6950 = vlaneseq
        %v6951 = vshrl.u32 %v6950, 7
        %v6952 = vsub.s32 4, %v6951
        %v6953 = vrot.slane %v5173, %v6952
        %v6954 = vlaneseq
        %v6955 = vshrl.u32 %v6954, 7
        %v6956 = vsub.s32 4, %v6955
        %v6957 = vrot.slane %v5178, %v6956
        %v6958 = vlaneseq
        %v6959 = vshrl.u32 %v6958, 7
        %v6960 = vsub.s32 4, %v6959
        %v6961 = vrot.slane %v5183, %v6960
        %v6962 = vlaneseq
        %v6963 = vshrl.u32 %v6962, 7
        %v6964 = vsub.s32 4, %v6963
        %v6965 = vrot.slane %v5188, %v6964
        %v6966 = vlaneseq
        %v6967 = vshrl.u32 %v6966, 7
        %v6968 = vsub.s32 4, %v6967
        %v6969 = vrot.slane %v5193, %v6968
        %v6970 = vlaneseq
        %v6971 = vshrl.u32 %v6970, 7
        %v6972 = vsub.s32 4, %v6971
        %v6973 = vrot.slane %v5198, %v6972
        %v6974 = vlaneseq
        %v6975 = vshrl.u32 %v6974, 7
        %v6976 = vsub.s32 4, %v6975
        %v6977 = vrot.slane %v5203, %v6976
        %v6978 = vlaneseq
        %v6979 = vshrl.u32 %v6978, 7
        %v6980 = vsub.s32 4, %v6979
        %v6981 = vrot.slane %v5208, %v6980
        %v6982 = vlaneseq
        %v6983 = vshrl.u32 %v6982, 7
        %v6984 = vsub.s32 4, %v6983
        %v6985 = vrot.slane %v5213, %v6984
        %v6986 = vlaneseq
        %v6987 = vshrl.u32 %v6986, 7
        %v6988 = vsub.s32 4, %v6987
        %v6989 = vrot.slane %v5218, %v6988
        %v6990 = vlaneseq
        %v6991 = vshrl.u32 %v6990, 7
        %v6992 = vsub.s32 4, %v6991
        %v6993 = vrot.slane %v5223, %v6992
        %v6994 = vlaneseq
        %v6995 = vshrl.u32 %v6994, 7
        %v6996 = vsub.s32 4, %v6995
        %v6997 = vrot.slane %v5228, %v6996
        %v6998 = vlaneseq
        %v6999 = vshrl.u32 %v6998, 7
        %v7000 = vsub.s32 4, %v6999
        %v7001 = vrot.slane %v5233, %v7000
        %v7002 = vlaneseq
        %v7003 = vshrl.u32 %v7002, 7
        %v7004 = vsub.s32 4, %v7003
        %v7005 = vrot.slane %v5238, %v7004
        %v7006 = vmax.f32 %v6926, %v6945
        %v7007 = vmax.f32 %v6927, %v6949
        %v7008 = vmax.f32 %v6928, %v6953
        %v7009 = vmax.f32 %v6929, %v6957
        %v7010 = vmax.f32 %v6930, %v6961
        %v7011 = vmax.f32 %v6931, %v6965
        %v7012 = vmax.f32 %v6932, %v6969
        %v7013 = vmax.f32 %v6933, %v6973
        %v7014 = vmax.f32 %v6934, %v6977
        %v7015 = vmax.f32 %v6935, %v6981
        %v7016 = vmax.f32 %v6936, %v6985
        %v7017 = vmax.f32 %v6937, %v6989
        %v7018 = vmax.f32 %v6938, %v6993
        %v7019 = vmax.f32 %v6939, %v6997
        %v7020 = vmax.f32 %v6940, %v7001
        %v7021 = vmax.f32 %v6941, %v7005
        %v7022 = vsel %vm1056, %v7006, %v6926
        %v7023 = vsel %vm1057, %v7007, %v6927
        %v7024 = vsel %vm1058, %v7008, %v6928
        %v7025 = vsel %vm1059, %v7009, %v6929
        %v7026 = vsel %vm1060, %v7010, %v6930
        %v7027 = vsel %vm1061, %v7011, %v6931
        %v7028 = vsel %vm1062, %v7012, %v6932
        %v7029 = vsel %vm1063, %v7013, %v6933
        %v7030 = vsel %vm1064, %v7014, %v6934
        %v7031 = vsel %vm1065, %v7015, %v6935
        %v7032 = vsel %vm1066, %v7016, %v6936
        %v7033 = vsel %vm1067, %v7017, %v6937
        %v7034 = vsel %vm1068, %v7018, %v6938
        %v7035 = vsel %vm1069, %v7019, %v6939
        %v7036 = vsel %vm1070, %v7020, %v6940
        %v7037 = vsel %vm1071, %v7021, %v6941
        %v7038 = vlaneseq
        %v7039 = vshrl.u32 %v7038, 7
        %v7040 = vsub.s32 5, %v7039
        %v7041 = vrot.slane %v5163, %v7040
        %v7042 = vlaneseq
        %v7043 = vshrl.u32 %v7042, 7
        %v7044 = vsub.s32 5, %v7043
        %v7045 = vrot.slane %v5168, %v7044
        %v7046 = vlaneseq
        %v7047 = vshrl.u32 %v7046, 7
        %v7048 = vsub.s32 5, %v7047
        %v7049 = vrot.slane %v5173, %v7048
        %v7050 = vlaneseq
        %v7051 = vshrl.u32 %v7050, 7
        %v7052 = vsub.s32 5, %v7051
        %v7053 = vrot.slane %v5178, %v7052
        %v7054 = vlaneseq
        %v7055 = vshrl.u32 %v7054, 7
        %v7056 = vsub.s32 5, %v7055
        %v7057 = vrot.slane %v5183, %v7056
        %v7058 = vlaneseq
        %v7059 = vshrl.u32 %v7058, 7
        %v7060 = vsub.s32 5, %v7059
        %v7061 = vrot.slane %v5188, %v7060
        %v7062 = vlaneseq
        %v7063 = vshrl.u32 %v7062, 7
        %v7064 = vsub.s32 5, %v7063
        %v7065 = vrot.slane %v5193, %v7064
        %v7066 = vlaneseq
        %v7067 = vshrl.u32 %v7066, 7
        %v7068 = vsub.s32 5, %v7067
        %v7069 = vrot.slane %v5198, %v7068
        %v7070 = vlaneseq
        %v7071 = vshrl.u32 %v7070, 7
        %v7072 = vsub.s32 5, %v7071
        %v7073 = vrot.slane %v5203, %v7072
        %v7074 = vlaneseq
        %v7075 = vshrl.u32 %v7074, 7
        %v7076 = vsub.s32 5, %v7075
        %v7077 = vrot.slane %v5208, %v7076
        %v7078 = vlaneseq
        %v7079 = vshrl.u32 %v7078, 7
        %v7080 = vsub.s32 5, %v7079
        %v7081 = vrot.slane %v5213, %v7080
        %v7082 = vlaneseq
        %v7083 = vshrl.u32 %v7082, 7
        %v7084 = vsub.s32 5, %v7083
        %v7085 = vrot.slane %v5218, %v7084
        %v7086 = vlaneseq
        %v7087 = vshrl.u32 %v7086, 7
        %v7088 = vsub.s32 5, %v7087
        %v7089 = vrot.slane %v5223, %v7088
        %v7090 = vlaneseq
        %v7091 = vshrl.u32 %v7090, 7
        %v7092 = vsub.s32 5, %v7091
        %v7093 = vrot.slane %v5228, %v7092
        %v7094 = vlaneseq
        %v7095 = vshrl.u32 %v7094, 7
        %v7096 = vsub.s32 5, %v7095
        %v7097 = vrot.slane %v5233, %v7096
        %v7098 = vlaneseq
        %v7099 = vshrl.u32 %v7098, 7
        %v7100 = vsub.s32 5, %v7099
        %v7101 = vrot.slane %v5238, %v7100
        %v7102 = vmax.f32 %v7022, %v7041
        %v7103 = vmax.f32 %v7023, %v7045
        %v7104 = vmax.f32 %v7024, %v7049
        %v7105 = vmax.f32 %v7025, %v7053
        %v7106 = vmax.f32 %v7026, %v7057
        %v7107 = vmax.f32 %v7027, %v7061
        %v7108 = vmax.f32 %v7028, %v7065
        %v7109 = vmax.f32 %v7029, %v7069
        %v7110 = vmax.f32 %v7030, %v7073
        %v7111 = vmax.f32 %v7031, %v7077
        %v7112 = vmax.f32 %v7032, %v7081
        %v7113 = vmax.f32 %v7033, %v7085
        %v7114 = vmax.f32 %v7034, %v7089
        %v7115 = vmax.f32 %v7035, %v7093
        %v7116 = vmax.f32 %v7036, %v7097
        %v7117 = vmax.f32 %v7037, %v7101
        %v7118 = vsel %vm1120, %v7102, %v7022
        %v7119 = vsel %vm1121, %v7103, %v7023
        %v7120 = vsel %vm1122, %v7104, %v7024
        %v7121 = vsel %vm1123, %v7105, %v7025
        %v7122 = vsel %vm1124, %v7106, %v7026
        %v7123 = vsel %vm1125, %v7107, %v7027
        %v7124 = vsel %vm1126, %v7108, %v7028
        %v7125 = vsel %vm1127, %v7109, %v7029
        %v7126 = vsel %vm1128, %v7110, %v7030
        %v7127 = vsel %vm1129, %v7111, %v7031
        %v7128 = vsel %vm1130, %v7112, %v7032
        %v7129 = vsel %vm1131, %v7113, %v7033
        %v7130 = vsel %vm1132, %v7114, %v7034
        %v7131 = vsel %vm1133, %v7115, %v7035
        %v7132 = vsel %vm1134, %v7116, %v7036
        %v7133 = vsel %vm1135, %v7117, %v7037
        %v7134 = vlaneseq
        %v7135 = vshrl.u32 %v7134, 7
        %v7136 = vsub.s32 6, %v7135
        %v7137 = vrot.slane %v5163, %v7136
        %v7138 = vlaneseq
        %v7139 = vshrl.u32 %v7138, 7
        %v7140 = vsub.s32 6, %v7139
        %v7141 = vrot.slane %v5168, %v7140
        %v7142 = vlaneseq
        %v7143 = vshrl.u32 %v7142, 7
        %v7144 = vsub.s32 6, %v7143
        %v7145 = vrot.slane %v5173, %v7144
        %v7146 = vlaneseq
        %v7147 = vshrl.u32 %v7146, 7
        %v7148 = vsub.s32 6, %v7147
        %v7149 = vrot.slane %v5178, %v7148
        %v7150 = vlaneseq
        %v7151 = vshrl.u32 %v7150, 7
        %v7152 = vsub.s32 6, %v7151
        %v7153 = vrot.slane %v5183, %v7152
        %v7154 = vlaneseq
        %v7155 = vshrl.u32 %v7154, 7
        %v7156 = vsub.s32 6, %v7155
        %v7157 = vrot.slane %v5188, %v7156
        %v7158 = vlaneseq
        %v7159 = vshrl.u32 %v7158, 7
        %v7160 = vsub.s32 6, %v7159
        %v7161 = vrot.slane %v5193, %v7160
        %v7162 = vlaneseq
        %v7163 = vshrl.u32 %v7162, 7
        %v7164 = vsub.s32 6, %v7163
        %v7165 = vrot.slane %v5198, %v7164
        %v7166 = vlaneseq
        %v7167 = vshrl.u32 %v7166, 7
        %v7168 = vsub.s32 6, %v7167
        %v7169 = vrot.slane %v5203, %v7168
        %v7170 = vlaneseq
        %v7171 = vshrl.u32 %v7170, 7
        %v7172 = vsub.s32 6, %v7171
        %v7173 = vrot.slane %v5208, %v7172
        %v7174 = vlaneseq
        %v7175 = vshrl.u32 %v7174, 7
        %v7176 = vsub.s32 6, %v7175
        %v7177 = vrot.slane %v5213, %v7176
        %v7178 = vlaneseq
        %v7179 = vshrl.u32 %v7178, 7
        %v7180 = vsub.s32 6, %v7179
        %v7181 = vrot.slane %v5218, %v7180
        %v7182 = vlaneseq
        %v7183 = vshrl.u32 %v7182, 7
        %v7184 = vsub.s32 6, %v7183
        %v7185 = vrot.slane %v5223, %v7184
        %v7186 = vlaneseq
        %v7187 = vshrl.u32 %v7186, 7
        %v7188 = vsub.s32 6, %v7187
        %v7189 = vrot.slane %v5228, %v7188
        %v7190 = vlaneseq
        %v7191 = vshrl.u32 %v7190, 7
        %v7192 = vsub.s32 6, %v7191
        %v7193 = vrot.slane %v5233, %v7192
        %v7194 = vlaneseq
        %v7195 = vshrl.u32 %v7194, 7
        %v7196 = vsub.s32 6, %v7195
        %v7197 = vrot.slane %v5238, %v7196
        %v7198 = vmax.f32 %v7118, %v7137
        %v7199 = vmax.f32 %v7119, %v7141
        %v7200 = vmax.f32 %v7120, %v7145
        %v7201 = vmax.f32 %v7121, %v7149
        %v7202 = vmax.f32 %v7122, %v7153
        %v7203 = vmax.f32 %v7123, %v7157
        %v7204 = vmax.f32 %v7124, %v7161
        %v7205 = vmax.f32 %v7125, %v7165
        %v7206 = vmax.f32 %v7126, %v7169
        %v7207 = vmax.f32 %v7127, %v7173
        %v7208 = vmax.f32 %v7128, %v7177
        %v7209 = vmax.f32 %v7129, %v7181
        %v7210 = vmax.f32 %v7130, %v7185
        %v7211 = vmax.f32 %v7131, %v7189
        %v7212 = vmax.f32 %v7132, %v7193
        %v7213 = vmax.f32 %v7133, %v7197
        %v7214 = vsel %vm1184, %v7198, %v7118
        %v7215 = vsel %vm1185, %v7199, %v7119
        %v7216 = vsel %vm1186, %v7200, %v7120
        %v7217 = vsel %vm1187, %v7201, %v7121
        %v7218 = vsel %vm1188, %v7202, %v7122
        %v7219 = vsel %vm1189, %v7203, %v7123
        %v7220 = vsel %vm1190, %v7204, %v7124
        %v7221 = vsel %vm1191, %v7205, %v7125
        %v7222 = vsel %vm1192, %v7206, %v7126
        %v7223 = vsel %vm1193, %v7207, %v7127
        %v7224 = vsel %vm1194, %v7208, %v7128
        %v7225 = vsel %vm1195, %v7209, %v7129
        %v7226 = vsel %vm1196, %v7210, %v7130
        %v7227 = vsel %vm1197, %v7211, %v7131
        %v7228 = vsel %vm1198, %v7212, %v7132
        %v7229 = vsel %vm1199, %v7213, %v7133
        %v7230 = vlaneseq
        %v7231 = vshrl.u32 %v7230, 7
        %v7232 = vsub.s32 7, %v7231
        %v7233 = vrot.slane %v5163, %v7232
        %v7234 = vlaneseq
        %v7235 = vshrl.u32 %v7234, 7
        %v7236 = vsub.s32 7, %v7235
        %v7237 = vrot.slane %v5168, %v7236
        %v7238 = vlaneseq
        %v7239 = vshrl.u32 %v7238, 7
        %v7240 = vsub.s32 7, %v7239
        %v7241 = vrot.slane %v5173, %v7240
        %v7242 = vlaneseq
        %v7243 = vshrl.u32 %v7242, 7
        %v7244 = vsub.s32 7, %v7243
        %v7245 = vrot.slane %v5178, %v7244
        %v7246 = vlaneseq
        %v7247 = vshrl.u32 %v7246, 7
        %v7248 = vsub.s32 7, %v7247
        %v7249 = vrot.slane %v5183, %v7248
        %v7250 = vlaneseq
        %v7251 = vshrl.u32 %v7250, 7
        %v7252 = vsub.s32 7, %v7251
        %v7253 = vrot.slane %v5188, %v7252
        %v7254 = vlaneseq
        %v7255 = vshrl.u32 %v7254, 7
        %v7256 = vsub.s32 7, %v7255
        %v7257 = vrot.slane %v5193, %v7256
        %v7258 = vlaneseq
        %v7259 = vshrl.u32 %v7258, 7
        %v7260 = vsub.s32 7, %v7259
        %v7261 = vrot.slane %v5198, %v7260
        %v7262 = vlaneseq
        %v7263 = vshrl.u32 %v7262, 7
        %v7264 = vsub.s32 7, %v7263
        %v7265 = vrot.slane %v5203, %v7264
        %v7266 = vlaneseq
        %v7267 = vshrl.u32 %v7266, 7
        %v7268 = vsub.s32 7, %v7267
        %v7269 = vrot.slane %v5208, %v7268
        %v7270 = vlaneseq
        %v7271 = vshrl.u32 %v7270, 7
        %v7272 = vsub.s32 7, %v7271
        %v7273 = vrot.slane %v5213, %v7272
        %v7274 = vlaneseq
        %v7275 = vshrl.u32 %v7274, 7
        %v7276 = vsub.s32 7, %v7275
        %v7277 = vrot.slane %v5218, %v7276
        %v7278 = vlaneseq
        %v7279 = vshrl.u32 %v7278, 7
        %v7280 = vsub.s32 7, %v7279
        %v7281 = vrot.slane %v5223, %v7280
        %v7282 = vlaneseq
        %v7283 = vshrl.u32 %v7282, 7
        %v7284 = vsub.s32 7, %v7283
        %v7285 = vrot.slane %v5228, %v7284
        %v7286 = vlaneseq
        %v7287 = vshrl.u32 %v7286, 7
        %v7288 = vsub.s32 7, %v7287
        %v7289 = vrot.slane %v5233, %v7288
        %v7290 = vlaneseq
        %v7291 = vshrl.u32 %v7290, 7
        %v7292 = vsub.s32 7, %v7291
        %v7293 = vrot.slane %v5238, %v7292
        %v7294 = vmax.f32 %v7214, %v7233
        %v7295 = vmax.f32 %v7215, %v7237
        %v7296 = vmax.f32 %v7216, %v7241
        %v7297 = vmax.f32 %v7217, %v7245
        %v7298 = vmax.f32 %v7218, %v7249
        %v7299 = vmax.f32 %v7219, %v7253
        %v7300 = vmax.f32 %v7220, %v7257
        %v7301 = vmax.f32 %v7221, %v7261
        %v7302 = vmax.f32 %v7222, %v7265
        %v7303 = vmax.f32 %v7223, %v7269
        %v7304 = vmax.f32 %v7224, %v7273
        %v7305 = vmax.f32 %v7225, %v7277
        %v7306 = vmax.f32 %v7226, %v7281
        %v7307 = vmax.f32 %v7227, %v7285
        %v7308 = vmax.f32 %v7228, %v7289
        %v7309 = vmax.f32 %v7229, %v7293
        %v7310 = vsel %vm1248, %v7294, %v7214
        %v7311 = vsel %vm1249, %v7295, %v7215
        %v7312 = vsel %vm1250, %v7296, %v7216
        %v7313 = vsel %vm1251, %v7297, %v7217
        %v7314 = vsel %vm1252, %v7298, %v7218
        %v7315 = vsel %vm1253, %v7299, %v7219
        %v7316 = vsel %vm1254, %v7300, %v7220
        %v7317 = vsel %vm1255, %v7301, %v7221
        %v7318 = vsel %vm1256, %v7302, %v7222
        %v7319 = vsel %vm1257, %v7303, %v7223
        %v7320 = vsel %vm1258, %v7304, %v7224
        %v7321 = vsel %vm1259, %v7305, %v7225
        %v7322 = vsel %vm1260, %v7306, %v7226
        %v7323 = vsel %vm1261, %v7307, %v7227
        %v7324 = vsel %vm1262, %v7308, %v7228
        %v7325 = vsel %vm1263, %v7309, %v7229
        %v7326 = vadd.f32 %v7310, %v5312
        %v7327 = vadd.f32 %v7311, %v5317
        %v7328 = vadd.f32 %v7312, %v5322
        %v7329 = vadd.f32 %v7313, %v5327
        %v7330 = vadd.f32 %v7314, %v5332
        %v7331 = vadd.f32 %v7315, %v5337
        %v7332 = vadd.f32 %v7316, %v5342
        %v7333 = vadd.f32 %v7317, %v5347
        %v7334 = vadd.f32 %v7318, %v5352
        %v7335 = vadd.f32 %v7319, %v5357
        %v7336 = vadd.f32 %v7320, %v5362
        %v7337 = vadd.f32 %v7321, %v5367
        %v7338 = vadd.f32 %v7322, %v5372
        %v7339 = vadd.f32 %v7323, %v5377
        %v7340 = vadd.f32 %v7324, %v5382
        %v7341 = vadd.f32 %v7325, %v5387
        %v7342 = vsel %vm704, %v7326, 0.0
        %v7343 = vsel %vm705, %v7327, 0.0
        %v7344 = vsel %vm706, %v7328, 0.0
        %v7345 = vsel %vm707, %v7329, 0.0
        %v7346 = vsel %vm708, %v7330, 0.0
        %v7347 = vsel %vm709, %v7331, 0.0
        %v7348 = vsel %vm710, %v7332, 0.0
        %v7349 = vsel %vm711, %v7333, 0.0
        %v7350 = vsel %vm712, %v7334, 0.0
        %v7351 = vsel %vm713, %v7335, 0.0
        %v7352 = vsel %vm714, %v7336, 0.0
        %v7353 = vsel %vm715, %v7337, 0.0
        %v7354 = vsel %vm716, %v7338, 0.0
        %v7355 = vsel %vm717, %v7339, 0.0
        %v7356 = vsel %vm718, %v7340, 0.0
        %v7357 = vsel %vm719, %v7341, 0.0
        %v7358 = vmul.f32 %v6542, %v672
        %v7359 = vmul.f32 %v6543, %v673
        %v7360 = vmul.f32 %v6544, %v674
        %v7361 = vmul.f32 %v6545, %v675
        %v7362 = vmul.f32 %v6546, %v676
        %v7363 = vmul.f32 %v6547, %v677
        %v7364 = vmul.f32 %v6548, %v678
        %v7365 = vmul.f32 %v6549, %v679
        %v7366 = vmul.f32 %v6550, %v680
        %v7367 = vmul.f32 %v6551, %v681
        %v7368 = vmul.f32 %v6552, %v682
        %v7369 = vmul.f32 %v6553, %v683
        %v7370 = vmul.f32 %v6554, %v684
        %v7371 = vmul.f32 %v6555, %v685
        %v7372 = vmul.f32 %v6556, %v686
        %v7373 = vmul.f32 %v6557, %v687
        %v7374 = vmul.f32 %v7342, %v672
        %v7375 = vmul.f32 %v7343, %v673
        %v7376 = vmul.f32 %v7344, %v674
        %v7377 = vmul.f32 %v7345, %v675
        %v7378 = vmul.f32 %v7346, %v676
        %v7379 = vmul.f32 %v7347, %v677
        %v7380 = vmul.f32 %v7348, %v678
        %v7381 = vmul.f32 %v7349, %v679
        %v7382 = vmul.f32 %v7350, %v680
        %v7383 = vmul.f32 %v7351, %v681
        %v7384 = vmul.f32 %v7352, %v682
        %v7385 = vmul.f32 %v7353, %v683
        %v7386 = vmul.f32 %v7354, %v684
        %v7387 = vmul.f32 %v7355, %v685
        %v7388 = vmul.f32 %v7356, %v686
        %v7389 = vmul.f32 %v7357, %v687
        %v7390 = vmul.f32 %v6526, %v672
        %v7391 = vmul.f32 %v6527, %v673
        %v7392 = vmul.f32 %v6528, %v674
        %v7393 = vmul.f32 %v6529, %v675
        %v7394 = vmul.f32 %v6530, %v676
        %v7395 = vmul.f32 %v6531, %v677
        %v7396 = vmul.f32 %v6532, %v678
        %v7397 = vmul.f32 %v6533, %v679
        %v7398 = vmul.f32 %v6534, %v680
        %v7399 = vmul.f32 %v6535, %v681
        %v7400 = vmul.f32 %v6536, %v682
        %v7401 = vmul.f32 %v6537, %v683
        %v7402 = vmul.f32 %v6538, %v684
        %v7403 = vmul.f32 %v6539, %v685
        %v7404 = vmul.f32 %v6540, %v686
        %v7405 = vmul.f32 %v6541, %v687
        %v7406 = vlaneseq
        %v7407 = vshrl.u32 %v7406, 7
        %v7408 = vsub.s32 0, %v7407
        %v7409 = vrot.slane %v5092, %v7408
        %7410 = vmatprep.subr.mxu0 0.0
        %7411 = vmatpush1.msra.mxu0 %v4977
        %7412 = vmatprep.subr.mxu0 0.0
        %7413 = vmatpush1.msra.mxu0 %v4976
        %7414 = vmatprep.subr.mxu0 0.0
        %7415 = vmatpush1.msra.mxu0 %v4975
        %7416 = vmatprep.subr.mxu0 0.0
        %7417 = vmatpush1.msra.mxu0 %v4974
        %7418 = vmatprep.subr.mxu0 0.0
        %7419 = vmatpush1.msra.mxu0 %v4973
        %7420 = vmatprep.subr.mxu0 0.0
        %7421 = vmatpush1.msra.mxu0 %v4972
        %7422 = vmatprep.subr.mxu0 0.0
        %7423 = vmatpush1.msra.mxu0 %v4971
        %7424 = vmatprep.subr.mxu0 0.0
        %7425 = vmatpush1.msra.mxu0 %v4970
        %7426 = vmatprep.subr.mxu0 0.0
        %7427 = vmatpush1.msra.mxu0 %v4969
        %7428 = vmatprep.subr.mxu0 0.0
        %7429 = vmatpush1.msra.mxu0 %v4968
        %7430 = vmatprep.subr.mxu0 0.0
        %7431 = vmatpush1.msra.mxu0 %v4967
        %7432 = vmatprep.subr.mxu0 0.0
        %7433 = vmatpush1.msra.mxu0 %v4966
        %7434 = vmatprep.subr.mxu0 0.0
        %7435 = vmatpush1.msra.mxu0 %v4965
        %7436 = vmatprep.subr.mxu0 0.0
        %7437 = vmatpush1.msra.mxu0 %v4964
        %7438 = vmatprep.subr.mxu0 0.0
        %7439 = vmatpush1.msra.mxu0 %v4963
        %7440 = vmatprep.subr.mxu0 0.0
        %7441 = vmatpush1.msra.mxu0 %v4962
        %7442 = vmatprep.subr.mxu0 0.0
        %7443 = vmatpush2.msra.mxu0 %v4993
        %7444 = vmatprep.subr.mxu0 0.0
        %7445 = vmatpush2.msra.mxu0 %v4992
        %7446 = vmatprep.subr.mxu0 0.0
        %7447 = vmatpush2.msra.mxu0 %v4991
        %7448 = vmatprep.subr.mxu0 0.0
        %7449 = vmatpush2.msra.mxu0 %v4990
        %7450 = vmatprep.subr.mxu0 0.0
        %7451 = vmatpush2.msra.mxu0 %v4989
        %7452 = vmatprep.subr.mxu0 0.0
        %7453 = vmatpush2.msra.mxu0 %v4988
        %7454 = vmatprep.subr.mxu0 0.0
        %7455 = vmatpush2.msra.mxu0 %v4987
        %7456 = vmatprep.subr.mxu0 0.0
        %7457 = vmatpush2.msra.mxu0 %v4986
        %7458 = vmatprep.subr.mxu0 0.0
        %7459 = vmatpush2.msra.mxu0 %v4985
        %7460 = vmatprep.subr.mxu0 0.0
        %7461 = vmatpush2.msra.mxu0 %v4984
        %7462 = vmatprep.subr.mxu0 0.0
        %7463 = vmatpush2.msra.mxu0 %v4983
        %7464 = vmatprep.subr.mxu0 0.0
        %7465 = vmatpush2.msra.mxu0 %v4982
        %7466 = vmatprep.subr.mxu0 0.0
        %7467 = vmatpush2.msra.mxu0 %v4981
        %7468 = vmatprep.subr.mxu0 0.0
        %7469 = vmatpush2.msra.mxu0 %v4980
        %7470 = vmatprep.subr.mxu0 0.0
        %7471 = vmatpush2.msra.mxu0 %v4979
        %7472 = vmatprep.subr.mxu0 0.0
        %7473 = vmatpush2.msra.mxu0 %v4978
        %7474 = vmatprep.mubr.f32.mxu0 %v6542
        %7475 = vmatmul.mubr.f32.gmra.mxu0 %v4913
        %v7476 = vpop.f32.mrf.mxu0
        %v7477 = vadd.f32 %v7409, %v7476
        %v7478 = vpop.f32.mrf.mxu0
        %7479 = vmatprep.mubr.f32.mxu0 %v6543
        %7480 = vmatmul.mubr.f32.gmra.mxu0 %v4914
        %v7481 = vpop.f32.mrf.mxu0
        %v7482 = vadd.f32 %v7409, %v7481
        %v7483 = vpop.f32.mrf.mxu0
        %7484 = vmatprep.mubr.f32.mxu0 %v6544
        %7485 = vmatmul.mubr.f32.gmra.mxu0 %v4915
        %v7486 = vpop.f32.mrf.mxu0
        %v7487 = vadd.f32 %v7409, %v7486
        %v7488 = vpop.f32.mrf.mxu0
        %7489 = vmatprep.mubr.f32.mxu0 %v6545
        %7490 = vmatmul.mubr.f32.gmra.mxu0 %v4916
        %v7491 = vpop.f32.mrf.mxu0
        %v7492 = vadd.f32 %v7409, %v7491
        %v7493 = vpop.f32.mrf.mxu0
        %7494 = vmatprep.mubr.f32.mxu0 %v6546
        %7495 = vmatmul.mubr.f32.gmra.mxu0 %v4917
        %v7496 = vpop.f32.mrf.mxu0
        %v7497 = vadd.f32 %v7409, %v7496
        %v7498 = vpop.f32.mrf.mxu0
        %7499 = vmatprep.mubr.f32.mxu0 %v6547
        %7500 = vmatmul.mubr.f32.gmra.mxu0 %v4918
        %v7501 = vpop.f32.mrf.mxu0
        %v7502 = vadd.f32 %v7409, %v7501
        %v7503 = vpop.f32.mrf.mxu0
        %7504 = vmatprep.mubr.f32.mxu0 %v6548
        %7505 = vmatmul.mubr.f32.gmra.mxu0 %v4919
        %v7506 = vpop.f32.mrf.mxu0
        %v7507 = vadd.f32 %v7409, %v7506
        %v7508 = vpop.f32.mrf.mxu0
        %7509 = vmatprep.mubr.f32.mxu0 %v6549
        %7510 = vmatmul.mubr.f32.gmra.mxu0 %v4920
        %v7511 = vpop.f32.mrf.mxu0
        %v7512 = vadd.f32 %v7409, %v7511
        %v7513 = vpop.f32.mrf.mxu0
        %7514 = vmatprep.mubr.f32.mxu0 %v6550
        %7515 = vmatmul.mubr.f32.gmra.mxu0 %v4921
        %v7516 = vpop.f32.mrf.mxu0
        %v7517 = vadd.f32 %v7409, %v7516
        %v7518 = vpop.f32.mrf.mxu0
        %7519 = vmatprep.mubr.f32.mxu0 %v6551
        %7520 = vmatmul.mubr.f32.gmra.mxu0 %v4922
        %v7521 = vpop.f32.mrf.mxu0
        %v7522 = vadd.f32 %v7409, %v7521
        %v7523 = vpop.f32.mrf.mxu0
        %7524 = vmatprep.mubr.f32.mxu0 %v6552
        %7525 = vmatmul.mubr.f32.gmra.mxu0 %v4923
        %v7526 = vpop.f32.mrf.mxu0
        %v7527 = vadd.f32 %v7409, %v7526
        %v7528 = vpop.f32.mrf.mxu0
        %7529 = vmatprep.mubr.f32.mxu0 %v6553
        %7530 = vmatmul.mubr.f32.gmra.mxu0 %v4924
        %v7531 = vpop.f32.mrf.mxu0
        %v7532 = vadd.f32 %v7409, %v7531
        %v7533 = vpop.f32.mrf.mxu0
        %7534 = vmatprep.mubr.f32.mxu0 %v6554
        %7535 = vmatmul.mubr.f32.gmra.mxu0 %v4925
        %v7536 = vpop.f32.mrf.mxu0
        %v7537 = vadd.f32 %v7409, %v7536
        %v7538 = vpop.f32.mrf.mxu0
        %7539 = vmatprep.mubr.f32.mxu0 %v6555
        %7540 = vmatmul.mubr.f32.gmra.mxu0 %v4926
        %v7541 = vpop.f32.mrf.mxu0
        %v7542 = vadd.f32 %v7409, %v7541
        %v7543 = vpop.f32.mrf.mxu0
        %7544 = vmatprep.mubr.f32.mxu0 %v6556
        %7545 = vmatmul.mubr.f32.gmra.mxu0 %v4927
        %v7546 = vpop.f32.mrf.mxu0
        %v7547 = vadd.f32 %v7409, %v7546
        %v7548 = vpop.f32.mrf.mxu0
        %7549 = vmatprep.mubr.f32.mxu0 %v6557
        %7550 = vmatmul.mubr.f32.gmra.mxu0 %v4928
        %v7551 = vpop.f32.mrf.mxu0
        %v7552 = vadd.f32 %v7409, %v7551
        %v7553 = vpop.f32.mrf.mxu0
        %7554 = vdwg.mxu0
        %7555 = vmatprep.subr.mxu0 0.0
        %7556 = vmatpush1.msra.mxu0 %v5009
        %7557 = vmatprep.subr.mxu0 0.0
        %7558 = vmatpush1.msra.mxu0 %v5008
        %7559 = vmatprep.subr.mxu0 0.0
        %7560 = vmatpush1.msra.mxu0 %v5007
        %7561 = vmatprep.subr.mxu0 0.0
        %7562 = vmatpush1.msra.mxu0 %v5006
        %7563 = vmatprep.subr.mxu0 0.0
        %7564 = vmatpush1.msra.mxu0 %v5005
        %7565 = vmatprep.subr.mxu0 0.0
        %7566 = vmatpush1.msra.mxu0 %v5004
        %7567 = vmatprep.subr.mxu0 0.0
        %7568 = vmatpush1.msra.mxu0 %v5003
        %7569 = vmatprep.subr.mxu0 0.0
        %7570 = vmatpush1.msra.mxu0 %v5002
        %7571 = vmatprep.subr.mxu0 0.0
        %7572 = vmatpush1.msra.mxu0 %v5001
        %7573 = vmatprep.subr.mxu0 0.0
        %7574 = vmatpush1.msra.mxu0 %v5000
        %7575 = vmatprep.subr.mxu0 0.0
        %7576 = vmatpush1.msra.mxu0 %v4999
        %7577 = vmatprep.subr.mxu0 0.0
        %7578 = vmatpush1.msra.mxu0 %v4998
        %7579 = vmatprep.subr.mxu0 0.0
        %7580 = vmatpush1.msra.mxu0 %v4997
        %7581 = vmatprep.subr.mxu0 0.0
        %7582 = vmatpush1.msra.mxu0 %v4996
        %7583 = vmatprep.subr.mxu0 0.0
        %7584 = vmatpush1.msra.mxu0 %v4995
        %7585 = vmatprep.subr.mxu0 0.0
        %7586 = vmatpush1.msra.mxu0 %v4994
        %7587 = vmatprep.subr.mxu0 0.0
        %7588 = vmatpush2.msra.mxu0 %v5025
        %7589 = vmatprep.subr.mxu0 0.0
        %7590 = vmatpush2.msra.mxu0 %v5024
        %7591 = vmatprep.subr.mxu0 0.0
        %7592 = vmatpush2.msra.mxu0 %v5023
        %7593 = vmatprep.subr.mxu0 0.0
        %7594 = vmatpush2.msra.mxu0 %v5022
        %7595 = vmatprep.subr.mxu0 0.0
        %7596 = vmatpush2.msra.mxu0 %v5021
        %7597 = vmatprep.subr.mxu0 0.0
        %7598 = vmatpush2.msra.mxu0 %v5020
        %7599 = vmatprep.subr.mxu0 0.0
        %7600 = vmatpush2.msra.mxu0 %v5019
        %7601 = vmatprep.subr.mxu0 0.0
        %7602 = vmatpush2.msra.mxu0 %v5018
        %7603 = vmatprep.subr.mxu0 0.0
        %7604 = vmatpush2.msra.mxu0 %v5017
        %7605 = vmatprep.subr.mxu0 0.0
        %7606 = vmatpush2.msra.mxu0 %v5016
        %7607 = vmatprep.subr.mxu0 0.0
        %7608 = vmatpush2.msra.mxu0 %v5015
        %7609 = vmatprep.subr.mxu0 0.0
        %7610 = vmatpush2.msra.mxu0 %v5014
        %7611 = vmatprep.subr.mxu0 0.0
        %7612 = vmatpush2.msra.mxu0 %v5013
        %7613 = vmatprep.subr.mxu0 0.0
        %7614 = vmatpush2.msra.mxu0 %v5012
        %7615 = vmatprep.subr.mxu0 0.0
        %7616 = vmatpush2.msra.mxu0 %v5011
        %7617 = vmatprep.subr.mxu0 0.0
        %7618 = vmatpush2.msra.mxu0 %v5010
        %7619 = vmatprep.mubr.f32.mxu0 %v6526
        %7620 = vmatmul.mubr.f32.gmra.mxu0 %v7342
        %v7621 = vpop.f32.mrf.mxu0
        %v7622 = vadd.f32 %v7477, %v7621
        %v7623 = vpop.f32.mrf.mxu0
        %7624 = vmatprep.mubr.f32.mxu0 %v6527
        %7625 = vmatmul.mubr.f32.gmra.mxu0 %v7343
        %v7626 = vpop.f32.mrf.mxu0
        %v7627 = vadd.f32 %v7482, %v7626
        %v7628 = vpop.f32.mrf.mxu0
        %7629 = vmatprep.mubr.f32.mxu0 %v6528
        %7630 = vmatmul.mubr.f32.gmra.mxu0 %v7344
        %v7631 = vpop.f32.mrf.mxu0
        %v7632 = vadd.f32 %v7487, %v7631
        %v7633 = vpop.f32.mrf.mxu0
        %7634 = vmatprep.mubr.f32.mxu0 %v6529
        %7635 = vmatmul.mubr.f32.gmra.mxu0 %v7345
        %v7636 = vpop.f32.mrf.mxu0
        %v7637 = vadd.f32 %v7492, %v7636
        %v7638 = vpop.f32.mrf.mxu0
        %7639 = vmatprep.mubr.f32.mxu0 %v6530
        %7640 = vmatmul.mubr.f32.gmra.mxu0 %v7346
        %v7641 = vpop.f32.mrf.mxu0
        %v7642 = vadd.f32 %v7497, %v7641
        %v7643 = vpop.f32.mrf.mxu0
        %7644 = vmatprep.mubr.f32.mxu0 %v6531
        %7645 = vmatmul.mubr.f32.gmra.mxu0 %v7347
        %v7646 = vpop.f32.mrf.mxu0
        %v7647 = vadd.f32 %v7502, %v7646
        %v7648 = vpop.f32.mrf.mxu0
        %7649 = vmatprep.mubr.f32.mxu0 %v6532
        %7650 = vmatmul.mubr.f32.gmra.mxu0 %v7348
        %v7651 = vpop.f32.mrf.mxu0
        %v7652 = vadd.f32 %v7507, %v7651
        %v7653 = vpop.f32.mrf.mxu0
        %7654 = vmatprep.mubr.f32.mxu0 %v6533
        %7655 = vmatmul.mubr.f32.gmra.mxu0 %v7349
        %v7656 = vpop.f32.mrf.mxu0
        %v7657 = vadd.f32 %v7512, %v7656
        %v7658 = vpop.f32.mrf.mxu0
        %7659 = vmatprep.mubr.f32.mxu0 %v6534
        %7660 = vmatmul.mubr.f32.gmra.mxu0 %v7350
        %v7661 = vpop.f32.mrf.mxu0
        %v7662 = vadd.f32 %v7517, %v7661
        %v7663 = vpop.f32.mrf.mxu0
        %7664 = vmatprep.mubr.f32.mxu0 %v6535
        %7665 = vmatmul.mubr.f32.gmra.mxu0 %v7351
        %v7666 = vpop.f32.mrf.mxu0
        %v7667 = vadd.f32 %v7522, %v7666
        %v7668 = vpop.f32.mrf.mxu0
        %7669 = vmatprep.mubr.f32.mxu0 %v6536
        %7670 = vmatmul.mubr.f32.gmra.mxu0 %v7352
        %v7671 = vpop.f32.mrf.mxu0
        %v7672 = vadd.f32 %v7527, %v7671
        %v7673 = vpop.f32.mrf.mxu0
        %7674 = vmatprep.mubr.f32.mxu0 %v6537
        %7675 = vmatmul.mubr.f32.gmra.mxu0 %v7353
        %v7676 = vpop.f32.mrf.mxu0
        %v7677 = vadd.f32 %v7532, %v7676
        %v7678 = vpop.f32.mrf.mxu0
        %7679 = vmatprep.mubr.f32.mxu0 %v6538
        %7680 = vmatmul.mubr.f32.gmra.mxu0 %v7354
        %v7681 = vpop.f32.mrf.mxu0
        %v7682 = vadd.f32 %v7537, %v7681
        %v7683 = vpop.f32.mrf.mxu0
        %7684 = vmatprep.mubr.f32.mxu0 %v6539
        %7685 = vmatmul.mubr.f32.gmra.mxu0 %v7355
        %v7686 = vpop.f32.mrf.mxu0
        %v7687 = vadd.f32 %v7542, %v7686
        %v7688 = vpop.f32.mrf.mxu0
        %7689 = vmatprep.mubr.f32.mxu0 %v6540
        %7690 = vmatmul.mubr.f32.gmra.mxu0 %v7356
        %v7691 = vpop.f32.mrf.mxu0
        %v7692 = vadd.f32 %v7547, %v7691
        %v7693 = vpop.f32.mrf.mxu0
        %7694 = vmatprep.mubr.f32.mxu0 %v6541
        %7695 = vmatmul.mubr.f32.gmra.mxu0 %v7357
        %v7696 = vpop.f32.mrf.mxu0
        %v7697 = vadd.f32 %v7552, %v7696
        %v7698 = vpop.f32.mrf.mxu0
        %7699 = vdwg.mxu0
        %7700 = vmatprep.subr.mxu0 0.0
        %7701 = vmatpush1.msra.mxu0 %v5041
        %7702 = vmatprep.subr.mxu0 0.0
        %7703 = vmatpush1.msra.mxu0 %v5040
        %7704 = vmatprep.subr.mxu0 0.0
        %7705 = vmatpush1.msra.mxu0 %v5039
        %7706 = vmatprep.subr.mxu0 0.0
        %7707 = vmatpush1.msra.mxu0 %v5038
        %7708 = vmatprep.subr.mxu0 0.0
        %7709 = vmatpush1.msra.mxu0 %v5037
        %7710 = vmatprep.subr.mxu0 0.0
        %7711 = vmatpush1.msra.mxu0 %v5036
        %7712 = vmatprep.subr.mxu0 0.0
        %7713 = vmatpush1.msra.mxu0 %v5035
        %7714 = vmatprep.subr.mxu0 0.0
        %7715 = vmatpush1.msra.mxu0 %v5034
        %7716 = vmatprep.subr.mxu0 0.0
        %7717 = vmatpush1.msra.mxu0 %v5033
        %7718 = vmatprep.subr.mxu0 0.0
        %7719 = vmatpush1.msra.mxu0 %v5032
        %7720 = vmatprep.subr.mxu0 0.0
        %7721 = vmatpush1.msra.mxu0 %v5031
        %7722 = vmatprep.subr.mxu0 0.0
        %7723 = vmatpush1.msra.mxu0 %v5030
        %7724 = vmatprep.subr.mxu0 0.0
        %7725 = vmatpush1.msra.mxu0 %v5029
        %7726 = vmatprep.subr.mxu0 0.0
        %7727 = vmatpush1.msra.mxu0 %v5028
        %7728 = vmatprep.subr.mxu0 0.0
        %7729 = vmatpush1.msra.mxu0 %v5027
        %7730 = vmatprep.subr.mxu0 0.0
        %7731 = vmatpush1.msra.mxu0 %v5026
        %7732 = vmatprep.subr.mxu0 0.0
        %7733 = vmatpush2.msra.mxu0 %v5057
        %7734 = vmatprep.subr.mxu0 0.0
        %7735 = vmatpush2.msra.mxu0 %v5056
        %7736 = vmatprep.subr.mxu0 0.0
        %7737 = vmatpush2.msra.mxu0 %v5055
        %7738 = vmatprep.subr.mxu0 0.0
        %7739 = vmatpush2.msra.mxu0 %v5054
        %7740 = vmatprep.subr.mxu0 0.0
        %7741 = vmatpush2.msra.mxu0 %v5053
        %7742 = vmatprep.subr.mxu0 0.0
        %7743 = vmatpush2.msra.mxu0 %v5052
        %7744 = vmatprep.subr.mxu0 0.0
        %7745 = vmatpush2.msra.mxu0 %v5051
        %7746 = vmatprep.subr.mxu0 0.0
        %7747 = vmatpush2.msra.mxu0 %v5050
        %7748 = vmatprep.subr.mxu0 0.0
        %7749 = vmatpush2.msra.mxu0 %v5049
        %7750 = vmatprep.subr.mxu0 0.0
        %7751 = vmatpush2.msra.mxu0 %v5048
        %7752 = vmatprep.subr.mxu0 0.0
        %7753 = vmatpush2.msra.mxu0 %v5047
        %7754 = vmatprep.subr.mxu0 0.0
        %7755 = vmatpush2.msra.mxu0 %v5046
        %7756 = vmatprep.subr.mxu0 0.0
        %7757 = vmatpush2.msra.mxu0 %v5045
        %7758 = vmatprep.subr.mxu0 0.0
        %7759 = vmatpush2.msra.mxu0 %v5044
        %7760 = vmatprep.subr.mxu0 0.0
        %7761 = vmatpush2.msra.mxu0 %v5043
        %7762 = vmatprep.subr.mxu0 0.0
        %7763 = vmatpush2.msra.mxu0 %v5042
        %7764 = vmatprep.mubr.f32.mxu0 %v7374
        %7765 = vmatmul.mubr.f32.gmra.mxu0 %v7358
        %v7766 = vpop.f32.mrf.mxu0
        %v7767 = vadd.f32 %v7622, %v7766
        %v7768 = vpop.f32.mrf.mxu0
        %7769 = vmatprep.mubr.f32.mxu0 %v7375
        %7770 = vmatmul.mubr.f32.gmra.mxu0 %v7359
        %v7771 = vpop.f32.mrf.mxu0
        %v7772 = vadd.f32 %v7627, %v7771
        %v7773 = vpop.f32.mrf.mxu0
        %7774 = vmatprep.mubr.f32.mxu0 %v7376
        %7775 = vmatmul.mubr.f32.gmra.mxu0 %v7360
        %v7776 = vpop.f32.mrf.mxu0
        %v7777 = vadd.f32 %v7632, %v7776
        %v7778 = vpop.f32.mrf.mxu0
        %7779 = vmatprep.mubr.f32.mxu0 %v7377
        %7780 = vmatmul.mubr.f32.gmra.mxu0 %v7361
        %v7781 = vpop.f32.mrf.mxu0
        %v7782 = vadd.f32 %v7637, %v7781
        %v7783 = vpop.f32.mrf.mxu0
        %7784 = vmatprep.mubr.f32.mxu0 %v7378
        %7785 = vmatmul.mubr.f32.gmra.mxu0 %v7362
        %v7786 = vpop.f32.mrf.mxu0
        %v7787 = vadd.f32 %v7642, %v7786
        %v7788 = vpop.f32.mrf.mxu0
        %7789 = vmatprep.mubr.f32.mxu0 %v7379
        %7790 = vmatmul.mubr.f32.gmra.mxu0 %v7363
        %v7791 = vpop.f32.mrf.mxu0
        %v7792 = vadd.f32 %v7647, %v7791
        %v7793 = vpop.f32.mrf.mxu0
        %7794 = vmatprep.mubr.f32.mxu0 %v7380
        %7795 = vmatmul.mubr.f32.gmra.mxu0 %v7364
        %v7796 = vpop.f32.mrf.mxu0
        %v7797 = vadd.f32 %v7652, %v7796
        %v7798 = vpop.f32.mrf.mxu0
        %7799 = vmatprep.mubr.f32.mxu0 %v7381
        %7800 = vmatmul.mubr.f32.gmra.mxu0 %v7365
        %v7801 = vpop.f32.mrf.mxu0
        %v7802 = vadd.f32 %v7657, %v7801
        %v7803 = vpop.f32.mrf.mxu0
        %7804 = vmatprep.mubr.f32.mxu0 %v7382
        %7805 = vmatmul.mubr.f32.gmra.mxu0 %v7366
        %v7806 = vpop.f32.mrf.mxu0
        %v7807 = vadd.f32 %v7662, %v7806
        %v7808 = vpop.f32.mrf.mxu0
        %7809 = vmatprep.mubr.f32.mxu0 %v7383
        %7810 = vmatmul.mubr.f32.gmra.mxu0 %v7367
        %v7811 = vpop.f32.mrf.mxu0
        %v7812 = vadd.f32 %v7667, %v7811
        %v7813 = vpop.f32.mrf.mxu0
        %7814 = vmatprep.mubr.f32.mxu0 %v7384
        %7815 = vmatmul.mubr.f32.gmra.mxu0 %v7368
        %v7816 = vpop.f32.mrf.mxu0
        %v7817 = vadd.f32 %v7672, %v7816
        %v7818 = vpop.f32.mrf.mxu0
        %7819 = vmatprep.mubr.f32.mxu0 %v7385
        %7820 = vmatmul.mubr.f32.gmra.mxu0 %v7369
        %v7821 = vpop.f32.mrf.mxu0
        %v7822 = vadd.f32 %v7677, %v7821
        %v7823 = vpop.f32.mrf.mxu0
        %7824 = vmatprep.mubr.f32.mxu0 %v7386
        %7825 = vmatmul.mubr.f32.gmra.mxu0 %v7370
        %v7826 = vpop.f32.mrf.mxu0
        %v7827 = vadd.f32 %v7682, %v7826
        %v7828 = vpop.f32.mrf.mxu0
        %7829 = vmatprep.mubr.f32.mxu0 %v7387
        %7830 = vmatmul.mubr.f32.gmra.mxu0 %v7371
        %v7831 = vpop.f32.mrf.mxu0
        %v7832 = vadd.f32 %v7687, %v7831
        %v7833 = vpop.f32.mrf.mxu0
        %7834 = vmatprep.mubr.f32.mxu0 %v7388
        %7835 = vmatmul.mubr.f32.gmra.mxu0 %v7372
        %v7836 = vpop.f32.mrf.mxu0
        %v7837 = vadd.f32 %v7692, %v7836
        %v7838 = vpop.f32.mrf.mxu0
        %7839 = vmatprep.mubr.f32.mxu0 %v7389
        %7840 = vmatmul.mubr.f32.gmra.mxu0 %v7373
        %v7841 = vpop.f32.mrf.mxu0
        %v7842 = vadd.f32 %v7697, %v7841
        %v7843 = vpop.f32.mrf.mxu0
        %7844 = vdwg.mxu0
        %7845 = vmatprep.subr.mxu0 0.0
        %7846 = vmatpush1.msra.mxu0 %v5073
        %7847 = vmatprep.subr.mxu0 0.0
        %7848 = vmatpush1.msra.mxu0 %v5072
        %7849 = vmatprep.subr.mxu0 0.0
        %7850 = vmatpush1.msra.mxu0 %v5071
        %7851 = vmatprep.subr.mxu0 0.0
        %7852 = vmatpush1.msra.mxu0 %v5070
        %7853 = vmatprep.subr.mxu0 0.0
        %7854 = vmatpush1.msra.mxu0 %v5069
        %7855 = vmatprep.subr.mxu0 0.0
        %7856 = vmatpush1.msra.mxu0 %v5068
        %7857 = vmatprep.subr.mxu0 0.0
        %7858 = vmatpush1.msra.mxu0 %v5067
        %7859 = vmatprep.subr.mxu0 0.0
        %7860 = vmatpush1.msra.mxu0 %v5066
        %7861 = vmatprep.subr.mxu0 0.0
        %7862 = vmatpush1.msra.mxu0 %v5065
        %7863 = vmatprep.subr.mxu0 0.0
        %7864 = vmatpush1.msra.mxu0 %v5064
        %7865 = vmatprep.subr.mxu0 0.0
        %7866 = vmatpush1.msra.mxu0 %v5063
        %7867 = vmatprep.subr.mxu0 0.0
        %7868 = vmatpush1.msra.mxu0 %v5062
        %7869 = vmatprep.subr.mxu0 0.0
        %7870 = vmatpush1.msra.mxu0 %v5061
        %7871 = vmatprep.subr.mxu0 0.0
        %7872 = vmatpush1.msra.mxu0 %v5060
        %7873 = vmatprep.subr.mxu0 0.0
        %7874 = vmatpush1.msra.mxu0 %v5059
        %7875 = vmatprep.subr.mxu0 0.0
        %7876 = vmatpush1.msra.mxu0 %v5058
        %7877 = vmatprep.subr.mxu0 0.0
        %7878 = vmatpush2.msra.mxu0 0.0
        %7879 = vmatprep.subr.mxu0 0.0
        %7880 = vmatpush2.msra.mxu0 0.0
        %7881 = vmatprep.subr.mxu0 0.0
        %7882 = vmatpush2.msra.mxu0 0.0
        %7883 = vmatprep.subr.mxu0 0.0
        %7884 = vmatpush2.msra.mxu0 0.0
        %7885 = vmatprep.subr.mxu0 0.0
        %7886 = vmatpush2.msra.mxu0 0.0
        %7887 = vmatprep.subr.mxu0 0.0
        %7888 = vmatpush2.msra.mxu0 0.0
        %7889 = vmatprep.subr.mxu0 0.0
        %7890 = vmatpush2.msra.mxu0 0.0
        %7891 = vmatprep.subr.mxu0 0.0
        %7892 = vmatpush2.msra.mxu0 0.0
        %7893 = vmatprep.subr.mxu0 0.0
        %7894 = vmatpush2.msra.mxu0 0.0
        %7895 = vmatprep.subr.mxu0 0.0
        %7896 = vmatpush2.msra.mxu0 0.0
        %7897 = vmatprep.subr.mxu0 0.0
        %7898 = vmatpush2.msra.mxu0 0.0
        %7899 = vmatprep.subr.mxu0 0.0
        %7900 = vmatpush2.msra.mxu0 0.0
        %7901 = vmatprep.subr.mxu0 0.0
        %7902 = vmatpush2.msra.mxu0 0.0
        %7903 = vmatprep.subr.mxu0 0.0
        %7904 = vmatpush2.msra.mxu0 0.0
        %7905 = vmatprep.subr.mxu0 0.0
        %7906 = vmatpush2.msra.mxu0 0.0
        %7907 = vmatprep.subr.mxu0 0.0
        %7908 = vmatpush2.msra.mxu0 0.0
        %7909 = vmatprep.mubr.f32.mxu0 0.0
        %7910 = vmatmul.mubr.f32.gmra.mxu0 %v7390
        %v7911 = vpop.f32.mrf.mxu0
        %v7912 = vadd.f32 %v7767, %v7911
        %v7913 = vpop.f32.mrf.mxu0
        %7914 = vmatprep.mubr.f32.mxu0 0.0
        %7915 = vmatmul.mubr.f32.gmra.mxu0 %v7391
        %v7916 = vpop.f32.mrf.mxu0
        %v7917 = vadd.f32 %v7772, %v7916
        %v7918 = vpop.f32.mrf.mxu0
        %7919 = vmatprep.mubr.f32.mxu0 0.0
        %7920 = vmatmul.mubr.f32.gmra.mxu0 %v7392
        %v7921 = vpop.f32.mrf.mxu0
        %v7922 = vadd.f32 %v7777, %v7921
        %v7923 = vpop.f32.mrf.mxu0
        %7924 = vmatprep.mubr.f32.mxu0 0.0
        %7925 = vmatmul.mubr.f32.gmra.mxu0 %v7393
        %v7926 = vpop.f32.mrf.mxu0
        %v7927 = vadd.f32 %v7782, %v7926
        %v7928 = vpop.f32.mrf.mxu0
        %7929 = vmatprep.mubr.f32.mxu0 0.0
        %7930 = vmatmul.mubr.f32.gmra.mxu0 %v7394
        %v7931 = vpop.f32.mrf.mxu0
        %v7932 = vadd.f32 %v7787, %v7931
        %v7933 = vpop.f32.mrf.mxu0
        %7934 = vmatprep.mubr.f32.mxu0 0.0
        %7935 = vmatmul.mubr.f32.gmra.mxu0 %v7395
        %v7936 = vpop.f32.mrf.mxu0
        %v7937 = vadd.f32 %v7792, %v7936
        %v7938 = vpop.f32.mrf.mxu0
        %7939 = vmatprep.mubr.f32.mxu0 0.0
        %7940 = vmatmul.mubr.f32.gmra.mxu0 %v7396
        %v7941 = vpop.f32.mrf.mxu0
        %v7942 = vadd.f32 %v7797, %v7941
        %v7943 = vpop.f32.mrf.mxu0
        %7944 = vmatprep.mubr.f32.mxu0 0.0
        %7945 = vmatmul.mubr.f32.gmra.mxu0 %v7397
        %v7946 = vpop.f32.mrf.mxu0
        %v7947 = vadd.f32 %v7802, %v7946
        %v7948 = vpop.f32.mrf.mxu0
        %7949 = vmatprep.mubr.f32.mxu0 0.0
        %7950 = vmatmul.mubr.f32.gmra.mxu0 %v7398
        %v7951 = vpop.f32.mrf.mxu0
        %v7952 = vadd.f32 %v7807, %v7951
        %v7953 = vpop.f32.mrf.mxu0
        %7954 = vmatprep.mubr.f32.mxu0 0.0
        %7955 = vmatmul.mubr.f32.gmra.mxu0 %v7399
        %v7956 = vpop.f32.mrf.mxu0
        %v7957 = vadd.f32 %v7812, %v7956
        %v7958 = vpop.f32.mrf.mxu0
        %7959 = vmatprep.mubr.f32.mxu0 0.0
        %7960 = vmatmul.mubr.f32.gmra.mxu0 %v7400
        %v7961 = vpop.f32.mrf.mxu0
        %v7962 = vadd.f32 %v7817, %v7961
        %v7963 = vpop.f32.mrf.mxu0
        %7964 = vmatprep.mubr.f32.mxu0 0.0
        %7965 = vmatmul.mubr.f32.gmra.mxu0 %v7401
        %v7966 = vpop.f32.mrf.mxu0
        %v7967 = vadd.f32 %v7822, %v7966
        %v7968 = vpop.f32.mrf.mxu0
        %7969 = vmatprep.mubr.f32.mxu0 0.0
        %7970 = vmatmul.mubr.f32.gmra.mxu0 %v7402
        %v7971 = vpop.f32.mrf.mxu0
        %v7972 = vadd.f32 %v7827, %v7971
        %v7973 = vpop.f32.mrf.mxu0
        %7974 = vmatprep.mubr.f32.mxu0 0.0
        %7975 = vmatmul.mubr.f32.gmra.mxu0 %v7403
        %v7976 = vpop.f32.mrf.mxu0
        %v7977 = vadd.f32 %v7832, %v7976
        %v7978 = vpop.f32.mrf.mxu0
        %7979 = vmatprep.mubr.f32.mxu0 0.0
        %7980 = vmatmul.mubr.f32.gmra.mxu0 %v7404
        %v7981 = vpop.f32.mrf.mxu0
        %v7982 = vadd.f32 %v7837, %v7981
        %v7983 = vpop.f32.mrf.mxu0
        %7984 = vmatprep.mubr.f32.mxu0 0.0
        %7985 = vmatmul.mubr.f32.gmra.mxu0 %v7405
        %v7986 = vpop.f32.mrf.mxu0
        %v7987 = vadd.f32 %v7842, %v7986
        %v7988 = vpop.f32.mrf.mxu0
        %7989 = vdwg.mxu0
        %v7990 = vmul.f32 %v7912, 0.35355338
        %v7991 = vmul.f32 %v7917, 0.35355338
        %v7992 = vmul.f32 %v7922, 0.35355338
        %v7993 = vmul.f32 %v7927, 0.35355338
        %v7994 = vmul.f32 %v7932, 0.35355338
        %v7995 = vmul.f32 %v7937, 0.35355338
        %v7996 = vmul.f32 %v7942, 0.35355338
        %v7997 = vmul.f32 %v7947, 0.35355338
        %v7998 = vmul.f32 %v7952, 0.35355338
        %v7999 = vmul.f32 %v7957, 0.35355338
        %v8000 = vmul.f32 %v7962, 0.35355338
        %v8001 = vmul.f32 %v7967, 0.35355338
        %v8002 = vmul.f32 %v7972, 0.35355338
        %v8003 = vmul.f32 %v7977, 0.35355338
        %v8004 = vmul.f32 %v7982, 0.35355338
        %v8005 = vmul.f32 %v7987, 0.35355338
        %v8006 = vrot.slane %v7990, 4
        %v8007 = vadd.f32 %v7990, %v8006
        %v8008 = vrot.slane %v8007, 2
        %v8009 = vadd.f32 %v8007, %v8008
        %v8010 = vrot.slane %v8009, 1
        %v8011 = vadd.f32 %v8009, %v8010
        %v8012 = vrot.slane %v7991, 4
        %v8013 = vadd.f32 %v7991, %v8012
        %v8014 = vrot.slane %v8013, 2
        %v8015 = vadd.f32 %v8013, %v8014
        %v8016 = vrot.slane %v8015, 1
        %v8017 = vadd.f32 %v8015, %v8016
        %v8018 = vrot.slane %v7992, 4
        %v8019 = vadd.f32 %v7992, %v8018
        %v8020 = vrot.slane %v8019, 2
        %v8021 = vadd.f32 %v8019, %v8020
        %v8022 = vrot.slane %v8021, 1
        %v8023 = vadd.f32 %v8021, %v8022
        %v8024 = vrot.slane %v7993, 4
        %v8025 = vadd.f32 %v7993, %v8024
        %v8026 = vrot.slane %v8025, 2
        %v8027 = vadd.f32 %v8025, %v8026
        %v8028 = vrot.slane %v8027, 1
        %v8029 = vadd.f32 %v8027, %v8028
        %v8030 = vrot.slane %v7994, 4
        %v8031 = vadd.f32 %v7994, %v8030
        %v8032 = vrot.slane %v8031, 2
        %v8033 = vadd.f32 %v8031, %v8032
        %v8034 = vrot.slane %v8033, 1
        %v8035 = vadd.f32 %v8033, %v8034
        %v8036 = vrot.slane %v7995, 4
        %v8037 = vadd.f32 %v7995, %v8036
        %v8038 = vrot.slane %v8037, 2
        %v8039 = vadd.f32 %v8037, %v8038
        %v8040 = vrot.slane %v8039, 1
        %v8041 = vadd.f32 %v8039, %v8040
        %v8042 = vrot.slane %v7996, 4
        %v8043 = vadd.f32 %v7996, %v8042
        %v8044 = vrot.slane %v8043, 2
        %v8045 = vadd.f32 %v8043, %v8044
        %v8046 = vrot.slane %v8045, 1
        %v8047 = vadd.f32 %v8045, %v8046
        %v8048 = vrot.slane %v7997, 4
        %v8049 = vadd.f32 %v7997, %v8048
        %v8050 = vrot.slane %v8049, 2
        %v8051 = vadd.f32 %v8049, %v8050
        %v8052 = vrot.slane %v8051, 1
        %v8053 = vadd.f32 %v8051, %v8052
        %v8054 = vrot.slane %v7998, 4
        %v8055 = vadd.f32 %v7998, %v8054
        %v8056 = vrot.slane %v8055, 2
        %v8057 = vadd.f32 %v8055, %v8056
        %v8058 = vrot.slane %v8057, 1
        %v8059 = vadd.f32 %v8057, %v8058
        %v8060 = vrot.slane %v7999, 4
        %v8061 = vadd.f32 %v7999, %v8060
        %v8062 = vrot.slane %v8061, 2
        %v8063 = vadd.f32 %v8061, %v8062
        %v8064 = vrot.slane %v8063, 1
        %v8065 = vadd.f32 %v8063, %v8064
        %v8066 = vrot.slane %v8000, 4
        %v8067 = vadd.f32 %v8000, %v8066
        %v8068 = vrot.slane %v8067, 2
        %v8069 = vadd.f32 %v8067, %v8068
        %v8070 = vrot.slane %v8069, 1
        %v8071 = vadd.f32 %v8069, %v8070
        %v8072 = vrot.slane %v8001, 4
        %v8073 = vadd.f32 %v8001, %v8072
        %v8074 = vrot.slane %v8073, 2
        %v8075 = vadd.f32 %v8073, %v8074
        %v8076 = vrot.slane %v8075, 1
        %v8077 = vadd.f32 %v8075, %v8076
        %v8078 = vrot.slane %v8002, 4
        %v8079 = vadd.f32 %v8002, %v8078
        %v8080 = vrot.slane %v8079, 2
        %v8081 = vadd.f32 %v8079, %v8080
        %v8082 = vrot.slane %v8081, 1
        %v8083 = vadd.f32 %v8081, %v8082
        %v8084 = vrot.slane %v8003, 4
        %v8085 = vadd.f32 %v8003, %v8084
        %v8086 = vrot.slane %v8085, 2
        %v8087 = vadd.f32 %v8085, %v8086
        %v8088 = vrot.slane %v8087, 1
        %v8089 = vadd.f32 %v8087, %v8088
        %v8090 = vrot.slane %v8004, 4
        %v8091 = vadd.f32 %v8004, %v8090
        %v8092 = vrot.slane %v8091, 2
        %v8093 = vadd.f32 %v8091, %v8092
        %v8094 = vrot.slane %v8093, 1
        %v8095 = vadd.f32 %v8093, %v8094
        %v8096 = vrot.slane %v8005, 4
        %v8097 = vadd.f32 %v8005, %v8096
        %v8098 = vrot.slane %v8097, 2
        %v8099 = vadd.f32 %v8097, %v8098
        %v8100 = vrot.slane %v8099, 1
        %v8101 = vadd.f32 %v8099, %v8100
        %v8102 = vmul.f32 %v8011, %v4483
        %v8103 = vmul.f32 %v8017, %v4483
        %v8104 = vmul.f32 %v8023, %v4483
        %v8105 = vmul.f32 %v8029, %v4483
        %v8106 = vmul.f32 %v8035, %v4483
        %v8107 = vmul.f32 %v8041, %v4483
        %v8108 = vmul.f32 %v8047, %v4483
        %v8109 = vmul.f32 %v8053, %v4483
        %v8110 = vmul.f32 %v8059, %v4483
        %v8111 = vmul.f32 %v8065, %v4483
        %v8112 = vmul.f32 %v8071, %v4483
        %v8113 = vmul.f32 %v8077, %v4483
        %v8114 = vmul.f32 %v8083, %v4483
        %v8115 = vmul.f32 %v8089, %v4483
        %v8116 = vmul.f32 %v8095, %v4483
        %v8117 = vmul.f32 %v8101, %v4483
        %v8118 = vsub.f32 %v7990, %v8102
        %v8119 = vsub.f32 %v7991, %v8103
        %v8120 = vsub.f32 %v7992, %v8104
        %v8121 = vsub.f32 %v7993, %v8105
        %v8122 = vsub.f32 %v7994, %v8106
        %v8123 = vsub.f32 %v7995, %v8107
        %v8124 = vsub.f32 %v7996, %v8108
        %v8125 = vsub.f32 %v7997, %v8109
        %v8126 = vsub.f32 %v7998, %v8110
        %v8127 = vsub.f32 %v7999, %v8111
        %v8128 = vsub.f32 %v8000, %v8112
        %v8129 = vsub.f32 %v8001, %v8113
        %v8130 = vsub.f32 %v8002, %v8114
        %v8131 = vsub.f32 %v8003, %v8115
        %v8132 = vsub.f32 %v8004, %v8116
        %v8133 = vsub.f32 %v8005, %v8117
        %v8134 = vmul.f32 %v8118, %v8118
        %v8135 = vmul.f32 %v8119, %v8119
        %v8136 = vmul.f32 %v8120, %v8120
        %v8137 = vmul.f32 %v8121, %v8121
        %v8138 = vmul.f32 %v8122, %v8122
        %v8139 = vmul.f32 %v8123, %v8123
        %v8140 = vmul.f32 %v8124, %v8124
        %v8141 = vmul.f32 %v8125, %v8125
        %v8142 = vmul.f32 %v8126, %v8126
        %v8143 = vmul.f32 %v8127, %v8127
        %v8144 = vmul.f32 %v8128, %v8128
        %v8145 = vmul.f32 %v8129, %v8129
        %v8146 = vmul.f32 %v8130, %v8130
        %v8147 = vmul.f32 %v8131, %v8131
        %v8148 = vmul.f32 %v8132, %v8132
        %v8149 = vmul.f32 %v8133, %v8133
        %v8150 = vrot.slane %v8134, 4
        %v8151 = vadd.f32 %v8134, %v8150
        %v8152 = vrot.slane %v8151, 2
        %v8153 = vadd.f32 %v8151, %v8152
        %v8154 = vrot.slane %v8153, 1
        %v8155 = vadd.f32 %v8153, %v8154
        %v8156 = vrot.slane %v8135, 4
        %v8157 = vadd.f32 %v8135, %v8156
        %v8158 = vrot.slane %v8157, 2
        %v8159 = vadd.f32 %v8157, %v8158
        %v8160 = vrot.slane %v8159, 1
        %v8161 = vadd.f32 %v8159, %v8160
        %v8162 = vrot.slane %v8136, 4
        %v8163 = vadd.f32 %v8136, %v8162
        %v8164 = vrot.slane %v8163, 2
        %v8165 = vadd.f32 %v8163, %v8164
        %v8166 = vrot.slane %v8165, 1
        %v8167 = vadd.f32 %v8165, %v8166
        %v8168 = vrot.slane %v8137, 4
        %v8169 = vadd.f32 %v8137, %v8168
        %v8170 = vrot.slane %v8169, 2
        %v8171 = vadd.f32 %v8169, %v8170
        %v8172 = vrot.slane %v8171, 1
        %v8173 = vadd.f32 %v8171, %v8172
        %v8174 = vrot.slane %v8138, 4
        %v8175 = vadd.f32 %v8138, %v8174
        %v8176 = vrot.slane %v8175, 2
        %v8177 = vadd.f32 %v8175, %v8176
        %v8178 = vrot.slane %v8177, 1
        %v8179 = vadd.f32 %v8177, %v8178
        %v8180 = vrot.slane %v8139, 4
        %v8181 = vadd.f32 %v8139, %v8180
        %v8182 = vrot.slane %v8181, 2
        %v8183 = vadd.f32 %v8181, %v8182
        %v8184 = vrot.slane %v8183, 1
        %v8185 = vadd.f32 %v8183, %v8184
        %v8186 = vrot.slane %v8140, 4
        %v8187 = vadd.f32 %v8140, %v8186
        %v8188 = vrot.slane %v8187, 2
        %v8189 = vadd.f32 %v8187, %v8188
        %v8190 = vrot.slane %v8189, 1
        %v8191 = vadd.f32 %v8189, %v8190
        %v8192 = vrot.slane %v8141, 4
        %v8193 = vadd.f32 %v8141, %v8192
        %v8194 = vrot.slane %v8193, 2
        %v8195 = vadd.f32 %v8193, %v8194
        %v8196 = vrot.slane %v8195, 1
        %v8197 = vadd.f32 %v8195, %v8196
        %v8198 = vrot.slane %v8142, 4
        %v8199 = vadd.f32 %v8142, %v8198
        %v8200 = vrot.slane %v8199, 2
        %v8201 = vadd.f32 %v8199, %v8200
        %v8202 = vrot.slane %v8201, 1
        %v8203 = vadd.f32 %v8201, %v8202
        %v8204 = vrot.slane %v8143, 4
        %v8205 = vadd.f32 %v8143, %v8204
        %v8206 = vrot.slane %v8205, 2
        %v8207 = vadd.f32 %v8205, %v8206
        %v8208 = vrot.slane %v8207, 1
        %v8209 = vadd.f32 %v8207, %v8208
        %v8210 = vrot.slane %v8144, 4
        %v8211 = vadd.f32 %v8144, %v8210
        %v8212 = vrot.slane %v8211, 2
        %v8213 = vadd.f32 %v8211, %v8212
        %v8214 = vrot.slane %v8213, 1
        %v8215 = vadd.f32 %v8213, %v8214
        %v8216 = vrot.slane %v8145, 4
        %v8217 = vadd.f32 %v8145, %v8216
        %v8218 = vrot.slane %v8217, 2
        %v8219 = vadd.f32 %v8217, %v8218
        %v8220 = vrot.slane %v8219, 1
        %v8221 = vadd.f32 %v8219, %v8220
        %v8222 = vrot.slane %v8146, 4
        %v8223 = vadd.f32 %v8146, %v8222
        %v8224 = vrot.slane %v8223, 2
        %v8225 = vadd.f32 %v8223, %v8224
        %v8226 = vrot.slane %v8225, 1
        %v8227 = vadd.f32 %v8225, %v8226
        %v8228 = vrot.slane %v8147, 4
        %v8229 = vadd.f32 %v8147, %v8228
        %v8230 = vrot.slane %v8229, 2
        %v8231 = vadd.f32 %v8229, %v8230
        %v8232 = vrot.slane %v8231, 1
        %v8233 = vadd.f32 %v8231, %v8232
        %v8234 = vrot.slane %v8148, 4
        %v8235 = vadd.f32 %v8148, %v8234
        %v8236 = vrot.slane %v8235, 2
        %v8237 = vadd.f32 %v8235, %v8236
        %v8238 = vrot.slane %v8237, 1
        %v8239 = vadd.f32 %v8237, %v8238
        %v8240 = vrot.slane %v8149, 4
        %v8241 = vadd.f32 %v8149, %v8240
        %v8242 = vrot.slane %v8241, 2
        %v8243 = vadd.f32 %v8241, %v8242
        %v8244 = vrot.slane %v8243, 1
        %v8245 = vadd.f32 %v8243, %v8244
        %v8246 = vmul.f32 %v8155, %v4483
        %v8247 = vmul.f32 %v8161, %v4483
        %v8248 = vmul.f32 %v8167, %v4483
        %v8249 = vmul.f32 %v8173, %v4483
        %v8250 = vmul.f32 %v8179, %v4483
        %v8251 = vmul.f32 %v8185, %v4483
        %v8252 = vmul.f32 %v8191, %v4483
        %v8253 = vmul.f32 %v8197, %v4483
        %v8254 = vmul.f32 %v8203, %v4483
        %v8255 = vmul.f32 %v8209, %v4483
        %v8256 = vmul.f32 %v8215, %v4483
        %v8257 = vmul.f32 %v8221, %v4483
        %v8258 = vmul.f32 %v8227, %v4483
        %v8259 = vmul.f32 %v8233, %v4483
        %v8260 = vmul.f32 %v8239, %v4483
        %v8261 = vmul.f32 %v8245, %v4483
        %v8262 = vadd.f32 %v8246, 1e-05
        %v8263 = vadd.f32 %v8247, 1e-05
        %v8264 = vadd.f32 %v8248, 1e-05
        %v8265 = vadd.f32 %v8249, 1e-05
        %v8266 = vadd.f32 %v8250, 1e-05
        %v8267 = vadd.f32 %v8251, 1e-05
        %v8268 = vadd.f32 %v8252, 1e-05
        %v8269 = vadd.f32 %v8253, 1e-05
        %v8270 = vadd.f32 %v8254, 1e-05
        %v8271 = vadd.f32 %v8255, 1e-05
        %v8272 = vadd.f32 %v8256, 1e-05
        %v8273 = vadd.f32 %v8257, 1e-05
        %v8274 = vadd.f32 %v8258, 1e-05
        %v8275 = vadd.f32 %v8259, 1e-05
        %v8276 = vadd.f32 %v8260, 1e-05
        %v8277 = vadd.f32 %v8261, 1e-05
        %v8278 = vrsqrt.pop %v8262
        %v8279 = vrsqrt.pop %v8263
        %v8280 = vrsqrt.pop %v8264
        %v8281 = vrsqrt.pop %v8265
        %v8282 = vrsqrt.pop %v8266
        %v8283 = vrsqrt.pop %v8267
        %v8284 = vrsqrt.pop %v8268
        %v8285 = vrsqrt.pop %v8269
        %v8286 = vrsqrt.pop %v8270
        %v8287 = vrsqrt.pop %v8271
        %v8288 = vrsqrt.pop %v8272
        %v8289 = vrsqrt.pop %v8273
        %v8290 = vrsqrt.pop %v8274
        %v8291 = vrsqrt.pop %v8275
        %v8292 = vrsqrt.pop %v8276
        %v8293 = vrsqrt.pop %v8277
        %v8294 = vmul.f32 %v8118, %v8278
        %v8295 = vmul.f32 %v8119, %v8279
        %v8296 = vmul.f32 %v8120, %v8280
        %v8297 = vmul.f32 %v8121, %v8281
        %v8298 = vmul.f32 %v8122, %v8282
        %v8299 = vmul.f32 %v8123, %v8283
        %v8300 = vmul.f32 %v8124, %v8284
        %v8301 = vmul.f32 %v8125, %v8285
        %v8302 = vmul.f32 %v8126, %v8286
        %v8303 = vmul.f32 %v8127, %v8287
        %v8304 = vmul.f32 %v8128, %v8288
        %v8305 = vmul.f32 %v8129, %v8289
        %v8306 = vmul.f32 %v8130, %v8290
        %v8307 = vmul.f32 %v8131, %v8291
        %v8308 = vmul.f32 %v8132, %v8292
        %v8309 = vmul.f32 %v8133, %v8293
        %v8310 = vlaneseq
        %v8311 = vshrl.u32 %v8310, 7
        %v8312 = vsub.s32 0, %v8311
        %v8313 = vrot.slane %v5093, %v8312
        %v8314 = vmul.f32 %v8294, %v8313
        %v8315 = vmul.f32 %v8295, %v8313
        %v8316 = vmul.f32 %v8296, %v8313
        %v8317 = vmul.f32 %v8297, %v8313
        %v8318 = vmul.f32 %v8298, %v8313
        %v8319 = vmul.f32 %v8299, %v8313
        %v8320 = vmul.f32 %v8300, %v8313
        %v8321 = vmul.f32 %v8301, %v8313
        %v8322 = vmul.f32 %v8302, %v8313
        %v8323 = vmul.f32 %v8303, %v8313
        %v8324 = vmul.f32 %v8304, %v8313
        %v8325 = vmul.f32 %v8305, %v8313
        %v8326 = vmul.f32 %v8306, %v8313
        %v8327 = vmul.f32 %v8307, %v8313
        %v8328 = vmul.f32 %v8308, %v8313
        %v8329 = vmul.f32 %v8309, %v8313
        %v8330 = vlaneseq
        %v8331 = vshrl.u32 %v8330, 7
        %v8332 = vsub.s32 0, %v8331
        %v8333 = vrot.slane %v5094, %v8332
        %v8334 = vadd.f32 %v8314, %v8333
        %v8335 = vadd.f32 %v8315, %v8333
        %v8336 = vadd.f32 %v8316, %v8333
        %v8337 = vadd.f32 %v8317, %v8333
        %v8338 = vadd.f32 %v8318, %v8333
        %v8339 = vadd.f32 %v8319, %v8333
        %v8340 = vadd.f32 %v8320, %v8333
        %v8341 = vadd.f32 %v8321, %v8333
        %v8342 = vadd.f32 %v8322, %v8333
        %v8343 = vadd.f32 %v8323, %v8333
        %v8344 = vadd.f32 %v8324, %v8333
        %v8345 = vadd.f32 %v8325, %v8333
        %v8346 = vadd.f32 %v8326, %v8333
        %v8347 = vadd.f32 %v8327, %v8333
        %v8348 = vadd.f32 %v8328, %v8333
        %v8349 = vadd.f32 %v8329, %v8333
        %v8350 = vlaneseq
        %v8351 = vshrl.u32 %v8350, 7
        %v8352 = vsub.s32 0, %v8351
        %v8353 = vrot.slane %v5095, %v8352
        %8354 = vmatprep.subr.mxu0 0.0
        %8355 = vmatpush1.msra.mxu0 %v5089
        %8356 = vmatprep.subr.mxu0 0.0
        %8357 = vmatpush1.msra.mxu0 %v5088
        %8358 = vmatprep.subr.mxu0 0.0
        %8359 = vmatpush1.msra.mxu0 %v5087
        %8360 = vmatprep.subr.mxu0 0.0
        %8361 = vmatpush1.msra.mxu0 %v5086
        %8362 = vmatprep.subr.mxu0 0.0
        %8363 = vmatpush1.msra.mxu0 %v5085
        %8364 = vmatprep.subr.mxu0 0.0
        %8365 = vmatpush1.msra.mxu0 %v5084
        %8366 = vmatprep.subr.mxu0 0.0
        %8367 = vmatpush1.msra.mxu0 %v5083
        %8368 = vmatprep.subr.mxu0 0.0
        %8369 = vmatpush1.msra.mxu0 %v5082
        %8370 = vmatprep.subr.mxu0 0.0
        %8371 = vmatpush1.msra.mxu0 %v5081
        %8372 = vmatprep.subr.mxu0 0.0
        %8373 = vmatpush1.msra.mxu0 %v5080
        %8374 = vmatprep.subr.mxu0 0.0
        %8375 = vmatpush1.msra.mxu0 %v5079
        %8376 = vmatprep.subr.mxu0 0.0
        %8377 = vmatpush1.msra.mxu0 %v5078
        %8378 = vmatprep.subr.mxu0 0.0
        %8379 = vmatpush1.msra.mxu0 %v5077
        %8380 = vmatprep.subr.mxu0 0.0
        %8381 = vmatpush1.msra.mxu0 %v5076
        %8382 = vmatprep.subr.mxu0 0.0
        %8383 = vmatpush1.msra.mxu0 %v5075
        %8384 = vmatprep.subr.mxu0 0.0
        %8385 = vmatpush1.msra.mxu0 %v5074
        %8386 = vmatprep.subr.mxu0 0.0
        %8387 = vmatpush2.msra.mxu0 0.0
        %8388 = vmatprep.subr.mxu0 0.0
        %8389 = vmatpush2.msra.mxu0 0.0
        %8390 = vmatprep.subr.mxu0 0.0
        %8391 = vmatpush2.msra.mxu0 0.0
        %8392 = vmatprep.subr.mxu0 0.0
        %8393 = vmatpush2.msra.mxu0 0.0
        %8394 = vmatprep.subr.mxu0 0.0
        %8395 = vmatpush2.msra.mxu0 0.0
        %8396 = vmatprep.subr.mxu0 0.0
        %8397 = vmatpush2.msra.mxu0 0.0
        %8398 = vmatprep.subr.mxu0 0.0
        %8399 = vmatpush2.msra.mxu0 0.0
        %8400 = vmatprep.subr.mxu0 0.0
        %8401 = vmatpush2.msra.mxu0 0.0
        %8402 = vmatprep.subr.mxu0 0.0
        %8403 = vmatpush2.msra.mxu0 0.0
        %8404 = vmatprep.subr.mxu0 0.0
        %8405 = vmatpush2.msra.mxu0 0.0
        %8406 = vmatprep.subr.mxu0 0.0
        %8407 = vmatpush2.msra.mxu0 0.0
        %8408 = vmatprep.subr.mxu0 0.0
        %8409 = vmatpush2.msra.mxu0 0.0
        %8410 = vmatprep.subr.mxu0 0.0
        %8411 = vmatpush2.msra.mxu0 0.0
        %8412 = vmatprep.subr.mxu0 0.0
        %8413 = vmatpush2.msra.mxu0 0.0
        %8414 = vmatprep.subr.mxu0 0.0
        %8415 = vmatpush2.msra.mxu0 0.0
        %8416 = vmatprep.subr.mxu0 0.0
        %8417 = vmatpush2.msra.mxu0 0.0
        %8418 = vmatprep.mubr.f32.mxu0 0.0
        %8419 = vmatmul.mubr.f32.gmra.mxu0 %v8334
        %v8420 = vpop.f32.mrf.mxu0
        %v8421 = vadd.f32 %v8353, %v8420
        %v8422 = vpop.f32.mrf.mxu0
        %8423 = vmatprep.mubr.f32.mxu0 0.0
        %8424 = vmatmul.mubr.f32.gmra.mxu0 %v8335
        %v8425 = vpop.f32.mrf.mxu0
        %v8426 = vadd.f32 %v8353, %v8425
        %v8427 = vpop.f32.mrf.mxu0
        %8428 = vmatprep.mubr.f32.mxu0 0.0
        %8429 = vmatmul.mubr.f32.gmra.mxu0 %v8336
        %v8430 = vpop.f32.mrf.mxu0
        %v8431 = vadd.f32 %v8353, %v8430
        %v8432 = vpop.f32.mrf.mxu0
        %8433 = vmatprep.mubr.f32.mxu0 0.0
        %8434 = vmatmul.mubr.f32.gmra.mxu0 %v8337
        %v8435 = vpop.f32.mrf.mxu0
        %v8436 = vadd.f32 %v8353, %v8435
        %v8437 = vpop.f32.mrf.mxu0
        %8438 = vmatprep.mubr.f32.mxu0 0.0
        %8439 = vmatmul.mubr.f32.gmra.mxu0 %v8338
        %v8440 = vpop.f32.mrf.mxu0
        %v8441 = vadd.f32 %v8353, %v8440
        %v8442 = vpop.f32.mrf.mxu0
        %8443 = vmatprep.mubr.f32.mxu0 0.0
        %8444 = vmatmul.mubr.f32.gmra.mxu0 %v8339
        %v8445 = vpop.f32.mrf.mxu0
        %v8446 = vadd.f32 %v8353, %v8445
        %v8447 = vpop.f32.mrf.mxu0
        %8448 = vmatprep.mubr.f32.mxu0 0.0
        %8449 = vmatmul.mubr.f32.gmra.mxu0 %v8340
        %v8450 = vpop.f32.mrf.mxu0
        %v8451 = vadd.f32 %v8353, %v8450
        %v8452 = vpop.f32.mrf.mxu0
        %8453 = vmatprep.mubr.f32.mxu0 0.0
        %8454 = vmatmul.mubr.f32.gmra.mxu0 %v8341
        %v8455 = vpop.f32.mrf.mxu0
        %v8456 = vadd.f32 %v8353, %v8455
        %v8457 = vpop.f32.mrf.mxu0
        %8458 = vmatprep.mubr.f32.mxu0 0.0
        %8459 = vmatmul.mubr.f32.gmra.mxu0 %v8342
        %v8460 = vpop.f32.mrf.mxu0
        %v8461 = vadd.f32 %v8353, %v8460
        %v8462 = vpop.f32.mrf.mxu0
        %8463 = vmatprep.mubr.f32.mxu0 0.0
        %8464 = vmatmul.mubr.f32.gmra.mxu0 %v8343
        %v8465 = vpop.f32.mrf.mxu0
        %v8466 = vadd.f32 %v8353, %v8465
        %v8467 = vpop.f32.mrf.mxu0
        %8468 = vmatprep.mubr.f32.mxu0 0.0
        %8469 = vmatmul.mubr.f32.gmra.mxu0 %v8344
        %v8470 = vpop.f32.mrf.mxu0
        %v8471 = vadd.f32 %v8353, %v8470
        %v8472 = vpop.f32.mrf.mxu0
        %8473 = vmatprep.mubr.f32.mxu0 0.0
        %8474 = vmatmul.mubr.f32.gmra.mxu0 %v8345
        %v8475 = vpop.f32.mrf.mxu0
        %v8476 = vadd.f32 %v8353, %v8475
        %v8477 = vpop.f32.mrf.mxu0
        %8478 = vmatprep.mubr.f32.mxu0 0.0
        %8479 = vmatmul.mubr.f32.gmra.mxu0 %v8346
        %v8480 = vpop.f32.mrf.mxu0
        %v8481 = vadd.f32 %v8353, %v8480
        %v8482 = vpop.f32.mrf.mxu0
        %8483 = vmatprep.mubr.f32.mxu0 0.0
        %8484 = vmatmul.mubr.f32.gmra.mxu0 %v8347
        %v8485 = vpop.f32.mrf.mxu0
        %v8486 = vadd.f32 %v8353, %v8485
        %v8487 = vpop.f32.mrf.mxu0
        %8488 = vmatprep.mubr.f32.mxu0 0.0
        %8489 = vmatmul.mubr.f32.gmra.mxu0 %v8348
        %v8490 = vpop.f32.mrf.mxu0
        %v8491 = vadd.f32 %v8353, %v8490
        %v8492 = vpop.f32.mrf.mxu0
        %8493 = vmatprep.mubr.f32.mxu0 0.0
        %8494 = vmatmul.mubr.f32.gmra.mxu0 %v8349
        %v8495 = vpop.f32.mrf.mxu0
        %v8496 = vadd.f32 %v8353, %v8495
        %v8497 = vpop.f32.mrf.mxu0
        %8498 = vdwg.mxu0
        %v8499 = vmul.f32 %v8421, 0.01
        %v8500 = vmul.f32 %v8426, 0.01
        %v8501 = vmul.f32 %v8431, 0.01
        %v8502 = vmul.f32 %v8436, 0.01
        %v8503 = vmul.f32 %v8441, 0.01
        %v8504 = vmul.f32 %v8446, 0.01
        %v8505 = vmul.f32 %v8451, 0.01
        %v8506 = vmul.f32 %v8456, 0.01
        %v8507 = vmul.f32 %v8461, 0.01
        %v8508 = vmul.f32 %v8466, 0.01
        %v8509 = vmul.f32 %v8471, 0.01
        %v8510 = vmul.f32 %v8476, 0.01
        %v8511 = vmul.f32 %v8481, 0.01
        %v8512 = vmul.f32 %v8486, 0.01
        %v8513 = vmul.f32 %v8491, 0.01
        %v8514 = vmul.f32 %v8496, 0.01
        %v8515 = vmax.f32 %v8421, %v8499
        %v8516 = vmax.f32 %v8426, %v8500
        %v8517 = vmax.f32 %v8431, %v8501
        %v8518 = vmax.f32 %v8436, %v8502
        %v8519 = vmax.f32 %v8441, %v8503
        %v8520 = vmax.f32 %v8446, %v8504
        %v8521 = vmax.f32 %v8451, %v8505
        %v8522 = vmax.f32 %v8456, %v8506
        %v8523 = vmax.f32 %v8461, %v8507
        %v8524 = vmax.f32 %v8466, %v8508
        %v8525 = vmax.f32 %v8471, %v8509
        %v8526 = vmax.f32 %v8476, %v8510
        %v8527 = vmax.f32 %v8481, %v8511
        %v8528 = vmax.f32 %v8486, %v8512
        %v8529 = vmax.f32 %v8491, %v8513
        %v8530 = vmax.f32 %v8496, %v8514
        %v8531 = vadd.f32 %v8515, %v4913
        %v8532 = vadd.f32 %v8516, %v4914
        %v8533 = vadd.f32 %v8517, %v4915
        %v8534 = vadd.f32 %v8518, %v4916
        %v8535 = vadd.f32 %v8519, %v4917
        %v8536 = vadd.f32 %v8520, %v4918
        %v8537 = vadd.f32 %v8521, %v4919
        %v8538 = vadd.f32 %v8522, %v4920
        %v8539 = vadd.f32 %v8523, %v4921
        %v8540 = vadd.f32 %v8524, %v4922
        %v8541 = vadd.f32 %v8525, %v4923
        %v8542 = vadd.f32 %v8526, %v4924
        %v8543 = vadd.f32 %v8527, %v4925
        %v8544 = vadd.f32 %v8528, %v4926
        %v8545 = vadd.f32 %v8529, %v4927
        %v8546 = vadd.f32 %v8530, %v4928
        %8547 = vst [vmem:[%s261] sm:$0xff] %v8531
        %8548 = vst [vmem:[%s261 + $0x8] sm:$0xff] %v8532
        %8549 = vst [vmem:[%s261 + $0x10] sm:$0xff] %v8533
        %8550 = vst [vmem:[%s261 + $0x18] sm:$0xff] %v8534
        %8551 = vst [vmem:[%s261 + $0x20] sm:$0xff] %v8535
        %8552 = vst [vmem:[%s261 + $0x28] sm:$0xff] %v8536
        %8553 = vst [vmem:[%s261 + $0x30] sm:$0xff] %v8537
        %8554 = vst [vmem:[%s261 + $0x38] sm:$0xff] %v8538
        %8555 = vst [vmem:[%s261 + $0x40] sm:$0xff] %v8539
        %8556 = vst [vmem:[%s261 + $0x48] sm:$0xff] %v8540
        %8557 = vst [vmem:[%s261 + $0x50] sm:$0xff] %v8541
        %8558 = vst [vmem:[%s261 + $0x58] sm:$0xff] %v8542
        %8559 = vst [vmem:[%s261 + $0x60] sm:$0xff] %v8543
        %8560 = vst [vmem:[%s261 + $0x68] sm:$0xff] %v8544
        %8561 = vst [vmem:[%s261 + $0x70] sm:$0xff] %v8545
        %8562 = vst [vmem:[%s261 + $0x78] sm:$0xff] %v8546
        %s8563 = sand.u32 %s164, 1
        %s8564 = scalar_lea.sflag [#allocation3], %s8563
        %s8565 = sand.u32 %s164, 1
        %s8566 = smul.addr %s8565, 128
        %s8567 = scalar_lea.vmem [#allocation2], %s8566
        // Predicated region
        $region45: #{static_pna_forward.1} parent=43 // pred_check
          %p8568 = pneg %p174
        $region46: #{static_pna_forward.1} parent=43 // pred_check_branch
          %8570 = sbr.rel (%p8568) target = $region48
        $region47: #{static_pna_forward.1} parent=43 // pred_region
          %s8571 = smul.u32 16, %s20
          %s8573 = ssub.s32 2048, 2048
          %8574 = vsyncadd %s8564, %s8573
          %s8575 = smul.addr %s8571, 128
          %s8576 = scalar_lea.hbm %s6, %s8575
          %s8577 = sshll.u32 %s8567, 4
          %s8578 = int_to_ptr.vmem [resolvable:$true] %s8577
          %8583 = dma.vmem_to_hbm [thread:$0]  %s8578, 2048, %s8576, %s8564, 128, 128, 8
        $region48: #{static_pna_forward.1} parent=43 // pred_fallthru
          _
      $region44: #{static_pna_forward.1} parent=5 // pred_fallthru
        _
      %p8584 = scmp.le.s32.totalorder 2, %s15
      // Predicated region
      $region49: #{static_pna_forward.1} parent=5 // pred_check
        %p8585 = pneg %p8584
      $region50: #{static_pna_forward.1} parent=5 // pred_check_branch
        %8587 = sbr.rel (%p8585) target = $region52
      $region51: #{static_pna_forward.1} parent=5 // pred_region
        %s8588 = ssub.s32 %s15, 2
        // Predicated region
        $region53: #{static_pna_forward.1} parent=51 // pred_check
          %p8589 = pneg %p180
        $region54: #{static_pna_forward.1} parent=51 // pred_check_branch
          %8591 = sbr.rel (%p8589) target = $region56
        $region55: #{static_pna_forward.1} parent=51 // pred_region
          %s8592 = sand.u32 %s165, 1
          %s8593 = scalar_lea.sflag [#allocation3], %s8592
          %s8594 = sand.u32 %s165, 1
          %s8595 = smul.addr %s8594, 128
          %s8596 = scalar_lea.vmem [#allocation2], %s8595
          %8597 = dma.done %s8593, 2048
        $region56: #{static_pna_forward.1} parent=51 // pred_fallthru
          _
      $region52: #{static_pna_forward.1} parent=5 // pred_fallthru
        _
    $region6: #{static_pna_forward.1} parent=1 // loop_footer
      %s19 = sadd.s32 1, %s15
    $region7: #{static_pna_forward.1} parent=1 // loop_footer_branch
      %14 = sbr.rel target = $region3
    $region8: #{static_pna_forward.1} parent=1 // loop_exit
      _
    %8598 = vsyncpa [#allocation3], 1
    %s8599 = scalar_lea.sflag [#allocation3], 1
    %8600 = vsyncpa %s8599, 1

</llo_original>
